<compile_context>
chip_gen: v6e
topology: v6e:2x2x1
jax: 0.10.0
libtpu: 0.0.40
codegen_flags: <defaults>
</compile_context>

<pallas_src>
import jax
import jax.numpy as jnp
from jax import lax
from jax.experimental import pallas as pl
from jax.experimental.pallas import tpu as pltpu


def _round_up(x, m):
    return ((x + m - 1) // m) * m


# --------------------------------------------------------------------------
# Kernel 1: full recurrence (attention + LSTMCell) in a single invocation.
# --------------------------------------------------------------------------
def decoder_rnn_kernel(bs_ref,                       # SMEM (1,)  score bias
                       emb_ref, feats_ref, h0_ref,
                       wv_ref, bv_ref, wh_ref, bh_ref, ws_ref,
                       wih_e_ref, wih_c_ref, whh_ref, bgate_ref,
                       hseq_ref):
    T = emb_ref.shape[0]
    Hp = h0_ref.shape[1]

    feats = feats_ref[...]                                   # (Bp, N, Df) f32

    # Time-invariant attention feature projection: computed ONCE (hoisted
    # out of the per-timestep loop).
    pf = jnp.einsum('bnd,da->bna', feats, wv_ref[...],
                    preferred_element_type=jnp.float32)
    pf = pf + bv_ref[...][None, :, :]                        # (Bp, N, Ap)

    wh = wh_ref[...]                                         # (Hp, Ap)
    bh = bh_ref[...]                                         # (1, Ap)
    ws_row = ws_ref[...]                                     # (1, Ap)
    bs = bs_ref[0]                                           # scalar (SMEM)
    wih_e = wih_e_ref[...]                                   # (E,  4Hp)
    wih_c = wih_c_ref[...]                                   # (Df, 4Hp)
    whh = whh_ref[...]                                       # (Hp, 4Hp)
    bg = bgate_ref[...]                                      # (1, 4Hp)

    def step(t, carry):
        h, c = carry                                         # (Bp, Hp) each

        # ---- Attention ----
        ph = jnp.dot(h, wh, preferred_element_type=jnp.float32) + bh  # (Bp, Ap)
        e = jnp.tanh(pf + ph[:, None, :])                             # (Bp, N, Ap)
        # score Linear as VPU multiply + lane reduction (no 1-wide matmul).
        scores = jnp.sum(e * ws_row[None, :, :], axis=-1) + bs        # (Bp, N)
        m = jnp.max(scores, axis=1, keepdims=True)
        p = jnp.exp(scores - m)
        inv_denom = pl.reciprocal(jnp.sum(p, axis=1, keepdims=True),
                                  approx=True)                        # EUP
        alpha = p * inv_denom                                         # (Bp, N)
        context = jnp.sum(alpha[:, :, None] * feats, axis=1)          # (Bp, Df)

        # ---- LSTMCell (pre-split input weights: no lane-axis concat) ----
        emb = emb_ref[t]                                              # (Bp, E)
        gates = (jnp.dot(emb, wih_e, preferred_element_type=jnp.float32)
                 + jnp.dot(context, wih_c, preferred_element_type=jnp.float32)
                 + jnp.dot(h, whh, preferred_element_type=jnp.float32)
                 + bg)                                                # (Bp, 4Hp)
        # Hp is a multiple of 128, so these slices are lane-tile aligned.
        i_g = jax.nn.sigmoid(gates[:, 0 * Hp:1 * Hp])
        f_g = jax.nn.sigmoid(gates[:, 1 * Hp:2 * Hp])
        g_g = jnp.tanh(gates[:, 2 * Hp:3 * Hp])
        o_g = jax.nn.sigmoid(gates[:, 3 * Hp:4 * Hp])
        c_new = f_g * c + i_g * g_g
        h_new = o_g * jnp.tanh(c_new)

        hseq_ref[t] = h_new.astype(hseq_ref.dtype)      # lane/sublane-dense
        return (h_new, c_new)

    h0 = h0_ref[...].astype(jnp.float32)
    c0 = jnp.zeros_like(h0)
    lax.fori_loop(0, T, step, (h0, c0), unroll=True)


# --------------------------------------------------------------------------
# Kernel 2: output (vocab) projection for all T*Bp rows at once.
# --------------------------------------------------------------------------
def vocab_proj_kernel(h_ref, w_ref, b_ref, o_ref):
    o_ref[...] = (jnp.dot(h_ref[...], w_ref[...],
                          preferred_element_type=jnp.float32)
                  + b_ref[...]).astype(o_ref.dtype)


# --------------------------------------------------------------------------
# Wrapper
# --------------------------------------------------------------------------
def decoder_forward(feats, init_hidden, captions, params):
    """feats: (B, N, Df), init_hidden: (B, H), captions: (B, T+1) int32."""
    B, N, Df = feats.shape
    H = init_hidden.shape[1]
    T = captions.shape[1] - 1
    E = params['emb'].shape[1]
    V = params['wout'].shape[0]
    A = params['wv'].shape[0]

    Hp = _round_up(max(H, 128), 128)   # lane-aligned hidden / gate blocks
    Ap = _round_up(max(A, 128), 128)   # lane-aligned attention intermediates
    Vp = _round_up(max(V, 128), 128)   # lane-dense logits output
    Bp = _round_up(max(B, 8), 8)       # sublane-aligned batch rows
    f32 = jnp.float32

    # Embedding gather (glue) -> time-major (T, Bp, E). Dropout = identity.
    emb_seq = jnp.transpose(params['emb'][captions[:, :T]], (1, 0, 2)).astype(f32)
    emb_seq = jnp.pad(emb_seq, ((0, 0), (0, Bp - B), (0, 0)))

    feats_p = jnp.pad(feats.astype(f32), ((0, Bp - B), (0, 0), (0, 0)))

    # ---- weight prep: transpose to (in, out); zero-pad hidden dims to Hp ----
    def pad_gate_cols(w_t):  # (in, 4H) per-gate [i|f|g|o] -> (in, 4Hp)
        d_in = w_t.shape[0]
        return jnp.pad(w_t.reshape(d_in, 4, H),
                       ((0, 0), (0, 0), (0, Hp - H))).reshape(d_in, 4 * Hp)

    wv_t = jnp.pad(params['wv'].T.astype(f32), ((0, 0), (0, Ap - A)))   # (Df, Ap)
    bv = jnp.pad(params['bv'].reshape(1, A).astype(f32),
                 ((0, 0), (0, Ap - A)))                                 # (1, Ap)
    wh_p = jnp.pad(params['wh'].T.astype(f32),
                   ((0, Hp - H), (0, Ap - A)))                          # (Hp, Ap)
    bh = jnp.pad(params['bh'].reshape(1, A).astype(f32),
                 ((0, 0), (0, Ap - A)))                                 # (1, Ap)
    ws_row = jnp.pad(params['ws'].reshape(1, A).astype(f32),
                     ((0, 0), (0, Ap - A)))                             # (1, Ap)
    bs = params['bs'].reshape(1).astype(f32)                            # SMEM

    wih_t = params['wih'].T.astype(f32)                                 # (E+Df, 4H)
    wih_e = pad_gate_cols(wih_t[:E])                                    # (E,  4Hp)
    wih_c = pad_gate_cols(wih_t[E:])                                    # (Df, 4Hp)
    whh_p = jnp.pad(pad_gate_cols(params['whh'].T.astype(f32)),
                    ((0, Hp - H), (0, 0)))                              # (Hp, 4Hp)
    bgate = jnp.pad((params['bih'] + params['bhh']).astype(f32).reshape(4, H),
                    ((0, 0), (0, Hp - H))).reshape(1, 4 * Hp)

    h0_p = jnp.pad(init_hidden.astype(f32),
                   ((0, Bp - B), (0, Hp - H)))                          # (Bp, Hp)

    wout_p = jnp.pad(params['wout'].T.astype(f32),
                     ((0, Hp - H), (0, Vp - V)))                        # (Hp, Vp)
    bout_p = jnp.pad(params['bout'].reshape(1, V).astype(f32),
                     ((0, 0), (0, Vp - V)))                             # (1, Vp)

    full = lambda shape: pl.BlockSpec(shape, lambda i: (0,) * len(shape))

    # ---- Kernel 1: sequential recurrence, single grid step, in-kernel loop.
    hseq = pl.pallas_call(
        decoder_rnn_kernel,
        out_shape=jax.ShapeDtypeStruct((T, Bp, Hp), jnp.float32),
        grid=(1,),
        in_specs=[
            pl.BlockSpec(memory_space=pltpu.MemorySpace.SMEM),   # bs (scalar)
            full((T, Bp, E)),                                    # emb_seq
            full((Bp, N, Df)),                                   # feats
            full((Bp, Hp)),                                      # h0
            full((Df, Ap)), full((1, Ap)),                       # v_proj
            full((Hp, Ap)), full((1, Ap)),                       # h_proj
            full((1, Ap)),                                       # score weight
            full((E, 4 * Hp)), full((Df, 4 * Hp)),               # wih split
            full((Hp, 4 * Hp)), full((1, 4 * Hp)),               # whh, bias
        ],
        out_specs=full((T, Bp, Hp)),
        compiler_params=pltpu.CompilerParams(
            dimension_semantics=("arbitrary",),
            vmem_limit_bytes=64 * 1024 * 1024),
    )(bs, emb_seq, feats_p, h0_p,
      wv_t, bv, wh_p, bh, ws_row,
      wih_e, wih_c, whh_p, bgate)

    # ---- Kernel 2: parallel vocab projection, tiled over lane-dense V blocks.
    M = T * Bp                                    # multiple of 8 (sublane-dense)
    h2d = hseq.reshape(M, Hp)                     # contiguous reshape, no copy
    TV = 128
    for cand in (1024, 512, 256, 128):            # biggest lane-dense tile
        if Vp % cand == 0:
            TV = cand
            break
    logits_p = pl.pallas_call(
        vocab_proj_kernel,
        out_shape=jax.ShapeDtypeStruct((M, Vp), jnp.float32),
        grid=(Vp // TV,),
        in_specs=[
            pl.BlockSpec((M, Hp), lambda j: (0, 0)),
            pl.BlockSpec((Hp, TV), lambda j: (0, j)),
            pl.BlockSpec((1, TV), lambda j: (0, j)),
        ],
        out_specs=pl.BlockSpec((M, TV), lambda j: (0, j)),
        compiler_params=pltpu.CompilerParams(
            dimension_semantics=("parallel",)),
    )(h2d, wout_p, bout_p)

    logits = logits_p.reshape(T, Bp, Vp)[:, :B, :V]
    return jnp.transpose(logits, (1, 0, 2))        # (B, T, V)


def init_params(key, vocab_size, embed_dim, hid_dim, feat_dim, attn_dim):
    ks = jax.random.split(key, 16)
    s = 0.1
    return {
        'emb':  s * jax.random.normal(ks[0], (vocab_size, embed_dim), jnp.float32),
        'wv':   s * jax.random.normal(ks[1], (attn_dim, feat_dim), jnp.float32),
        'bv':   s * jax.random.normal(ks[2], (attn_dim,), jnp.float32),
        'wh':   s * jax.random.normal(ks[3], (attn_dim, hid_dim), jnp.float32),
        'bh':   s * jax.random.normal(ks[4], (attn_dim,), jnp.float32),
        'ws':   s * jax.random.normal(ks[5], (1, attn_dim), jnp.float32),
        'bs':   s * jax.random.normal(ks[6], (1,), jnp.float32),
        'wih':  s * jax.random.normal(ks[7], (4 * hid_dim, embed_dim + feat_dim), jnp.float32),
        'whh':  s * jax.random.normal(ks[8], (4 * hid_dim, hid_dim), jnp.float32),
        'bih':  s * jax.random.normal(ks[9], (4 * hid_dim,), jnp.float32),
        'bhh':  s * jax.random.normal(ks[10], (4 * hid_dim,), jnp.float32),
        'wout': s * jax.random.normal(ks[11], (vocab_size, hid_dim), jnp.float32),
        'bout': s * jax.random.normal(ks[12], (vocab_size,), jnp.float32),
    }


if __name__ == "__main__":
    vocab_size, embed_dim, hid_dim, feat_dim, attn_dim = 64, 16, 32, 16, 16
    B, N, cap_len = 2, 8, 8      # T = cap_len - 1 = 7

    key = jax.random.PRNGKey(0)
    kp, kf, kh, kc = jax.random.split(key, 4)

    params = init_params(kp, vocab_size, embed_dim, hid_dim, feat_dim, attn_dim)
    feats = jax.random.normal(kf, (B, N, feat_dim), jnp.float32)
    init_hidden = jax.random.normal(kh, (B, hid_dim), jnp.float32)
    captions = jax.random.randint(kc, (B, cap_len), 0, vocab_size, jnp.int32)

    out = decoder_forward(feats, init_hidden, captions, params)
    jax.block_until_ready(out)
    assert out.shape == (B, cap_len - 1, vocab_size)
    print("KERNEL_OK")
</pallas_src>

<mosaic_0001>
module attributes {stable_mosaic.version = 11 : i64} {
  func.func @decoder_rnn_kernel(%arg0: i32, %arg1: memref<1xf32, #tpu.memory_space<smem>>, %arg2: memref<7x8x16xf32, #tpu.memory_space<vmem>>, %arg3: memref<8x8x16xf32, #tpu.memory_space<vmem>>, %arg4: memref<8x128xf32, #tpu.memory_space<vmem>>, %arg5: memref<16x128xf32, #tpu.memory_space<vmem>>, %arg6: memref<1x128xf32, #tpu.memory_space<vmem>>, %arg7: memref<128x128xf32, #tpu.memory_space<vmem>>, %arg8: memref<1x128xf32, #tpu.memory_space<vmem>>, %arg9: memref<1x128xf32, #tpu.memory_space<vmem>>, %arg10: memref<16x512xf32, #tpu.memory_space<vmem>>, %arg11: memref<16x512xf32, #tpu.memory_space<vmem>>, %arg12: memref<128x512xf32, #tpu.memory_space<vmem>>, %arg13: memref<1x512xf32, #tpu.memory_space<vmem>>, %arg14: memref<7x8x128xf32, #tpu.memory_space<vmem>>) attributes {dimension_semantics = [#tpu.dimension_semantics<arbitrary>], iteration_bounds = array<i64: 1>, scalar_prefetch = 0 : i64, scratch_operands = 0 : i64, tpu.core_type = #tpu.core_type<tc>, window_params = [{transform_indices = @transform_0, window_bounds = array<i64: 1>}, {pipeline_mode = #tpu.pipeline_mode<synchronous>, transform_indices = @transform_1, window_bounds = array<i64: 7, 8, 16>}, {pipeline_mode = #tpu.pipeline_mode<synchronous>, transform_indices = @transform_2, window_bounds = array<i64: 8, 8, 16>}, {pipeline_mode = #tpu.pipeline_mode<synchronous>, transform_indices = @transform_3, window_bounds = array<i64: 8, 128>}, {pipeline_mode = #tpu.pipeline_mode<synchronous>, transform_indices = @transform_4, window_bounds = array<i64: 16, 128>}, {pipeline_mode = #tpu.pipeline_mode<synchronous>, transform_indices = @transform_5, window_bounds = array<i64: 1, 128>}, {pipeline_mode = #tpu.pipeline_mode<synchronous>, transform_indices = @transform_6, window_bounds = array<i64: 128, 128>}, {pipeline_mode = #tpu.pipeline_mode<synchronous>, transform_indices = @transform_7, window_bounds = array<i64: 1, 128>}, {pipeline_mode = #tpu.pipeline_mode<synchronous>, transform_indices = @transform_8, window_bounds = array<i64: 1, 128>}, {pipeline_mode = #tpu.pipeline_mode<synchronous>, transform_indices = @transform_9, window_bounds = array<i64: 16, 512>}, {pipeline_mode = #tpu.pipeline_mode<synchronous>, transform_indices = @transform_10, window_bounds = array<i64: 16, 512>}, {pipeline_mode = #tpu.pipeline_mode<synchronous>, transform_indices = @transform_11, window_bounds = array<i64: 128, 512>}, {pipeline_mode = #tpu.pipeline_mode<synchronous>, transform_indices = @transform_12, window_bounds = array<i64: 1, 512>}, {pipeline_mode = #tpu.pipeline_mode<synchronous>, transform_indices = @transform_13, window_bounds = array<i64: 7, 8, 128>}]} {
    %c0 = arith.constant 0 : index
    %c0_0 = arith.constant 0 : index
    %c0_1 = arith.constant 0 : index
    %0 = vector.load %arg3[%c0, %c0_0, %c0_1] : memref<8x8x16xf32, #tpu.memory_space<vmem>>, vector<8x8x16xf32>
    %c0_2 = arith.constant 0 : index
    %c0_3 = arith.constant 0 : index
    %1 = vector.load %arg5[%c0_2, %c0_3] : memref<16x128xf32, #tpu.memory_space<vmem>>, vector<16x128xf32>
    "tpu.trace_start"() <{level = 10 : i32, message = "bnd,da->bna"}> : () -> ()
    %cst = arith.constant dense<0.000000e+00> : vector<8x8x128xf32>
    %2 = tpu.matmul %0, %1, %cst {dimension_numbers = #tpu.dot_dimension_numbers<[2], [0], [0, 1], [1], [0, 0, 0, 1, 1, 1], [], []>} : vector<8x8x16xf32>, vector<16x128xf32>, vector<8x8x128xf32> -> vector<8x8x128xf32>
    "tpu.trace_stop"() : () -> ()
    %c0_4 = arith.constant 0 : index
    %c0_5 = arith.constant 0 : index
    %3 = vector.load %arg6[%c0_4, %c0_5] : memref<1x128xf32, #tpu.memory_space<vmem>>, vector<1x128xf32>
    %4 = vector.shape_cast %3 : vector<1x128xf32> to vector<1x1x128xf32>
    %5 = vector.broadcast %4 : vector<1x1x128xf32> to vector<8x8x128xf32>
    %6 = arith.addf %2, %5 : vector<8x8x128xf32>
    %c0_6 = arith.constant 0 : index
    %c0_7 = arith.constant 0 : index
    %7 = vector.load %arg7[%c0_6, %c0_7] : memref<128x128xf32, #tpu.memory_space<vmem>>, vector<128x128xf32>
    %c0_8 = arith.constant 0 : index
    %c0_9 = arith.constant 0 : index
    %8 = vector.load %arg8[%c0_8, %c0_9] : memref<1x128xf32, #tpu.memory_space<vmem>>, vector<1x128xf32>
    %c0_10 = arith.constant 0 : index
    %c0_11 = arith.constant 0 : index
    %9 = vector.load %arg9[%c0_10, %c0_11] : memref<1x128xf32, #tpu.memory_space<vmem>>, vector<1x128xf32>
    %c0_12 = arith.constant 0 : index
    %10 = memref.load %arg1[%c0_12] : memref<1xf32, #tpu.memory_space<smem>>
    %c0_13 = arith.constant 0 : index
    %c0_14 = arith.constant 0 : index
    %11 = vector.load %arg10[%c0_13, %c0_14] : memref<16x512xf32, #tpu.memory_space<vmem>>, vector<16x512xf32>
    %c0_15 = arith.constant 0 : index
    %c0_16 = arith.constant 0 : index
    %12 = vector.load %arg11[%c0_15, %c0_16] : memref<16x512xf32, #tpu.memory_space<vmem>>, vector<16x512xf32>
    %c0_17 = arith.constant 0 : index
    %c0_18 = arith.constant 0 : index
    %13 = vector.load %arg12[%c0_17, %c0_18] : memref<128x512xf32, #tpu.memory_space<vmem>>, vector<128x512xf32>
    %c0_19 = arith.constant 0 : index
    %c0_20 = arith.constant 0 : index
    %14 = vector.load %arg13[%c0_19, %c0_20] : memref<1x512xf32, #tpu.memory_space<vmem>>, vector<1x512xf32>
    %c0_21 = arith.constant 0 : index
    %c0_22 = arith.constant 0 : index
    %15 = vector.load %arg4[%c0_21, %c0_22] : memref<8x128xf32, #tpu.memory_space<vmem>>, vector<8x128xf32>
    %cst_23 = arith.constant 0.000000e+00 : f32
    %16 = vector.broadcast %cst_23 : f32 to vector<8x128xf32>
    %c0_i32 = arith.constant 0 : i32
    %cst_24 = arith.constant dense<0.000000e+00> : vector<8x128xf32>
    %17 = tpu.matmul %15, %7, %cst_24 {dimension_numbers = #tpu.dot_dimension_numbers<[1], [0], [0], [1], [0, 0, 1, 1], [], []>} : vector<8x128xf32>, vector<128x128xf32>, vector<8x128xf32> -> vector<8x128xf32>
    %18 = vector.broadcast %8 : vector<1x128xf32> to vector<8x128xf32>
    %19 = arith.addf %17, %18 : vector<8x128xf32>
    %20 = vector.shape_cast %19 : vector<8x128xf32> to vector<8x1x128xf32>
    %21 = vector.broadcast %20 : vector<8x1x128xf32> to vector<8x8x128xf32>
    %22 = arith.addf %6, %21 : vector<8x8x128xf32>
    %23 = math.tanh %22 : vector<8x8x128xf32>
    %24 = vector.shape_cast %9 : vector<1x128xf32> to vector<1x1x128xf32>
    %25 = vector.broadcast %24 : vector<1x1x128xf32> to vector<8x8x128xf32>
    %26 = arith.mulf %23, %25 : vector<8x8x128xf32>
    %cst_25 = arith.constant dense<0.000000e+00> : vector<8x8xf32>
    %27 = vector.multi_reduction <add>, %26, %cst_25 [2] : vector<8x8x128xf32> to vector<8x8xf32>
    %28 = vector.broadcast %10 : f32 to vector<8x8xf32>
    %29 = arith.addf %27, %28 : vector<8x8xf32>
    %cst_26 = arith.constant dense<0xFF800000> : vector<8xf32>
    %30 = vector.multi_reduction <maximumf>, %29, %cst_26 [1] : vector<8x8xf32> to vector<8xf32>
    %31 = vector.shape_cast %30 : vector<8xf32> to vector<8x1xf32>
    %32 = vector.broadcast %31 : vector<8x1xf32> to vector<8x8xf32>
    %33 = arith.subf %29, %32 : vector<8x8xf32>
    %34 = math.exp %33 : vector<8x8xf32>
    %cst_27 = arith.constant dense<0.000000e+00> : vector<8xf32>
    %35 = vector.multi_reduction <add>, %34, %cst_27 [1] : vector<8x8xf32> to vector<8xf32>
    %36 = vector.shape_cast %35 : vector<8xf32> to vector<8x1xf32>
    %37 = tpu.reciprocal %36 {approx = true} : vector<8x1xf32> -> vector<8x1xf32>
    %38 = vector.broadcast %37 : vector<8x1xf32> to vector<8x8xf32>
    %39 = arith.mulf %34, %38 : vector<8x8xf32>
    %40 = vector.shape_cast %39 : vector<8x8xf32> to vector<8x8x1xf32>
    %41 = vector.broadcast %40 : vector<8x8x1xf32> to vector<8x8x16xf32>
    %42 = arith.mulf %41, %0 : vector<8x8x16xf32>
    %cst_28 = arith.constant dense<0.000000e+00> : vector<8x16xf32>
    %43 = vector.multi_reduction <add>, %42, %cst_28 [1] : vector<8x8x16xf32> to vector<8x16xf32>
    %44 = arith.index_cast %c0_i32 : i32 to index
    %c0_29 = arith.constant 0 : index
    %c0_30 = arith.constant 0 : index
    %45 = vector.load %arg2[%44, %c0_29, %c0_30] : memref<7x8x16xf32, #tpu.memory_space<vmem>>, vector<1x8x16xf32>
    %46 = vector.shape_cast %45 : vector<1x8x16xf32> to vector<8x16xf32>
    %cst_31 = arith.constant dense<0.000000e+00> : vector<8x512xf32>
    %47 = tpu.matmul %46, %11, %cst_31 {dimension_numbers = #tpu.dot_dimension_numbers<[1], [0], [0], [1], [0, 0, 1, 1], [], []>} : vector<8x16xf32>, vector<16x512xf32>, vector<8x512xf32> -> vector<8x512xf32>
    %cst_32 = arith.constant dense<0.000000e+00> : vector<8x512xf32>
    %48 = tpu.matmul %43, %12, %cst_32 {dimension_numbers = #tpu.dot_dimension_numbers<[1], [0], [0], [1], [0, 0, 1, 1], [], []>} : vector<8x16xf32>, vector<16x512xf32>, vector<8x512xf32> -> vector<8x512xf32>
    %49 = arith.addf %47, %48 : vector<8x512xf32>
    %cst_33 = arith.constant dense<0.000000e+00> : vector<8x512xf32>
    %50 = tpu.matmul %15, %13, %cst_33 {dimension_numbers = #tpu.dot_dimension_numbers<[1], [0], [0], [1], [0, 0, 1, 1], [], []>} : vector<8x128xf32>, vector<128x512xf32>, vector<8x512xf32> -> vector<8x512xf32>
    %51 = arith.addf %49, %50 : vector<8x512xf32>
    %52 = vector.broadcast %14 : vector<1x512xf32> to vector<8x512xf32>
    %53 = arith.addf %51, %52 : vector<8x512xf32>
    %54 = vector.extract_strided_slice %53 {offsets = [0, 0], sizes = [8, 128], strides = [1, 1]} : vector<8x512xf32> to vector<8x128xf32>
    %55 = arith.negf %54 : vector<8x128xf32>
    %56 = math.exp %55 : vector<8x128xf32>
    %cst_34 = arith.constant 1.000000e+00 : f32
    %57 = vector.broadcast %cst_34 : f32 to vector<8x128xf32>
    %58 = arith.addf %57, %56 : vector<8x128xf32>
    %59 = arith.divf %57, %58 : vector<8x128xf32>
    %60 = vector.extract_strided_slice %53 {offsets = [0, 128], sizes = [8, 128], strides = [1, 1]} : vector<8x512xf32> to vector<8x128xf32>
    %61 = arith.negf %60 : vector<8x128xf32>
    %62 = math.exp %61 : vector<8x128xf32>
    %cst_35 = arith.constant 1.000000e+00 : f32
    %63 = vector.broadcast %cst_35 : f32 to vector<8x128xf32>
    %64 = arith.addf %63, %62 : vector<8x128xf32>
    %65 = arith.divf %63, %64 : vector<8x128xf32>
    %66 = vector.extract_strided_slice %53 {offsets = [0, 256], sizes = [8, 128], strides = [1, 1]} : vector<8x512xf32> to vector<8x128xf32>
    %67 = math.tanh %66 : vector<8x128xf32>
    %68 = vector.extract_strided_slice %53 {offsets = [0, 384], sizes = [8, 128], strides = [1, 1]} : vector<8x512xf32> to vector<8x128xf32>
    %69 = arith.negf %68 : vector<8x128xf32>
    %70 = math.exp %69 : vector<8x128xf32>
    %cst_36 = arith.constant 1.000000e+00 : f32
    %71 = vector.broadcast %cst_36 : f32 to vector<8x128xf32>
    %72 = arith.addf %71, %70 : vector<8x128xf32>
    %73 = arith.divf %71, %72 : vector<8x128xf32>
    %74 = arith.mulf %65, %16 : vector<8x128xf32>
    %75 = arith.mulf %59, %67 : vector<8x128xf32>
    %76 = arith.addf %74, %75 : vector<8x128xf32>
    %77 = math.tanh %76 : vector<8x128xf32>
    %78 = arith.mulf %73, %77 : vector<8x128xf32>
    %79 = arith.index_cast %c0_i32 : i32 to index
    %c0_37 = arith.constant 0 : index
    %c0_38 = arith.constant 0 : index
    %80 = vector.load %arg14[%79, %c0_37, %c0_38] : memref<7x8x128xf32, #tpu.memory_space<vmem>>, vector<1x8x128xf32>
    %81 = vector.shape_cast %80 : vector<1x8x128xf32> to vector<8x128xf32>
    %82 = vector.shape_cast %78 : vector<8x128xf32> to vector<1x8x128xf32>
    tpu.vector_store %arg14[%79, %c0_37, %c0_38], %82 {strides = array<i32>} : memref<7x8x128xf32, #tpu.memory_space<vmem>>, vector<1x8x128xf32>,
    %c1_i32 = arith.constant 1 : i32
    %cst_39 = arith.constant dense<0.000000e+00> : vector<8x128xf32>
    %83 = tpu.matmul %78, %7, %cst_39 {dimension_numbers = #tpu.dot_dimension_numbers<[1], [0], [0], [1], [0, 0, 1, 1], [], []>} : vector<8x128xf32>, vector<128x128xf32>, vector<8x128xf32> -> vector<8x128xf32>
    %84 = vector.broadcast %8 : vector<1x128xf32> to vector<8x128xf32>
    %85 = arith.addf %83, %84 : vector<8x128xf32>
    %86 = vector.shape_cast %85 : vector<8x128xf32> to vector<8x1x128xf32>
    %87 = vector.broadcast %86 : vector<8x1x128xf32> to vector<8x8x128xf32>
    %88 = arith.addf %6, %87 : vector<8x8x128xf32>
    %89 = math.tanh %88 : vector<8x8x128xf32>
    %90 = vector.shape_cast %9 : vector<1x128xf32> to vector<1x1x128xf32>
    %91 = vector.broadcast %90 : vector<1x1x128xf32> to vector<8x8x128xf32>
    %92 = arith.mulf %89, %91 : vector<8x8x128xf32>
    %cst_40 = arith.constant dense<0.000000e+00> : vector<8x8xf32>
    %93 = vector.multi_reduction <add>, %92, %cst_40 [2] : vector<8x8x128xf32> to vector<8x8xf32>
    %94 = vector.broadcast %10 : f32 to vector<8x8xf32>
    %95 = arith.addf %93, %94 : vector<8x8xf32>
    %cst_41 = arith.constant dense<0xFF800000> : vector<8xf32>
    %96 = vector.multi_reduction <maximumf>, %95, %cst_41 [1] : vector<8x8xf32> to vector<8xf32>
    %97 = vector.shape_cast %96 : vector<8xf32> to vector<8x1xf32>
    %98 = vector.broadcast %97 : vector<8x1xf32> to vector<8x8xf32>
    %99 = arith.subf %95, %98 : vector<8x8xf32>
    %100 = math.exp %99 : vector<8x8xf32>
    %cst_42 = arith.constant dense<0.000000e+00> : vector<8xf32>
    %101 = vector.multi_reduction <add>, %100, %cst_42 [1] : vector<8x8xf32> to vector<8xf32>
    %102 = vector.shape_cast %101 : vector<8xf32> to vector<8x1xf32>
    %103 = tpu.reciprocal %102 {approx = true} : vector<8x1xf32> -> vector<8x1xf32>
    %104 = vector.broadcast %103 : vector<8x1xf32> to vector<8x8xf32>
    %105 = arith.mulf %100, %104 : vector<8x8xf32>
    %106 = vector.shape_cast %105 : vector<8x8xf32> to vector<8x8x1xf32>
    %107 = vector.broadcast %106 : vector<8x8x1xf32> to vector<8x8x16xf32>
    %108 = arith.mulf %107, %0 : vector<8x8x16xf32>
    %cst_43 = arith.constant dense<0.000000e+00> : vector<8x16xf32>
    %109 = vector.multi_reduction <add>, %108, %cst_43 [1] : vector<8x8x16xf32> to vector<8x16xf32>
    %110 = arith.index_cast %c1_i32 : i32 to index
    %c0_44 = arith.constant 0 : index
    %c0_45 = arith.constant 0 : index
    %111 = vector.load %arg2[%110, %c0_44, %c0_45] : memref<7x8x16xf32, #tpu.memory_space<vmem>>, vector<1x8x16xf32>
    %112 = vector.shape_cast %111 : vector<1x8x16xf32> to vector<8x16xf32>
    %cst_46 = arith.constant dense<0.000000e+00> : vector<8x512xf32>
    %113 = tpu.matmul %112, %11, %cst_46 {dimension_numbers = #tpu.dot_dimension_numbers<[1], [0], [0], [1], [0, 0, 1, 1], [], []>} : vector<8x16xf32>, vector<16x512xf32>, vector<8x512xf32> -> vector<8x512xf32>
    %cst_47 = arith.constant dense<0.000000e+00> : vector<8x512xf32>
    %114 = tpu.matmul %109, %12, %cst_47 {dimension_numbers = #tpu.dot_dimension_numbers<[1], [0], [0], [1], [0, 0, 1, 1], [], []>} : vector<8x16xf32>, vector<16x512xf32>, vector<8x512xf32> -> vector<8x512xf32>
    %115 = arith.addf %113, %114 : vector<8x512xf32>
    %cst_48 = arith.constant dense<0.000000e+00> : vector<8x512xf32>
    %116 = tpu.matmul %78, %13, %cst_48 {dimension_numbers = #tpu.dot_dimension_numbers<[1], [0], [0], [1], [0, 0, 1, 1], [], []>} : vector<8x128xf32>, vector<128x512xf32>, vector<8x512xf32> -> vector<8x512xf32>
    %117 = arith.addf %115, %116 : vector<8x512xf32>
    %118 = vector.broadcast %14 : vector<1x512xf32> to vector<8x512xf32>
    %119 = arith.addf %117, %118 : vector<8x512xf32>
    %120 = vector.extract_strided_slice %119 {offsets = [0, 0], sizes = [8, 128], strides = [1, 1]} : vector<8x512xf32> to vector<8x128xf32>
    %121 = arith.negf %120 : vector<8x128xf32>
    %122 = math.exp %121 : vector<8x128xf32>
    %cst_49 = arith.constant 1.000000e+00 : f32
    %123 = vector.broadcast %cst_49 : f32 to vector<8x128xf32>
    %124 = arith.addf %123, %122 : vector<8x128xf32>
    %125 = arith.divf %123, %124 : vector<8x128xf32>
    %126 = vector.extract_strided_slice %119 {offsets = [0, 128], sizes = [8, 128], strides = [1, 1]} : vector<8x512xf32> to vector<8x128xf32>
    %127 = arith.negf %126 : vector<8x128xf32>
    %128 = math.exp %127 : vector<8x128xf32>
    %cst_50 = arith.constant 1.000000e+00 : f32
    %129 = vector.broadcast %cst_50 : f32 to vector<8x128xf32>
    %130 = arith.addf %129, %128 : vector<8x128xf32>
    %131 = arith.divf %129, %130 : vector<8x128xf32>
    %132 = vector.extract_strided_slice %119 {offsets = [0, 256], sizes = [8, 128], strides = [1, 1]} : vector<8x512xf32> to vector<8x128xf32>
    %133 = math.tanh %132 : vector<8x128xf32>
    %134 = vector.extract_strided_slice %119 {offsets = [0, 384], sizes = [8, 128], strides = [1, 1]} : vector<8x512xf32> to vector<8x128xf32>
    %135 = arith.negf %134 : vector<8x128xf32>
    %136 = math.exp %135 : vector<8x128xf32>
    %cst_51 = arith.constant 1.000000e+00 : f32
    %137 = vector.broadcast %cst_51 : f32 to vector<8x128xf32>
    %138 = arith.addf %137, %136 : vector<8x128xf32>
    %139 = arith.divf %137, %138 : vector<8x128xf32>
    %140 = arith.mulf %131, %76 : vector<8x128xf32>
    %141 = arith.mulf %125, %133 : vector<8x128xf32>
    %142 = arith.addf %140, %141 : vector<8x128xf32>
    %143 = math.tanh %142 : vector<8x128xf32>
    %144 = arith.mulf %139, %143 : vector<8x128xf32>
    %145 = arith.index_cast %c1_i32 : i32 to index
    %c0_52 = arith.constant 0 : index
    %c0_53 = arith.constant 0 : index
    %146 = vector.load %arg14[%145, %c0_52, %c0_53] : memref<7x8x128xf32, #tpu.memory_space<vmem>>, vector<1x8x128xf32>
    %147 = vector.shape_cast %146 : vector<1x8x128xf32> to vector<8x128xf32>
    %148 = vector.shape_cast %144 : vector<8x128xf32> to vector<1x8x128xf32>
    tpu.vector_store %arg14[%145, %c0_52, %c0_53], %148 {strides = array<i32>} : memref<7x8x128xf32, #tpu.memory_space<vmem>>, vector<1x8x128xf32>,
    %c2_i32 = arith.constant 2 : i32
    %cst_54 = arith.constant dense<0.000000e+00> : vector<8x128xf32>
    %149 = tpu.matmul %144, %7, %cst_54 {dimension_numbers = #tpu.dot_dimension_numbers<[1], [0], [0], [1], [0, 0, 1, 1], [], []>} : vector<8x128xf32>, vector<128x128xf32>, vector<8x128xf32> -> vector<8x128xf32>
    %150 = vector.broadcast %8 : vector<1x128xf32> to vector<8x128xf32>
    %151 = arith.addf %149, %150 : vector<8x128xf32>
    %152 = vector.shape_cast %151 : vector<8x128xf32> to vector<8x1x128xf32>
    %153 = vector.broadcast %152 : vector<8x1x128xf32> to vector<8x8x128xf32>
    %154 = arith.addf %6, %153 : vector<8x8x128xf32>
    %155 = math.tanh %154 : vector<8x8x128xf32>
    %156 = vector.shape_cast %9 : vector<1x128xf32> to vector<1x1x128xf32>
    %157 = vector.broadcast %156 : vector<1x1x128xf32> to vector<8x8x128xf32>
    %158 = arith.mulf %155, %157 : vector<8x8x128xf32>
    %cst_55 = arith.constant dense<0.000000e+00> : vector<8x8xf32>
    %159 = vector.multi_reduction <add>, %158, %cst_55 [2] : vector<8x8x128xf32> to vector<8x8xf32>
    %160 = vector.broadcast %10 : f32 to vector<8x8xf32>
    %161 = arith.addf %159, %160 : vector<8x8xf32>
    %cst_56 = arith.constant dense<0xFF800000> : vector<8xf32>
    %162 = vector.multi_reduction <maximumf>, %161, %cst_56 [1] : vector<8x8xf32> to vector<8xf32>
    %163 = vector.shape_cast %162 : vector<8xf32> to vector<8x1xf32>
    %164 = vector.broadcast %163 : vector<8x1xf32> to vector<8x8xf32>
    %165 = arith.subf %161, %164 : vector<8x8xf32>
    %166 = math.exp %165 : vector<8x8xf32>
    %cst_57 = arith.constant dense<0.000000e+00> : vector<8xf32>
    %167 = vector.multi_reduction <add>, %166, %cst_57 [1] : vector<8x8xf32> to vector<8xf32>
    %168 = vector.shape_cast %167 : vector<8xf32> to vector<8x1xf32>
    %169 = tpu.reciprocal %168 {approx = true} : vector<8x1xf32> -> vector<8x1xf32>
    %170 = vector.broadcast %169 : vector<8x1xf32> to vector<8x8xf32>
    %171 = arith.mulf %166, %170 : vector<8x8xf32>
    %172 = vector.shape_cast %171 : vector<8x8xf32> to vector<8x8x1xf32>
    %173 = vector.broadcast %172 : vector<8x8x1xf32> to vector<8x8x16xf32>
    %174 = arith.mulf %173, %0 : vector<8x8x16xf32>
    %cst_58 = arith.constant dense<0.000000e+00> : vector<8x16xf32>
    %175 = vector.multi_reduction <add>, %174, %cst_58 [1] : vector<8x8x16xf32> to vector<8x16xf32>
    %176 = arith.index_cast %c2_i32 : i32 to index
    %c0_59 = arith.constant 0 : index
    %c0_60 = arith.constant 0 : index
    %177 = vector.load %arg2[%176, %c0_59, %c0_60] : memref<7x8x16xf32, #tpu.memory_space<vmem>>, vector<1x8x16xf32>
    %178 = vector.shape_cast %177 : vector<1x8x16xf32> to vector<8x16xf32>
    %cst_61 = arith.constant dense<0.000000e+00> : vector<8x512xf32>
    %179 = tpu.matmul %178, %11, %cst_61 {dimension_numbers = #tpu.dot_dimension_numbers<[1], [0], [0], [1], [0, 0, 1, 1], [], []>} : vector<8x16xf32>, vector<16x512xf32>, vector<8x512xf32> -> vector<8x512xf32>
    %cst_62 = arith.constant dense<0.000000e+00> : vector<8x512xf32>
    %180 = tpu.matmul %175, %12, %cst_62 {dimension_numbers = #tpu.dot_dimension_numbers<[1], [0], [0], [1], [0, 0, 1, 1], [], []>} : vector<8x16xf32>, vector<16x512xf32>, vector<8x512xf32> -> vector<8x512xf32>
    %181 = arith.addf %179, %180 : vector<8x512xf32>
    %cst_63 = arith.constant dense<0.000000e+00> : vector<8x512xf32>
    %182 = tpu.matmul %144, %13, %cst_63 {dimension_numbers = #tpu.dot_dimension_numbers<[1], [0], [0], [1], [0, 0, 1, 1], [], []>} : vector<8x128xf32>, vector<128x512xf32>, vector<8x512xf32> -> vector<8x512xf32>
    %183 = arith.addf %181, %182 : vector<8x512xf32>
    %184 = vector.broadcast %14 : vector<1x512xf32> to vector<8x512xf32>
    %185 = arith.addf %183, %184 : vector<8x512xf32>
    %186 = vector.extract_strided_slice %185 {offsets = [0, 0], sizes = [8, 128], strides = [1, 1]} : vector<8x512xf32> to vector<8x128xf32>
    %187 = arith.negf %186 : vector<8x128xf32>
    %188 = math.exp %187 : vector<8x128xf32>
    %cst_64 = arith.constant 1.000000e+00 : f32
    %189 = vector.broadcast %cst_64 : f32 to vector<8x128xf32>
    %190 = arith.addf %189, %188 : vector<8x128xf32>
    %191 = arith.divf %189, %190 : vector<8x128xf32>
    %192 = vector.extract_strided_slice %185 {offsets = [0, 128], sizes = [8, 128], strides = [1, 1]} : vector<8x512xf32> to vector<8x128xf32>
    %193 = arith.negf %192 : vector<8x128xf32>
    %194 = math.exp %193 : vector<8x128xf32>
    %cst_65 = arith.constant 1.000000e+00 : f32
    %195 = vector.broadcast %cst_65 : f32 to vector<8x128xf32>
    %196 = arith.addf %195, %194 : vector<8x128xf32>
    %197 = arith.divf %195, %196 : vector<8x128xf32>
    %198 = vector.extract_strided_slice %185 {offsets = [0, 256], sizes = [8, 128], strides = [1, 1]} : vector<8x512xf32> to vector<8x128xf32>
    %199 = math.tanh %198 : vector<8x128xf32>
    %200 = vector.extract_strided_slice %185 {offsets = [0, 384], sizes = [8, 128], strides = [1, 1]} : vector<8x512xf32> to vector<8x128xf32>
    %201 = arith.negf %200 : vector<8x128xf32>
    %202 = math.exp %201 : vector<8x128xf32>
    %cst_66 = arith.constant 1.000000e+00 : f32
    %203 = vector.broadcast %cst_66 : f32 to vector<8x128xf32>
    %204 = arith.addf %203, %202 : vector<8x128xf32>
    %205 = arith.divf %203, %204 : vector<8x128xf32>
    %206 = arith.mulf %197, %142 : vector<8x128xf32>
    %207 = arith.mulf %191, %199 : vector<8x128xf32>
    %208 = arith.addf %206, %207 : vector<8x128xf32>
    %209 = math.tanh %208 : vector<8x128xf32>
    %210 = arith.mulf %205, %209 : vector<8x128xf32>
    %211 = arith.index_cast %c2_i32 : i32 to index
    %c0_67 = arith.constant 0 : index
    %c0_68 = arith.constant 0 : index
    %212 = vector.load %arg14[%211, %c0_67, %c0_68] : memref<7x8x128xf32, #tpu.memory_space<vmem>>, vector<1x8x128xf32>
    %213 = vector.shape_cast %212 : vector<1x8x128xf32> to vector<8x128xf32>
    %214 = vector.shape_cast %210 : vector<8x128xf32> to vector<1x8x128xf32>
    tpu.vector_store %arg14[%211, %c0_67, %c0_68], %214 {strides = array<i32>} : memref<7x8x128xf32, #tpu.memory_space<vmem>>, vector<1x8x128xf32>,
    %c3_i32 = arith.constant 3 : i32
    %cst_69 = arith.constant dense<0.000000e+00> : vector<8x128xf32>
    %215 = tpu.matmul %210, %7, %cst_69 {dimension_numbers = #tpu.dot_dimension_numbers<[1], [0], [0], [1], [0, 0, 1, 1], [], []>} : vector<8x128xf32>, vector<128x128xf32>, vector<8x128xf32> -> vector<8x128xf32>
    %216 = vector.broadcast %8 : vector<1x128xf32> to vector<8x128xf32>
    %217 = arith.addf %215, %216 : vector<8x128xf32>
    %218 = vector.shape_cast %217 : vector<8x128xf32> to vector<8x1x128xf32>
    %219 = vector.broadcast %218 : vector<8x1x128xf32> to vector<8x8x128xf32>
    %220 = arith.addf %6, %219 : vector<8x8x128xf32>
    %221 = math.tanh %220 : vector<8x8x128xf32>
    %222 = vector.shape_cast %9 : vector<1x128xf32> to vector<1x1x128xf32>
    %223 = vector.broadcast %222 : vector<1x1x128xf32> to vector<8x8x128xf32>
    %224 = arith.mulf %221, %223 : vector<8x8x128xf32>
    %cst_70 = arith.constant dense<0.000000e+00> : vector<8x8xf32>
    %225 = vector.multi_reduction <add>, %224, %cst_70 [2] : vector<8x8x128xf32> to vector<8x8xf32>
    %226 = vector.broadcast %10 : f32 to vector<8x8xf32>
    %227 = arith.addf %225, %226 : vector<8x8xf32>
    %cst_71 = arith.constant dense<0xFF800000> : vector<8xf32>
    %228 = vector.multi_reduction <maximumf>, %227, %cst_71 [1] : vector<8x8xf32> to vector<8xf32>
    %229 = vector.shape_cast %228 : vector<8xf32> to vector<8x1xf32>
    %230 = vector.broadcast %229 : vector<8x1xf32> to vector<8x8xf32>
    %231 = arith.subf %227, %230 : vector<8x8xf32>
    %232 = math.exp %231 : vector<8x8xf32>
    %cst_72 = arith.constant dense<0.000000e+00> : vector<8xf32>
    %233 = vector.multi_reduction <add>, %232, %cst_72 [1] : vector<8x8xf32> to vector<8xf32>
    %234 = vector.shape_cast %233 : vector<8xf32> to vector<8x1xf32>
    %235 = tpu.reciprocal %234 {approx = true} : vector<8x1xf32> -> vector<8x1xf32>
    %236 = vector.broadcast %235 : vector<8x1xf32> to vector<8x8xf32>
    %237 = arith.mulf %232, %236 : vector<8x8xf32>
    %238 = vector.shape_cast %237 : vector<8x8xf32> to vector<8x8x1xf32>
    %239 = vector.broadcast %238 : vector<8x8x1xf32> to vector<8x8x16xf32>
    %240 = arith.mulf %239, %0 : vector<8x8x16xf32>
    %cst_73 = arith.constant dense<0.000000e+00> : vector<8x16xf32>
    %241 = vector.multi_reduction <add>, %240, %cst_73 [1] : vector<8x8x16xf32> to vector<8x16xf32>
    %242 = arith.index_cast %c3_i32 : i32 to index
    %c0_74 = arith.constant 0 : index
    %c0_75 = arith.constant 0 : index
    %243 = vector.load %arg2[%242, %c0_74, %c0_75] : memref<7x8x16xf32, #tpu.memory_space<vmem>>, vector<1x8x16xf32>
    %244 = vector.shape_cast %243 : vector<1x8x16xf32> to vector<8x16xf32>
    %cst_76 = arith.constant dense<0.000000e+00> : vector<8x512xf32>
    %245 = tpu.matmul %244, %11, %cst_76 {dimension_numbers = #tpu.dot_dimension_numbers<[1], [0], [0], [1], [0, 0, 1, 1], [], []>} : vector<8x16xf32>, vector<16x512xf32>, vector<8x512xf32> -> vector<8x512xf32>
    %cst_77 = arith.constant dense<0.000000e+00> : vector<8x512xf32>
    %246 = tpu.matmul %241, %12, %cst_77 {dimension_numbers = #tpu.dot_dimension_numbers<[1], [0], [0], [1], [0, 0, 1, 1], [], []>} : vector<8x16xf32>, vector<16x512xf32>, vector<8x512xf32> -> vector<8x512xf32>
    %247 = arith.addf %245, %246 : vector<8x512xf32>
    %cst_78 = arith.constant dense<0.000000e+00> : vector<8x512xf32>
    %248 = tpu.matmul %210, %13, %cst_78 {dimension_numbers = #tpu.dot_dimension_numbers<[1], [0], [0], [1], [0, 0, 1, 1], [], []>} : vector<8x128xf32>, vector<128x512xf32>, vector<8x512xf32> -> vector<8x512xf32>
    %249 = arith.addf %247, %248 : vector<8x512xf32>
    %250 = vector.broadcast %14 : vector<1x512xf32> to vector<8x512xf32>
    %251 = arith.addf %249, %250 : vector<8x512xf32>
    %252 = vector.extract_strided_slice %251 {offsets = [0, 0], sizes = [8, 128], strides = [1, 1]} : vector<8x512xf32> to vector<8x128xf32>
    %253 = arith.negf %252 : vector<8x128xf32>
    %254 = math.exp %253 : vector<8x128xf32>
    %cst_79 = arith.constant 1.000000e+00 : f32
    %255 = vector.broadcast %cst_79 : f32 to vector<8x128xf32>
    %256 = arith.addf %255, %254 : vector<8x128xf32>
    %257 = arith.divf %255, %256 : vector<8x128xf32>
    %258 = vector.extract_strided_slice %251 {offsets = [0, 128], sizes = [8, 128], strides = [1, 1]} : vector<8x512xf32> to vector<8x128xf32>
    %259 = arith.negf %258 : vector<8x128xf32>
    %260 = math.exp %259 : vector<8x128xf32>
    %cst_80 = arith.constant 1.000000e+00 : f32
    %261 = vector.broadcast %cst_80 : f32 to vector<8x128xf32>
    %262 = arith.addf %261, %260 : vector<8x128xf32>
    %263 = arith.divf %261, %262 : vector<8x128xf32>
    %264 = vector.extract_strided_slice %251 {offsets = [0, 256], sizes = [8, 128], strides = [1, 1]} : vector<8x512xf32> to vector<8x128xf32>
    %265 = math.tanh %264 : vector<8x128xf32>
    %266 = vector.extract_strided_slice %251 {offsets = [0, 384], sizes = [8, 128], strides = [1, 1]} : vector<8x512xf32> to vector<8x128xf32>
    %267 = arith.negf %266 : vector<8x128xf32>
    %268 = math.exp %267 : vector<8x128xf32>
    %cst_81 = arith.constant 1.000000e+00 : f32
    %269 = vector.broadcast %cst_81 : f32 to vector<8x128xf32>
    %270 = arith.addf %269, %268 : vector<8x128xf32>
    %271 = arith.divf %269, %270 : vector<8x128xf32>
    %272 = arith.mulf %263, %208 : vector<8x128xf32>
    %273 = arith.mulf %257, %265 : vector<8x128xf32>
    %274 = arith.addf %272, %273 : vector<8x128xf32>
    %275 = math.tanh %274 : vector<8x128xf32>
    %276 = arith.mulf %271, %275 : vector<8x128xf32>
    %277 = arith.index_cast %c3_i32 : i32 to index
    %c0_82 = arith.constant 0 : index
    %c0_83 = arith.constant 0 : index
    %278 = vector.load %arg14[%277, %c0_82, %c0_83] : memref<7x8x128xf32, #tpu.memory_space<vmem>>, vector<1x8x128xf32>
    %279 = vector.shape_cast %278 : vector<1x8x128xf32> to vector<8x128xf32>
    %280 = vector.shape_cast %276 : vector<8x128xf32> to vector<1x8x128xf32>
    tpu.vector_store %arg14[%277, %c0_82, %c0_83], %280 {strides = array<i32>} : memref<7x8x128xf32, #tpu.memory_space<vmem>>, vector<1x8x128xf32>,
    %c4_i32 = arith.constant 4 : i32
    %cst_84 = arith.constant dense<0.000000e+00> : vector<8x128xf32>
    %281 = tpu.matmul %276, %7, %cst_84 {dimension_numbers = #tpu.dot_dimension_numbers<[1], [0], [0], [1], [0, 0, 1, 1], [], []>} : vector<8x128xf32>, vector<128x128xf32>, vector<8x128xf32> -> vector<8x128xf32>
    %282 = vector.broadcast %8 : vector<1x128xf32> to vector<8x128xf32>
    %283 = arith.addf %281, %282 : vector<8x128xf32>
    %284 = vector.shape_cast %283 : vector<8x128xf32> to vector<8x1x128xf32>
    %285 = vector.broadcast %284 : vector<8x1x128xf32> to vector<8x8x128xf32>
    %286 = arith.addf %6, %285 : vector<8x8x128xf32>
    %287 = math.tanh %286 : vector<8x8x128xf32>
    %288 = vector.shape_cast %9 : vector<1x128xf32> to vector<1x1x128xf32>
    %289 = vector.broadcast %288 : vector<1x1x128xf32> to vector<8x8x128xf32>
    %290 = arith.mulf %287, %289 : vector<8x8x128xf32>
    %cst_85 = arith.constant dense<0.000000e+00> : vector<8x8xf32>
    %291 = vector.multi_reduction <add>, %290, %cst_85 [2] : vector<8x8x128xf32> to vector<8x8xf32>
    %292 = vector.broadcast %10 : f32 to vector<8x8xf32>
    %293 = arith.addf %291, %292 : vector<8x8xf32>
    %cst_86 = arith.constant dense<0xFF800000> : vector<8xf32>
    %294 = vector.multi_reduction <maximumf>, %293, %cst_86 [1] : vector<8x8xf32> to vector<8xf32>
    %295 = vector.shape_cast %294 : vector<8xf32> to vector<8x1xf32>
    %296 = vector.broadcast %295 : vector<8x1xf32> to vector<8x8xf32>
    %297 = arith.subf %293, %296 : vector<8x8xf32>
    %298 = math.exp %297 : vector<8x8xf32>
    %cst_87 = arith.constant dense<0.000000e+00> : vector<8xf32>
    %299 = vector.multi_reduction <add>, %298, %cst_87 [1] : vector<8x8xf32> to vector<8xf32>
    %300 = vector.shape_cast %299 : vector<8xf32> to vector<8x1xf32>
    %301 = tpu.reciprocal %300 {approx = true} : vector<8x1xf32> -> vector<8x1xf32>
    %302 = vector.broadcast %301 : vector<8x1xf32> to vector<8x8xf32>
    %303 = arith.mulf %298, %302 : vector<8x8xf32>
    %304 = vector.shape_cast %303 : vector<8x8xf32> to vector<8x8x1xf32>
    %305 = vector.broadcast %304 : vector<8x8x1xf32> to vector<8x8x16xf32>
    %306 = arith.mulf %305, %0 : vector<8x8x16xf32>
    %cst_88 = arith.constant dense<0.000000e+00> : vector<8x16xf32>
    %307 = vector.multi_reduction <add>, %306, %cst_88 [1] : vector<8x8x16xf32> to vector<8x16xf32>
    %308 = arith.index_cast %c4_i32 : i32 to index
    %c0_89 = arith.constant 0 : index
    %c0_90 = arith.constant 0 : index
    %309 = vector.load %arg2[%308, %c0_89, %c0_90] : memref<7x8x16xf32, #tpu.memory_space<vmem>>, vector<1x8x16xf32>
    %310 = vector.shape_cast %309 : vector<1x8x16xf32> to vector<8x16xf32>
    %cst_91 = arith.constant dense<0.000000e+00> : vector<8x512xf32>
    %311 = tpu.matmul %310, %11, %cst_91 {dimension_numbers = #tpu.dot_dimension_numbers<[1], [0], [0], [1], [0, 0, 1, 1], [], []>} : vector<8x16xf32>, vector<16x512xf32>, vector<8x512xf32> -> vector<8x512xf32>
    %cst_92 = arith.constant dense<0.000000e+00> : vector<8x512xf32>
    %312 = tpu.matmul %307, %12, %cst_92 {dimension_numbers = #tpu.dot_dimension_numbers<[1], [0], [0], [1], [0, 0, 1, 1], [], []>} : vector<8x16xf32>, vector<16x512xf32>, vector<8x512xf32> -> vector<8x512xf32>
    %313 = arith.addf %311, %312 : vector<8x512xf32>
    %cst_93 = arith.constant dense<0.000000e+00> : vector<8x512xf32>
    %314 = tpu.matmul %276, %13, %cst_93 {dimension_numbers = #tpu.dot_dimension_numbers<[1], [0], [0], [1], [0, 0, 1, 1], [], []>} : vector<8x128xf32>, vector<128x512xf32>, vector<8x512xf32> -> vector<8x512xf32>
    %315 = arith.addf %313, %314 : vector<8x512xf32>
    %316 = vector.broadcast %14 : vector<1x512xf32> to vector<8x512xf32>
    %317 = arith.addf %315, %316 : vector<8x512xf32>
    %318 = vector.extract_strided_slice %317 {offsets = [0, 0], sizes = [8, 128], strides = [1, 1]} : vector<8x512xf32> to vector<8x128xf32>
    %319 = arith.negf %318 : vector<8x128xf32>
    %320 = math.exp %319 : vector<8x128xf32>
    %cst_94 = arith.constant 1.000000e+00 : f32
    %321 = vector.broadcast %cst_94 : f32 to vector<8x128xf32>
    %322 = arith.addf %321, %320 : vector<8x128xf32>
    %323 = arith.divf %321, %322 : vector<8x128xf32>
    %324 = vector.extract_strided_slice %317 {offsets = [0, 128], sizes = [8, 128], strides = [1, 1]} : vector<8x512xf32> to vector<8x128xf32>
    %325 = arith.negf %324 : vector<8x128xf32>
    %326 = math.exp %325 : vector<8x128xf32>
    %cst_95 = arith.constant 1.000000e+00 : f32
    %327 = vector.broadcast %cst_95 : f32 to vector<8x128xf32>
    %328 = arith.addf %327, %326 : vector<8x128xf32>
    %329 = arith.divf %327, %328 : vector<8x128xf32>
    %330 = vector.extract_strided_slice %317 {offsets = [0, 256], sizes = [8, 128], strides = [1, 1]} : vector<8x512xf32> to vector<8x128xf32>
    %331 = math.tanh %330 : vector<8x128xf32>
    %332 = vector.extract_strided_slice %317 {offsets = [0, 384], sizes = [8, 128], strides = [1, 1]} : vector<8x512xf32> to vector<8x128xf32>
    %333 = arith.negf %332 : vector<8x128xf32>
    %334 = math.exp %333 : vector<8x128xf32>
    %cst_96 = arith.constant 1.000000e+00 : f32
    %335 = vector.broadcast %cst_96 : f32 to vector<8x128xf32>
    %336 = arith.addf %335, %334 : vector<8x128xf32>
    %337 = arith.divf %335, %336 : vector<8x128xf32>
    %338 = arith.mulf %329, %274 : vector<8x128xf32>
    %339 = arith.mulf %323, %331 : vector<8x128xf32>
    %340 = arith.addf %338, %339 : vector<8x128xf32>
    %341 = math.tanh %340 : vector<8x128xf32>
    %342 = arith.mulf %337, %341 : vector<8x128xf32>
    %343 = arith.index_cast %c4_i32 : i32 to index
    %c0_97 = arith.constant 0 : index
    %c0_98 = arith.constant 0 : index
    %344 = vector.load %arg14[%343, %c0_97, %c0_98] : memref<7x8x128xf32, #tpu.memory_space<vmem>>, vector<1x8x128xf32>
    %345 = vector.shape_cast %344 : vector<1x8x128xf32> to vector<8x128xf32>
    %346 = vector.shape_cast %342 : vector<8x128xf32> to vector<1x8x128xf32>
    tpu.vector_store %arg14[%343, %c0_97, %c0_98], %346 {strides = array<i32>} : memref<7x8x128xf32, #tpu.memory_space<vmem>>, vector<1x8x128xf32>,
    %c5_i32 = arith.constant 5 : i32
    %cst_99 = arith.constant dense<0.000000e+00> : vector<8x128xf32>
    %347 = tpu.matmul %342, %7, %cst_99 {dimension_numbers = #tpu.dot_dimension_numbers<[1], [0], [0], [1], [0, 0, 1, 1], [], []>} : vector<8x128xf32>, vector<128x128xf32>, vector<8x128xf32> -> vector<8x128xf32>
    %348 = vector.broadcast %8 : vector<1x128xf32> to vector<8x128xf32>
    %349 = arith.addf %347, %348 : vector<8x128xf32>
    %350 = vector.shape_cast %349 : vector<8x128xf32> to vector<8x1x128xf32>
    %351 = vector.broadcast %350 : vector<8x1x128xf32> to vector<8x8x128xf32>
    %352 = arith.addf %6, %351 : vector<8x8x128xf32>
    %353 = math.tanh %352 : vector<8x8x128xf32>
    %354 = vector.shape_cast %9 : vector<1x128xf32> to vector<1x1x128xf32>
    %355 = vector.broadcast %354 : vector<1x1x128xf32> to vector<8x8x128xf32>
    %356 = arith.mulf %353, %355 : vector<8x8x128xf32>
    %cst_100 = arith.constant dense<0.000000e+00> : vector<8x8xf32>
    %357 = vector.multi_reduction <add>, %356, %cst_100 [2] : vector<8x8x128xf32> to vector<8x8xf32>
    %358 = vector.broadcast %10 : f32 to vector<8x8xf32>
    %359 = arith.addf %357, %358 : vector<8x8xf32>
    %cst_101 = arith.constant dense<0xFF800000> : vector<8xf32>
    %360 = vector.multi_reduction <maximumf>, %359, %cst_101 [1] : vector<8x8xf32> to vector<8xf32>
    %361 = vector.shape_cast %360 : vector<8xf32> to vector<8x1xf32>
    %362 = vector.broadcast %361 : vector<8x1xf32> to vector<8x8xf32>
    %363 = arith.subf %359, %362 : vector<8x8xf32>
    %364 = math.exp %363 : vector<8x8xf32>
    %cst_102 = arith.constant dense<0.000000e+00> : vector<8xf32>
    %365 = vector.multi_reduction <add>, %364, %cst_102 [1] : vector<8x8xf32> to vector<8xf32>
    %366 = vector.shape_cast %365 : vector<8xf32> to vector<8x1xf32>
    %367 = tpu.reciprocal %366 {approx = true} : vector<8x1xf32> -> vector<8x1xf32>
    %368 = vector.broadcast %367 : vector<8x1xf32> to vector<8x8xf32>
    %369 = arith.mulf %364, %368 : vector<8x8xf32>
    %370 = vector.shape_cast %369 : vector<8x8xf32> to vector<8x8x1xf32>
    %371 = vector.broadcast %370 : vector<8x8x1xf32> to vector<8x8x16xf32>
    %372 = arith.mulf %371, %0 : vector<8x8x16xf32>
    %cst_103 = arith.constant dense<0.000000e+00> : vector<8x16xf32>
    %373 = vector.multi_reduction <add>, %372, %cst_103 [1] : vector<8x8x16xf32> to vector<8x16xf32>
    %374 = arith.index_cast %c5_i32 : i32 to index
    %c0_104 = arith.constant 0 : index
    %c0_105 = arith.constant 0 : index
    %375 = vector.load %arg2[%374, %c0_104, %c0_105] : memref<7x8x16xf32, #tpu.memory_space<vmem>>, vector<1x8x16xf32>
    %376 = vector.shape_cast %375 : vector<1x8x16xf32> to vector<8x16xf32>
    %cst_106 = arith.constant dense<0.000000e+00> : vector<8x512xf32>
    %377 = tpu.matmul %376, %11, %cst_106 {dimension_numbers = #tpu.dot_dimension_numbers<[1], [0], [0], [1], [0, 0, 1, 1], [], []>} : vector<8x16xf32>, vector<16x512xf32>, vector<8x512xf32> -> vector<8x512xf32>
    %cst_107 = arith.constant dense<0.000000e+00> : vector<8x512xf32>
    %378 = tpu.matmul %373, %12, %cst_107 {dimension_numbers = #tpu.dot_dimension_numbers<[1], [0], [0], [1], [0, 0, 1, 1], [], []>} : vector<8x16xf32>, vector<16x512xf32>, vector<8x512xf32> -> vector<8x512xf32>
    %379 = arith.addf %377, %378 : vector<8x512xf32>
    %cst_108 = arith.constant dense<0.000000e+00> : vector<8x512xf32>
    %380 = tpu.matmul %342, %13, %cst_108 {dimension_numbers = #tpu.dot_dimension_numbers<[1], [0], [0], [1], [0, 0, 1, 1], [], []>} : vector<8x128xf32>, vector<128x512xf32>, vector<8x512xf32> -> vector<8x512xf32>
    %381 = arith.addf %379, %380 : vector<8x512xf32>
    %382 = vector.broadcast %14 : vector<1x512xf32> to vector<8x512xf32>
    %383 = arith.addf %381, %382 : vector<8x512xf32>
    %384 = vector.extract_strided_slice %383 {offsets = [0, 0], sizes = [8, 128], strides = [1, 1]} : vector<8x512xf32> to vector<8x128xf32>
    %385 = arith.negf %384 : vector<8x128xf32>
    %386 = math.exp %385 : vector<8x128xf32>
    %cst_109 = arith.constant 1.000000e+00 : f32
    %387 = vector.broadcast %cst_109 : f32 to vector<8x128xf32>
    %388 = arith.addf %387, %386 : vector<8x128xf32>
    %389 = arith.divf %387, %388 : vector<8x128xf32>
    %390 = vector.extract_strided_slice %383 {offsets = [0, 128], sizes = [8, 128], strides = [1, 1]} : vector<8x512xf32> to vector<8x128xf32>
    %391 = arith.negf %390 : vector<8x128xf32>
    %392 = math.exp %391 : vector<8x128xf32>
    %cst_110 = arith.constant 1.000000e+00 : f32
    %393 = vector.broadcast %cst_110 : f32 to vector<8x128xf32>
    %394 = arith.addf %393, %392 : vector<8x128xf32>
    %395 = arith.divf %393, %394 : vector<8x128xf32>
    %396 = vector.extract_strided_slice %383 {offsets = [0, 256], sizes = [8, 128], strides = [1, 1]} : vector<8x512xf32> to vector<8x128xf32>
    %397 = math.tanh %396 : vector<8x128xf32>
    %398 = vector.extract_strided_slice %383 {offsets = [0, 384], sizes = [8, 128], strides = [1, 1]} : vector<8x512xf32> to vector<8x128xf32>
    %399 = arith.negf %398 : vector<8x128xf32>
    %400 = math.exp %399 : vector<8x128xf32>
    %cst_111 = arith.constant 1.000000e+00 : f32
    %401 = vector.broadcast %cst_111 : f32 to vector<8x128xf32>
    %402 = arith.addf %401, %400 : vector<8x128xf32>
    %403 = arith.divf %401, %402 : vector<8x128xf32>
    %404 = arith.mulf %395, %340 : vector<8x128xf32>
    %405 = arith.mulf %389, %397 : vector<8x128xf32>
    %406 = arith.addf %404, %405 : vector<8x128xf32>
    %407 = math.tanh %406 : vector<8x128xf32>
    %408 = arith.mulf %403, %407 : vector<8x128xf32>
    %409 = arith.index_cast %c5_i32 : i32 to index
    %c0_112 = arith.constant 0 : index
    %c0_113 = arith.constant 0 : index
    %410 = vector.load %arg14[%409, %c0_112, %c0_113] : memref<7x8x128xf32, #tpu.memory_space<vmem>>, vector<1x8x128xf32>
    %411 = vector.shape_cast %410 : vector<1x8x128xf32> to vector<8x128xf32>
    %412 = vector.shape_cast %408 : vector<8x128xf32> to vector<1x8x128xf32>
    tpu.vector_store %arg14[%409, %c0_112, %c0_113], %412 {strides = array<i32>} : memref<7x8x128xf32, #tpu.memory_space<vmem>>, vector<1x8x128xf32>,
    %c6_i32 = arith.constant 6 : i32
    %cst_114 = arith.constant dense<0.000000e+00> : vector<8x128xf32>
    %413 = tpu.matmul %408, %7, %cst_114 {dimension_numbers = #tpu.dot_dimension_numbers<[1], [0], [0], [1], [0, 0, 1, 1], [], []>} : vector<8x128xf32>, vector<128x128xf32>, vector<8x128xf32> -> vector<8x128xf32>
    %414 = vector.broadcast %8 : vector<1x128xf32> to vector<8x128xf32>
    %415 = arith.addf %413, %414 : vector<8x128xf32>
    %416 = vector.shape_cast %415 : vector<8x128xf32> to vector<8x1x128xf32>
    %417 = vector.broadcast %416 : vector<8x1x128xf32> to vector<8x8x128xf32>
    %418 = arith.addf %6, %417 : vector<8x8x128xf32>
    %419 = math.tanh %418 : vector<8x8x128xf32>
    %420 = vector.shape_cast %9 : vector<1x128xf32> to vector<1x1x128xf32>
    %421 = vector.broadcast %420 : vector<1x1x128xf32> to vector<8x8x128xf32>
    %422 = arith.mulf %419, %421 : vector<8x8x128xf32>
    %cst_115 = arith.constant dense<0.000000e+00> : vector<8x8xf32>
    %423 = vector.multi_reduction <add>, %422, %cst_115 [2] : vector<8x8x128xf32> to vector<8x8xf32>
    %424 = vector.broadcast %10 : f32 to vector<8x8xf32>
    %425 = arith.addf %423, %424 : vector<8x8xf32>
    %cst_116 = arith.constant dense<0xFF800000> : vector<8xf32>
    %426 = vector.multi_reduction <maximumf>, %425, %cst_116 [1] : vector<8x8xf32> to vector<8xf32>
    %427 = vector.shape_cast %426 : vector<8xf32> to vector<8x1xf32>
    %428 = vector.broadcast %427 : vector<8x1xf32> to vector<8x8xf32>
    %429 = arith.subf %425, %428 : vector<8x8xf32>
    %430 = math.exp %429 : vector<8x8xf32>
    %cst_117 = arith.constant dense<0.000000e+00> : vector<8xf32>
    %431 = vector.multi_reduction <add>, %430, %cst_117 [1] : vector<8x8xf32> to vector<8xf32>
    %432 = vector.shape_cast %431 : vector<8xf32> to vector<8x1xf32>
    %433 = tpu.reciprocal %432 {approx = true} : vector<8x1xf32> -> vector<8x1xf32>
    %434 = vector.broadcast %433 : vector<8x1xf32> to vector<8x8xf32>
    %435 = arith.mulf %430, %434 : vector<8x8xf32>
    %436 = vector.shape_cast %435 : vector<8x8xf32> to vector<8x8x1xf32>
    %437 = vector.broadcast %436 : vector<8x8x1xf32> to vector<8x8x16xf32>
    %438 = arith.mulf %437, %0 : vector<8x8x16xf32>
    %cst_118 = arith.constant dense<0.000000e+00> : vector<8x16xf32>
    %439 = vector.multi_reduction <add>, %438, %cst_118 [1] : vector<8x8x16xf32> to vector<8x16xf32>
    %440 = arith.index_cast %c6_i32 : i32 to index
    %c0_119 = arith.constant 0 : index
    %c0_120 = arith.constant 0 : index
    %441 = vector.load %arg2[%440, %c0_119, %c0_120] : memref<7x8x16xf32, #tpu.memory_space<vmem>>, vector<1x8x16xf32>
    %442 = vector.shape_cast %441 : vector<1x8x16xf32> to vector<8x16xf32>
    %cst_121 = arith.constant dense<0.000000e+00> : vector<8x512xf32>
    %443 = tpu.matmul %442, %11, %cst_121 {dimension_numbers = #tpu.dot_dimension_numbers<[1], [0], [0], [1], [0, 0, 1, 1], [], []>} : vector<8x16xf32>, vector<16x512xf32>, vector<8x512xf32> -> vector<8x512xf32>
    %cst_122 = arith.constant dense<0.000000e+00> : vector<8x512xf32>
    %444 = tpu.matmul %439, %12, %cst_122 {dimension_numbers = #tpu.dot_dimension_numbers<[1], [0], [0], [1], [0, 0, 1, 1], [], []>} : vector<8x16xf32>, vector<16x512xf32>, vector<8x512xf32> -> vector<8x512xf32>
    %445 = arith.addf %443, %444 : vector<8x512xf32>
    %cst_123 = arith.constant dense<0.000000e+00> : vector<8x512xf32>
    %446 = tpu.matmul %408, %13, %cst_123 {dimension_numbers = #tpu.dot_dimension_numbers<[1], [0], [0], [1], [0, 0, 1, 1], [], []>} : vector<8x128xf32>, vector<128x512xf32>, vector<8x512xf32> -> vector<8x512xf32>
    %447 = arith.addf %445, %446 : vector<8x512xf32>
    %448 = vector.broadcast %14 : vector<1x512xf32> to vector<8x512xf32>
    %449 = arith.addf %447, %448 : vector<8x512xf32>
    %450 = vector.extract_strided_slice %449 {offsets = [0, 0], sizes = [8, 128], strides = [1, 1]} : vector<8x512xf32> to vector<8x128xf32>
    %451 = arith.negf %450 : vector<8x128xf32>
    %452 = math.exp %451 : vector<8x128xf32>
    %cst_124 = arith.constant 1.000000e+00 : f32
    %453 = vector.broadcast %cst_124 : f32 to vector<8x128xf32>
    %454 = arith.addf %453, %452 : vector<8x128xf32>
    %455 = arith.divf %453, %454 : vector<8x128xf32>
    %456 = vector.extract_strided_slice %449 {offsets = [0, 128], sizes = [8, 128], strides = [1, 1]} : vector<8x512xf32> to vector<8x128xf32>
    %457 = arith.negf %456 : vector<8x128xf32>
    %458 = math.exp %457 : vector<8x128xf32>
    %cst_125 = arith.constant 1.000000e+00 : f32
    %459 = vector.broadcast %cst_125 : f32 to vector<8x128xf32>
    %460 = arith.addf %459, %458 : vector<8x128xf32>
    %461 = arith.divf %459, %460 : vector<8x128xf32>
    %462 = vector.extract_strided_slice %449 {offsets = [0, 256], sizes = [8, 128], strides = [1, 1]} : vector<8x512xf32> to vector<8x128xf32>
    %463 = math.tanh %462 : vector<8x128xf32>
    %464 = vector.extract_strided_slice %449 {offsets = [0, 384], sizes = [8, 128], strides = [1, 1]} : vector<8x512xf32> to vector<8x128xf32>
    %465 = arith.negf %464 : vector<8x128xf32>
    %466 = math.exp %465 : vector<8x128xf32>
    %cst_126 = arith.constant 1.000000e+00 : f32
    %467 = vector.broadcast %cst_126 : f32 to vector<8x128xf32>
    %468 = arith.addf %467, %466 : vector<8x128xf32>
    %469 = arith.divf %467, %468 : vector<8x128xf32>
    %470 = arith.mulf %461, %406 : vector<8x128xf32>
    %471 = arith.mulf %455, %463 : vector<8x128xf32>
    %472 = arith.addf %470, %471 : vector<8x128xf32>
    %473 = math.tanh %472 : vector<8x128xf32>
    %474 = arith.mulf %469, %473 : vector<8x128xf32>
    %475 = arith.index_cast %c6_i32 : i32 to index
    %c0_127 = arith.constant 0 : index
    %c0_128 = arith.constant 0 : index
    %476 = vector.load %arg14[%475, %c0_127, %c0_128] : memref<7x8x128xf32, #tpu.memory_space<vmem>>, vector<1x8x128xf32>
    %477 = vector.shape_cast %476 : vector<1x8x128xf32> to vector<8x128xf32>
    %478 = vector.shape_cast %474 : vector<8x128xf32> to vector<1x8x128xf32>
    tpu.vector_store %arg14[%475, %c0_127, %c0_128], %478 {strides = array<i32>} : memref<7x8x128xf32, #tpu.memory_space<vmem>>, vector<1x8x128xf32>,
    %c7_i32 = arith.constant 7 : i32
    return
  }
  func.func @transform_0(%arg0: i32) -> i32 {
    %c0_i32 = arith.constant 0 : i32
    %c0_i32_0 = arith.constant 0 : i32
    return %c0_i32 : i32
  }
  func.func @transform_1(%arg0: i32) -> (i32, i32, i32) {
    %c0_i32 = arith.constant 0 : i32
    %c0_i32_0 = arith.constant 0 : i32
    %c0_i32_1 = arith.constant 0 : i32
    %c0_i32_2 = arith.constant 0 : i32
    return %c0_i32, %c0_i32_0, %c0_i32_1 : i32, i32, i32
  }
  func.func @transform_2(%arg0: i32) -> (i32, i32, i32) {
    %c0_i32 = arith.constant 0 : i32
    %c0_i32_0 = arith.constant 0 : i32
    %c0_i32_1 = arith.constant 0 : i32
    %c0_i32_2 = arith.constant 0 : i32
    return %c0_i32, %c0_i32_0, %c0_i32_1 : i32, i32, i32
  }
  func.func @transform_3(%arg0: i32) -> (i32, i32) {
    %c0_i32 = arith.constant 0 : i32
    %c0_i32_0 = arith.constant 0 : i32
    %c0_i32_1 = arith.constant 0 : i32
    return %c0_i32, %c0_i32_0 : i32, i32
  }
  func.func @transform_4(%arg0: i32) -> (i32, i32) {
    %c0_i32 = arith.constant 0 : i32
    %c0_i32_0 = arith.constant 0 : i32
    %c0_i32_1 = arith.constant 0 : i32
    return %c0_i32, %c0_i32_0 : i32, i32
  }
  func.func @transform_5(%arg0: i32) -> (i32, i32) {
    %c0_i32 = arith.constant 0 : i32
    %c0_i32_0 = arith.constant 0 : i32
    %c0_i32_1 = arith.constant 0 : i32
    return %c0_i32, %c0_i32_0 : i32, i32
  }
  func.func @transform_6(%arg0: i32) -> (i32, i32) {
    %c0_i32 = arith.constant 0 : i32
    %c0_i32_0 = arith.constant 0 : i32
    %c0_i32_1 = arith.constant 0 : i32
    return %c0_i32, %c0_i32_0 : i32, i32
  }
  func.func @transform_7(%arg0: i32) -> (i32, i32) {
    %c0_i32 = arith.constant 0 : i32
    %c0_i32_0 = arith.constant 0 : i32
    %c0_i32_1 = arith.constant 0 : i32
    return %c0_i32, %c0_i32_0 : i32, i32
  }
  func.func @transform_8(%arg0: i32) -> (i32, i32) {
    %c0_i32 = arith.constant 0 : i32
    %c0_i32_0 = arith.constant 0 : i32
    %c0_i32_1 = arith.constant 0 : i32
    return %c0_i32, %c0_i32_0 : i32, i32
  }
  func.func @transform_9(%arg0: i32) -> (i32, i32) {
    %c0_i32 = arith.constant 0 : i32
    %c0_i32_0 = arith.constant 0 : i32
    %c0_i32_1 = arith.constant 0 : i32
    return %c0_i32, %c0_i32_0 : i32, i32
  }
  func.func @transform_10(%arg0: i32) -> (i32, i32) {
    %c0_i32 = arith.constant 0 : i32
    %c0_i32_0 = arith.constant 0 : i32
    %c0_i32_1 = arith.constant 0 : i32
    return %c0_i32, %c0_i32_0 : i32, i32
  }
  func.func @transform_11(%arg0: i32) -> (i32, i32) {
    %c0_i32 = arith.constant 0 : i32
    %c0_i32_0 = arith.constant 0 : i32
    %c0_i32_1 = arith.constant 0 : i32
    return %c0_i32, %c0_i32_0 : i32, i32
  }
  func.func @transform_12(%arg0: i32) -> (i32, i32) {
    %c0_i32 = arith.constant 0 : i32
    %c0_i32_0 = arith.constant 0 : i32
    %c0_i32_1 = arith.constant 0 : i32
    return %c0_i32, %c0_i32_0 : i32, i32
  }
  func.func @transform_13(%arg0: i32) -> (i32, i32, i32) {
    %c0_i32 = arith.constant 0 : i32
    %c0_i32_0 = arith.constant 0 : i32
    %c0_i32_1 = arith.constant 0 : i32
    %c0_i32_2 = arith.constant 0 : i32
    return %c0_i32, %c0_i32_0, %c0_i32_1 : i32, i32, i32
  }
}

</mosaic_0001>

<llo_original>
// kernel: tpu_custom_call.1
$region0: #{tpu_custom_call.1}
  #allocation0 [shape = 'u32[]', space=smem, size = 0x4, offset = 0x4, fixed_abs, tag = 'smem constant byte address 0x4 - core index']
  #allocation1 [shape = 'u32[144,128]{1,0:T(1,128)}', space=vmem, size = 0x12000, scoped, tag = 'internal scratch']
  #allocation2 [shape = 'f32[1]{0:T(128)S(6)}', space=smem, size = 0x200, scoped, tag = 'scoped memory for tpu_custom_call.1']
  %s0 = inlined_call_operand.<no memory space> [shape: f32[1], index: 0, kind: input, shape index: {}]
  %s1 = inlined_call_operand.hbm [shape: f32[7,8,16], index: 1, kind: input, shape index: {}]
  %s2 = inlined_call_operand.hbm [shape: f32[8,8,16], index: 2, kind: input, shape index: {}]
  %s3 = inlined_call_operand.hbm [shape: f32[8,128], index: 3, kind: input, shape index: {}]
  %s4 = inlined_call_operand.hbm [shape: f32[16,128], index: 4, kind: input, shape index: {}]
  %s5 = inlined_call_operand.vmem [shape: f32[1,128], index: 5, kind: input, shape index: {}]
  %s6 = inlined_call_operand.hbm [shape: f32[128,128], index: 6, kind: input, shape index: {}]
  %s7 = inlined_call_operand.vmem [shape: f32[1,128], index: 7, kind: input, shape index: {}]
  %s8 = inlined_call_operand.vmem [shape: f32[1,128], index: 8, kind: input, shape index: {}]
  %s9 = inlined_call_operand.hbm [shape: f32[16,512], index: 9, kind: input, shape index: {}]
  %s10 = inlined_call_operand.hbm [shape: f32[16,512], index: 10, kind: input, shape index: {}]
  %s11 = inlined_call_operand.hbm [shape: f32[128,512], index: 11, kind: input, shape index: {}]
  %s12 = inlined_call_operand.vmem [shape: f32[1,512], index: 12, kind: input, shape index: {}]
  %s13 = inlined_call_operand.hbm [shape: f32[7,8,128], index: 13, kind: output, shape index: {}]
  %s14 = sld [smem:[#allocation0]]
  $region94: #{tpu_custom_call.1} parent=0
    _
  %s16 = ssub.s32 1, %s14
  %s17 = scalar_select 0, %s16, %s14
  %18 = sst [smem:[#allocation2]] %s0
  $region1: #{tpu_custom_call.1} parent=0
    #allocation3 [shape = 'u8[28672]{0}', space=vmem, size = 0x7000, scoped, tag = 'input window, operand 1, single buffered']
    #allocation4 [shape = 's32[1]{0}', space=sflag, size = 0x4, scoped, tag = 'scoped memory for tpu_custom_call.1']
    #allocation5 [shape = 's32[1]{0}', space=sflag, size = 0x4, scoped, tag = 'scoped memory for tpu_custom_call.1']
    #allocation6 [shape = 'u8[32768]{0}', space=vmem, size = 0x8000, scoped, tag = 'input window, operand 2, single buffered']
    #allocation7 [shape = 's32[1]{0}', space=sflag, size = 0x4, scoped, tag = 'scoped memory for tpu_custom_call.1']
    #allocation8 [shape = 'u8[4096]{0}', space=vmem, size = 0x1000, scoped, tag = 'input window, operand 3, single buffered']
    #allocation9 [shape = 'u8[8192]{0}', space=vmem, size = 0x2000, scoped, tag = 'input window, operand 4, single buffered']
    #allocation10 [shape = 's32[1]{0}', space=sflag, size = 0x4, scoped, tag = 'scoped memory for tpu_custom_call.1']
    #allocation11 [shape = 'u8[65536]{0}', space=vmem, size = 0x10000, scoped, tag = 'input window, operand 6, single buffered']
    #allocation12 [shape = 'u8[32768]{0}', space=vmem, size = 0x8000, scoped, tag = 'input window, operand 9, single buffered']
    #allocation13 [shape = 's32[1]{0}', space=sflag, size = 0x4, scoped, tag = 'scoped memory for tpu_custom_call.1']
    #allocation14 [shape = 'u8[32768]{0}', space=vmem, size = 0x8000, scoped, tag = 'input window, operand 10, single buffered']
    #allocation15 [shape = 'u8[262144]{0}', space=vmem, size = 0x40000, scoped, tag = 'input window, operand 11, single buffered']
    #allocation16 [shape = 's32[1]{0}', space=sflag, size = 0x4, scoped, tag = 'scoped memory for tpu_custom_call.1']
    #allocation17 [shape = 'u8[28672]{0}', space=vmem, size = 0x7000, scoped, tag = 'output window, operand 0, single buffered']
    %19 = vsyncpa [#allocation4], 0
    %20 = vsyncpa [#allocation7], 0
    %21 = vsyncpa [#allocation10], 0
    %22 = vsyncpa [#allocation13], 0
    %23 = vsyncpa [#allocation16], 0
    %24 = vsyncpa [#allocation5], 0
    // Predicated region
    $region2: #{tpu_custom_call.1} parent=1 // pred_check
      _
    $region3: #{tpu_custom_call.1} parent=1 // pred_check_branch
      %26 = sbr.rel (0) target = $region5
    $region4: #{tpu_custom_call.1} parent=1 // pred_region
      _
    $region5: #{tpu_custom_call.1} parent=1 // pred_fallthru
      _
    // Predicated region
    $region6: #{tpu_custom_call.1} parent=1 // pred_check
      _
    $region7: #{tpu_custom_call.1} parent=1 // pred_check_branch
      %28 = sbr.rel (0) target = $region9
    $region8: #{tpu_custom_call.1} parent=1 // pred_region
      %s30 = ssub.s32 896, 896
      %31 = vsyncadd [#allocation4], %s30
      %s32 = sshll.u32 [#allocation3], 4
      %s33 = int_to_ptr.vmem [resolvable:$true] %s32
      %38 = dma.hbm_to_vmem [thread:$0]  %s1, 896, %s33, [#allocation4], 128, 128, 8
    $region9: #{tpu_custom_call.1} parent=1 // pred_fallthru
      _
    // Predicated region
    $region10: #{tpu_custom_call.1} parent=1 // pred_check
      _
    $region11: #{tpu_custom_call.1} parent=1 // pred_check_branch
      %40 = sbr.rel (0) target = $region13
    $region12: #{tpu_custom_call.1} parent=1 // pred_region
      %s42 = ssub.s32 1024, 1024
      %43 = vsyncadd [#allocation7], %s42
      %s44 = sshll.u32 [#allocation6], 4
      %s45 = int_to_ptr.vmem [resolvable:$true] %s44
      %50 = dma.hbm_to_vmem [thread:$0]  %s2, 1024, %s45, [#allocation7], 128, 128, 8
    $region13: #{tpu_custom_call.1} parent=1 // pred_fallthru
      _
    // Predicated region
    $region14: #{tpu_custom_call.1} parent=1 // pred_check
      _
    $region15: #{tpu_custom_call.1} parent=1 // pred_check_branch
      %52 = sbr.rel (0) target = $region17
    $region16: #{tpu_custom_call.1} parent=1 // pred_region
      %s54 = ssub.s32 128, 128
      %55 = vsyncadd [#allocation7], %s54
      %s57 = sshll.u32 [#allocation8], 4
      %s58 = int_to_ptr.vmem [resolvable:$true] %s57
      %60 = dma.hbm_to_vmem [thread:$0]  %s3, 128, %s58, [#allocation7]
    $region17: #{tpu_custom_call.1} parent=1 // pred_fallthru
      _
    // Predicated region
    $region18: #{tpu_custom_call.1} parent=1 // pred_check
      _
    $region19: #{tpu_custom_call.1} parent=1 // pred_check_branch
      %62 = sbr.rel (0) target = $region21
    $region20: #{tpu_custom_call.1} parent=1 // pred_region
      %s64 = ssub.s32 256, 256
      %65 = vsyncadd [#allocation10], %s64
      %s66 = sshll.u32 [#allocation9], 4
      %s67 = int_to_ptr.vmem [resolvable:$true] %s66
      %72 = dma.hbm_to_vmem [thread:$0]  %s4, 256, %s67, [#allocation10], 128, 128, 8
    $region21: #{tpu_custom_call.1} parent=1 // pred_fallthru
      _
    // Predicated region
    $region22: #{tpu_custom_call.1} parent=1 // pred_check
      _
    $region23: #{tpu_custom_call.1} parent=1 // pred_check_branch
      %74 = sbr.rel (0) target = $region25
    $region24: #{tpu_custom_call.1} parent=1 // pred_region
      _
    $region25: #{tpu_custom_call.1} parent=1 // pred_fallthru
      _
    // Predicated region
    $region26: #{tpu_custom_call.1} parent=1 // pred_check
      _
    $region27: #{tpu_custom_call.1} parent=1 // pred_check_branch
      %76 = sbr.rel (0) target = $region29
    $region28: #{tpu_custom_call.1} parent=1 // pred_region
      %s78 = ssub.s32 2048, 2048
      %79 = vsyncadd [#allocation10], %s78
      %s80 = sshll.u32 [#allocation11], 4
      %s81 = int_to_ptr.vmem [resolvable:$true] %s80
      %86 = dma.hbm_to_vmem [thread:$0]  %s6, 2048, %s81, [#allocation10], 128, 128, 8
    $region29: #{tpu_custom_call.1} parent=1 // pred_fallthru
      _
    // Predicated region
    $region30: #{tpu_custom_call.1} parent=1 // pred_check
      _
    $region31: #{tpu_custom_call.1} parent=1 // pred_check_branch
      %88 = sbr.rel (0) target = $region33
    $region32: #{tpu_custom_call.1} parent=1 // pred_region
      _
    $region33: #{tpu_custom_call.1} parent=1 // pred_fallthru
      _
    // Predicated region
    $region34: #{tpu_custom_call.1} parent=1 // pred_check
      _
    $region35: #{tpu_custom_call.1} parent=1 // pred_check_branch
      %90 = sbr.rel (0) target = $region37
    $region36: #{tpu_custom_call.1} parent=1 // pred_region
      _
    $region37: #{tpu_custom_call.1} parent=1 // pred_fallthru
      _
    // Predicated region
    $region38: #{tpu_custom_call.1} parent=1 // pred_check
      _
    $region39: #{tpu_custom_call.1} parent=1 // pred_check_branch
      %92 = sbr.rel (0) target = $region41
    $region40: #{tpu_custom_call.1} parent=1 // pred_region
      %s94 = ssub.s32 1024, 1024
      %95 = vsyncadd [#allocation13], %s94
      %s96 = sshll.u32 [#allocation12], 4
      %s97 = int_to_ptr.vmem [resolvable:$true] %s96
      %102 = dma.hbm_to_vmem [thread:$0]  %s9, 1024, %s97, [#allocation13], 512, 512, 32
    $region41: #{tpu_custom_call.1} parent=1 // pred_fallthru
      _
    // Predicated region
    $region42: #{tpu_custom_call.1} parent=1 // pred_check
      _
    $region43: #{tpu_custom_call.1} parent=1 // pred_check_branch
      %104 = sbr.rel (0) target = $region45
    $region44: #{tpu_custom_call.1} parent=1 // pred_region
      %s106 = ssub.s32 1024, 1024
      %107 = vsyncadd [#allocation13], %s106
      %s108 = sshll.u32 [#allocation14], 4
      %s109 = int_to_ptr.vmem [resolvable:$true] %s108
      %114 = dma.hbm_to_vmem [thread:$0]  %s10, 1024, %s109, [#allocation13], 512, 512, 32
    $region45: #{tpu_custom_call.1} parent=1 // pred_fallthru
      _
    // Predicated region
    $region46: #{tpu_custom_call.1} parent=1 // pred_check
      _
    $region47: #{tpu_custom_call.1} parent=1 // pred_check_branch
      %116 = sbr.rel (0) target = $region49
    $region48: #{tpu_custom_call.1} parent=1 // pred_region
      %s118 = ssub.s32 8192, 8192
      %119 = vsyncadd [#allocation16], %s118
      %s120 = sshll.u32 [#allocation15], 4
      %s121 = int_to_ptr.vmem [resolvable:$true] %s120
      %126 = dma.hbm_to_vmem [thread:$0]  %s11, 8192, %s121, [#allocation16], 512, 512, 32
    $region49: #{tpu_custom_call.1} parent=1 // pred_fallthru
      _
    // Predicated region
    $region50: #{tpu_custom_call.1} parent=1 // pred_check
      _
    $region51: #{tpu_custom_call.1} parent=1 // pred_check_branch
      %128 = sbr.rel (0) target = $region53
    $region52: #{tpu_custom_call.1} parent=1 // pred_region
      _
    $region53: #{tpu_custom_call.1} parent=1 // pred_fallthru
      _
    // Predicated region
    $region54: #{tpu_custom_call.1} parent=1 // pred_check
      _
    $region55: #{tpu_custom_call.1} parent=1 // pred_check_branch
      %130 = sbr.rel (0) target = $region57
    $region56: #{tpu_custom_call.1} parent=1 // pred_region
      %131 = dma.done [#allocation4], 896
    $region57: #{tpu_custom_call.1} parent=1 // pred_fallthru
      _
    // Predicated region
    $region58: #{tpu_custom_call.1} parent=1 // pred_check
      _
    $region59: #{tpu_custom_call.1} parent=1 // pred_check_branch
      %133 = sbr.rel (0) target = $region61
    $region60: #{tpu_custom_call.1} parent=1 // pred_region
      %134 = dma.done [#allocation7], 1024
    $region61: #{tpu_custom_call.1} parent=1 // pred_fallthru
      _
    // Predicated region
    $region62: #{tpu_custom_call.1} parent=1 // pred_check
      _
    $region63: #{tpu_custom_call.1} parent=1 // pred_check_branch
      %136 = sbr.rel (0) target = $region65
    $region64: #{tpu_custom_call.1} parent=1 // pred_region
      %137 = dma.done [#allocation7], 128
    $region65: #{tpu_custom_call.1} parent=1 // pred_fallthru
      _
    // Predicated region
    $region66: #{tpu_custom_call.1} parent=1 // pred_check
      _
    $region67: #{tpu_custom_call.1} parent=1 // pred_check_branch
      %139 = sbr.rel (0) target = $region69
    $region68: #{tpu_custom_call.1} parent=1 // pred_region
      %140 = dma.done [#allocation10], 256
    $region69: #{tpu_custom_call.1} parent=1 // pred_fallthru
      _
    // Predicated region
    $region70: #{tpu_custom_call.1} parent=1 // pred_check
      _
    $region71: #{tpu_custom_call.1} parent=1 // pred_check_branch
      %142 = sbr.rel (0) target = $region73
    $region72: #{tpu_custom_call.1} parent=1 // pred_region
      %143 = dma.done [#allocation10], 2048
    $region73: #{tpu_custom_call.1} parent=1 // pred_fallthru
      _
    // Predicated region
    $region74: #{tpu_custom_call.1} parent=1 // pred_check
      _
    $region75: #{tpu_custom_call.1} parent=1 // pred_check_branch
      %145 = sbr.rel (0) target = $region77
    $region76: #{tpu_custom_call.1} parent=1 // pred_region
      %146 = dma.done [#allocation13], 1024
    $region77: #{tpu_custom_call.1} parent=1 // pred_fallthru
      _
    // Predicated region
    $region78: #{tpu_custom_call.1} parent=1 // pred_check
      _
    $region79: #{tpu_custom_call.1} parent=1 // pred_check_branch
      %148 = sbr.rel (0) target = $region81
    $region80: #{tpu_custom_call.1} parent=1 // pred_region
      %149 = dma.done [#allocation13], 1024
    $region81: #{tpu_custom_call.1} parent=1 // pred_fallthru
      _
    // Predicated region
    $region82: #{tpu_custom_call.1} parent=1 // pred_check
      _
    $region83: #{tpu_custom_call.1} parent=1 // pred_check_branch
      %151 = sbr.rel (0) target = $region85
    $region84: #{tpu_custom_call.1} parent=1 // pred_region
      %152 = dma.done [#allocation16], 8192
    $region85: #{tpu_custom_call.1} parent=1 // pred_fallthru
      _
    %v153 = vld [vmem:[#allocation6] sm:$0xff]
    %v154 = vld [vmem:[#allocation6 + $0x8] sm:$0xff]
    %v155 = vld [vmem:[#allocation6 + $0x10] sm:$0xff]
    %v156 = vld [vmem:[#allocation6 + $0x18] sm:$0xff]
    %v157 = vld [vmem:[#allocation6 + $0x20] sm:$0xff]
    %v158 = vld [vmem:[#allocation6 + $0x28] sm:$0xff]
    %v159 = vld [vmem:[#allocation6 + $0x30] sm:$0xff]
    %v160 = vld [vmem:[#allocation6 + $0x38] sm:$0xff]
    %v161 = vld [vmem:[#allocation9] sm:$0xff]
    %v162 = vld [vmem:[#allocation9 + $0x8] sm:$0xff]
    %v163 = vld [vmem:[%s5] sm:$0x1]
    %v165 = vlaneseq
    %v166 = vshrl.u32 %v165, 7
    %v167 = vsub.s32 0, %v166
    %v168 = vrot.slane %v163, %v167
    %vm170 = vcmask 130048
    %v172 = vsel %vm170, %v153, 0
    %v175 = vsel %vm170, %v154, 0
    %v178 = vsel %vm170, %v155, 0
    %v181 = vsel %vm170, %v156, 0
    %v184 = vsel %vm170, %v157, 0
    %v187 = vsel %vm170, %v158, 0
    %v190 = vsel %vm170, %v159, 0
    %v193 = vsel %vm170, %v160, 0
    %195 = vmatprep.subr.mxu0 0.0
    %196 = vmatpush1.msra.mxu0 0.0
    %197 = vmatprep.subr.mxu0 0.0
    %198 = vmatpush1.msra.mxu0 0.0
    %199 = vmatprep.subr.mxu0 0.0
    %200 = vmatpush1.msra.mxu0 0.0
    %201 = vmatprep.subr.mxu0 0.0
    %202 = vmatpush1.msra.mxu0 0.0
    %203 = vmatprep.subr.mxu0 0.0
    %204 = vmatpush1.msra.mxu0 0.0
    %205 = vmatprep.subr.mxu0 0.0
    %206 = vmatpush1.msra.mxu0 0.0
    %207 = vmatprep.subr.mxu0 0.0
    %208 = vmatpush1.msra.mxu0 0.0
    %209 = vmatprep.subr.mxu0 0.0
    %210 = vmatpush1.msra.mxu0 0.0
    %211 = vmatprep.subr.mxu0 0.0
    %212 = vmatpush1.msra.mxu0 0.0
    %213 = vmatprep.subr.mxu0 0.0
    %214 = vmatpush1.msra.mxu0 0.0
    %215 = vmatprep.subr.mxu0 0.0
    %216 = vmatpush1.msra.mxu0 0.0
    %217 = vmatprep.subr.mxu0 0.0
    %218 = vmatpush1.msra.mxu0 0.0
    %219 = vmatprep.subr.mxu0 0.0
    %220 = vmatpush1.msra.mxu0 0.0
    %221 = vmatprep.subr.mxu0 0.0
    %222 = vmatpush1.msra.mxu0 0.0
    %223 = vmatprep.subr.mxu0 0.0
    %224 = vmatpush1.msra.mxu0 %v162
    %225 = vmatprep.subr.mxu0 0.0
    %226 = vmatpush1.msra.mxu0 %v161
    %227 = vmatprep.subr.mxu0 0.0
    %228 = vmatpush2.msra.mxu0 0.0
    %229 = vmatprep.subr.mxu0 0.0
    %230 = vmatpush2.msra.mxu0 0.0
    %231 = vmatprep.subr.mxu0 0.0
    %232 = vmatpush2.msra.mxu0 0.0
    %233 = vmatprep.subr.mxu0 0.0
    %234 = vmatpush2.msra.mxu0 0.0
    %235 = vmatprep.subr.mxu0 0.0
    %236 = vmatpush2.msra.mxu0 0.0
    %237 = vmatprep.subr.mxu0 0.0
    %238 = vmatpush2.msra.mxu0 0.0
    %239 = vmatprep.subr.mxu0 0.0
    %240 = vmatpush2.msra.mxu0 0.0
    %241 = vmatprep.subr.mxu0 0.0
    %242 = vmatpush2.msra.mxu0 0.0
    %243 = vmatprep.subr.mxu0 0.0
    %244 = vmatpush2.msra.mxu0 0.0
    %245 = vmatprep.subr.mxu0 0.0
    %246 = vmatpush2.msra.mxu0 0.0
    %247 = vmatprep.subr.mxu0 0.0
    %248 = vmatpush2.msra.mxu0 0.0
    %249 = vmatprep.subr.mxu0 0.0
    %250 = vmatpush2.msra.mxu0 0.0
    %251 = vmatprep.subr.mxu0 0.0
    %252 = vmatpush2.msra.mxu0 0.0
    %253 = vmatprep.subr.mxu0 0.0
    %254 = vmatpush2.msra.mxu0 0.0
    %255 = vmatprep.subr.mxu0 0.0
    %256 = vmatpush2.msra.mxu0 0.0
    %257 = vmatprep.subr.mxu0 0.0
    %258 = vmatpush2.msra.mxu0 0.0
    %259 = vmatprep.mubr.f32.mxu0 0.0
    %260 = vmatmul.mubr.f32.gmra.mxu0 %v172
    %v261 = vpop.f32.mrf.mxu0
    %v262 = vadd.f32 %v168, %v261
    %v263 = vpop.f32.mrf.mxu0
    %264 = vmatprep.mubr.f32.mxu0 0.0
    %265 = vmatmul.mubr.f32.gmra.mxu0 %v175
    %v266 = vpop.f32.mrf.mxu0
    %v267 = vadd.f32 %v168, %v266
    %v268 = vpop.f32.mrf.mxu0
    %269 = vmatprep.mubr.f32.mxu0 0.0
    %270 = vmatmul.mubr.f32.gmra.mxu0 %v178
    %v271 = vpop.f32.mrf.mxu0
    %v272 = vadd.f32 %v168, %v271
    %v273 = vpop.f32.mrf.mxu0
    %274 = vmatprep.mubr.f32.mxu0 0.0
    %275 = vmatmul.mubr.f32.gmra.mxu0 %v181
    %v276 = vpop.f32.mrf.mxu0
    %v277 = vadd.f32 %v168, %v276
    %v278 = vpop.f32.mrf.mxu0
    %279 = vmatprep.mubr.f32.mxu0 0.0
    %280 = vmatmul.mubr.f32.gmra.mxu0 %v184
    %v281 = vpop.f32.mrf.mxu0
    %v282 = vadd.f32 %v168, %v281
    %v283 = vpop.f32.mrf.mxu0
    %284 = vmatprep.mubr.f32.mxu0 0.0
    %285 = vmatmul.mubr.f32.gmra.mxu0 %v187
    %v286 = vpop.f32.mrf.mxu0
    %v287 = vadd.f32 %v168, %v286
    %v288 = vpop.f32.mrf.mxu0
    %289 = vmatprep.mubr.f32.mxu0 0.0
    %290 = vmatmul.mubr.f32.gmra.mxu0 %v190
    %v291 = vpop.f32.mrf.mxu0
    %v292 = vadd.f32 %v168, %v291
    %v293 = vpop.f32.mrf.mxu0
    %294 = vmatprep.mubr.f32.mxu0 0.0
    %295 = vmatmul.mubr.f32.gmra.mxu0 %v193
    %v296 = vpop.f32.mrf.mxu0
    %v297 = vadd.f32 %v168, %v296
    %v298 = vpop.f32.mrf.mxu0
    %299 = vdwg.mxu0
    %v300 = vld [vmem:[#allocation11] sm:$0xff]
    %v301 = vld [vmem:[#allocation11 + $0x8] sm:$0xff]
    %v302 = vld [vmem:[#allocation11 + $0x10] sm:$0xff]
    %v303 = vld [vmem:[#allocation11 + $0x18] sm:$0xff]
    %v304 = vld [vmem:[#allocation11 + $0x20] sm:$0xff]
    %v305 = vld [vmem:[#allocation11 + $0x28] sm:$0xff]
    %v306 = vld [vmem:[#allocation11 + $0x30] sm:$0xff]
    %v307 = vld [vmem:[#allocation11 + $0x38] sm:$0xff]
    %v308 = vld [vmem:[#allocation11 + $0x40] sm:$0xff]
    %v309 = vld [vmem:[#allocation11 + $0x48] sm:$0xff]
    %v310 = vld [vmem:[#allocation11 + $0x50] sm:$0xff]
    %v311 = vld [vmem:[#allocation11 + $0x58] sm:$0xff]
    %v312 = vld [vmem:[#allocation11 + $0x60] sm:$0xff]
    %v313 = vld [vmem:[#allocation11 + $0x68] sm:$0xff]
    %v314 = vld [vmem:[#allocation11 + $0x70] sm:$0xff]
    %v315 = vld [vmem:[#allocation11 + $0x78] sm:$0xff]
    %v316 = vld [vmem:[%s7] sm:$0x1]
    %v317 = vld [vmem:[%s8] sm:$0x1]
    %s318 = sld [smem:[#allocation2]]
    %v319 = vld [vmem:[#allocation12] sm:$0xff]
    %v320 = vld [vmem:[#allocation12 + $0x8] sm:$0xff]
    %v321 = vld [vmem:[#allocation12 + $0x10] sm:$0xff]
    %v322 = vld [vmem:[#allocation12 + $0x18] sm:$0xff]
    %v323 = vld [vmem:[#allocation12 + $0x20] sm:$0xff]
    %v324 = vld [vmem:[#allocation12 + $0x28] sm:$0xff]
    %v325 = vld [vmem:[#allocation12 + $0x30] sm:$0xff]
    %v326 = vld [vmem:[#allocation12 + $0x38] sm:$0xff]
    %v327 = vld [vmem:[#allocation14] sm:$0xff]
    %v328 = vld [vmem:[#allocation14 + $0x8] sm:$0xff]
    %v329 = vld [vmem:[#allocation14 + $0x10] sm:$0xff]
    %v330 = vld [vmem:[#allocation14 + $0x18] sm:$0xff]
    %v331 = vld [vmem:[#allocation14 + $0x20] sm:$0xff]
    %v332 = vld [vmem:[#allocation14 + $0x28] sm:$0xff]
    %v333 = vld [vmem:[#allocation14 + $0x30] sm:$0xff]
    %v334 = vld [vmem:[#allocation14 + $0x38] sm:$0xff]
    %v335 = vld [vmem:[#allocation15] sm:$0xff]
    %v336 = vld [vmem:[#allocation15 + $0x8] sm:$0xff]
    %v337 = vld [vmem:[#allocation15 + $0x10] sm:$0xff]
    %v338 = vld [vmem:[#allocation15 + $0x18] sm:$0xff]
    %v339 = vld [vmem:[#allocation15 + $0x20] sm:$0xff]
    %v340 = vld [vmem:[#allocation15 + $0x28] sm:$0xff]
    %v341 = vld [vmem:[#allocation15 + $0x30] sm:$0xff]
    %v342 = vld [vmem:[#allocation15 + $0x38] sm:$0xff]
    %v343 = vld [vmem:[#allocation15 + $0x40] sm:$0xff]
    %v344 = vld [vmem:[#allocation15 + $0x48] sm:$0xff]
    %v345 = vld [vmem:[#allocation15 + $0x50] sm:$0xff]
    %v346 = vld [vmem:[#allocation15 + $0x58] sm:$0xff]
    %v347 = vld [vmem:[#allocation15 + $0x60] sm:$0xff]
    %v348 = vld [vmem:[#allocation15 + $0x68] sm:$0xff]
    %v349 = vld [vmem:[#allocation15 + $0x70] sm:$0xff]
    %v350 = vld [vmem:[#allocation15 + $0x78] sm:$0xff]
    %v351 = vld [vmem:[#allocation15 + $0x80] sm:$0xff]
    %v352 = vld [vmem:[#allocation15 + $0x88] sm:$0xff]
    %v353 = vld [vmem:[#allocation15 + $0x90] sm:$0xff]
    %v354 = vld [vmem:[#allocation15 + $0x98] sm:$0xff]
    %v355 = vld [vmem:[#allocation15 + $0xa0] sm:$0xff]
    %v356 = vld [vmem:[#allocation15 + $0xa8] sm:$0xff]
    %v357 = vld [vmem:[#allocation15 + $0xb0] sm:$0xff]
    %v358 = vld [vmem:[#allocation15 + $0xb8] sm:$0xff]
    %v359 = vld [vmem:[#allocation15 + $0xc0] sm:$0xff]
    %v360 = vld [vmem:[#allocation15 + $0xc8] sm:$0xff]
    %v361 = vld [vmem:[#allocation15 + $0xd0] sm:$0xff]
    %v362 = vld [vmem:[#allocation15 + $0xd8] sm:$0xff]
    %v363 = vld [vmem:[#allocation15 + $0xe0] sm:$0xff]
    %v364 = vld [vmem:[#allocation15 + $0xe8] sm:$0xff]
    %v365 = vld [vmem:[#allocation15 + $0xf0] sm:$0xff]
    %v366 = vld [vmem:[#allocation15 + $0xf8] sm:$0xff]
    %v367 = vld [vmem:[#allocation15 + $0x100] sm:$0xff]
    %v368 = vld [vmem:[#allocation15 + $0x108] sm:$0xff]
    %v369 = vld [vmem:[#allocation15 + $0x110] sm:$0xff]
    %v370 = vld [vmem:[#allocation15 + $0x118] sm:$0xff]
    %v371 = vld [vmem:[#allocation15 + $0x120] sm:$0xff]
    %v372 = vld [vmem:[#allocation15 + $0x128] sm:$0xff]
    %v373 = vld [vmem:[#allocation15 + $0x130] sm:$0xff]
    %v374 = vld [vmem:[#allocation15 + $0x138] sm:$0xff]
    %v375 = vld [vmem:[#allocation15 + $0x140] sm:$0xff]
    %v376 = vld [vmem:[#allocation15 + $0x148] sm:$0xff]
    %v377 = vld [vmem:[#allocation15 + $0x150] sm:$0xff]
    %v378 = vld [vmem:[#allocation15 + $0x158] sm:$0xff]
    %v379 = vld [vmem:[#allocation15 + $0x160] sm:$0xff]
    %v380 = vld [vmem:[#allocation15 + $0x168] sm:$0xff]
    %v381 = vld [vmem:[#allocation15 + $0x170] sm:$0xff]
    %v382 = vld [vmem:[#allocation15 + $0x178] sm:$0xff]
    %v383 = vld [vmem:[#allocation15 + $0x180] sm:$0xff]
    %v384 = vld [vmem:[#allocation15 + $0x188] sm:$0xff]
    %v385 = vld [vmem:[#allocation15 + $0x190] sm:$0xff]
    %v386 = vld [vmem:[#allocation15 + $0x198] sm:$0xff]
    %v387 = vld [vmem:[#allocation15 + $0x1a0] sm:$0xff]
    %v388 = vld [vmem:[#allocation15 + $0x1a8] sm:$0xff]
    %v389 = vld [vmem:[#allocation15 + $0x1b0] sm:$0xff]
    %v390 = vld [vmem:[#allocation15 + $0x1b8] sm:$0xff]
    %v391 = vld [vmem:[#allocation15 + $0x1c0] sm:$0xff]
    %v392 = vld [vmem:[#allocation15 + $0x1c8] sm:$0xff]
    %v393 = vld [vmem:[#allocation15 + $0x1d0] sm:$0xff]
    %v394 = vld [vmem:[#allocation15 + $0x1d8] sm:$0xff]
    %v395 = vld [vmem:[#allocation15 + $0x1e0] sm:$0xff]
    %v396 = vld [vmem:[#allocation15 + $0x1e8] sm:$0xff]
    %v397 = vld [vmem:[#allocation15 + $0x1f0] sm:$0xff]
    %v398 = vld [vmem:[#allocation15 + $0x1f8] sm:$0xff]
    %v399 = vld [vmem:[%s12] sm:$0xf]
    %v400 = vld [vmem:[#allocation8] sm:$0xff]
    %v402 = vlaneseq
    %v403 = vshrl.u32 %v402, 7
    %v404 = vsub.s32 0, %v403
    %v405 = vrot.slane %v316, %v404
    %407 = vmatprep.subr.mxu0 0.0
    %408 = vmatpush1.msra.mxu0 %v315
    %409 = vmatprep.subr.mxu0 0.0
    %410 = vmatpush1.msra.mxu0 %v314
    %411 = vmatprep.subr.mxu0 0.0
    %412 = vmatpush1.msra.mxu0 %v313
    %413 = vmatprep.subr.mxu0 0.0
    %414 = vmatpush1.msra.mxu0 %v312
    %415 = vmatprep.subr.mxu0 0.0
    %416 = vmatpush1.msra.mxu0 %v311
    %417 = vmatprep.subr.mxu0 0.0
    %418 = vmatpush1.msra.mxu0 %v310
    %419 = vmatprep.subr.mxu0 0.0
    %420 = vmatpush1.msra.mxu0 %v309
    %421 = vmatprep.subr.mxu0 0.0
    %422 = vmatpush1.msra.mxu0 %v308
    %423 = vmatprep.subr.mxu0 0.0
    %424 = vmatpush1.msra.mxu0 %v307
    %425 = vmatprep.subr.mxu0 0.0
    %426 = vmatpush1.msra.mxu0 %v306
    %427 = vmatprep.subr.mxu0 0.0
    %428 = vmatpush1.msra.mxu0 %v305
    %429 = vmatprep.subr.mxu0 0.0
    %430 = vmatpush1.msra.mxu0 %v304
    %431 = vmatprep.subr.mxu0 0.0
    %432 = vmatpush1.msra.mxu0 %v303
    %433 = vmatprep.subr.mxu0 0.0
    %434 = vmatpush1.msra.mxu0 %v302
    %435 = vmatprep.subr.mxu0 0.0
    %436 = vmatpush1.msra.mxu0 %v301
    %437 = vmatprep.subr.mxu0 0.0
    %438 = vmatpush1.msra.mxu0 %v300
    %439 = vmatprep.subr.mxu0 0.0
    %440 = vmatpush2.msra.mxu0 0.0
    %441 = vmatprep.subr.mxu0 0.0
    %442 = vmatpush2.msra.mxu0 0.0
    %443 = vmatprep.subr.mxu0 0.0
    %444 = vmatpush2.msra.mxu0 0.0
    %445 = vmatprep.subr.mxu0 0.0
    %446 = vmatpush2.msra.mxu0 0.0
    %447 = vmatprep.subr.mxu0 0.0
    %448 = vmatpush2.msra.mxu0 0.0
    %449 = vmatprep.subr.mxu0 0.0
    %450 = vmatpush2.msra.mxu0 0.0
    %451 = vmatprep.subr.mxu0 0.0
    %452 = vmatpush2.msra.mxu0 0.0
    %453 = vmatprep.subr.mxu0 0.0
    %454 = vmatpush2.msra.mxu0 0.0
    %455 = vmatprep.subr.mxu0 0.0
    %456 = vmatpush2.msra.mxu0 0.0
    %457 = vmatprep.subr.mxu0 0.0
    %458 = vmatpush2.msra.mxu0 0.0
    %459 = vmatprep.subr.mxu0 0.0
    %460 = vmatpush2.msra.mxu0 0.0
    %461 = vmatprep.subr.mxu0 0.0
    %462 = vmatpush2.msra.mxu0 0.0
    %463 = vmatprep.subr.mxu0 0.0
    %464 = vmatpush2.msra.mxu0 0.0
    %465 = vmatprep.subr.mxu0 0.0
    %466 = vmatpush2.msra.mxu0 0.0
    %467 = vmatprep.subr.mxu0 0.0
    %468 = vmatpush2.msra.mxu0 0.0
    %469 = vmatprep.subr.mxu0 0.0
    %470 = vmatpush2.msra.mxu0 0.0
    %471 = vmatprep.mubr.f32.mxu0 0.0
    %472 = vmatmul.mubr.f32.gmra.mxu0 %v400
    %v473 = vpop.f32.mrf.mxu0
    %v474 = vadd.f32 %v405, %v473
    %v475 = vpop.f32.mrf.mxu0
    %476 = vdwg.mxu0
    %v478 = vcombine.high %v474, %v474
    %v480 = vunpack.c.l.s4 1966171168
    %v481 = vunpack.c.0.s8 %v480
    %v482 = vlaneseq
    %v483 = vshrl.u32 %v482, 7
    %v484 = vsub.s32 %v481, %v483
    %v485 = vrot.slane %v474, %v484
    %v487 = vunpack.c.l.s4 1966171168
    %v488 = vunpack.c.0.s8 %v487
    %v489 = vlaneseq
    %v490 = vshrl.u32 %v489, 7
    %v491 = vsub.s32 %v488, %v490
    %v492 = vrot.slane %v478, %v491
    %v493 = vcombine.high %v485, %v485
    %v494 = vcombine.high %v492, %v492
    %v496 = vunpack.c.l.s4 1966171168
    %v497 = vunpack.c.0.s8 %v496
    %v498 = vlaneseq
    %v499 = vshrl.u32 %v498, 7
    %v500 = vsub.s32 %v497, %v499
    %v501 = vrot.slane %v485, %v500
    %v503 = vunpack.c.l.s4 1966171168
    %v504 = vunpack.c.0.s8 %v503
    %v505 = vlaneseq
    %v506 = vshrl.u32 %v505, 7
    %v507 = vsub.s32 %v504, %v506
    %v508 = vrot.slane %v492, %v507
    %v510 = vunpack.c.l.s4 1966171168
    %v511 = vunpack.c.0.s8 %v510
    %v512 = vlaneseq
    %v513 = vshrl.u32 %v512, 7
    %v514 = vsub.s32 %v511, %v513
    %v515 = vrot.slane %v493, %v514
    %v517 = vunpack.c.l.s4 1966171168
    %v518 = vunpack.c.0.s8 %v517
    %v519 = vlaneseq
    %v520 = vshrl.u32 %v519, 7
    %v521 = vsub.s32 %v518, %v520
    %v522 = vrot.slane %v494, %v521
    %v523 = vcombine.high %v501, %v501
    %v524 = vcombine.high %v508, %v508
    %v525 = vcombine.high %v515, %v515
    %v526 = vcombine.high %v522, %v522
    %v527 = vlaneseq
    %v528 = vshrl.u32 %v527, 7
    %v529 = vsub.s32 0, %v528
    %v530 = vrot.slane %v501, %v529
    %v531 = vlaneseq
    %v532 = vshrl.u32 %v531, 7
    %v533 = vsub.s32 0, %v532
    %v534 = vrot.slane %v515, %v533
    %v535 = vlaneseq
    %v536 = vshrl.u32 %v535, 7
    %v537 = vsub.s32 0, %v536
    %v538 = vrot.slane %v523, %v537
    %v539 = vlaneseq
    %v540 = vshrl.u32 %v539, 7
    %v541 = vsub.s32 0, %v540
    %v542 = vrot.slane %v525, %v541
    %v543 = vlaneseq
    %v544 = vshrl.u32 %v543, 7
    %v545 = vsub.s32 0, %v544
    %v546 = vrot.slane %v508, %v545
    %v547 = vlaneseq
    %v548 = vshrl.u32 %v547, 7
    %v549 = vsub.s32 0, %v548
    %v550 = vrot.slane %v522, %v549
    %v551 = vlaneseq
    %v552 = vshrl.u32 %v551, 7
    %v553 = vsub.s32 0, %v552
    %v554 = vrot.slane %v524, %v553
    %v555 = vlaneseq
    %v556 = vshrl.u32 %v555, 7
    %v557 = vsub.s32 0, %v556
    %v558 = vrot.slane %v526, %v557
    %v567 = vadd.f32 %v262, %v530
    %v568 = vadd.f32 %v267, %v534
    %v569 = vadd.f32 %v272, %v538
    %v570 = vadd.f32 %v277, %v542
    %v571 = vadd.f32 %v282, %v546
    %v572 = vadd.f32 %v287, %v550
    %v573 = vadd.f32 %v292, %v554
    %v574 = vadd.f32 %v297, %v558
    %v575 = vtanh.pop %v567
    %v576 = vtanh.pop %v568
    %v577 = vtanh.pop %v569
    %v578 = vtanh.pop %v570
    %v579 = vtanh.pop %v571
    %v580 = vtanh.pop %v572
    %v581 = vtanh.pop %v573
    %v582 = vtanh.pop %v574
    %v584 = vlaneseq
    %v585 = vshrl.u32 %v584, 7
    %v586 = vsub.s32 0, %v585
    %v587 = vrot.slane %v317, %v586
    %v589 = vmul.f32 %v575, %v587
    %v590 = vmul.f32 %v576, %v587
    %v591 = vmul.f32 %v577, %v587
    %v592 = vmul.f32 %v578, %v587
    %v593 = vmul.f32 %v579, %v587
    %v594 = vmul.f32 %v580, %v587
    %v595 = vmul.f32 %v581, %v587
    %v596 = vmul.f32 %v582, %v587
    %597 = vadd.xlane.f32.xlu0 %v589
    %v598 = vpop.xlane.xlu0 %597
    %599 = vadd.xlane.f32.xlu0 %v590
    %v600 = vpop.xlane.xlu0 %599
    %601 = vadd.xlane.f32.xlu0 %v591
    %v602 = vpop.xlane.xlu0 %601
    %603 = vadd.xlane.f32.xlu0 %v592
    %v604 = vpop.xlane.xlu0 %603
    %605 = vadd.xlane.f32.xlu0 %v593
    %v606 = vpop.xlane.xlu0 %605
    %607 = vadd.xlane.f32.xlu0 %v594
    %v608 = vpop.xlane.xlu0 %607
    %609 = vadd.xlane.f32.xlu0 %v595
    %v610 = vpop.xlane.xlu0 %609
    %611 = vadd.xlane.f32.xlu0 %v596
    %v612 = vpop.xlane.xlu0 %611
    %v613 = vstv %s318
    %v614 = vadd.f32 %v598, %v613
    %v615 = vadd.f32 %v600, %v613
    %v616 = vadd.f32 %v602, %v613
    %v617 = vadd.f32 %v604, %v613
    %v618 = vadd.f32 %v606, %v613
    %v619 = vadd.f32 %v608, %v613
    %v620 = vadd.f32 %v610, %v613
    %v621 = vadd.f32 %v612, %v613
    %v630 = vlaneseq
    %v631 = vand.u32 %v630, 127
    %v632 = vlaneseq
    %v633 = vshrl.u32 %v632, 7
    %v634 = vsub.s32 %v631, %v633
    %v635 = vrot.slane %v614, %v634
    %v636 = vlaneseq
    %v637 = vshrl.u32 %v636, 7
    %v638 = vsub.s32 %v631, %v637
    %v639 = vrot.slane %v615, %v638
    %v640 = vlaneseq
    %v641 = vshrl.u32 %v640, 7
    %v642 = vsub.s32 %v631, %v641
    %v643 = vrot.slane %v616, %v642
    %v644 = vlaneseq
    %v645 = vshrl.u32 %v644, 7
    %v646 = vsub.s32 %v631, %v645
    %v647 = vrot.slane %v617, %v646
    %v648 = vlaneseq
    %v649 = vshrl.u32 %v648, 7
    %v650 = vsub.s32 %v631, %v649
    %v651 = vrot.slane %v618, %v650
    %v652 = vlaneseq
    %v653 = vshrl.u32 %v652, 7
    %v654 = vsub.s32 %v631, %v653
    %v655 = vrot.slane %v619, %v654
    %v656 = vlaneseq
    %v657 = vshrl.u32 %v656, 7
    %v658 = vsub.s32 %v631, %v657
    %v659 = vrot.slane %v620, %v658
    %v660 = vlaneseq
    %v661 = vshrl.u32 %v660, 7
    %v662 = vsub.s32 %v631, %v661
    %v663 = vrot.slane %v621, %v662
    %vm664 = vcmask 1041409
    %v665 = vsel %vm664, %v639, %v635
    %vm666 = vcmask 1042434
    %v667 = vsel %vm666, %v643, %v665
    %vm668 = vcmask 1043459
    %v669 = vsel %vm668, %v647, %v667
    %vm670 = vcmask 1044484
    %v671 = vsel %vm670, %v651, %v669
    %vm672 = vcmask 1045509
    %v673 = vsel %vm672, %v655, %v671
    %vm674 = vcmask 1046534
    %v675 = vsel %vm674, %v659, %v673
    %vm676 = vcmask 1047559
    %v677 = vsel %vm676, %v663, %v675
    %vm679 = vcmask 64512
    %v680 = vsel %vm679, %v677, -inf
    %681 = vmax.xlane.f32.xlu0 %v680
    %v682 = vpop.xlane.xlu0 %681
    %v684 = vlaneseq
    %v685 = vshrl.u32 %v684, 7
    %v686 = vsub.s32 0, %v685
    %v687 = vrot.slane %v682, %v686
    %v688 = vlaneseq
    %v689 = vshrl.u32 %v688, 7
    %v690 = vsub.s32 1, %v689
    %v691 = vrot.slane %v682, %v690
    %v692 = vlaneseq
    %v693 = vshrl.u32 %v692, 7
    %v694 = vsub.s32 2, %v693
    %v695 = vrot.slane %v682, %v694
    %v696 = vlaneseq
    %v697 = vshrl.u32 %v696, 7
    %v698 = vsub.s32 3, %v697
    %v699 = vrot.slane %v682, %v698
    %v700 = vlaneseq
    %v701 = vshrl.u32 %v700, 7
    %v702 = vsub.s32 4, %v701
    %v703 = vrot.slane %v682, %v702
    %v704 = vlaneseq
    %v705 = vshrl.u32 %v704, 7
    %v706 = vsub.s32 5, %v705
    %v707 = vrot.slane %v682, %v706
    %v708 = vlaneseq
    %v709 = vshrl.u32 %v708, 7
    %v710 = vsub.s32 6, %v709
    %v711 = vrot.slane %v682, %v710
    %v712 = vlaneseq
    %v713 = vshrl.u32 %v712, 7
    %v714 = vsub.s32 7, %v713
    %v715 = vrot.slane %v682, %v714
    %v724 = vsub.f32 %v614, %v687
    %v725 = vsub.f32 %v615, %v691
    %v726 = vsub.f32 %v616, %v695
    %v727 = vsub.f32 %v617, %v699
    %v728 = vsub.f32 %v618, %v703
    %v729 = vsub.f32 %v619, %v707
    %v730 = vsub.f32 %v620, %v711
    %v731 = vsub.f32 %v621, %v715
    %v732 = vmul.f32 %v724, 1.442695
    %v733 = vpow.pop %v732
    %v734 = vmul.f32 %v725, 1.442695
    %v735 = vpow.pop %v734
    %v736 = vmul.f32 %v726, 1.442695
    %v737 = vpow.pop %v736
    %v738 = vmul.f32 %v727, 1.442695
    %v739 = vpow.pop %v738
    %v740 = vmul.f32 %v728, 1.442695
    %v741 = vpow.pop %v740
    %v742 = vmul.f32 %v729, 1.442695
    %v743 = vpow.pop %v742
    %v744 = vmul.f32 %v730, 1.442695
    %v745 = vpow.pop %v744
    %v746 = vmul.f32 %v731, 1.442695
    %v747 = vpow.pop %v746
    %756 = vset.pattern.permute.xlu0 0
    %757 = vperm.xlu0 %756, %v733
    %v758 = vpop.permute.xlu0 %757
    %759 = vset.pattern.permute.xlu0 0
    %760 = vperm.xlu0 %759, %v735
    %v761 = vpop.permute.xlu0 %760
    %762 = vset.pattern.permute.xlu0 0
    %763 = vperm.xlu0 %762, %v737
    %v764 = vpop.permute.xlu0 %763
    %765 = vset.pattern.permute.xlu0 0
    %766 = vperm.xlu0 %765, %v739
    %v767 = vpop.permute.xlu0 %766
    %768 = vset.pattern.permute.xlu0 0
    %769 = vperm.xlu0 %768, %v741
    %v770 = vpop.permute.xlu0 %769
    %771 = vset.pattern.permute.xlu0 0
    %772 = vperm.xlu0 %771, %v743
    %v773 = vpop.permute.xlu0 %772
    %774 = vset.pattern.permute.xlu0 0
    %775 = vperm.xlu0 %774, %v745
    %v776 = vpop.permute.xlu0 %775
    %777 = vset.pattern.permute.xlu0 0
    %778 = vperm.xlu0 %777, %v747
    %v779 = vpop.permute.xlu0 %778
    %v780 = vlaneseq
    %v781 = vshrl.u32 %v780, 7
    %v782 = vsub.s32 %v631, %v781
    %v783 = vrot.slane %v758, %v782
    %v784 = vlaneseq
    %v785 = vshrl.u32 %v784, 7
    %v786 = vsub.s32 %v631, %v785
    %v787 = vrot.slane %v761, %v786
    %v788 = vlaneseq
    %v789 = vshrl.u32 %v788, 7
    %v790 = vsub.s32 %v631, %v789
    %v791 = vrot.slane %v764, %v790
    %v792 = vlaneseq
    %v793 = vshrl.u32 %v792, 7
    %v794 = vsub.s32 %v631, %v793
    %v795 = vrot.slane %v767, %v794
    %v796 = vlaneseq
    %v797 = vshrl.u32 %v796, 7
    %v798 = vsub.s32 %v631, %v797
    %v799 = vrot.slane %v770, %v798
    %v800 = vlaneseq
    %v801 = vshrl.u32 %v800, 7
    %v802 = vsub.s32 %v631, %v801
    %v803 = vrot.slane %v773, %v802
    %v804 = vlaneseq
    %v805 = vshrl.u32 %v804, 7
    %v806 = vsub.s32 %v631, %v805
    %v807 = vrot.slane %v776, %v806
    %v808 = vlaneseq
    %v809 = vshrl.u32 %v808, 7
    %v810 = vsub.s32 %v631, %v809
    %v811 = vrot.slane %v779, %v810
    %v812 = vsel %vm664, %v787, %v783
    %v813 = vsel %vm666, %v791, %v812
    %v814 = vsel %vm668, %v795, %v813
    %v815 = vsel %vm670, %v799, %v814
    %v816 = vsel %vm672, %v803, %v815
    %v817 = vsel %vm674, %v807, %v816
    %v818 = vsel %vm676, %v811, %v817
    %v820 = vsel %vm679, %v818, 0.0
    %821 = vadd.xlane.f32.xlu0 %v820
    %v822 = vpop.xlane.xlu0 %821
    %v823 = vrcp.pop %v822
    %v825 = vlaneseq
    %v826 = vshrl.u32 %v825, 7
    %v827 = vsub.s32 0, %v826
    %v828 = vrot.slane %v823, %v827
    %v829 = vlaneseq
    %v830 = vshrl.u32 %v829, 7
    %v831 = vsub.s32 1, %v830
    %v832 = vrot.slane %v823, %v831
    %v833 = vlaneseq
    %v834 = vshrl.u32 %v833, 7
    %v835 = vsub.s32 2, %v834
    %v836 = vrot.slane %v823, %v835
    %v837 = vlaneseq
    %v838 = vshrl.u32 %v837, 7
    %v839 = vsub.s32 3, %v838
    %v840 = vrot.slane %v823, %v839
    %v841 = vlaneseq
    %v842 = vshrl.u32 %v841, 7
    %v843 = vsub.s32 4, %v842
    %v844 = vrot.slane %v823, %v843
    %v845 = vlaneseq
    %v846 = vshrl.u32 %v845, 7
    %v847 = vsub.s32 5, %v846
    %v848 = vrot.slane %v823, %v847
    %v849 = vlaneseq
    %v850 = vshrl.u32 %v849, 7
    %v851 = vsub.s32 6, %v850
    %v852 = vrot.slane %v823, %v851
    %v853 = vlaneseq
    %v854 = vshrl.u32 %v853, 7
    %v855 = vsub.s32 7, %v854
    %v856 = vrot.slane %v823, %v855
    %v865 = vmul.f32 %v733, %v828
    %v866 = vmul.f32 %v735, %v832
    %v867 = vmul.f32 %v737, %v836
    %v868 = vmul.f32 %v739, %v840
    %v869 = vmul.f32 %v741, %v844
    %v870 = vmul.f32 %v743, %v848
    %v871 = vmul.f32 %v745, %v852
    %v872 = vmul.f32 %v747, %v856
    %874 = vset.pattern.permute.xlu0 0
    %875 = vperm.xlu0 %874, %v865
    %v876 = vpop.permute.xlu0 %875
    %879 = vset.pattern.permute.xlu0 0
    %880 = vperm.xlu0 %879, %v866
    %v881 = vpop.permute.xlu0 %880
    %884 = vset.pattern.permute.xlu0 0
    %885 = vperm.xlu0 %884, %v867
    %v886 = vpop.permute.xlu0 %885
    %889 = vset.pattern.permute.xlu0 0
    %890 = vperm.xlu0 %889, %v868
    %v891 = vpop.permute.xlu0 %890
    %894 = vset.pattern.permute.xlu0 0
    %895 = vperm.xlu0 %894, %v869
    %v896 = vpop.permute.xlu0 %895
    %899 = vset.pattern.permute.xlu0 0
    %900 = vperm.xlu0 %899, %v870
    %v901 = vpop.permute.xlu0 %900
    %904 = vset.pattern.permute.xlu0 0
    %905 = vperm.xlu0 %904, %v871
    %v906 = vpop.permute.xlu0 %905
    %909 = vset.pattern.permute.xlu0 0
    %910 = vperm.xlu0 %909, %v872
    %v911 = vpop.permute.xlu0 %910
    %v913 = vmul.f32 %v876, %v153
    %v914 = vmul.f32 %v881, %v154
    %v915 = vmul.f32 %v886, %v155
    %v916 = vmul.f32 %v891, %v156
    %v917 = vmul.f32 %v896, %v157
    %v918 = vmul.f32 %v901, %v158
    %v919 = vmul.f32 %v906, %v159
    %v920 = vmul.f32 %v911, %v160
    %v921 = vsel %vm170, %v913, 0.0
    %v922 = vrot.slane %v921, 4
    %v923 = vadd.f32 %v921, %v922
    %v924 = vrot.slane %v923, 2
    %v925 = vadd.f32 %v923, %v924
    %v926 = vrot.slane %v925, 1
    %v927 = vadd.f32 %v925, %v926
    %v928 = vsel %vm170, %v914, 0.0
    %v929 = vrot.slane %v928, 4
    %v930 = vadd.f32 %v928, %v929
    %v931 = vrot.slane %v930, 2
    %v932 = vadd.f32 %v930, %v931
    %v933 = vrot.slane %v932, 1
    %v934 = vadd.f32 %v932, %v933
    %v935 = vsel %vm170, %v915, 0.0
    %v936 = vrot.slane %v935, 4
    %v937 = vadd.f32 %v935, %v936
    %v938 = vrot.slane %v937, 2
    %v939 = vadd.f32 %v937, %v938
    %v940 = vrot.slane %v939, 1
    %v941 = vadd.f32 %v939, %v940
    %v942 = vsel %vm170, %v916, 0.0
    %v943 = vrot.slane %v942, 4
    %v944 = vadd.f32 %v942, %v943
    %v945 = vrot.slane %v944, 2
    %v946 = vadd.f32 %v944, %v945
    %v947 = vrot.slane %v946, 1
    %v948 = vadd.f32 %v946, %v947
    %v949 = vsel %vm170, %v917, 0.0
    %v950 = vrot.slane %v949, 4
    %v951 = vadd.f32 %v949, %v950
    %v952 = vrot.slane %v951, 2
    %v953 = vadd.f32 %v951, %v952
    %v954 = vrot.slane %v953, 1
    %v955 = vadd.f32 %v953, %v954
    %v956 = vsel %vm170, %v918, 0.0
    %v957 = vrot.slane %v956, 4
    %v958 = vadd.f32 %v956, %v957
    %v959 = vrot.slane %v958, 2
    %v960 = vadd.f32 %v958, %v959
    %v961 = vrot.slane %v960, 1
    %v962 = vadd.f32 %v960, %v961
    %v963 = vsel %vm170, %v919, 0.0
    %v964 = vrot.slane %v963, 4
    %v965 = vadd.f32 %v963, %v964
    %v966 = vrot.slane %v965, 2
    %v967 = vadd.f32 %v965, %v966
    %v968 = vrot.slane %v967, 1
    %v969 = vadd.f32 %v967, %v968
    %v970 = vsel %vm170, %v920, 0.0
    %v971 = vrot.slane %v970, 4
    %v972 = vadd.f32 %v970, %v971
    %v973 = vrot.slane %v972, 2
    %v974 = vadd.f32 %v972, %v973
    %v975 = vrot.slane %v974, 1
    %v976 = vadd.f32 %v974, %v975
    %v977 = vld [vmem:[#allocation3] sm:$0xff]
    %v986 = vsel %vm664, %v934, %v927
    %v987 = vsel %vm666, %v941, %v986
    %v988 = vsel %vm668, %v948, %v987
    %v989 = vsel %vm670, %v955, %v988
    %v990 = vsel %vm672, %v962, %v989
    %v991 = vsel %vm674, %v969, %v990
    %v992 = vsel %vm676, %v976, %v991
    %v993 = vsel %vm170, %v992, 0
    %995 = vmatprep.subr.mxu0 0.0
    %996 = vmatpush1.msra.mxu0 0.0
    %997 = vmatprep.subr.mxu0 0.0
    %998 = vmatpush1.msra.mxu0 0.0
    %999 = vmatprep.subr.mxu0 0.0
    %1000 = vmatpush1.msra.mxu0 0.0
    %1001 = vmatprep.subr.mxu0 0.0
    %1002 = vmatpush1.msra.mxu0 0.0
    %1003 = vmatprep.subr.mxu0 0.0
    %1004 = vmatpush1.msra.mxu0 0.0
    %1005 = vmatprep.subr.mxu0 0.0
    %1006 = vmatpush1.msra.mxu0 0.0
    %1007 = vmatprep.subr.mxu0 0.0
    %1008 = vmatpush1.msra.mxu0 0.0
    %1009 = vmatprep.subr.mxu0 0.0
    %1010 = vmatpush1.msra.mxu0 0.0
    %1011 = vmatprep.subr.mxu0 0.0
    %1012 = vmatpush1.msra.mxu0 0.0
    %1013 = vmatprep.subr.mxu0 0.0
    %1014 = vmatpush1.msra.mxu0 0.0
    %1015 = vmatprep.subr.mxu0 0.0
    %1016 = vmatpush1.msra.mxu0 0.0
    %1017 = vmatprep.subr.mxu0 0.0
    %1018 = vmatpush1.msra.mxu0 0.0
    %1019 = vmatprep.subr.mxu0 0.0
    %1020 = vmatpush1.msra.mxu0 0.0
    %1021 = vmatprep.subr.mxu0 0.0
    %1022 = vmatpush1.msra.mxu0 0.0
    %1023 = vmatprep.subr.mxu0 %v332
    %1024 = vmatpush1.msra.mxu0 %v331
    %1025 = vmatprep.subr.mxu0 %v328
    %1026 = vmatpush1.msra.mxu0 %v327
    %1027 = vmatprep.subr.mxu0 0.0
    %1028 = vmatpush2.msra.mxu0 0.0
    %1029 = vmatprep.subr.mxu0 0.0
    %1030 = vmatpush2.msra.mxu0 0.0
    %1031 = vmatprep.subr.mxu0 0.0
    %1032 = vmatpush2.msra.mxu0 0.0
    %1033 = vmatprep.subr.mxu0 0.0
    %1034 = vmatpush2.msra.mxu0 0.0
    %1035 = vmatprep.subr.mxu0 0.0
    %1036 = vmatpush2.msra.mxu0 0.0
    %1037 = vmatprep.subr.mxu0 0.0
    %1038 = vmatpush2.msra.mxu0 0.0
    %1039 = vmatprep.subr.mxu0 0.0
    %1040 = vmatpush2.msra.mxu0 0.0
    %1041 = vmatprep.subr.mxu0 0.0
    %1042 = vmatpush2.msra.mxu0 0.0
    %1043 = vmatprep.subr.mxu0 0.0
    %1044 = vmatpush2.msra.mxu0 0.0
    %1045 = vmatprep.subr.mxu0 0.0
    %1046 = vmatpush2.msra.mxu0 0.0
    %1047 = vmatprep.subr.mxu0 0.0
    %1048 = vmatpush2.msra.mxu0 0.0
    %1049 = vmatprep.subr.mxu0 0.0
    %1050 = vmatpush2.msra.mxu0 0.0
    %1051 = vmatprep.subr.mxu0 0.0
    %1052 = vmatpush2.msra.mxu0 0.0
    %1053 = vmatprep.subr.mxu0 0.0
    %1054 = vmatpush2.msra.mxu0 0.0
    %1055 = vmatprep.subr.mxu0 0.0
    %1056 = vmatpush2.msra.mxu0 0.0
    %1057 = vmatprep.subr.mxu0 0.0
    %1058 = vmatpush2.msra.mxu0 0.0
    %1059 = vmatprep.mubr.f32.mxu0 0.0
    %1060 = vmatmul.mubr.f32.gmra.mxu0 %v993
    %v1061 = vpop.f32.mrf.mxu0
    %v1062 = vadd.f32 0.0, %v1061
    %v1063 = vpop.f32.mrf.mxu0
    %v1064 = vadd.f32 0.0, %v1063
    %1065 = vdwg.mxu0
    %1066 = vmatprep.subr.mxu0 0.0
    %1067 = vmatpush1.msra.mxu0 0.0
    %1068 = vmatprep.subr.mxu0 0.0
    %1069 = vmatpush1.msra.mxu0 0.0
    %1070 = vmatprep.subr.mxu0 0.0
    %1071 = vmatpush1.msra.mxu0 0.0
    %1072 = vmatprep.subr.mxu0 0.0
    %1073 = vmatpush1.msra.mxu0 0.0
    %1074 = vmatprep.subr.mxu0 0.0
    %1075 = vmatpush1.msra.mxu0 0.0
    %1076 = vmatprep.subr.mxu0 0.0
    %1077 = vmatpush1.msra.mxu0 0.0
    %1078 = vmatprep.subr.mxu0 0.0
    %1079 = vmatpush1.msra.mxu0 0.0
    %1080 = vmatprep.subr.mxu0 0.0
    %1081 = vmatpush1.msra.mxu0 0.0
    %1082 = vmatprep.subr.mxu0 0.0
    %1083 = vmatpush1.msra.mxu0 0.0
    %1084 = vmatprep.subr.mxu0 0.0
    %1085 = vmatpush1.msra.mxu0 0.0
    %1086 = vmatprep.subr.mxu0 0.0
    %1087 = vmatpush1.msra.mxu0 0.0
    %1088 = vmatprep.subr.mxu0 0.0
    %1089 = vmatpush1.msra.mxu0 0.0
    %1090 = vmatprep.subr.mxu0 0.0
    %1091 = vmatpush1.msra.mxu0 0.0
    %1092 = vmatprep.subr.mxu0 0.0
    %1093 = vmatpush1.msra.mxu0 0.0
    %1094 = vmatprep.subr.mxu0 %v334
    %1095 = vmatpush1.msra.mxu0 %v333
    %1096 = vmatprep.subr.mxu0 %v330
    %1097 = vmatpush1.msra.mxu0 %v329
    %1098 = vmatprep.subr.mxu0 0.0
    %1099 = vmatpush2.msra.mxu0 0.0
    %1100 = vmatprep.subr.mxu0 0.0
    %1101 = vmatpush2.msra.mxu0 0.0
    %1102 = vmatprep.subr.mxu0 0.0
    %1103 = vmatpush2.msra.mxu0 0.0
    %1104 = vmatprep.subr.mxu0 0.0
    %1105 = vmatpush2.msra.mxu0 0.0
    %1106 = vmatprep.subr.mxu0 0.0
    %1107 = vmatpush2.msra.mxu0 0.0
    %1108 = vmatprep.subr.mxu0 0.0
    %1109 = vmatpush2.msra.mxu0 0.0
    %1110 = vmatprep.subr.mxu0 0.0
    %1111 = vmatpush2.msra.mxu0 0.0
    %1112 = vmatprep.subr.mxu0 0.0
    %1113 = vmatpush2.msra.mxu0 0.0
    %1114 = vmatprep.subr.mxu0 0.0
    %1115 = vmatpush2.msra.mxu0 0.0
    %1116 = vmatprep.subr.mxu0 0.0
    %1117 = vmatpush2.msra.mxu0 0.0
    %1118 = vmatprep.subr.mxu0 0.0
    %1119 = vmatpush2.msra.mxu0 0.0
    %1120 = vmatprep.subr.mxu0 0.0
    %1121 = vmatpush2.msra.mxu0 0.0
    %1122 = vmatprep.subr.mxu0 0.0
    %1123 = vmatpush2.msra.mxu0 0.0
    %1124 = vmatprep.subr.mxu0 0.0
    %1125 = vmatpush2.msra.mxu0 0.0
    %1126 = vmatprep.subr.mxu0 0.0
    %1127 = vmatpush2.msra.mxu0 0.0
    %1128 = vmatprep.subr.mxu0 0.0
    %1129 = vmatpush2.msra.mxu0 0.0
    %1130 = vmatprep.mubr.f32.mxu0 0.0
    %1131 = vmatmul.mubr.f32.gmra.mxu0 %v993
    %v1132 = vpop.f32.mrf.mxu0
    %v1133 = vadd.f32 0.0, %v1132
    %v1134 = vpop.f32.mrf.mxu0
    %v1135 = vadd.f32 0.0, %v1134
    %1136 = vdwg.mxu0
    %v1138 = vsel %vm170, %v977, 0
    %1140 = vmatprep.subr.mxu0 0.0
    %1141 = vmatpush1.msra.mxu0 0.0
    %1142 = vmatprep.subr.mxu0 0.0
    %1143 = vmatpush1.msra.mxu0 0.0
    %1144 = vmatprep.subr.mxu0 0.0
    %1145 = vmatpush1.msra.mxu0 0.0
    %1146 = vmatprep.subr.mxu0 0.0
    %1147 = vmatpush1.msra.mxu0 0.0
    %1148 = vmatprep.subr.mxu0 0.0
    %1149 = vmatpush1.msra.mxu0 0.0
    %1150 = vmatprep.subr.mxu0 0.0
    %1151 = vmatpush1.msra.mxu0 0.0
    %1152 = vmatprep.subr.mxu0 0.0
    %1153 = vmatpush1.msra.mxu0 0.0
    %1154 = vmatprep.subr.mxu0 0.0
    %1155 = vmatpush1.msra.mxu0 0.0
    %1156 = vmatprep.subr.mxu0 0.0
    %1157 = vmatpush1.msra.mxu0 0.0
    %1158 = vmatprep.subr.mxu0 0.0
    %1159 = vmatpush1.msra.mxu0 0.0
    %1160 = vmatprep.subr.mxu0 0.0
    %1161 = vmatpush1.msra.mxu0 0.0
    %1162 = vmatprep.subr.mxu0 0.0
    %1163 = vmatpush1.msra.mxu0 0.0
    %1164 = vmatprep.subr.mxu0 0.0
    %1165 = vmatpush1.msra.mxu0 0.0
    %1166 = vmatprep.subr.mxu0 0.0
    %1167 = vmatpush1.msra.mxu0 0.0
    %1168 = vmatprep.subr.mxu0 %v324
    %1169 = vmatpush1.msra.mxu0 %v323
    %1170 = vmatprep.subr.mxu0 %v320
    %1171 = vmatpush1.msra.mxu0 %v319
    %1172 = vmatprep.subr.mxu0 0.0
    %1173 = vmatpush2.msra.mxu0 0.0
    %1174 = vmatprep.subr.mxu0 0.0
    %1175 = vmatpush2.msra.mxu0 0.0
    %1176 = vmatprep.subr.mxu0 0.0
    %1177 = vmatpush2.msra.mxu0 0.0
    %1178 = vmatprep.subr.mxu0 0.0
    %1179 = vmatpush2.msra.mxu0 0.0
    %1180 = vmatprep.subr.mxu0 0.0
    %1181 = vmatpush2.msra.mxu0 0.0
    %1182 = vmatprep.subr.mxu0 0.0
    %1183 = vmatpush2.msra.mxu0 0.0
    %1184 = vmatprep.subr.mxu0 0.0
    %1185 = vmatpush2.msra.mxu0 0.0
    %1186 = vmatprep.subr.mxu0 0.0
    %1187 = vmatpush2.msra.mxu0 0.0
    %1188 = vmatprep.subr.mxu0 0.0
    %1189 = vmatpush2.msra.mxu0 0.0
    %1190 = vmatprep.subr.mxu0 0.0
    %1191 = vmatpush2.msra.mxu0 0.0
    %1192 = vmatprep.subr.mxu0 0.0
    %1193 = vmatpush2.msra.mxu0 0.0
    %1194 = vmatprep.subr.mxu0 0.0
    %1195 = vmatpush2.msra.mxu0 0.0
    %1196 = vmatprep.subr.mxu0 0.0
    %1197 = vmatpush2.msra.mxu0 0.0
    %1198 = vmatprep.subr.mxu0 0.0
    %1199 = vmatpush2.msra.mxu0 0.0
    %1200 = vmatprep.subr.mxu0 0.0
    %1201 = vmatpush2.msra.mxu0 0.0
    %1202 = vmatprep.subr.mxu0 0.0
    %1203 = vmatpush2.msra.mxu0 0.0
    %1204 = vmatprep.mubr.f32.mxu0 0.0
    %1205 = vmatmul.mubr.f32.gmra.mxu0 %v1138
    %v1206 = vpop.f32.mrf.mxu0
    %v1207 = vadd.f32 %v1062, %v1206
    %v1208 = vpop.f32.mrf.mxu0
    %v1209 = vadd.f32 %v1064, %v1208
    %1210 = vdwg.mxu0
    %1211 = vmatprep.subr.mxu0 0.0
    %1212 = vmatpush1.msra.mxu0 0.0
    %1213 = vmatprep.subr.mxu0 0.0
    %1214 = vmatpush1.msra.mxu0 0.0
    %1215 = vmatprep.subr.mxu0 0.0
    %1216 = vmatpush1.msra.mxu0 0.0
    %1217 = vmatprep.subr.mxu0 0.0
    %1218 = vmatpush1.msra.mxu0 0.0
    %1219 = vmatprep.subr.mxu0 0.0
    %1220 = vmatpush1.msra.mxu0 0.0
    %1221 = vmatprep.subr.mxu0 0.0
    %1222 = vmatpush1.msra.mxu0 0.0
    %1223 = vmatprep.subr.mxu0 0.0
    %1224 = vmatpush1.msra.mxu0 0.0
    %1225 = vmatprep.subr.mxu0 0.0
    %1226 = vmatpush1.msra.mxu0 0.0
    %1227 = vmatprep.subr.mxu0 0.0
    %1228 = vmatpush1.msra.mxu0 0.0
    %1229 = vmatprep.subr.mxu0 0.0
    %1230 = vmatpush1.msra.mxu0 0.0
    %1231 = vmatprep.subr.mxu0 0.0
    %1232 = vmatpush1.msra.mxu0 0.0
    %1233 = vmatprep.subr.mxu0 0.0
    %1234 = vmatpush1.msra.mxu0 0.0
    %1235 = vmatprep.subr.mxu0 0.0
    %1236 = vmatpush1.msra.mxu0 0.0
    %1237 = vmatprep.subr.mxu0 0.0
    %1238 = vmatpush1.msra.mxu0 0.0
    %1239 = vmatprep.subr.mxu0 %v326
    %1240 = vmatpush1.msra.mxu0 %v325
    %1241 = vmatprep.subr.mxu0 %v322
    %1242 = vmatpush1.msra.mxu0 %v321
    %1243 = vmatprep.subr.mxu0 0.0
    %1244 = vmatpush2.msra.mxu0 0.0
    %1245 = vmatprep.subr.mxu0 0.0
    %1246 = vmatpush2.msra.mxu0 0.0
    %1247 = vmatprep.subr.mxu0 0.0
    %1248 = vmatpush2.msra.mxu0 0.0
    %1249 = vmatprep.subr.mxu0 0.0
    %1250 = vmatpush2.msra.mxu0 0.0
    %1251 = vmatprep.subr.mxu0 0.0
    %1252 = vmatpush2.msra.mxu0 0.0
    %1253 = vmatprep.subr.mxu0 0.0
    %1254 = vmatpush2.msra.mxu0 0.0
    %1255 = vmatprep.subr.mxu0 0.0
    %1256 = vmatpush2.msra.mxu0 0.0
    %1257 = vmatprep.subr.mxu0 0.0
    %1258 = vmatpush2.msra.mxu0 0.0
    %1259 = vmatprep.subr.mxu0 0.0
    %1260 = vmatpush2.msra.mxu0 0.0
    %1261 = vmatprep.subr.mxu0 0.0
    %1262 = vmatpush2.msra.mxu0 0.0
    %1263 = vmatprep.subr.mxu0 0.0
    %1264 = vmatpush2.msra.mxu0 0.0
    %1265 = vmatprep.subr.mxu0 0.0
    %1266 = vmatpush2.msra.mxu0 0.0
    %1267 = vmatprep.subr.mxu0 0.0
    %1268 = vmatpush2.msra.mxu0 0.0
    %1269 = vmatprep.subr.mxu0 0.0
    %1270 = vmatpush2.msra.mxu0 0.0
    %1271 = vmatprep.subr.mxu0 0.0
    %1272 = vmatpush2.msra.mxu0 0.0
    %1273 = vmatprep.subr.mxu0 0.0
    %1274 = vmatpush2.msra.mxu0 0.0
    %1275 = vmatprep.mubr.f32.mxu0 0.0
    %1276 = vmatmul.mubr.f32.gmra.mxu0 %v1138
    %v1277 = vpop.f32.mrf.mxu0
    %v1278 = vadd.f32 %v1133, %v1277
    %v1279 = vpop.f32.mrf.mxu0
    %v1280 = vadd.f32 %v1135, %v1279
    %1281 = vdwg.mxu0
    %1282 = vmatprep.subr.mxu0 %v396
    %1283 = vmatpush1.msra.mxu0 %v395
    %1284 = vmatprep.subr.mxu0 %v392
    %1285 = vmatpush1.msra.mxu0 %v391
    %1286 = vmatprep.subr.mxu0 %v388
    %1287 = vmatpush1.msra.mxu0 %v387
    %1288 = vmatprep.subr.mxu0 %v384
    %1289 = vmatpush1.msra.mxu0 %v383
    %1290 = vmatprep.subr.mxu0 %v380
    %1291 = vmatpush1.msra.mxu0 %v379
    %1292 = vmatprep.subr.mxu0 %v376
    %1293 = vmatpush1.msra.mxu0 %v375
    %1294 = vmatprep.subr.mxu0 %v372
    %1295 = vmatpush1.msra.mxu0 %v371
    %1296 = vmatprep.subr.mxu0 %v368
    %1297 = vmatpush1.msra.mxu0 %v367
    %1298 = vmatprep.subr.mxu0 %v364
    %1299 = vmatpush1.msra.mxu0 %v363
    %1300 = vmatprep.subr.mxu0 %v360
    %1301 = vmatpush1.msra.mxu0 %v359
    %1302 = vmatprep.subr.mxu0 %v356
    %1303 = vmatpush1.msra.mxu0 %v355
    %1304 = vmatprep.subr.mxu0 %v352
    %1305 = vmatpush1.msra.mxu0 %v351
    %1306 = vmatprep.subr.mxu0 %v348
    %1307 = vmatpush1.msra.mxu0 %v347
    %1308 = vmatprep.subr.mxu0 %v344
    %1309 = vmatpush1.msra.mxu0 %v343
    %1310 = vmatprep.subr.mxu0 %v340
    %1311 = vmatpush1.msra.mxu0 %v339
    %1312 = vmatprep.subr.mxu0 %v336
    %1313 = vmatpush1.msra.mxu0 %v335
    %1314 = vmatprep.subr.mxu0 0.0
    %1315 = vmatpush2.msra.mxu0 0.0
    %1316 = vmatprep.subr.mxu0 0.0
    %1317 = vmatpush2.msra.mxu0 0.0
    %1318 = vmatprep.subr.mxu0 0.0
    %1319 = vmatpush2.msra.mxu0 0.0
    %1320 = vmatprep.subr.mxu0 0.0
    %1321 = vmatpush2.msra.mxu0 0.0
    %1322 = vmatprep.subr.mxu0 0.0
    %1323 = vmatpush2.msra.mxu0 0.0
    %1324 = vmatprep.subr.mxu0 0.0
    %1325 = vmatpush2.msra.mxu0 0.0
    %1326 = vmatprep.subr.mxu0 0.0
    %1327 = vmatpush2.msra.mxu0 0.0
    %1328 = vmatprep.subr.mxu0 0.0
    %1329 = vmatpush2.msra.mxu0 0.0
    %1330 = vmatprep.subr.mxu0 0.0
    %1331 = vmatpush2.msra.mxu0 0.0
    %1332 = vmatprep.subr.mxu0 0.0
    %1333 = vmatpush2.msra.mxu0 0.0
    %1334 = vmatprep.subr.mxu0 0.0
    %1335 = vmatpush2.msra.mxu0 0.0
    %1336 = vmatprep.subr.mxu0 0.0
    %1337 = vmatpush2.msra.mxu0 0.0
    %1338 = vmatprep.subr.mxu0 0.0
    %1339 = vmatpush2.msra.mxu0 0.0
    %1340 = vmatprep.subr.mxu0 0.0
    %1341 = vmatpush2.msra.mxu0 0.0
    %1342 = vmatprep.subr.mxu0 0.0
    %1343 = vmatpush2.msra.mxu0 0.0
    %1344 = vmatprep.subr.mxu0 0.0
    %1345 = vmatpush2.msra.mxu0 0.0
    %1346 = vmatprep.mubr.f32.mxu0 0.0
    %1347 = vmatmul.mubr.f32.gmra.mxu0 %v400
    %v1348 = vpop.f32.mrf.mxu0
    %v1349 = vadd.f32 0.0, %v1348
    %v1350 = vpop.f32.mrf.mxu0
    %v1351 = vadd.f32 0.0, %v1350
    %1352 = vdwg.mxu0
    %1353 = vmatprep.subr.mxu0 %v398
    %1354 = vmatpush1.msra.mxu0 %v397
    %1355 = vmatprep.subr.mxu0 %v394
    %1356 = vmatpush1.msra.mxu0 %v393
    %1357 = vmatprep.subr.mxu0 %v390
    %1358 = vmatpush1.msra.mxu0 %v389
    %1359 = vmatprep.subr.mxu0 %v386
    %1360 = vmatpush1.msra.mxu0 %v385
    %1361 = vmatprep.subr.mxu0 %v382
    %1362 = vmatpush1.msra.mxu0 %v381
    %1363 = vmatprep.subr.mxu0 %v378
    %1364 = vmatpush1.msra.mxu0 %v377
    %1365 = vmatprep.subr.mxu0 %v374
    %1366 = vmatpush1.msra.mxu0 %v373
    %1367 = vmatprep.subr.mxu0 %v370
    %1368 = vmatpush1.msra.mxu0 %v369
    %1369 = vmatprep.subr.mxu0 %v366
    %1370 = vmatpush1.msra.mxu0 %v365
    %1371 = vmatprep.subr.mxu0 %v362
    %1372 = vmatpush1.msra.mxu0 %v361
    %1373 = vmatprep.subr.mxu0 %v358
    %1374 = vmatpush1.msra.mxu0 %v357
    %1375 = vmatprep.subr.mxu0 %v354
    %1376 = vmatpush1.msra.mxu0 %v353
    %1377 = vmatprep.subr.mxu0 %v350
    %1378 = vmatpush1.msra.mxu0 %v349
    %1379 = vmatprep.subr.mxu0 %v346
    %1380 = vmatpush1.msra.mxu0 %v345
    %1381 = vmatprep.subr.mxu0 %v342
    %1382 = vmatpush1.msra.mxu0 %v341
    %1383 = vmatprep.subr.mxu0 %v338
    %1384 = vmatpush1.msra.mxu0 %v337
    %1385 = vmatprep.subr.mxu0 0.0
    %1386 = vmatpush2.msra.mxu0 0.0
    %1387 = vmatprep.subr.mxu0 0.0
    %1388 = vmatpush2.msra.mxu0 0.0
    %1389 = vmatprep.subr.mxu0 0.0
    %1390 = vmatpush2.msra.mxu0 0.0
    %1391 = vmatprep.subr.mxu0 0.0
    %1392 = vmatpush2.msra.mxu0 0.0
    %1393 = vmatprep.subr.mxu0 0.0
    %1394 = vmatpush2.msra.mxu0 0.0
    %1395 = vmatprep.subr.mxu0 0.0
    %1396 = vmatpush2.msra.mxu0 0.0
    %1397 = vmatprep.subr.mxu0 0.0
    %1398 = vmatpush2.msra.mxu0 0.0
    %1399 = vmatprep.subr.mxu0 0.0
    %1400 = vmatpush2.msra.mxu0 0.0
    %1401 = vmatprep.subr.mxu0 0.0
    %1402 = vmatpush2.msra.mxu0 0.0
    %1403 = vmatprep.subr.mxu0 0.0
    %1404 = vmatpush2.msra.mxu0 0.0
    %1405 = vmatprep.subr.mxu0 0.0
    %1406 = vmatpush2.msra.mxu0 0.0
    %1407 = vmatprep.subr.mxu0 0.0
    %1408 = vmatpush2.msra.mxu0 0.0
    %1409 = vmatprep.subr.mxu0 0.0
    %1410 = vmatpush2.msra.mxu0 0.0
    %1411 = vmatprep.subr.mxu0 0.0
    %1412 = vmatpush2.msra.mxu0 0.0
    %1413 = vmatprep.subr.mxu0 0.0
    %1414 = vmatpush2.msra.mxu0 0.0
    %1415 = vmatprep.subr.mxu0 0.0
    %1416 = vmatpush2.msra.mxu0 0.0
    %1417 = vmatprep.mubr.f32.mxu0 0.0
    %1418 = vmatmul.mubr.f32.gmra.mxu0 %v400
    %v1419 = vpop.f32.mrf.mxu0
    %v1420 = vadd.f32 0.0, %v1419
    %v1421 = vpop.f32.mrf.mxu0
    %v1422 = vadd.f32 0.0, %v1421
    %1423 = vdwg.mxu0
    %v1424 = vadd.f32 %v1207, %v1349
    %v1425 = vadd.f32 %v1209, %v1351
    %v1426 = vadd.f32 %v1278, %v1420
    %v1427 = vadd.f32 %v1280, %v1422
    %v1429 = vlaneseq
    %v1430 = vshrl.u32 %v1429, 7
    %v1431 = vsub.s32 0, %v1430
    %v1432 = vrot.slane %v399, %v1431
    %v1433 = vlaneseq
    %v1434 = vshrl.u32 %v1433, 7
    %v1435 = vsub.s32 1, %v1434
    %v1436 = vrot.slane %v399, %v1435
    %v1437 = vlaneseq
    %v1438 = vshrl.u32 %v1437, 7
    %v1439 = vsub.s32 2, %v1438
    %v1440 = vrot.slane %v399, %v1439
    %v1441 = vlaneseq
    %v1442 = vshrl.u32 %v1441, 7
    %v1443 = vsub.s32 3, %v1442
    %v1444 = vrot.slane %v399, %v1443
    %v1449 = vadd.f32 %v1424, %v1432
    %v1450 = vadd.f32 %v1425, %v1436
    %v1451 = vadd.f32 %v1426, %v1440
    %v1452 = vadd.f32 %v1427, %v1444
    %v1453 = vxor.u32 %v1449, 2147483648
    %v1454 = vmul.f32 %v1453, 1.442695
    %v1455 = vpow.pop %v1454
    %v1456 = vadd.f32 %v1455, 1.0
    %v1457 = vrcp.pop %v1456
    %v1458 = vmul.f32 1.0, %v1457
    %v1459 = vxor.u32 %v1450, 2147483648
    %v1460 = vmul.f32 %v1459, 1.442695
    %v1461 = vpow.pop %v1460
    %v1462 = vadd.f32 %v1461, 1.0
    %v1463 = vrcp.pop %v1462
    %v1464 = vmul.f32 1.0, %v1463
    %v1465 = vtanh.pop %v1451
    %v1466 = vxor.u32 %v1452, 2147483648
    %v1467 = vmul.f32 %v1466, 1.442695
    %v1468 = vpow.pop %v1467
    %v1469 = vadd.f32 %v1468, 1.0
    %v1470 = vrcp.pop %v1469
    %v1471 = vmul.f32 1.0, %v1470
    %v1472 = vmul.f32 %v1464, 0.0
    %v1473 = vmul.f32 %v1458, %v1465
    %v1474 = vadd.f32 %v1472, %v1473
    %v1475 = vtanh.pop %v1474
    %v1476 = vmul.f32 %v1471, %v1475
    %1477 = vst [vmem:[#allocation17] sm:$0xff] %v1476
    %1478 = vmatprep.subr.mxu0 0.0
    %1479 = vmatpush1.msra.mxu0 %v315
    %1480 = vmatprep.subr.mxu0 0.0
    %1481 = vmatpush1.msra.mxu0 %v314
    %1482 = vmatprep.subr.mxu0 0.0
    %1483 = vmatpush1.msra.mxu0 %v313
    %1484 = vmatprep.subr.mxu0 0.0
    %1485 = vmatpush1.msra.mxu0 %v312
    %1486 = vmatprep.subr.mxu0 0.0
    %1487 = vmatpush1.msra.mxu0 %v311
    %1488 = vmatprep.subr.mxu0 0.0
    %1489 = vmatpush1.msra.mxu0 %v310
    %1490 = vmatprep.subr.mxu0 0.0
    %1491 = vmatpush1.msra.mxu0 %v309
    %1492 = vmatprep.subr.mxu0 0.0
    %1493 = vmatpush1.msra.mxu0 %v308
    %1494 = vmatprep.subr.mxu0 0.0
    %1495 = vmatpush1.msra.mxu0 %v307
    %1496 = vmatprep.subr.mxu0 0.0
    %1497 = vmatpush1.msra.mxu0 %v306
    %1498 = vmatprep.subr.mxu0 0.0
    %1499 = vmatpush1.msra.mxu0 %v305
    %1500 = vmatprep.subr.mxu0 0.0
    %1501 = vmatpush1.msra.mxu0 %v304
    %1502 = vmatprep.subr.mxu0 0.0
    %1503 = vmatpush1.msra.mxu0 %v303
    %1504 = vmatprep.subr.mxu0 0.0
    %1505 = vmatpush1.msra.mxu0 %v302
    %1506 = vmatprep.subr.mxu0 0.0
    %1507 = vmatpush1.msra.mxu0 %v301
    %1508 = vmatprep.subr.mxu0 0.0
    %1509 = vmatpush1.msra.mxu0 %v300
    %1510 = vmatprep.subr.mxu0 0.0
    %1511 = vmatpush2.msra.mxu0 0.0
    %1512 = vmatprep.subr.mxu0 0.0
    %1513 = vmatpush2.msra.mxu0 0.0
    %1514 = vmatprep.subr.mxu0 0.0
    %1515 = vmatpush2.msra.mxu0 0.0
    %1516 = vmatprep.subr.mxu0 0.0
    %1517 = vmatpush2.msra.mxu0 0.0
    %1518 = vmatprep.subr.mxu0 0.0
    %1519 = vmatpush2.msra.mxu0 0.0
    %1520 = vmatprep.subr.mxu0 0.0
    %1521 = vmatpush2.msra.mxu0 0.0
    %1522 = vmatprep.subr.mxu0 0.0
    %1523 = vmatpush2.msra.mxu0 0.0
    %1524 = vmatprep.subr.mxu0 0.0
    %1525 = vmatpush2.msra.mxu0 0.0
    %1526 = vmatprep.subr.mxu0 0.0
    %1527 = vmatpush2.msra.mxu0 0.0
    %1528 = vmatprep.subr.mxu0 0.0
    %1529 = vmatpush2.msra.mxu0 0.0
    %1530 = vmatprep.subr.mxu0 0.0
    %1531 = vmatpush2.msra.mxu0 0.0
    %1532 = vmatprep.subr.mxu0 0.0
    %1533 = vmatpush2.msra.mxu0 0.0
    %1534 = vmatprep.subr.mxu0 0.0
    %1535 = vmatpush2.msra.mxu0 0.0
    %1536 = vmatprep.subr.mxu0 0.0
    %1537 = vmatpush2.msra.mxu0 0.0
    %1538 = vmatprep.subr.mxu0 0.0
    %1539 = vmatpush2.msra.mxu0 0.0
    %1540 = vmatprep.subr.mxu0 0.0
    %1541 = vmatpush2.msra.mxu0 0.0
    %1542 = vmatprep.mubr.f32.mxu0 0.0
    %1543 = vmatmul.mubr.f32.gmra.mxu0 %v1476
    %v1544 = vpop.f32.mrf.mxu0
    %v1545 = vadd.f32 %v405, %v1544
    %v1546 = vpop.f32.mrf.mxu0
    %1547 = vdwg.mxu0
    %v1549 = vcombine.high %v1545, %v1545
    %v1551 = vunpack.c.l.s4 1966171168
    %v1552 = vunpack.c.0.s8 %v1551
    %v1553 = vlaneseq
    %v1554 = vshrl.u32 %v1553, 7
    %v1555 = vsub.s32 %v1552, %v1554
    %v1556 = vrot.slane %v1545, %v1555
    %v1558 = vunpack.c.l.s4 1966171168
    %v1559 = vunpack.c.0.s8 %v1558
    %v1560 = vlaneseq
    %v1561 = vshrl.u32 %v1560, 7
    %v1562 = vsub.s32 %v1559, %v1561
    %v1563 = vrot.slane %v1549, %v1562
    %v1564 = vcombine.high %v1556, %v1556
    %v1565 = vcombine.high %v1563, %v1563
    %v1567 = vunpack.c.l.s4 1966171168
    %v1568 = vunpack.c.0.s8 %v1567
    %v1569 = vlaneseq
    %v1570 = vshrl.u32 %v1569, 7
    %v1571 = vsub.s32 %v1568, %v1570
    %v1572 = vrot.slane %v1556, %v1571
    %v1574 = vunpack.c.l.s4 1966171168
    %v1575 = vunpack.c.0.s8 %v1574
    %v1576 = vlaneseq
    %v1577 = vshrl.u32 %v1576, 7
    %v1578 = vsub.s32 %v1575, %v1577
    %v1579 = vrot.slane %v1563, %v1578
    %v1581 = vunpack.c.l.s4 1966171168
    %v1582 = vunpack.c.0.s8 %v1581
    %v1583 = vlaneseq
    %v1584 = vshrl.u32 %v1583, 7
    %v1585 = vsub.s32 %v1582, %v1584
    %v1586 = vrot.slane %v1564, %v1585
    %v1588 = vunpack.c.l.s4 1966171168
    %v1589 = vunpack.c.0.s8 %v1588
    %v1590 = vlaneseq
    %v1591 = vshrl.u32 %v1590, 7
    %v1592 = vsub.s32 %v1589, %v1591
    %v1593 = vrot.slane %v1565, %v1592
    %v1594 = vcombine.high %v1572, %v1572
    %v1595 = vcombine.high %v1579, %v1579
    %v1596 = vcombine.high %v1586, %v1586
    %v1597 = vcombine.high %v1593, %v1593
    %v1598 = vlaneseq
    %v1599 = vshrl.u32 %v1598, 7
    %v1600 = vsub.s32 0, %v1599
    %v1601 = vrot.slane %v1572, %v1600
    %v1602 = vlaneseq
    %v1603 = vshrl.u32 %v1602, 7
    %v1604 = vsub.s32 0, %v1603
    %v1605 = vrot.slane %v1586, %v1604
    %v1606 = vlaneseq
    %v1607 = vshrl.u32 %v1606, 7
    %v1608 = vsub.s32 0, %v1607
    %v1609 = vrot.slane %v1594, %v1608
    %v1610 = vlaneseq
    %v1611 = vshrl.u32 %v1610, 7
    %v1612 = vsub.s32 0, %v1611
    %v1613 = vrot.slane %v1596, %v1612
    %v1614 = vlaneseq
    %v1615 = vshrl.u32 %v1614, 7
    %v1616 = vsub.s32 0, %v1615
    %v1617 = vrot.slane %v1579, %v1616
    %v1618 = vlaneseq
    %v1619 = vshrl.u32 %v1618, 7
    %v1620 = vsub.s32 0, %v1619
    %v1621 = vrot.slane %v1593, %v1620
    %v1622 = vlaneseq
    %v1623 = vshrl.u32 %v1622, 7
    %v1624 = vsub.s32 0, %v1623
    %v1625 = vrot.slane %v1595, %v1624
    %v1626 = vlaneseq
    %v1627 = vshrl.u32 %v1626, 7
    %v1628 = vsub.s32 0, %v1627
    %v1629 = vrot.slane %v1597, %v1628
    %v1638 = vadd.f32 %v262, %v1601
    %v1639 = vadd.f32 %v267, %v1605
    %v1640 = vadd.f32 %v272, %v1609
    %v1641 = vadd.f32 %v277, %v1613
    %v1642 = vadd.f32 %v282, %v1617
    %v1643 = vadd.f32 %v287, %v1621
    %v1644 = vadd.f32 %v292, %v1625
    %v1645 = vadd.f32 %v297, %v1629
    %v1646 = vtanh.pop %v1638
    %v1647 = vtanh.pop %v1639
    %v1648 = vtanh.pop %v1640
    %v1649 = vtanh.pop %v1641
    %v1650 = vtanh.pop %v1642
    %v1651 = vtanh.pop %v1643
    %v1652 = vtanh.pop %v1644
    %v1653 = vtanh.pop %v1645
    %v1654 = vmul.f32 %v1646, %v587
    %v1655 = vmul.f32 %v1647, %v587
    %v1656 = vmul.f32 %v1648, %v587
    %v1657 = vmul.f32 %v1649, %v587
    %v1658 = vmul.f32 %v1650, %v587
    %v1659 = vmul.f32 %v1651, %v587
    %v1660 = vmul.f32 %v1652, %v587
    %v1661 = vmul.f32 %v1653, %v587
    %1662 = vadd.xlane.f32.xlu0 %v1654
    %v1663 = vpop.xlane.xlu0 %1662
    %1664 = vadd.xlane.f32.xlu0 %v1655
    %v1665 = vpop.xlane.xlu0 %1664
    %1666 = vadd.xlane.f32.xlu0 %v1656
    %v1667 = vpop.xlane.xlu0 %1666
    %1668 = vadd.xlane.f32.xlu0 %v1657
    %v1669 = vpop.xlane.xlu0 %1668
    %1670 = vadd.xlane.f32.xlu0 %v1658
    %v1671 = vpop.xlane.xlu0 %1670
    %1672 = vadd.xlane.f32.xlu0 %v1659
    %v1673 = vpop.xlane.xlu0 %1672
    %1674 = vadd.xlane.f32.xlu0 %v1660
    %v1675 = vpop.xlane.xlu0 %1674
    %1676 = vadd.xlane.f32.xlu0 %v1661
    %v1677 = vpop.xlane.xlu0 %1676
    %v1678 = vadd.f32 %v1663, %v613
    %v1679 = vadd.f32 %v1665, %v613
    %v1680 = vadd.f32 %v1667, %v613
    %v1681 = vadd.f32 %v1669, %v613
    %v1682 = vadd.f32 %v1671, %v613
    %v1683 = vadd.f32 %v1673, %v613
    %v1684 = vadd.f32 %v1675, %v613
    %v1685 = vadd.f32 %v1677, %v613
    %v1694 = vlaneseq
    %v1695 = vshrl.u32 %v1694, 7
    %v1696 = vsub.s32 %v631, %v1695
    %v1697 = vrot.slane %v1678, %v1696
    %v1698 = vlaneseq
    %v1699 = vshrl.u32 %v1698, 7
    %v1700 = vsub.s32 %v631, %v1699
    %v1701 = vrot.slane %v1679, %v1700
    %v1702 = vlaneseq
    %v1703 = vshrl.u32 %v1702, 7
    %v1704 = vsub.s32 %v631, %v1703
    %v1705 = vrot.slane %v1680, %v1704
    %v1706 = vlaneseq
    %v1707 = vshrl.u32 %v1706, 7
    %v1708 = vsub.s32 %v631, %v1707
    %v1709 = vrot.slane %v1681, %v1708
    %v1710 = vlaneseq
    %v1711 = vshrl.u32 %v1710, 7
    %v1712 = vsub.s32 %v631, %v1711
    %v1713 = vrot.slane %v1682, %v1712
    %v1714 = vlaneseq
    %v1715 = vshrl.u32 %v1714, 7
    %v1716 = vsub.s32 %v631, %v1715
    %v1717 = vrot.slane %v1683, %v1716
    %v1718 = vlaneseq
    %v1719 = vshrl.u32 %v1718, 7
    %v1720 = vsub.s32 %v631, %v1719
    %v1721 = vrot.slane %v1684, %v1720
    %v1722 = vlaneseq
    %v1723 = vshrl.u32 %v1722, 7
    %v1724 = vsub.s32 %v631, %v1723
    %v1725 = vrot.slane %v1685, %v1724
    %v1726 = vsel %vm664, %v1701, %v1697
    %v1727 = vsel %vm666, %v1705, %v1726
    %v1728 = vsel %vm668, %v1709, %v1727
    %v1729 = vsel %vm670, %v1713, %v1728
    %v1730 = vsel %vm672, %v1717, %v1729
    %v1731 = vsel %vm674, %v1721, %v1730
    %v1732 = vsel %vm676, %v1725, %v1731
    %v1734 = vsel %vm679, %v1732, -inf
    %1735 = vmax.xlane.f32.xlu0 %v1734
    %v1736 = vpop.xlane.xlu0 %1735
    %v1738 = vlaneseq
    %v1739 = vshrl.u32 %v1738, 7
    %v1740 = vsub.s32 0, %v1739
    %v1741 = vrot.slane %v1736, %v1740
    %v1742 = vlaneseq
    %v1743 = vshrl.u32 %v1742, 7
    %v1744 = vsub.s32 1, %v1743
    %v1745 = vrot.slane %v1736, %v1744
    %v1746 = vlaneseq
    %v1747 = vshrl.u32 %v1746, 7
    %v1748 = vsub.s32 2, %v1747
    %v1749 = vrot.slane %v1736, %v1748
    %v1750 = vlaneseq
    %v1751 = vshrl.u32 %v1750, 7
    %v1752 = vsub.s32 3, %v1751
    %v1753 = vrot.slane %v1736, %v1752
    %v1754 = vlaneseq
    %v1755 = vshrl.u32 %v1754, 7
    %v1756 = vsub.s32 4, %v1755
    %v1757 = vrot.slane %v1736, %v1756
    %v1758 = vlaneseq
    %v1759 = vshrl.u32 %v1758, 7
    %v1760 = vsub.s32 5, %v1759
    %v1761 = vrot.slane %v1736, %v1760
    %v1762 = vlaneseq
    %v1763 = vshrl.u32 %v1762, 7
    %v1764 = vsub.s32 6, %v1763
    %v1765 = vrot.slane %v1736, %v1764
    %v1766 = vlaneseq
    %v1767 = vshrl.u32 %v1766, 7
    %v1768 = vsub.s32 7, %v1767
    %v1769 = vrot.slane %v1736, %v1768
    %v1778 = vsub.f32 %v1678, %v1741
    %v1779 = vsub.f32 %v1679, %v1745
    %v1780 = vsub.f32 %v1680, %v1749
    %v1781 = vsub.f32 %v1681, %v1753
    %v1782 = vsub.f32 %v1682, %v1757
    %v1783 = vsub.f32 %v1683, %v1761
    %v1784 = vsub.f32 %v1684, %v1765
    %v1785 = vsub.f32 %v1685, %v1769
    %v1786 = vmul.f32 %v1778, 1.442695
    %v1787 = vpow.pop %v1786
    %v1788 = vmul.f32 %v1779, 1.442695
    %v1789 = vpow.pop %v1788
    %v1790 = vmul.f32 %v1780, 1.442695
    %v1791 = vpow.pop %v1790
    %v1792 = vmul.f32 %v1781, 1.442695
    %v1793 = vpow.pop %v1792
    %v1794 = vmul.f32 %v1782, 1.442695
    %v1795 = vpow.pop %v1794
    %v1796 = vmul.f32 %v1783, 1.442695
    %v1797 = vpow.pop %v1796
    %v1798 = vmul.f32 %v1784, 1.442695
    %v1799 = vpow.pop %v1798
    %v1800 = vmul.f32 %v1785, 1.442695
    %v1801 = vpow.pop %v1800
    %1810 = vset.pattern.permute.xlu0 0
    %1811 = vperm.xlu0 %1810, %v1787
    %v1812 = vpop.permute.xlu0 %1811
    %1813 = vset.pattern.permute.xlu0 0
    %1814 = vperm.xlu0 %1813, %v1789
    %v1815 = vpop.permute.xlu0 %1814
    %1816 = vset.pattern.permute.xlu0 0
    %1817 = vperm.xlu0 %1816, %v1791
    %v1818 = vpop.permute.xlu0 %1817
    %1819 = vset.pattern.permute.xlu0 0
    %1820 = vperm.xlu0 %1819, %v1793
    %v1821 = vpop.permute.xlu0 %1820
    %1822 = vset.pattern.permute.xlu0 0
    %1823 = vperm.xlu0 %1822, %v1795
    %v1824 = vpop.permute.xlu0 %1823
    %1825 = vset.pattern.permute.xlu0 0
    %1826 = vperm.xlu0 %1825, %v1797
    %v1827 = vpop.permute.xlu0 %1826
    %1828 = vset.pattern.permute.xlu0 0
    %1829 = vperm.xlu0 %1828, %v1799
    %v1830 = vpop.permute.xlu0 %1829
    %1831 = vset.pattern.permute.xlu0 0
    %1832 = vperm.xlu0 %1831, %v1801
    %v1833 = vpop.permute.xlu0 %1832
    %v1834 = vlaneseq
    %v1835 = vshrl.u32 %v1834, 7
    %v1836 = vsub.s32 %v631, %v1835
    %v1837 = vrot.slane %v1812, %v1836
    %v1838 = vlaneseq
    %v1839 = vshrl.u32 %v1838, 7
    %v1840 = vsub.s32 %v631, %v1839
    %v1841 = vrot.slane %v1815, %v1840
    %v1842 = vlaneseq
    %v1843 = vshrl.u32 %v1842, 7
    %v1844 = vsub.s32 %v631, %v1843
    %v1845 = vrot.slane %v1818, %v1844
    %v1846 = vlaneseq
    %v1847 = vshrl.u32 %v1846, 7
    %v1848 = vsub.s32 %v631, %v1847
    %v1849 = vrot.slane %v1821, %v1848
    %v1850 = vlaneseq
    %v1851 = vshrl.u32 %v1850, 7
    %v1852 = vsub.s32 %v631, %v1851
    %v1853 = vrot.slane %v1824, %v1852
    %v1854 = vlaneseq
    %v1855 = vshrl.u32 %v1854, 7
    %v1856 = vsub.s32 %v631, %v1855
    %v1857 = vrot.slane %v1827, %v1856
    %v1858 = vlaneseq
    %v1859 = vshrl.u32 %v1858, 7
    %v1860 = vsub.s32 %v631, %v1859
    %v1861 = vrot.slane %v1830, %v1860
    %v1862 = vlaneseq
    %v1863 = vshrl.u32 %v1862, 7
    %v1864 = vsub.s32 %v631, %v1863
    %v1865 = vrot.slane %v1833, %v1864
    %v1866 = vsel %vm664, %v1841, %v1837
    %v1867 = vsel %vm666, %v1845, %v1866
    %v1868 = vsel %vm668, %v1849, %v1867
    %v1869 = vsel %vm670, %v1853, %v1868
    %v1870 = vsel %vm672, %v1857, %v1869
    %v1871 = vsel %vm674, %v1861, %v1870
    %v1872 = vsel %vm676, %v1865, %v1871
    %v1874 = vsel %vm679, %v1872, 0.0
    %1875 = vadd.xlane.f32.xlu0 %v1874
    %v1876 = vpop.xlane.xlu0 %1875
    %v1877 = vrcp.pop %v1876
    %v1879 = vlaneseq
    %v1880 = vshrl.u32 %v1879, 7
    %v1881 = vsub.s32 0, %v1880
    %v1882 = vrot.slane %v1877, %v1881
    %v1883 = vlaneseq
    %v1884 = vshrl.u32 %v1883, 7
    %v1885 = vsub.s32 1, %v1884
    %v1886 = vrot.slane %v1877, %v1885
    %v1887 = vlaneseq
    %v1888 = vshrl.u32 %v1887, 7
    %v1889 = vsub.s32 2, %v1888
    %v1890 = vrot.slane %v1877, %v1889
    %v1891 = vlaneseq
    %v1892 = vshrl.u32 %v1891, 7
    %v1893 = vsub.s32 3, %v1892
    %v1894 = vrot.slane %v1877, %v1893
    %v1895 = vlaneseq
    %v1896 = vshrl.u32 %v1895, 7
    %v1897 = vsub.s32 4, %v1896
    %v1898 = vrot.slane %v1877, %v1897
    %v1899 = vlaneseq
    %v1900 = vshrl.u32 %v1899, 7
    %v1901 = vsub.s32 5, %v1900
    %v1902 = vrot.slane %v1877, %v1901
    %v1903 = vlaneseq
    %v1904 = vshrl.u32 %v1903, 7
    %v1905 = vsub.s32 6, %v1904
    %v1906 = vrot.slane %v1877, %v1905
    %v1907 = vlaneseq
    %v1908 = vshrl.u32 %v1907, 7
    %v1909 = vsub.s32 7, %v1908
    %v1910 = vrot.slane %v1877, %v1909
    %v1919 = vmul.f32 %v1787, %v1882
    %v1920 = vmul.f32 %v1789, %v1886
    %v1921 = vmul.f32 %v1791, %v1890
    %v1922 = vmul.f32 %v1793, %v1894
    %v1923 = vmul.f32 %v1795, %v1898
    %v1924 = vmul.f32 %v1797, %v1902
    %v1925 = vmul.f32 %v1799, %v1906
    %v1926 = vmul.f32 %v1801, %v1910
    %1928 = vset.pattern.permute.xlu0 0
    %1929 = vperm.xlu0 %1928, %v1919
    %v1930 = vpop.permute.xlu0 %1929
    %1933 = vset.pattern.permute.xlu0 0
    %1934 = vperm.xlu0 %1933, %v1920
    %v1935 = vpop.permute.xlu0 %1934
    %1938 = vset.pattern.permute.xlu0 0
    %1939 = vperm.xlu0 %1938, %v1921
    %v1940 = vpop.permute.xlu0 %1939
    %1943 = vset.pattern.permute.xlu0 0
    %1944 = vperm.xlu0 %1943, %v1922
    %v1945 = vpop.permute.xlu0 %1944
    %1948 = vset.pattern.permute.xlu0 0
    %1949 = vperm.xlu0 %1948, %v1923
    %v1950 = vpop.permute.xlu0 %1949
    %1953 = vset.pattern.permute.xlu0 0
    %1954 = vperm.xlu0 %1953, %v1924
    %v1955 = vpop.permute.xlu0 %1954
    %1958 = vset.pattern.permute.xlu0 0
    %1959 = vperm.xlu0 %1958, %v1925
    %v1960 = vpop.permute.xlu0 %1959
    %1963 = vset.pattern.permute.xlu0 0
    %1964 = vperm.xlu0 %1963, %v1926
    %v1965 = vpop.permute.xlu0 %1964
    %v1967 = vmul.f32 %v1930, %v153
    %v1968 = vmul.f32 %v1935, %v154
    %v1969 = vmul.f32 %v1940, %v155
    %v1970 = vmul.f32 %v1945, %v156
    %v1971 = vmul.f32 %v1950, %v157
    %v1972 = vmul.f32 %v1955, %v158
    %v1973 = vmul.f32 %v1960, %v159
    %v1974 = vmul.f32 %v1965, %v160
    %v1975 = vsel %vm170, %v1967, 0.0
    %v1976 = vrot.slane %v1975, 4
    %v1977 = vadd.f32 %v1975, %v1976
    %v1978 = vrot.slane %v1977, 2
    %v1979 = vadd.f32 %v1977, %v1978
    %v1980 = vrot.slane %v1979, 1
    %v1981 = vadd.f32 %v1979, %v1980
    %v1982 = vsel %vm170, %v1968, 0.0
    %v1983 = vrot.slane %v1982, 4
    %v1984 = vadd.f32 %v1982, %v1983
    %v1985 = vrot.slane %v1984, 2
    %v1986 = vadd.f32 %v1984, %v1985
    %v1987 = vrot.slane %v1986, 1
    %v1988 = vadd.f32 %v1986, %v1987
    %v1989 = vsel %vm170, %v1969, 0.0
    %v1990 = vrot.slane %v1989, 4
    %v1991 = vadd.f32 %v1989, %v1990
    %v1992 = vrot.slane %v1991, 2
    %v1993 = vadd.f32 %v1991, %v1992
    %v1994 = vrot.slane %v1993, 1
    %v1995 = vadd.f32 %v1993, %v1994
    %v1996 = vsel %vm170, %v1970, 0.0
    %v1997 = vrot.slane %v1996, 4
    %v1998 = vadd.f32 %v1996, %v1997
    %v1999 = vrot.slane %v1998, 2
    %v2000 = vadd.f32 %v1998, %v1999
    %v2001 = vrot.slane %v2000, 1
    %v2002 = vadd.f32 %v2000, %v2001
    %v2003 = vsel %vm170, %v1971, 0.0
    %v2004 = vrot.slane %v2003, 4
    %v2005 = vadd.f32 %v2003, %v2004
    %v2006 = vrot.slane %v2005, 2
    %v2007 = vadd.f32 %v2005, %v2006
    %v2008 = vrot.slane %v2007, 1
    %v2009 = vadd.f32 %v2007, %v2008
    %v2010 = vsel %vm170, %v1972, 0.0
    %v2011 = vrot.slane %v2010, 4
    %v2012 = vadd.f32 %v2010, %v2011
    %v2013 = vrot.slane %v2012, 2
    %v2014 = vadd.f32 %v2012, %v2013
    %v2015 = vrot.slane %v2014, 1
    %v2016 = vadd.f32 %v2014, %v2015
    %v2017 = vsel %vm170, %v1973, 0.0
    %v2018 = vrot.slane %v2017, 4
    %v2019 = vadd.f32 %v2017, %v2018
    %v2020 = vrot.slane %v2019, 2
    %v2021 = vadd.f32 %v2019, %v2020
    %v2022 = vrot.slane %v2021, 1
    %v2023 = vadd.f32 %v2021, %v2022
    %v2024 = vsel %vm170, %v1974, 0.0
    %v2025 = vrot.slane %v2024, 4
    %v2026 = vadd.f32 %v2024, %v2025
    %v2027 = vrot.slane %v2026, 2
    %v2028 = vadd.f32 %v2026, %v2027
    %v2029 = vrot.slane %v2028, 1
    %v2030 = vadd.f32 %v2028, %v2029
    %s2031 = scalar_lea.vmem [#allocation3], 8
    %v2032 = vld [vmem:[%s2031] sm:$0xff]
    %v2041 = vsel %vm664, %v1988, %v1981
    %v2042 = vsel %vm666, %v1995, %v2041
    %v2043 = vsel %vm668, %v2002, %v2042
    %v2044 = vsel %vm670, %v2009, %v2043
    %v2045 = vsel %vm672, %v2016, %v2044
    %v2046 = vsel %vm674, %v2023, %v2045
    %v2047 = vsel %vm676, %v2030, %v2046
    %v2048 = vsel %vm170, %v2047, 0
    %2050 = vmatprep.subr.mxu0 0.0
    %2051 = vmatpush1.msra.mxu0 0.0
    %2052 = vmatprep.subr.mxu0 0.0
    %2053 = vmatpush1.msra.mxu0 0.0
    %2054 = vmatprep.subr.mxu0 0.0
    %2055 = vmatpush1.msra.mxu0 0.0
    %2056 = vmatprep.subr.mxu0 0.0
    %2057 = vmatpush1.msra.mxu0 0.0
    %2058 = vmatprep.subr.mxu0 0.0
    %2059 = vmatpush1.msra.mxu0 0.0
    %2060 = vmatprep.subr.mxu0 0.0
    %2061 = vmatpush1.msra.mxu0 0.0
    %2062 = vmatprep.subr.mxu0 0.0
    %2063 = vmatpush1.msra.mxu0 0.0
    %2064 = vmatprep.subr.mxu0 0.0
    %2065 = vmatpush1.msra.mxu0 0.0
    %2066 = vmatprep.subr.mxu0 0.0
    %2067 = vmatpush1.msra.mxu0 0.0
    %2068 = vmatprep.subr.mxu0 0.0
    %2069 = vmatpush1.msra.mxu0 0.0
    %2070 = vmatprep.subr.mxu0 0.0
    %2071 = vmatpush1.msra.mxu0 0.0
    %2072 = vmatprep.subr.mxu0 0.0
    %2073 = vmatpush1.msra.mxu0 0.0
    %2074 = vmatprep.subr.mxu0 0.0
    %2075 = vmatpush1.msra.mxu0 0.0
    %2076 = vmatprep.subr.mxu0 0.0
    %2077 = vmatpush1.msra.mxu0 0.0
    %2078 = vmatprep.subr.mxu0 %v332
    %2079 = vmatpush1.msra.mxu0 %v331
    %2080 = vmatprep.subr.mxu0 %v328
    %2081 = vmatpush1.msra.mxu0 %v327
    %2082 = vmatprep.subr.mxu0 0.0
    %2083 = vmatpush2.msra.mxu0 0.0
    %2084 = vmatprep.subr.mxu0 0.0
    %2085 = vmatpush2.msra.mxu0 0.0
    %2086 = vmatprep.subr.mxu0 0.0
    %2087 = vmatpush2.msra.mxu0 0.0
    %2088 = vmatprep.subr.mxu0 0.0
    %2089 = vmatpush2.msra.mxu0 0.0
    %2090 = vmatprep.subr.mxu0 0.0
    %2091 = vmatpush2.msra.mxu0 0.0
    %2092 = vmatprep.subr.mxu0 0.0
    %2093 = vmatpush2.msra.mxu0 0.0
    %2094 = vmatprep.subr.mxu0 0.0
    %2095 = vmatpush2.msra.mxu0 0.0
    %2096 = vmatprep.subr.mxu0 0.0
    %2097 = vmatpush2.msra.mxu0 0.0
    %2098 = vmatprep.subr.mxu0 0.0
    %2099 = vmatpush2.msra.mxu0 0.0
    %2100 = vmatprep.subr.mxu0 0.0
    %2101 = vmatpush2.msra.mxu0 0.0
    %2102 = vmatprep.subr.mxu0 0.0
    %2103 = vmatpush2.msra.mxu0 0.0
    %2104 = vmatprep.subr.mxu0 0.0
    %2105 = vmatpush2.msra.mxu0 0.0
    %2106 = vmatprep.subr.mxu0 0.0
    %2107 = vmatpush2.msra.mxu0 0.0
    %2108 = vmatprep.subr.mxu0 0.0
    %2109 = vmatpush2.msra.mxu0 0.0
    %2110 = vmatprep.subr.mxu0 0.0
    %2111 = vmatpush2.msra.mxu0 0.0
    %2112 = vmatprep.subr.mxu0 0.0
    %2113 = vmatpush2.msra.mxu0 0.0
    %2114 = vmatprep.mubr.f32.mxu0 0.0
    %2115 = vmatmul.mubr.f32.gmra.mxu0 %v2048
    %v2116 = vpop.f32.mrf.mxu0
    %v2117 = vadd.f32 0.0, %v2116
    %v2118 = vpop.f32.mrf.mxu0
    %v2119 = vadd.f32 0.0, %v2118
    %2120 = vdwg.mxu0
    %2121 = vmatprep.subr.mxu0 0.0
    %2122 = vmatpush1.msra.mxu0 0.0
    %2123 = vmatprep.subr.mxu0 0.0
    %2124 = vmatpush1.msra.mxu0 0.0
    %2125 = vmatprep.subr.mxu0 0.0
    %2126 = vmatpush1.msra.mxu0 0.0
    %2127 = vmatprep.subr.mxu0 0.0
    %2128 = vmatpush1.msra.mxu0 0.0
    %2129 = vmatprep.subr.mxu0 0.0
    %2130 = vmatpush1.msra.mxu0 0.0
    %2131 = vmatprep.subr.mxu0 0.0
    %2132 = vmatpush1.msra.mxu0 0.0
    %2133 = vmatprep.subr.mxu0 0.0
    %2134 = vmatpush1.msra.mxu0 0.0
    %2135 = vmatprep.subr.mxu0 0.0
    %2136 = vmatpush1.msra.mxu0 0.0
    %2137 = vmatprep.subr.mxu0 0.0
    %2138 = vmatpush1.msra.mxu0 0.0
    %2139 = vmatprep.subr.mxu0 0.0
    %2140 = vmatpush1.msra.mxu0 0.0
    %2141 = vmatprep.subr.mxu0 0.0
    %2142 = vmatpush1.msra.mxu0 0.0
    %2143 = vmatprep.subr.mxu0 0.0
    %2144 = vmatpush1.msra.mxu0 0.0
    %2145 = vmatprep.subr.mxu0 0.0
    %2146 = vmatpush1.msra.mxu0 0.0
    %2147 = vmatprep.subr.mxu0 0.0
    %2148 = vmatpush1.msra.mxu0 0.0
    %2149 = vmatprep.subr.mxu0 %v334
    %2150 = vmatpush1.msra.mxu0 %v333
    %2151 = vmatprep.subr.mxu0 %v330
    %2152 = vmatpush1.msra.mxu0 %v329
    %2153 = vmatprep.subr.mxu0 0.0
    %2154 = vmatpush2.msra.mxu0 0.0
    %2155 = vmatprep.subr.mxu0 0.0
    %2156 = vmatpush2.msra.mxu0 0.0
    %2157 = vmatprep.subr.mxu0 0.0
    %2158 = vmatpush2.msra.mxu0 0.0
    %2159 = vmatprep.subr.mxu0 0.0
    %2160 = vmatpush2.msra.mxu0 0.0
    %2161 = vmatprep.subr.mxu0 0.0
    %2162 = vmatpush2.msra.mxu0 0.0
    %2163 = vmatprep.subr.mxu0 0.0
    %2164 = vmatpush2.msra.mxu0 0.0
    %2165 = vmatprep.subr.mxu0 0.0
    %2166 = vmatpush2.msra.mxu0 0.0
    %2167 = vmatprep.subr.mxu0 0.0
    %2168 = vmatpush2.msra.mxu0 0.0
    %2169 = vmatprep.subr.mxu0 0.0
    %2170 = vmatpush2.msra.mxu0 0.0
    %2171 = vmatprep.subr.mxu0 0.0
    %2172 = vmatpush2.msra.mxu0 0.0
    %2173 = vmatprep.subr.mxu0 0.0
    %2174 = vmatpush2.msra.mxu0 0.0
    %2175 = vmatprep.subr.mxu0 0.0
    %2176 = vmatpush2.msra.mxu0 0.0
    %2177 = vmatprep.subr.mxu0 0.0
    %2178 = vmatpush2.msra.mxu0 0.0
    %2179 = vmatprep.subr.mxu0 0.0
    %2180 = vmatpush2.msra.mxu0 0.0
    %2181 = vmatprep.subr.mxu0 0.0
    %2182 = vmatpush2.msra.mxu0 0.0
    %2183 = vmatprep.subr.mxu0 0.0
    %2184 = vmatpush2.msra.mxu0 0.0
    %2185 = vmatprep.mubr.f32.mxu0 0.0
    %2186 = vmatmul.mubr.f32.gmra.mxu0 %v2048
    %v2187 = vpop.f32.mrf.mxu0
    %v2188 = vadd.f32 0.0, %v2187
    %v2189 = vpop.f32.mrf.mxu0
    %v2190 = vadd.f32 0.0, %v2189
    %2191 = vdwg.mxu0
    %v2193 = vsel %vm170, %v2032, 0
    %2195 = vmatprep.subr.mxu0 0.0
    %2196 = vmatpush1.msra.mxu0 0.0
    %2197 = vmatprep.subr.mxu0 0.0
    %2198 = vmatpush1.msra.mxu0 0.0
    %2199 = vmatprep.subr.mxu0 0.0
    %2200 = vmatpush1.msra.mxu0 0.0
    %2201 = vmatprep.subr.mxu0 0.0
    %2202 = vmatpush1.msra.mxu0 0.0
    %2203 = vmatprep.subr.mxu0 0.0
    %2204 = vmatpush1.msra.mxu0 0.0
    %2205 = vmatprep.subr.mxu0 0.0
    %2206 = vmatpush1.msra.mxu0 0.0
    %2207 = vmatprep.subr.mxu0 0.0
    %2208 = vmatpush1.msra.mxu0 0.0
    %2209 = vmatprep.subr.mxu0 0.0
    %2210 = vmatpush1.msra.mxu0 0.0
    %2211 = vmatprep.subr.mxu0 0.0
    %2212 = vmatpush1.msra.mxu0 0.0
    %2213 = vmatprep.subr.mxu0 0.0
    %2214 = vmatpush1.msra.mxu0 0.0
    %2215 = vmatprep.subr.mxu0 0.0
    %2216 = vmatpush1.msra.mxu0 0.0
    %2217 = vmatprep.subr.mxu0 0.0
    %2218 = vmatpush1.msra.mxu0 0.0
    %2219 = vmatprep.subr.mxu0 0.0
    %2220 = vmatpush1.msra.mxu0 0.0
    %2221 = vmatprep.subr.mxu0 0.0
    %2222 = vmatpush1.msra.mxu0 0.0
    %2223 = vmatprep.subr.mxu0 %v324
    %2224 = vmatpush1.msra.mxu0 %v323
    %2225 = vmatprep.subr.mxu0 %v320
    %2226 = vmatpush1.msra.mxu0 %v319
    %2227 = vmatprep.subr.mxu0 0.0
    %2228 = vmatpush2.msra.mxu0 0.0
    %2229 = vmatprep.subr.mxu0 0.0
    %2230 = vmatpush2.msra.mxu0 0.0
    %2231 = vmatprep.subr.mxu0 0.0
    %2232 = vmatpush2.msra.mxu0 0.0
    %2233 = vmatprep.subr.mxu0 0.0
    %2234 = vmatpush2.msra.mxu0 0.0
    %2235 = vmatprep.subr.mxu0 0.0
    %2236 = vmatpush2.msra.mxu0 0.0
    %2237 = vmatprep.subr.mxu0 0.0
    %2238 = vmatpush2.msra.mxu0 0.0
    %2239 = vmatprep.subr.mxu0 0.0
    %2240 = vmatpush2.msra.mxu0 0.0
    %2241 = vmatprep.subr.mxu0 0.0
    %2242 = vmatpush2.msra.mxu0 0.0
    %2243 = vmatprep.subr.mxu0 0.0
    %2244 = vmatpush2.msra.mxu0 0.0
    %2245 = vmatprep.subr.mxu0 0.0
    %2246 = vmatpush2.msra.mxu0 0.0
    %2247 = vmatprep.subr.mxu0 0.0
    %2248 = vmatpush2.msra.mxu0 0.0
    %2249 = vmatprep.subr.mxu0 0.0
    %2250 = vmatpush2.msra.mxu0 0.0
    %2251 = vmatprep.subr.mxu0 0.0
    %2252 = vmatpush2.msra.mxu0 0.0
    %2253 = vmatprep.subr.mxu0 0.0
    %2254 = vmatpush2.msra.mxu0 0.0
    %2255 = vmatprep.subr.mxu0 0.0
    %2256 = vmatpush2.msra.mxu0 0.0
    %2257 = vmatprep.subr.mxu0 0.0
    %2258 = vmatpush2.msra.mxu0 0.0
    %2259 = vmatprep.mubr.f32.mxu0 0.0
    %2260 = vmatmul.mubr.f32.gmra.mxu0 %v2193
    %v2261 = vpop.f32.mrf.mxu0
    %v2262 = vadd.f32 %v2117, %v2261
    %v2263 = vpop.f32.mrf.mxu0
    %v2264 = vadd.f32 %v2119, %v2263
    %2265 = vdwg.mxu0
    %2266 = vmatprep.subr.mxu0 0.0
    %2267 = vmatpush1.msra.mxu0 0.0
    %2268 = vmatprep.subr.mxu0 0.0
    %2269 = vmatpush1.msra.mxu0 0.0
    %2270 = vmatprep.subr.mxu0 0.0
    %2271 = vmatpush1.msra.mxu0 0.0
    %2272 = vmatprep.subr.mxu0 0.0
    %2273 = vmatpush1.msra.mxu0 0.0
    %2274 = vmatprep.subr.mxu0 0.0
    %2275 = vmatpush1.msra.mxu0 0.0
    %2276 = vmatprep.subr.mxu0 0.0
    %2277 = vmatpush1.msra.mxu0 0.0
    %2278 = vmatprep.subr.mxu0 0.0
    %2279 = vmatpush1.msra.mxu0 0.0
    %2280 = vmatprep.subr.mxu0 0.0
    %2281 = vmatpush1.msra.mxu0 0.0
    %2282 = vmatprep.subr.mxu0 0.0
    %2283 = vmatpush1.msra.mxu0 0.0
    %2284 = vmatprep.subr.mxu0 0.0
    %2285 = vmatpush1.msra.mxu0 0.0
    %2286 = vmatprep.subr.mxu0 0.0
    %2287 = vmatpush1.msra.mxu0 0.0
    %2288 = vmatprep.subr.mxu0 0.0
    %2289 = vmatpush1.msra.mxu0 0.0
    %2290 = vmatprep.subr.mxu0 0.0
    %2291 = vmatpush1.msra.mxu0 0.0
    %2292 = vmatprep.subr.mxu0 0.0
    %2293 = vmatpush1.msra.mxu0 0.0
    %2294 = vmatprep.subr.mxu0 %v326
    %2295 = vmatpush1.msra.mxu0 %v325
    %2296 = vmatprep.subr.mxu0 %v322
    %2297 = vmatpush1.msra.mxu0 %v321
    %2298 = vmatprep.subr.mxu0 0.0
    %2299 = vmatpush2.msra.mxu0 0.0
    %2300 = vmatprep.subr.mxu0 0.0
    %2301 = vmatpush2.msra.mxu0 0.0
    %2302 = vmatprep.subr.mxu0 0.0
    %2303 = vmatpush2.msra.mxu0 0.0
    %2304 = vmatprep.subr.mxu0 0.0
    %2305 = vmatpush2.msra.mxu0 0.0
    %2306 = vmatprep.subr.mxu0 0.0
    %2307 = vmatpush2.msra.mxu0 0.0
    %2308 = vmatprep.subr.mxu0 0.0
    %2309 = vmatpush2.msra.mxu0 0.0
    %2310 = vmatprep.subr.mxu0 0.0
    %2311 = vmatpush2.msra.mxu0 0.0
    %2312 = vmatprep.subr.mxu0 0.0
    %2313 = vmatpush2.msra.mxu0 0.0
    %2314 = vmatprep.subr.mxu0 0.0
    %2315 = vmatpush2.msra.mxu0 0.0
    %2316 = vmatprep.subr.mxu0 0.0
    %2317 = vmatpush2.msra.mxu0 0.0
    %2318 = vmatprep.subr.mxu0 0.0
    %2319 = vmatpush2.msra.mxu0 0.0
    %2320 = vmatprep.subr.mxu0 0.0
    %2321 = vmatpush2.msra.mxu0 0.0
    %2322 = vmatprep.subr.mxu0 0.0
    %2323 = vmatpush2.msra.mxu0 0.0
    %2324 = vmatprep.subr.mxu0 0.0
    %2325 = vmatpush2.msra.mxu0 0.0
    %2326 = vmatprep.subr.mxu0 0.0
    %2327 = vmatpush2.msra.mxu0 0.0
    %2328 = vmatprep.subr.mxu0 0.0
    %2329 = vmatpush2.msra.mxu0 0.0
    %2330 = vmatprep.mubr.f32.mxu0 0.0
    %2331 = vmatmul.mubr.f32.gmra.mxu0 %v2193
    %v2332 = vpop.f32.mrf.mxu0
    %v2333 = vadd.f32 %v2188, %v2332
    %v2334 = vpop.f32.mrf.mxu0
    %v2335 = vadd.f32 %v2190, %v2334
    %2336 = vdwg.mxu0
    %2337 = vmatprep.subr.mxu0 %v396
    %2338 = vmatpush1.msra.mxu0 %v395
    %2339 = vmatprep.subr.mxu0 %v392
    %2340 = vmatpush1.msra.mxu0 %v391
    %2341 = vmatprep.subr.mxu0 %v388
    %2342 = vmatpush1.msra.mxu0 %v387
    %2343 = vmatprep.subr.mxu0 %v384
    %2344 = vmatpush1.msra.mxu0 %v383
    %2345 = vmatprep.subr.mxu0 %v380
    %2346 = vmatpush1.msra.mxu0 %v379
    %2347 = vmatprep.subr.mxu0 %v376
    %2348 = vmatpush1.msra.mxu0 %v375
    %2349 = vmatprep.subr.mxu0 %v372
    %2350 = vmatpush1.msra.mxu0 %v371
    %2351 = vmatprep.subr.mxu0 %v368
    %2352 = vmatpush1.msra.mxu0 %v367
    %2353 = vmatprep.subr.mxu0 %v364
    %2354 = vmatpush1.msra.mxu0 %v363
    %2355 = vmatprep.subr.mxu0 %v360
    %2356 = vmatpush1.msra.mxu0 %v359
    %2357 = vmatprep.subr.mxu0 %v356
    %2358 = vmatpush1.msra.mxu0 %v355
    %2359 = vmatprep.subr.mxu0 %v352
    %2360 = vmatpush1.msra.mxu0 %v351
    %2361 = vmatprep.subr.mxu0 %v348
    %2362 = vmatpush1.msra.mxu0 %v347
    %2363 = vmatprep.subr.mxu0 %v344
    %2364 = vmatpush1.msra.mxu0 %v343
    %2365 = vmatprep.subr.mxu0 %v340
    %2366 = vmatpush1.msra.mxu0 %v339
    %2367 = vmatprep.subr.mxu0 %v336
    %2368 = vmatpush1.msra.mxu0 %v335
    %2369 = vmatprep.subr.mxu0 0.0
    %2370 = vmatpush2.msra.mxu0 0.0
    %2371 = vmatprep.subr.mxu0 0.0
    %2372 = vmatpush2.msra.mxu0 0.0
    %2373 = vmatprep.subr.mxu0 0.0
    %2374 = vmatpush2.msra.mxu0 0.0
    %2375 = vmatprep.subr.mxu0 0.0
    %2376 = vmatpush2.msra.mxu0 0.0
    %2377 = vmatprep.subr.mxu0 0.0
    %2378 = vmatpush2.msra.mxu0 0.0
    %2379 = vmatprep.subr.mxu0 0.0
    %2380 = vmatpush2.msra.mxu0 0.0
    %2381 = vmatprep.subr.mxu0 0.0
    %2382 = vmatpush2.msra.mxu0 0.0
    %2383 = vmatprep.subr.mxu0 0.0
    %2384 = vmatpush2.msra.mxu0 0.0
    %2385 = vmatprep.subr.mxu0 0.0
    %2386 = vmatpush2.msra.mxu0 0.0
    %2387 = vmatprep.subr.mxu0 0.0
    %2388 = vmatpush2.msra.mxu0 0.0
    %2389 = vmatprep.subr.mxu0 0.0
    %2390 = vmatpush2.msra.mxu0 0.0
    %2391 = vmatprep.subr.mxu0 0.0
    %2392 = vmatpush2.msra.mxu0 0.0
    %2393 = vmatprep.subr.mxu0 0.0
    %2394 = vmatpush2.msra.mxu0 0.0
    %2395 = vmatprep.subr.mxu0 0.0
    %2396 = vmatpush2.msra.mxu0 0.0
    %2397 = vmatprep.subr.mxu0 0.0
    %2398 = vmatpush2.msra.mxu0 0.0
    %2399 = vmatprep.subr.mxu0 0.0
    %2400 = vmatpush2.msra.mxu0 0.0
    %2401 = vmatprep.mubr.f32.mxu0 0.0
    %2402 = vmatmul.mubr.f32.gmra.mxu0 %v1476
    %v2403 = vpop.f32.mrf.mxu0
    %v2404 = vadd.f32 0.0, %v2403
    %v2405 = vpop.f32.mrf.mxu0
    %v2406 = vadd.f32 0.0, %v2405
    %2407 = vdwg.mxu0
    %2408 = vmatprep.subr.mxu0 %v398
    %2409 = vmatpush1.msra.mxu0 %v397
    %2410 = vmatprep.subr.mxu0 %v394
    %2411 = vmatpush1.msra.mxu0 %v393
    %2412 = vmatprep.subr.mxu0 %v390
    %2413 = vmatpush1.msra.mxu0 %v389
    %2414 = vmatprep.subr.mxu0 %v386
    %2415 = vmatpush1.msra.mxu0 %v385
    %2416 = vmatprep.subr.mxu0 %v382
    %2417 = vmatpush1.msra.mxu0 %v381
    %2418 = vmatprep.subr.mxu0 %v378
    %2419 = vmatpush1.msra.mxu0 %v377
    %2420 = vmatprep.subr.mxu0 %v374
    %2421 = vmatpush1.msra.mxu0 %v373
    %2422 = vmatprep.subr.mxu0 %v370
    %2423 = vmatpush1.msra.mxu0 %v369
    %2424 = vmatprep.subr.mxu0 %v366
    %2425 = vmatpush1.msra.mxu0 %v365
    %2426 = vmatprep.subr.mxu0 %v362
    %2427 = vmatpush1.msra.mxu0 %v361
    %2428 = vmatprep.subr.mxu0 %v358
    %2429 = vmatpush1.msra.mxu0 %v357
    %2430 = vmatprep.subr.mxu0 %v354
    %2431 = vmatpush1.msra.mxu0 %v353
    %2432 = vmatprep.subr.mxu0 %v350
    %2433 = vmatpush1.msra.mxu0 %v349
    %2434 = vmatprep.subr.mxu0 %v346
    %2435 = vmatpush1.msra.mxu0 %v345
    %2436 = vmatprep.subr.mxu0 %v342
    %2437 = vmatpush1.msra.mxu0 %v341
    %2438 = vmatprep.subr.mxu0 %v338
    %2439 = vmatpush1.msra.mxu0 %v337
    %2440 = vmatprep.subr.mxu0 0.0
    %2441 = vmatpush2.msra.mxu0 0.0
    %2442 = vmatprep.subr.mxu0 0.0
    %2443 = vmatpush2.msra.mxu0 0.0
    %2444 = vmatprep.subr.mxu0 0.0
    %2445 = vmatpush2.msra.mxu0 0.0
    %2446 = vmatprep.subr.mxu0 0.0
    %2447 = vmatpush2.msra.mxu0 0.0
    %2448 = vmatprep.subr.mxu0 0.0
    %2449 = vmatpush2.msra.mxu0 0.0
    %2450 = vmatprep.subr.mxu0 0.0
    %2451 = vmatpush2.msra.mxu0 0.0
    %2452 = vmatprep.subr.mxu0 0.0
    %2453 = vmatpush2.msra.mxu0 0.0
    %2454 = vmatprep.subr.mxu0 0.0
    %2455 = vmatpush2.msra.mxu0 0.0
    %2456 = vmatprep.subr.mxu0 0.0
    %2457 = vmatpush2.msra.mxu0 0.0
    %2458 = vmatprep.subr.mxu0 0.0
    %2459 = vmatpush2.msra.mxu0 0.0
    %2460 = vmatprep.subr.mxu0 0.0
    %2461 = vmatpush2.msra.mxu0 0.0
    %2462 = vmatprep.subr.mxu0 0.0
    %2463 = vmatpush2.msra.mxu0 0.0
    %2464 = vmatprep.subr.mxu0 0.0
    %2465 = vmatpush2.msra.mxu0 0.0
    %2466 = vmatprep.subr.mxu0 0.0
    %2467 = vmatpush2.msra.mxu0 0.0
    %2468 = vmatprep.subr.mxu0 0.0
    %2469 = vmatpush2.msra.mxu0 0.0
    %2470 = vmatprep.subr.mxu0 0.0
    %2471 = vmatpush2.msra.mxu0 0.0
    %2472 = vmatprep.mubr.f32.mxu0 0.0
    %2473 = vmatmul.mubr.f32.gmra.mxu0 %v1476
    %v2474 = vpop.f32.mrf.mxu0
    %v2475 = vadd.f32 0.0, %v2474
    %v2476 = vpop.f32.mrf.mxu0
    %v2477 = vadd.f32 0.0, %v2476
    %2478 = vdwg.mxu0
    %v2479 = vadd.f32 %v2262, %v2404
    %v2480 = vadd.f32 %v2264, %v2406
    %v2481 = vadd.f32 %v2333, %v2475
    %v2482 = vadd.f32 %v2335, %v2477
    %v2483 = vadd.f32 %v2479, %v1432
    %v2484 = vadd.f32 %v2480, %v1436
    %v2485 = vadd.f32 %v2481, %v1440
    %v2486 = vadd.f32 %v2482, %v1444
    %v2487 = vxor.u32 %v2483, 2147483648
    %v2488 = vmul.f32 %v2487, 1.442695
    %v2489 = vpow.pop %v2488
    %v2490 = vadd.f32 %v2489, 1.0
    %v2491 = vrcp.pop %v2490
    %v2492 = vmul.f32 1.0, %v2491
    %v2493 = vxor.u32 %v2484, 2147483648
    %v2494 = vmul.f32 %v2493, 1.442695
    %v2495 = vpow.pop %v2494
    %v2496 = vadd.f32 %v2495, 1.0
    %v2497 = vrcp.pop %v2496
    %v2498 = vmul.f32 1.0, %v2497
    %v2499 = vtanh.pop %v2485
    %v2500 = vxor.u32 %v2486, 2147483648
    %v2501 = vmul.f32 %v2500, 1.442695
    %v2502 = vpow.pop %v2501
    %v2503 = vadd.f32 %v2502, 1.0
    %v2504 = vrcp.pop %v2503
    %v2505 = vmul.f32 1.0, %v2504
    %v2506 = vmul.f32 %v2498, %v1474
    %v2507 = vmul.f32 %v2492, %v2499
    %v2508 = vadd.f32 %v2506, %v2507
    %v2509 = vtanh.pop %v2508
    %v2510 = vmul.f32 %v2505, %v2509
    %s2511 = scalar_lea.vmem [#allocation17], 8
    %2512 = vst [vmem:[%s2511] sm:$0xff] %v2510
    %2513 = vmatprep.subr.mxu0 0.0
    %2514 = vmatpush1.msra.mxu0 %v315
    %2515 = vmatprep.subr.mxu0 0.0
    %2516 = vmatpush1.msra.mxu0 %v314
    %2517 = vmatprep.subr.mxu0 0.0
    %2518 = vmatpush1.msra.mxu0 %v313
    %2519 = vmatprep.subr.mxu0 0.0
    %2520 = vmatpush1.msra.mxu0 %v312
    %2521 = vmatprep.subr.mxu0 0.0
    %2522 = vmatpush1.msra.mxu0 %v311
    %2523 = vmatprep.subr.mxu0 0.0
    %2524 = vmatpush1.msra.mxu0 %v310
    %2525 = vmatprep.subr.mxu0 0.0
    %2526 = vmatpush1.msra.mxu0 %v309
    %2527 = vmatprep.subr.mxu0 0.0
    %2528 = vmatpush1.msra.mxu0 %v308
    %2529 = vmatprep.subr.mxu0 0.0
    %2530 = vmatpush1.msra.mxu0 %v307
    %2531 = vmatprep.subr.mxu0 0.0
    %2532 = vmatpush1.msra.mxu0 %v306
    %2533 = vmatprep.subr.mxu0 0.0
    %2534 = vmatpush1.msra.mxu0 %v305
    %2535 = vmatprep.subr.mxu0 0.0
    %2536 = vmatpush1.msra.mxu0 %v304
    %2537 = vmatprep.subr.mxu0 0.0
    %2538 = vmatpush1.msra.mxu0 %v303
    %2539 = vmatprep.subr.mxu0 0.0
    %2540 = vmatpush1.msra.mxu0 %v302
    %2541 = vmatprep.subr.mxu0 0.0
    %2542 = vmatpush1.msra.mxu0 %v301
    %2543 = vmatprep.subr.mxu0 0.0
    %2544 = vmatpush1.msra.mxu0 %v300
    %2545 = vmatprep.subr.mxu0 0.0
    %2546 = vmatpush2.msra.mxu0 0.0
    %2547 = vmatprep.subr.mxu0 0.0
    %2548 = vmatpush2.msra.mxu0 0.0
    %2549 = vmatprep.subr.mxu0 0.0
    %2550 = vmatpush2.msra.mxu0 0.0
    %2551 = vmatprep.subr.mxu0 0.0
    %2552 = vmatpush2.msra.mxu0 0.0
    %2553 = vmatprep.subr.mxu0 0.0
    %2554 = vmatpush2.msra.mxu0 0.0
    %2555 = vmatprep.subr.mxu0 0.0
    %2556 = vmatpush2.msra.mxu0 0.0
    %2557 = vmatprep.subr.mxu0 0.0
    %2558 = vmatpush2.msra.mxu0 0.0
    %2559 = vmatprep.subr.mxu0 0.0
    %2560 = vmatpush2.msra.mxu0 0.0
    %2561 = vmatprep.subr.mxu0 0.0
    %2562 = vmatpush2.msra.mxu0 0.0
    %2563 = vmatprep.subr.mxu0 0.0
    %2564 = vmatpush2.msra.mxu0 0.0
    %2565 = vmatprep.subr.mxu0 0.0
    %2566 = vmatpush2.msra.mxu0 0.0
    %2567 = vmatprep.subr.mxu0 0.0
    %2568 = vmatpush2.msra.mxu0 0.0
    %2569 = vmatprep.subr.mxu0 0.0
    %2570 = vmatpush2.msra.mxu0 0.0
    %2571 = vmatprep.subr.mxu0 0.0
    %2572 = vmatpush2.msra.mxu0 0.0
    %2573 = vmatprep.subr.mxu0 0.0
    %2574 = vmatpush2.msra.mxu0 0.0
    %2575 = vmatprep.subr.mxu0 0.0
    %2576 = vmatpush2.msra.mxu0 0.0
    %2577 = vmatprep.mubr.f32.mxu0 0.0
    %2578 = vmatmul.mubr.f32.gmra.mxu0 %v2510
    %v2579 = vpop.f32.mrf.mxu0
    %v2580 = vadd.f32 %v405, %v2579
    %v2581 = vpop.f32.mrf.mxu0
    %2582 = vdwg.mxu0
    %v2584 = vcombine.high %v2580, %v2580
    %v2586 = vunpack.c.l.s4 1966171168
    %v2587 = vunpack.c.0.s8 %v2586
    %v2588 = vlaneseq
    %v2589 = vshrl.u32 %v2588, 7
    %v2590 = vsub.s32 %v2587, %v2589
    %v2591 = vrot.slane %v2580, %v2590
    %v2593 = vunpack.c.l.s4 1966171168
    %v2594 = vunpack.c.0.s8 %v2593
    %v2595 = vlaneseq
    %v2596 = vshrl.u32 %v2595, 7
    %v2597 = vsub.s32 %v2594, %v2596
    %v2598 = vrot.slane %v2584, %v2597
    %v2599 = vcombine.high %v2591, %v2591
    %v2600 = vcombine.high %v2598, %v2598
    %v2602 = vunpack.c.l.s4 1966171168
    %v2603 = vunpack.c.0.s8 %v2602
    %v2604 = vlaneseq
    %v2605 = vshrl.u32 %v2604, 7
    %v2606 = vsub.s32 %v2603, %v2605
    %v2607 = vrot.slane %v2591, %v2606
    %v2609 = vunpack.c.l.s4 1966171168
    %v2610 = vunpack.c.0.s8 %v2609
    %v2611 = vlaneseq
    %v2612 = vshrl.u32 %v2611, 7
    %v2613 = vsub.s32 %v2610, %v2612
    %v2614 = vrot.slane %v2598, %v2613
    %v2616 = vunpack.c.l.s4 1966171168
    %v2617 = vunpack.c.0.s8 %v2616
    %v2618 = vlaneseq
    %v2619 = vshrl.u32 %v2618, 7
    %v2620 = vsub.s32 %v2617, %v2619
    %v2621 = vrot.slane %v2599, %v2620
    %v2623 = vunpack.c.l.s4 1966171168
    %v2624 = vunpack.c.0.s8 %v2623
    %v2625 = vlaneseq
    %v2626 = vshrl.u32 %v2625, 7
    %v2627 = vsub.s32 %v2624, %v2626
    %v2628 = vrot.slane %v2600, %v2627
    %v2629 = vcombine.high %v2607, %v2607
    %v2630 = vcombine.high %v2614, %v2614
    %v2631 = vcombine.high %v2621, %v2621
    %v2632 = vcombine.high %v2628, %v2628
    %v2633 = vlaneseq
    %v2634 = vshrl.u32 %v2633, 7
    %v2635 = vsub.s32 0, %v2634
    %v2636 = vrot.slane %v2607, %v2635
    %v2637 = vlaneseq
    %v2638 = vshrl.u32 %v2637, 7
    %v2639 = vsub.s32 0, %v2638
    %v2640 = vrot.slane %v2621, %v2639
    %v2641 = vlaneseq
    %v2642 = vshrl.u32 %v2641, 7
    %v2643 = vsub.s32 0, %v2642
    %v2644 = vrot.slane %v2629, %v2643
    %v2645 = vlaneseq
    %v2646 = vshrl.u32 %v2645, 7
    %v2647 = vsub.s32 0, %v2646
    %v2648 = vrot.slane %v2631, %v2647
    %v2649 = vlaneseq
    %v2650 = vshrl.u32 %v2649, 7
    %v2651 = vsub.s32 0, %v2650
    %v2652 = vrot.slane %v2614, %v2651
    %v2653 = vlaneseq
    %v2654 = vshrl.u32 %v2653, 7
    %v2655 = vsub.s32 0, %v2654
    %v2656 = vrot.slane %v2628, %v2655
    %v2657 = vlaneseq
    %v2658 = vshrl.u32 %v2657, 7
    %v2659 = vsub.s32 0, %v2658
    %v2660 = vrot.slane %v2630, %v2659
    %v2661 = vlaneseq
    %v2662 = vshrl.u32 %v2661, 7
    %v2663 = vsub.s32 0, %v2662
    %v2664 = vrot.slane %v2632, %v2663
    %v2673 = vadd.f32 %v262, %v2636
    %v2674 = vadd.f32 %v267, %v2640
    %v2675 = vadd.f32 %v272, %v2644
    %v2676 = vadd.f32 %v277, %v2648
    %v2677 = vadd.f32 %v282, %v2652
    %v2678 = vadd.f32 %v287, %v2656
    %v2679 = vadd.f32 %v292, %v2660
    %v2680 = vadd.f32 %v297, %v2664
    %v2681 = vtanh.pop %v2673
    %v2682 = vtanh.pop %v2674
    %v2683 = vtanh.pop %v2675
    %v2684 = vtanh.pop %v2676
    %v2685 = vtanh.pop %v2677
    %v2686 = vtanh.pop %v2678
    %v2687 = vtanh.pop %v2679
    %v2688 = vtanh.pop %v2680
    %v2689 = vmul.f32 %v2681, %v587
    %v2690 = vmul.f32 %v2682, %v587
    %v2691 = vmul.f32 %v2683, %v587
    %v2692 = vmul.f32 %v2684, %v587
    %v2693 = vmul.f32 %v2685, %v587
    %v2694 = vmul.f32 %v2686, %v587
    %v2695 = vmul.f32 %v2687, %v587
    %v2696 = vmul.f32 %v2688, %v587
    %2697 = vadd.xlane.f32.xlu0 %v2689
    %v2698 = vpop.xlane.xlu0 %2697
    %2699 = vadd.xlane.f32.xlu0 %v2690
    %v2700 = vpop.xlane.xlu0 %2699
    %2701 = vadd.xlane.f32.xlu0 %v2691
    %v2702 = vpop.xlane.xlu0 %2701
    %2703 = vadd.xlane.f32.xlu0 %v2692
    %v2704 = vpop.xlane.xlu0 %2703
    %2705 = vadd.xlane.f32.xlu0 %v2693
    %v2706 = vpop.xlane.xlu0 %2705
    %2707 = vadd.xlane.f32.xlu0 %v2694
    %v2708 = vpop.xlane.xlu0 %2707
    %2709 = vadd.xlane.f32.xlu0 %v2695
    %v2710 = vpop.xlane.xlu0 %2709
    %2711 = vadd.xlane.f32.xlu0 %v2696
    %v2712 = vpop.xlane.xlu0 %2711
    %v2713 = vadd.f32 %v2698, %v613
    %v2714 = vadd.f32 %v2700, %v613
    %v2715 = vadd.f32 %v2702, %v613
    %v2716 = vadd.f32 %v2704, %v613
    %v2717 = vadd.f32 %v2706, %v613
    %v2718 = vadd.f32 %v2708, %v613
    %v2719 = vadd.f32 %v2710, %v613
    %v2720 = vadd.f32 %v2712, %v613
    %v2729 = vlaneseq
    %v2730 = vshrl.u32 %v2729, 7
    %v2731 = vsub.s32 %v631, %v2730
    %v2732 = vrot.slane %v2713, %v2731
    %v2733 = vlaneseq
    %v2734 = vshrl.u32 %v2733, 7
    %v2735 = vsub.s32 %v631, %v2734
    %v2736 = vrot.slane %v2714, %v2735
    %v2737 = vlaneseq
    %v2738 = vshrl.u32 %v2737, 7
    %v2739 = vsub.s32 %v631, %v2738
    %v2740 = vrot.slane %v2715, %v2739
    %v2741 = vlaneseq
    %v2742 = vshrl.u32 %v2741, 7
    %v2743 = vsub.s32 %v631, %v2742
    %v2744 = vrot.slane %v2716, %v2743
    %v2745 = vlaneseq
    %v2746 = vshrl.u32 %v2745, 7
    %v2747 = vsub.s32 %v631, %v2746
    %v2748 = vrot.slane %v2717, %v2747
    %v2749 = vlaneseq
    %v2750 = vshrl.u32 %v2749, 7
    %v2751 = vsub.s32 %v631, %v2750
    %v2752 = vrot.slane %v2718, %v2751
    %v2753 = vlaneseq
    %v2754 = vshrl.u32 %v2753, 7
    %v2755 = vsub.s32 %v631, %v2754
    %v2756 = vrot.slane %v2719, %v2755
    %v2757 = vlaneseq
    %v2758 = vshrl.u32 %v2757, 7
    %v2759 = vsub.s32 %v631, %v2758
    %v2760 = vrot.slane %v2720, %v2759
    %v2761 = vsel %vm664, %v2736, %v2732
    %v2762 = vsel %vm666, %v2740, %v2761
    %v2763 = vsel %vm668, %v2744, %v2762
    %v2764 = vsel %vm670, %v2748, %v2763
    %v2765 = vsel %vm672, %v2752, %v2764
    %v2766 = vsel %vm674, %v2756, %v2765
    %v2767 = vsel %vm676, %v2760, %v2766
    %v2769 = vsel %vm679, %v2767, -inf
    %2770 = vmax.xlane.f32.xlu0 %v2769
    %v2771 = vpop.xlane.xlu0 %2770
    %v2773 = vlaneseq
    %v2774 = vshrl.u32 %v2773, 7
    %v2775 = vsub.s32 0, %v2774
    %v2776 = vrot.slane %v2771, %v2775
    %v2777 = vlaneseq
    %v2778 = vshrl.u32 %v2777, 7
    %v2779 = vsub.s32 1, %v2778
    %v2780 = vrot.slane %v2771, %v2779
    %v2781 = vlaneseq
    %v2782 = vshrl.u32 %v2781, 7
    %v2783 = vsub.s32 2, %v2782
    %v2784 = vrot.slane %v2771, %v2783
    %v2785 = vlaneseq
    %v2786 = vshrl.u32 %v2785, 7
    %v2787 = vsub.s32 3, %v2786
    %v2788 = vrot.slane %v2771, %v2787
    %v2789 = vlaneseq
    %v2790 = vshrl.u32 %v2789, 7
    %v2791 = vsub.s32 4, %v2790
    %v2792 = vrot.slane %v2771, %v2791
    %v2793 = vlaneseq
    %v2794 = vshrl.u32 %v2793, 7
    %v2795 = vsub.s32 5, %v2794
    %v2796 = vrot.slane %v2771, %v2795
    %v2797 = vlaneseq
    %v2798 = vshrl.u32 %v2797, 7
    %v2799 = vsub.s32 6, %v2798
    %v2800 = vrot.slane %v2771, %v2799
    %v2801 = vlaneseq
    %v2802 = vshrl.u32 %v2801, 7
    %v2803 = vsub.s32 7, %v2802
    %v2804 = vrot.slane %v2771, %v2803
    %v2813 = vsub.f32 %v2713, %v2776
    %v2814 = vsub.f32 %v2714, %v2780
    %v2815 = vsub.f32 %v2715, %v2784
    %v2816 = vsub.f32 %v2716, %v2788
    %v2817 = vsub.f32 %v2717, %v2792
    %v2818 = vsub.f32 %v2718, %v2796
    %v2819 = vsub.f32 %v2719, %v2800
    %v2820 = vsub.f32 %v2720, %v2804
    %v2821 = vmul.f32 %v2813, 1.442695
    %v2822 = vpow.pop %v2821
    %v2823 = vmul.f32 %v2814, 1.442695
    %v2824 = vpow.pop %v2823
    %v2825 = vmul.f32 %v2815, 1.442695
    %v2826 = vpow.pop %v2825
    %v2827 = vmul.f32 %v2816, 1.442695
    %v2828 = vpow.pop %v2827
    %v2829 = vmul.f32 %v2817, 1.442695
    %v2830 = vpow.pop %v2829
    %v2831 = vmul.f32 %v2818, 1.442695
    %v2832 = vpow.pop %v2831
    %v2833 = vmul.f32 %v2819, 1.442695
    %v2834 = vpow.pop %v2833
    %v2835 = vmul.f32 %v2820, 1.442695
    %v2836 = vpow.pop %v2835
    %2845 = vset.pattern.permute.xlu0 0
    %2846 = vperm.xlu0 %2845, %v2822
    %v2847 = vpop.permute.xlu0 %2846
    %2848 = vset.pattern.permute.xlu0 0
    %2849 = vperm.xlu0 %2848, %v2824
    %v2850 = vpop.permute.xlu0 %2849
    %2851 = vset.pattern.permute.xlu0 0
    %2852 = vperm.xlu0 %2851, %v2826
    %v2853 = vpop.permute.xlu0 %2852
    %2854 = vset.pattern.permute.xlu0 0
    %2855 = vperm.xlu0 %2854, %v2828
    %v2856 = vpop.permute.xlu0 %2855
    %2857 = vset.pattern.permute.xlu0 0
    %2858 = vperm.xlu0 %2857, %v2830
    %v2859 = vpop.permute.xlu0 %2858
    %2860 = vset.pattern.permute.xlu0 0
    %2861 = vperm.xlu0 %2860, %v2832
    %v2862 = vpop.permute.xlu0 %2861
    %2863 = vset.pattern.permute.xlu0 0
    %2864 = vperm.xlu0 %2863, %v2834
    %v2865 = vpop.permute.xlu0 %2864
    %2866 = vset.pattern.permute.xlu0 0
    %2867 = vperm.xlu0 %2866, %v2836
    %v2868 = vpop.permute.xlu0 %2867
    %v2869 = vlaneseq
    %v2870 = vshrl.u32 %v2869, 7
    %v2871 = vsub.s32 %v631, %v2870
    %v2872 = vrot.slane %v2847, %v2871
    %v2873 = vlaneseq
    %v2874 = vshrl.u32 %v2873, 7
    %v2875 = vsub.s32 %v631, %v2874
    %v2876 = vrot.slane %v2850, %v2875
    %v2877 = vlaneseq
    %v2878 = vshrl.u32 %v2877, 7
    %v2879 = vsub.s32 %v631, %v2878
    %v2880 = vrot.slane %v2853, %v2879
    %v2881 = vlaneseq
    %v2882 = vshrl.u32 %v2881, 7
    %v2883 = vsub.s32 %v631, %v2882
    %v2884 = vrot.slane %v2856, %v2883
    %v2885 = vlaneseq
    %v2886 = vshrl.u32 %v2885, 7
    %v2887 = vsub.s32 %v631, %v2886
    %v2888 = vrot.slane %v2859, %v2887
    %v2889 = vlaneseq
    %v2890 = vshrl.u32 %v2889, 7
    %v2891 = vsub.s32 %v631, %v2890
    %v2892 = vrot.slane %v2862, %v2891
    %v2893 = vlaneseq
    %v2894 = vshrl.u32 %v2893, 7
    %v2895 = vsub.s32 %v631, %v2894
    %v2896 = vrot.slane %v2865, %v2895
    %v2897 = vlaneseq
    %v2898 = vshrl.u32 %v2897, 7
    %v2899 = vsub.s32 %v631, %v2898
    %v2900 = vrot.slane %v2868, %v2899
    %v2901 = vsel %vm664, %v2876, %v2872
    %v2902 = vsel %vm666, %v2880, %v2901
    %v2903 = vsel %vm668, %v2884, %v2902
    %v2904 = vsel %vm670, %v2888, %v2903
    %v2905 = vsel %vm672, %v2892, %v2904
    %v2906 = vsel %vm674, %v2896, %v2905
    %v2907 = vsel %vm676, %v2900, %v2906
    %v2909 = vsel %vm679, %v2907, 0.0
    %2910 = vadd.xlane.f32.xlu0 %v2909
    %v2911 = vpop.xlane.xlu0 %2910
    %v2912 = vrcp.pop %v2911
    %v2914 = vlaneseq
    %v2915 = vshrl.u32 %v2914, 7
    %v2916 = vsub.s32 0, %v2915
    %v2917 = vrot.slane %v2912, %v2916
    %v2918 = vlaneseq
    %v2919 = vshrl.u32 %v2918, 7
    %v2920 = vsub.s32 1, %v2919
    %v2921 = vrot.slane %v2912, %v2920
    %v2922 = vlaneseq
    %v2923 = vshrl.u32 %v2922, 7
    %v2924 = vsub.s32 2, %v2923
    %v2925 = vrot.slane %v2912, %v2924
    %v2926 = vlaneseq
    %v2927 = vshrl.u32 %v2926, 7
    %v2928 = vsub.s32 3, %v2927
    %v2929 = vrot.slane %v2912, %v2928
    %v2930 = vlaneseq
    %v2931 = vshrl.u32 %v2930, 7
    %v2932 = vsub.s32 4, %v2931
    %v2933 = vrot.slane %v2912, %v2932
    %v2934 = vlaneseq
    %v2935 = vshrl.u32 %v2934, 7
    %v2936 = vsub.s32 5, %v2935
    %v2937 = vrot.slane %v2912, %v2936
    %v2938 = vlaneseq
    %v2939 = vshrl.u32 %v2938, 7
    %v2940 = vsub.s32 6, %v2939
    %v2941 = vrot.slane %v2912, %v2940
    %v2942 = vlaneseq
    %v2943 = vshrl.u32 %v2942, 7
    %v2944 = vsub.s32 7, %v2943
    %v2945 = vrot.slane %v2912, %v2944
    %v2954 = vmul.f32 %v2822, %v2917
    %v2955 = vmul.f32 %v2824, %v2921
    %v2956 = vmul.f32 %v2826, %v2925
    %v2957 = vmul.f32 %v2828, %v2929
    %v2958 = vmul.f32 %v2830, %v2933
    %v2959 = vmul.f32 %v2832, %v2937
    %v2960 = vmul.f32 %v2834, %v2941
    %v2961 = vmul.f32 %v2836, %v2945
    %2963 = vset.pattern.permute.xlu0 0
    %2964 = vperm.xlu0 %2963, %v2954
    %v2965 = vpop.permute.xlu0 %2964
    %2968 = vset.pattern.permute.xlu0 0
    %2969 = vperm.xlu0 %2968, %v2955
    %v2970 = vpop.permute.xlu0 %2969
    %2973 = vset.pattern.permute.xlu0 0
    %2974 = vperm.xlu0 %2973, %v2956
    %v2975 = vpop.permute.xlu0 %2974
    %2978 = vset.pattern.permute.xlu0 0
    %2979 = vperm.xlu0 %2978, %v2957
    %v2980 = vpop.permute.xlu0 %2979
    %2983 = vset.pattern.permute.xlu0 0
    %2984 = vperm.xlu0 %2983, %v2958
    %v2985 = vpop.permute.xlu0 %2984
    %2988 = vset.pattern.permute.xlu0 0
    %2989 = vperm.xlu0 %2988, %v2959
    %v2990 = vpop.permute.xlu0 %2989
    %2993 = vset.pattern.permute.xlu0 0
    %2994 = vperm.xlu0 %2993, %v2960
    %v2995 = vpop.permute.xlu0 %2994
    %2998 = vset.pattern.permute.xlu0 0
    %2999 = vperm.xlu0 %2998, %v2961
    %v3000 = vpop.permute.xlu0 %2999
    %v3002 = vmul.f32 %v2965, %v153
    %v3003 = vmul.f32 %v2970, %v154
    %v3004 = vmul.f32 %v2975, %v155
    %v3005 = vmul.f32 %v2980, %v156
    %v3006 = vmul.f32 %v2985, %v157
    %v3007 = vmul.f32 %v2990, %v158
    %v3008 = vmul.f32 %v2995, %v159
    %v3009 = vmul.f32 %v3000, %v160
    %v3010 = vsel %vm170, %v3002, 0.0
    %v3011 = vrot.slane %v3010, 4
    %v3012 = vadd.f32 %v3010, %v3011
    %v3013 = vrot.slane %v3012, 2
    %v3014 = vadd.f32 %v3012, %v3013
    %v3015 = vrot.slane %v3014, 1
    %v3016 = vadd.f32 %v3014, %v3015
    %v3017 = vsel %vm170, %v3003, 0.0
    %v3018 = vrot.slane %v3017, 4
    %v3019 = vadd.f32 %v3017, %v3018
    %v3020 = vrot.slane %v3019, 2
    %v3021 = vadd.f32 %v3019, %v3020
    %v3022 = vrot.slane %v3021, 1
    %v3023 = vadd.f32 %v3021, %v3022
    %v3024 = vsel %vm170, %v3004, 0.0
    %v3025 = vrot.slane %v3024, 4
    %v3026 = vadd.f32 %v3024, %v3025
    %v3027 = vrot.slane %v3026, 2
    %v3028 = vadd.f32 %v3026, %v3027
    %v3029 = vrot.slane %v3028, 1
    %v3030 = vadd.f32 %v3028, %v3029
    %v3031 = vsel %vm170, %v3005, 0.0
    %v3032 = vrot.slane %v3031, 4
    %v3033 = vadd.f32 %v3031, %v3032
    %v3034 = vrot.slane %v3033, 2
    %v3035 = vadd.f32 %v3033, %v3034
    %v3036 = vrot.slane %v3035, 1
    %v3037 = vadd.f32 %v3035, %v3036
    %v3038 = vsel %vm170, %v3006, 0.0
    %v3039 = vrot.slane %v3038, 4
    %v3040 = vadd.f32 %v3038, %v3039
    %v3041 = vrot.slane %v3040, 2
    %v3042 = vadd.f32 %v3040, %v3041
    %v3043 = vrot.slane %v3042, 1
    %v3044 = vadd.f32 %v3042, %v3043
    %v3045 = vsel %vm170, %v3007, 0.0
    %v3046 = vrot.slane %v3045, 4
    %v3047 = vadd.f32 %v3045, %v3046
    %v3048 = vrot.slane %v3047, 2
    %v3049 = vadd.f32 %v3047, %v3048
    %v3050 = vrot.slane %v3049, 1
    %v3051 = vadd.f32 %v3049, %v3050
    %v3052 = vsel %vm170, %v3008, 0.0
    %v3053 = vrot.slane %v3052, 4
    %v3054 = vadd.f32 %v3052, %v3053
    %v3055 = vrot.slane %v3054, 2
    %v3056 = vadd.f32 %v3054, %v3055
    %v3057 = vrot.slane %v3056, 1
    %v3058 = vadd.f32 %v3056, %v3057
    %v3059 = vsel %vm170, %v3009, 0.0
    %v3060 = vrot.slane %v3059, 4
    %v3061 = vadd.f32 %v3059, %v3060
    %v3062 = vrot.slane %v3061, 2
    %v3063 = vadd.f32 %v3061, %v3062
    %v3064 = vrot.slane %v3063, 1
    %v3065 = vadd.f32 %v3063, %v3064
    %s3066 = scalar_lea.vmem [#allocation3], 16
    %v3067 = vld [vmem:[%s3066] sm:$0xff]
    %v3076 = vsel %vm664, %v3023, %v3016
    %v3077 = vsel %vm666, %v3030, %v3076
    %v3078 = vsel %vm668, %v3037, %v3077
    %v3079 = vsel %vm670, %v3044, %v3078
    %v3080 = vsel %vm672, %v3051, %v3079
    %v3081 = vsel %vm674, %v3058, %v3080
    %v3082 = vsel %vm676, %v3065, %v3081
    %v3083 = vsel %vm170, %v3082, 0
    %3085 = vmatprep.subr.mxu0 0.0
    %3086 = vmatpush1.msra.mxu0 0.0
    %3087 = vmatprep.subr.mxu0 0.0
    %3088 = vmatpush1.msra.mxu0 0.0
    %3089 = vmatprep.subr.mxu0 0.0
    %3090 = vmatpush1.msra.mxu0 0.0
    %3091 = vmatprep.subr.mxu0 0.0
    %3092 = vmatpush1.msra.mxu0 0.0
    %3093 = vmatprep.subr.mxu0 0.0
    %3094 = vmatpush1.msra.mxu0 0.0
    %3095 = vmatprep.subr.mxu0 0.0
    %3096 = vmatpush1.msra.mxu0 0.0
    %3097 = vmatprep.subr.mxu0 0.0
    %3098 = vmatpush1.msra.mxu0 0.0
    %3099 = vmatprep.subr.mxu0 0.0
    %3100 = vmatpush1.msra.mxu0 0.0
    %3101 = vmatprep.subr.mxu0 0.0
    %3102 = vmatpush1.msra.mxu0 0.0
    %3103 = vmatprep.subr.mxu0 0.0
    %3104 = vmatpush1.msra.mxu0 0.0
    %3105 = vmatprep.subr.mxu0 0.0
    %3106 = vmatpush1.msra.mxu0 0.0
    %3107 = vmatprep.subr.mxu0 0.0
    %3108 = vmatpush1.msra.mxu0 0.0
    %3109 = vmatprep.subr.mxu0 0.0
    %3110 = vmatpush1.msra.mxu0 0.0
    %3111 = vmatprep.subr.mxu0 0.0
    %3112 = vmatpush1.msra.mxu0 0.0
    %3113 = vmatprep.subr.mxu0 %v332
    %3114 = vmatpush1.msra.mxu0 %v331
    %3115 = vmatprep.subr.mxu0 %v328
    %3116 = vmatpush1.msra.mxu0 %v327
    %3117 = vmatprep.subr.mxu0 0.0
    %3118 = vmatpush2.msra.mxu0 0.0
    %3119 = vmatprep.subr.mxu0 0.0
    %3120 = vmatpush2.msra.mxu0 0.0
    %3121 = vmatprep.subr.mxu0 0.0
    %3122 = vmatpush2.msra.mxu0 0.0
    %3123 = vmatprep.subr.mxu0 0.0
    %3124 = vmatpush2.msra.mxu0 0.0
    %3125 = vmatprep.subr.mxu0 0.0
    %3126 = vmatpush2.msra.mxu0 0.0
    %3127 = vmatprep.subr.mxu0 0.0
    %3128 = vmatpush2.msra.mxu0 0.0
    %3129 = vmatprep.subr.mxu0 0.0
    %3130 = vmatpush2.msra.mxu0 0.0
    %3131 = vmatprep.subr.mxu0 0.0
    %3132 = vmatpush2.msra.mxu0 0.0
    %3133 = vmatprep.subr.mxu0 0.0
    %3134 = vmatpush2.msra.mxu0 0.0
    %3135 = vmatprep.subr.mxu0 0.0
    %3136 = vmatpush2.msra.mxu0 0.0
    %3137 = vmatprep.subr.mxu0 0.0
    %3138 = vmatpush2.msra.mxu0 0.0
    %3139 = vmatprep.subr.mxu0 0.0
    %3140 = vmatpush2.msra.mxu0 0.0
    %3141 = vmatprep.subr.mxu0 0.0
    %3142 = vmatpush2.msra.mxu0 0.0
    %3143 = vmatprep.subr.mxu0 0.0
    %3144 = vmatpush2.msra.mxu0 0.0
    %3145 = vmatprep.subr.mxu0 0.0
    %3146 = vmatpush2.msra.mxu0 0.0
    %3147 = vmatprep.subr.mxu0 0.0
    %3148 = vmatpush2.msra.mxu0 0.0
    %3149 = vmatprep.mubr.f32.mxu0 0.0
    %3150 = vmatmul.mubr.f32.gmra.mxu0 %v3083
    %v3151 = vpop.f32.mrf.mxu0
    %v3152 = vadd.f32 0.0, %v3151
    %v3153 = vpop.f32.mrf.mxu0
    %v3154 = vadd.f32 0.0, %v3153
    %3155 = vdwg.mxu0
    %3156 = vmatprep.subr.mxu0 0.0
    %3157 = vmatpush1.msra.mxu0 0.0
    %3158 = vmatprep.subr.mxu0 0.0
    %3159 = vmatpush1.msra.mxu0 0.0
    %3160 = vmatprep.subr.mxu0 0.0
    %3161 = vmatpush1.msra.mxu0 0.0
    %3162 = vmatprep.subr.mxu0 0.0
    %3163 = vmatpush1.msra.mxu0 0.0
    %3164 = vmatprep.subr.mxu0 0.0
    %3165 = vmatpush1.msra.mxu0 0.0
    %3166 = vmatprep.subr.mxu0 0.0
    %3167 = vmatpush1.msra.mxu0 0.0
    %3168 = vmatprep.subr.mxu0 0.0
    %3169 = vmatpush1.msra.mxu0 0.0
    %3170 = vmatprep.subr.mxu0 0.0
    %3171 = vmatpush1.msra.mxu0 0.0
    %3172 = vmatprep.subr.mxu0 0.0
    %3173 = vmatpush1.msra.mxu0 0.0
    %3174 = vmatprep.subr.mxu0 0.0
    %3175 = vmatpush1.msra.mxu0 0.0
    %3176 = vmatprep.subr.mxu0 0.0
    %3177 = vmatpush1.msra.mxu0 0.0
    %3178 = vmatprep.subr.mxu0 0.0
    %3179 = vmatpush1.msra.mxu0 0.0
    %3180 = vmatprep.subr.mxu0 0.0
    %3181 = vmatpush1.msra.mxu0 0.0
    %3182 = vmatprep.subr.mxu0 0.0
    %3183 = vmatpush1.msra.mxu0 0.0
    %3184 = vmatprep.subr.mxu0 %v334
    %3185 = vmatpush1.msra.mxu0 %v333
    %3186 = vmatprep.subr.mxu0 %v330
    %3187 = vmatpush1.msra.mxu0 %v329
    %3188 = vmatprep.subr.mxu0 0.0
    %3189 = vmatpush2.msra.mxu0 0.0
    %3190 = vmatprep.subr.mxu0 0.0
    %3191 = vmatpush2.msra.mxu0 0.0
    %3192 = vmatprep.subr.mxu0 0.0
    %3193 = vmatpush2.msra.mxu0 0.0
    %3194 = vmatprep.subr.mxu0 0.0
    %3195 = vmatpush2.msra.mxu0 0.0
    %3196 = vmatprep.subr.mxu0 0.0
    %3197 = vmatpush2.msra.mxu0 0.0
    %3198 = vmatprep.subr.mxu0 0.0
    %3199 = vmatpush2.msra.mxu0 0.0
    %3200 = vmatprep.subr.mxu0 0.0
    %3201 = vmatpush2.msra.mxu0 0.0
    %3202 = vmatprep.subr.mxu0 0.0
    %3203 = vmatpush2.msra.mxu0 0.0
    %3204 = vmatprep.subr.mxu0 0.0
    %3205 = vmatpush2.msra.mxu0 0.0
    %3206 = vmatprep.subr.mxu0 0.0
    %3207 = vmatpush2.msra.mxu0 0.0
    %3208 = vmatprep.subr.mxu0 0.0
    %3209 = vmatpush2.msra.mxu0 0.0
    %3210 = vmatprep.subr.mxu0 0.0
    %3211 = vmatpush2.msra.mxu0 0.0
    %3212 = vmatprep.subr.mxu0 0.0
    %3213 = vmatpush2.msra.mxu0 0.0
    %3214 = vmatprep.subr.mxu0 0.0
    %3215 = vmatpush2.msra.mxu0 0.0
    %3216 = vmatprep.subr.mxu0 0.0
    %3217 = vmatpush2.msra.mxu0 0.0
    %3218 = vmatprep.subr.mxu0 0.0
    %3219 = vmatpush2.msra.mxu0 0.0
    %3220 = vmatprep.mubr.f32.mxu0 0.0
    %3221 = vmatmul.mubr.f32.gmra.mxu0 %v3083
    %v3222 = vpop.f32.mrf.mxu0
    %v3223 = vadd.f32 0.0, %v3222
    %v3224 = vpop.f32.mrf.mxu0
    %v3225 = vadd.f32 0.0, %v3224
    %3226 = vdwg.mxu0
    %v3228 = vsel %vm170, %v3067, 0
    %3230 = vmatprep.subr.mxu0 0.0
    %3231 = vmatpush1.msra.mxu0 0.0
    %3232 = vmatprep.subr.mxu0 0.0
    %3233 = vmatpush1.msra.mxu0 0.0
    %3234 = vmatprep.subr.mxu0 0.0
    %3235 = vmatpush1.msra.mxu0 0.0
    %3236 = vmatprep.subr.mxu0 0.0
    %3237 = vmatpush1.msra.mxu0 0.0
    %3238 = vmatprep.subr.mxu0 0.0
    %3239 = vmatpush1.msra.mxu0 0.0
    %3240 = vmatprep.subr.mxu0 0.0
    %3241 = vmatpush1.msra.mxu0 0.0
    %3242 = vmatprep.subr.mxu0 0.0
    %3243 = vmatpush1.msra.mxu0 0.0
    %3244 = vmatprep.subr.mxu0 0.0
    %3245 = vmatpush1.msra.mxu0 0.0
    %3246 = vmatprep.subr.mxu0 0.0
    %3247 = vmatpush1.msra.mxu0 0.0
    %3248 = vmatprep.subr.mxu0 0.0
    %3249 = vmatpush1.msra.mxu0 0.0
    %3250 = vmatprep.subr.mxu0 0.0
    %3251 = vmatpush1.msra.mxu0 0.0
    %3252 = vmatprep.subr.mxu0 0.0
    %3253 = vmatpush1.msra.mxu0 0.0
    %3254 = vmatprep.subr.mxu0 0.0
    %3255 = vmatpush1.msra.mxu0 0.0
    %3256 = vmatprep.subr.mxu0 0.0
    %3257 = vmatpush1.msra.mxu0 0.0
    %3258 = vmatprep.subr.mxu0 %v324
    %3259 = vmatpush1.msra.mxu0 %v323
    %3260 = vmatprep.subr.mxu0 %v320
    %3261 = vmatpush1.msra.mxu0 %v319
    %3262 = vmatprep.subr.mxu0 0.0
    %3263 = vmatpush2.msra.mxu0 0.0
    %3264 = vmatprep.subr.mxu0 0.0
    %3265 = vmatpush2.msra.mxu0 0.0
    %3266 = vmatprep.subr.mxu0 0.0
    %3267 = vmatpush2.msra.mxu0 0.0
    %3268 = vmatprep.subr.mxu0 0.0
    %3269 = vmatpush2.msra.mxu0 0.0
    %3270 = vmatprep.subr.mxu0 0.0
    %3271 = vmatpush2.msra.mxu0 0.0
    %3272 = vmatprep.subr.mxu0 0.0
    %3273 = vmatpush2.msra.mxu0 0.0
    %3274 = vmatprep.subr.mxu0 0.0
    %3275 = vmatpush2.msra.mxu0 0.0
    %3276 = vmatprep.subr.mxu0 0.0
    %3277 = vmatpush2.msra.mxu0 0.0
    %3278 = vmatprep.subr.mxu0 0.0
    %3279 = vmatpush2.msra.mxu0 0.0
    %3280 = vmatprep.subr.mxu0 0.0
    %3281 = vmatpush2.msra.mxu0 0.0
    %3282 = vmatprep.subr.mxu0 0.0
    %3283 = vmatpush2.msra.mxu0 0.0
    %3284 = vmatprep.subr.mxu0 0.0
    %3285 = vmatpush2.msra.mxu0 0.0
    %3286 = vmatprep.subr.mxu0 0.0
    %3287 = vmatpush2.msra.mxu0 0.0
    %3288 = vmatprep.subr.mxu0 0.0
    %3289 = vmatpush2.msra.mxu0 0.0
    %3290 = vmatprep.subr.mxu0 0.0
    %3291 = vmatpush2.msra.mxu0 0.0
    %3292 = vmatprep.subr.mxu0 0.0
    %3293 = vmatpush2.msra.mxu0 0.0
    %3294 = vmatprep.mubr.f32.mxu0 0.0
    %3295 = vmatmul.mubr.f32.gmra.mxu0 %v3228
    %v3296 = vpop.f32.mrf.mxu0
    %v3297 = vadd.f32 %v3152, %v3296
    %v3298 = vpop.f32.mrf.mxu0
    %v3299 = vadd.f32 %v3154, %v3298
    %3300 = vdwg.mxu0
    %3301 = vmatprep.subr.mxu0 0.0
    %3302 = vmatpush1.msra.mxu0 0.0
    %3303 = vmatprep.subr.mxu0 0.0
    %3304 = vmatpush1.msra.mxu0 0.0
    %3305 = vmatprep.subr.mxu0 0.0
    %3306 = vmatpush1.msra.mxu0 0.0
    %3307 = vmatprep.subr.mxu0 0.0
    %3308 = vmatpush1.msra.mxu0 0.0
    %3309 = vmatprep.subr.mxu0 0.0
    %3310 = vmatpush1.msra.mxu0 0.0
    %3311 = vmatprep.subr.mxu0 0.0
    %3312 = vmatpush1.msra.mxu0 0.0
    %3313 = vmatprep.subr.mxu0 0.0
    %3314 = vmatpush1.msra.mxu0 0.0
    %3315 = vmatprep.subr.mxu0 0.0
    %3316 = vmatpush1.msra.mxu0 0.0
    %3317 = vmatprep.subr.mxu0 0.0
    %3318 = vmatpush1.msra.mxu0 0.0
    %3319 = vmatprep.subr.mxu0 0.0
    %3320 = vmatpush1.msra.mxu0 0.0
    %3321 = vmatprep.subr.mxu0 0.0
    %3322 = vmatpush1.msra.mxu0 0.0
    %3323 = vmatprep.subr.mxu0 0.0
    %3324 = vmatpush1.msra.mxu0 0.0
    %3325 = vmatprep.subr.mxu0 0.0
    %3326 = vmatpush1.msra.mxu0 0.0
    %3327 = vmatprep.subr.mxu0 0.0
    %3328 = vmatpush1.msra.mxu0 0.0
    %3329 = vmatprep.subr.mxu0 %v326
    %3330 = vmatpush1.msra.mxu0 %v325
    %3331 = vmatprep.subr.mxu0 %v322
    %3332 = vmatpush1.msra.mxu0 %v321
    %3333 = vmatprep.subr.mxu0 0.0
    %3334 = vmatpush2.msra.mxu0 0.0
    %3335 = vmatprep.subr.mxu0 0.0
    %3336 = vmatpush2.msra.mxu0 0.0
    %3337 = vmatprep.subr.mxu0 0.0
    %3338 = vmatpush2.msra.mxu0 0.0
    %3339 = vmatprep.subr.mxu0 0.0
    %3340 = vmatpush2.msra.mxu0 0.0
    %3341 = vmatprep.subr.mxu0 0.0
    %3342 = vmatpush2.msra.mxu0 0.0
    %3343 = vmatprep.subr.mxu0 0.0
    %3344 = vmatpush2.msra.mxu0 0.0
    %3345 = vmatprep.subr.mxu0 0.0
    %3346 = vmatpush2.msra.mxu0 0.0
    %3347 = vmatprep.subr.mxu0 0.0
    %3348 = vmatpush2.msra.mxu0 0.0
    %3349 = vmatprep.subr.mxu0 0.0
    %3350 = vmatpush2.msra.mxu0 0.0
    %3351 = vmatprep.subr.mxu0 0.0
    %3352 = vmatpush2.msra.mxu0 0.0
    %3353 = vmatprep.subr.mxu0 0.0
    %3354 = vmatpush2.msra.mxu0 0.0
    %3355 = vmatprep.subr.mxu0 0.0
    %3356 = vmatpush2.msra.mxu0 0.0
    %3357 = vmatprep.subr.mxu0 0.0
    %3358 = vmatpush2.msra.mxu0 0.0
    %3359 = vmatprep.subr.mxu0 0.0
    %3360 = vmatpush2.msra.mxu0 0.0
    %3361 = vmatprep.subr.mxu0 0.0
    %3362 = vmatpush2.msra.mxu0 0.0
    %3363 = vmatprep.subr.mxu0 0.0
    %3364 = vmatpush2.msra.mxu0 0.0
    %3365 = vmatprep.mubr.f32.mxu0 0.0
    %3366 = vmatmul.mubr.f32.gmra.mxu0 %v3228
    %v3367 = vpop.f32.mrf.mxu0
    %v3368 = vadd.f32 %v3223, %v3367
    %v3369 = vpop.f32.mrf.mxu0
    %v3370 = vadd.f32 %v3225, %v3369
    %3371 = vdwg.mxu0
    %3372 = vmatprep.subr.mxu0 %v396
    %3373 = vmatpush1.msra.mxu0 %v395
    %3374 = vmatprep.subr.mxu0 %v392
    %3375 = vmatpush1.msra.mxu0 %v391
    %3376 = vmatprep.subr.mxu0 %v388
    %3377 = vmatpush1.msra.mxu0 %v387
    %3378 = vmatprep.subr.mxu0 %v384
    %3379 = vmatpush1.msra.mxu0 %v383
    %3380 = vmatprep.subr.mxu0 %v380
    %3381 = vmatpush1.msra.mxu0 %v379
    %3382 = vmatprep.subr.mxu0 %v376
    %3383 = vmatpush1.msra.mxu0 %v375
    %3384 = vmatprep.subr.mxu0 %v372
    %3385 = vmatpush1.msra.mxu0 %v371
    %3386 = vmatprep.subr.mxu0 %v368
    %3387 = vmatpush1.msra.mxu0 %v367
    %3388 = vmatprep.subr.mxu0 %v364
    %3389 = vmatpush1.msra.mxu0 %v363
    %3390 = vmatprep.subr.mxu0 %v360
    %3391 = vmatpush1.msra.mxu0 %v359
    %3392 = vmatprep.subr.mxu0 %v356
    %3393 = vmatpush1.msra.mxu0 %v355
    %3394 = vmatprep.subr.mxu0 %v352
    %3395 = vmatpush1.msra.mxu0 %v351
    %3396 = vmatprep.subr.mxu0 %v348
    %3397 = vmatpush1.msra.mxu0 %v347
    %3398 = vmatprep.subr.mxu0 %v344
    %3399 = vmatpush1.msra.mxu0 %v343
    %3400 = vmatprep.subr.mxu0 %v340
    %3401 = vmatpush1.msra.mxu0 %v339
    %3402 = vmatprep.subr.mxu0 %v336
    %3403 = vmatpush1.msra.mxu0 %v335
    %3404 = vmatprep.subr.mxu0 0.0
    %3405 = vmatpush2.msra.mxu0 0.0
    %3406 = vmatprep.subr.mxu0 0.0
    %3407 = vmatpush2.msra.mxu0 0.0
    %3408 = vmatprep.subr.mxu0 0.0
    %3409 = vmatpush2.msra.mxu0 0.0
    %3410 = vmatprep.subr.mxu0 0.0
    %3411 = vmatpush2.msra.mxu0 0.0
    %3412 = vmatprep.subr.mxu0 0.0
    %3413 = vmatpush2.msra.mxu0 0.0
    %3414 = vmatprep.subr.mxu0 0.0
    %3415 = vmatpush2.msra.mxu0 0.0
    %3416 = vmatprep.subr.mxu0 0.0
    %3417 = vmatpush2.msra.mxu0 0.0
    %3418 = vmatprep.subr.mxu0 0.0
    %3419 = vmatpush2.msra.mxu0 0.0
    %3420 = vmatprep.subr.mxu0 0.0
    %3421 = vmatpush2.msra.mxu0 0.0
    %3422 = vmatprep.subr.mxu0 0.0
    %3423 = vmatpush2.msra.mxu0 0.0
    %3424 = vmatprep.subr.mxu0 0.0
    %3425 = vmatpush2.msra.mxu0 0.0
    %3426 = vmatprep.subr.mxu0 0.0
    %3427 = vmatpush2.msra.mxu0 0.0
    %3428 = vmatprep.subr.mxu0 0.0
    %3429 = vmatpush2.msra.mxu0 0.0
    %3430 = vmatprep.subr.mxu0 0.0
    %3431 = vmatpush2.msra.mxu0 0.0
    %3432 = vmatprep.subr.mxu0 0.0
    %3433 = vmatpush2.msra.mxu0 0.0
    %3434 = vmatprep.subr.mxu0 0.0
    %3435 = vmatpush2.msra.mxu0 0.0
    %3436 = vmatprep.mubr.f32.mxu0 0.0
    %3437 = vmatmul.mubr.f32.gmra.mxu0 %v2510
    %v3438 = vpop.f32.mrf.mxu0
    %v3439 = vadd.f32 0.0, %v3438
    %v3440 = vpop.f32.mrf.mxu0
    %v3441 = vadd.f32 0.0, %v3440
    %3442 = vdwg.mxu0
    %3443 = vmatprep.subr.mxu0 %v398
    %3444 = vmatpush1.msra.mxu0 %v397
    %3445 = vmatprep.subr.mxu0 %v394
    %3446 = vmatpush1.msra.mxu0 %v393
    %3447 = vmatprep.subr.mxu0 %v390
    %3448 = vmatpush1.msra.mxu0 %v389
    %3449 = vmatprep.subr.mxu0 %v386
    %3450 = vmatpush1.msra.mxu0 %v385
    %3451 = vmatprep.subr.mxu0 %v382
    %3452 = vmatpush1.msra.mxu0 %v381
    %3453 = vmatprep.subr.mxu0 %v378
    %3454 = vmatpush1.msra.mxu0 %v377
    %3455 = vmatprep.subr.mxu0 %v374
    %3456 = vmatpush1.msra.mxu0 %v373
    %3457 = vmatprep.subr.mxu0 %v370
    %3458 = vmatpush1.msra.mxu0 %v369
    %3459 = vmatprep.subr.mxu0 %v366
    %3460 = vmatpush1.msra.mxu0 %v365
    %3461 = vmatprep.subr.mxu0 %v362
    %3462 = vmatpush1.msra.mxu0 %v361
    %3463 = vmatprep.subr.mxu0 %v358
    %3464 = vmatpush1.msra.mxu0 %v357
    %3465 = vmatprep.subr.mxu0 %v354
    %3466 = vmatpush1.msra.mxu0 %v353
    %3467 = vmatprep.subr.mxu0 %v350
    %3468 = vmatpush1.msra.mxu0 %v349
    %3469 = vmatprep.subr.mxu0 %v346
    %3470 = vmatpush1.msra.mxu0 %v345
    %3471 = vmatprep.subr.mxu0 %v342
    %3472 = vmatpush1.msra.mxu0 %v341
    %3473 = vmatprep.subr.mxu0 %v338
    %3474 = vmatpush1.msra.mxu0 %v337
    %3475 = vmatprep.subr.mxu0 0.0
    %3476 = vmatpush2.msra.mxu0 0.0
    %3477 = vmatprep.subr.mxu0 0.0
    %3478 = vmatpush2.msra.mxu0 0.0
    %3479 = vmatprep.subr.mxu0 0.0
    %3480 = vmatpush2.msra.mxu0 0.0
    %3481 = vmatprep.subr.mxu0 0.0
    %3482 = vmatpush2.msra.mxu0 0.0
    %3483 = vmatprep.subr.mxu0 0.0
    %3484 = vmatpush2.msra.mxu0 0.0
    %3485 = vmatprep.subr.mxu0 0.0
    %3486 = vmatpush2.msra.mxu0 0.0
    %3487 = vmatprep.subr.mxu0 0.0
    %3488 = vmatpush2.msra.mxu0 0.0
    %3489 = vmatprep.subr.mxu0 0.0
    %3490 = vmatpush2.msra.mxu0 0.0
    %3491 = vmatprep.subr.mxu0 0.0
    %3492 = vmatpush2.msra.mxu0 0.0
    %3493 = vmatprep.subr.mxu0 0.0
    %3494 = vmatpush2.msra.mxu0 0.0
    %3495 = vmatprep.subr.mxu0 0.0
    %3496 = vmatpush2.msra.mxu0 0.0
    %3497 = vmatprep.subr.mxu0 0.0
    %3498 = vmatpush2.msra.mxu0 0.0
    %3499 = vmatprep.subr.mxu0 0.0
    %3500 = vmatpush2.msra.mxu0 0.0
    %3501 = vmatprep.subr.mxu0 0.0
    %3502 = vmatpush2.msra.mxu0 0.0
    %3503 = vmatprep.subr.mxu0 0.0
    %3504 = vmatpush2.msra.mxu0 0.0
    %3505 = vmatprep.subr.mxu0 0.0
    %3506 = vmatpush2.msra.mxu0 0.0
    %3507 = vmatprep.mubr.f32.mxu0 0.0
    %3508 = vmatmul.mubr.f32.gmra.mxu0 %v2510
    %v3509 = vpop.f32.mrf.mxu0
    %v3510 = vadd.f32 0.0, %v3509
    %v3511 = vpop.f32.mrf.mxu0
    %v3512 = vadd.f32 0.0, %v3511
    %3513 = vdwg.mxu0
    %v3514 = vadd.f32 %v3297, %v3439
    %v3515 = vadd.f32 %v3299, %v3441
    %v3516 = vadd.f32 %v3368, %v3510
    %v3517 = vadd.f32 %v3370, %v3512
    %v3518 = vadd.f32 %v3514, %v1432
    %v3519 = vadd.f32 %v3515, %v1436
    %v3520 = vadd.f32 %v3516, %v1440
    %v3521 = vadd.f32 %v3517, %v1444
    %v3522 = vxor.u32 %v3518, 2147483648
    %v3523 = vmul.f32 %v3522, 1.442695
    %v3524 = vpow.pop %v3523
    %v3525 = vadd.f32 %v3524, 1.0
    %v3526 = vrcp.pop %v3525
    %v3527 = vmul.f32 1.0, %v3526
    %v3528 = vxor.u32 %v3519, 2147483648
    %v3529 = vmul.f32 %v3528, 1.442695
    %v3530 = vpow.pop %v3529
    %v3531 = vadd.f32 %v3530, 1.0
    %v3532 = vrcp.pop %v3531
    %v3533 = vmul.f32 1.0, %v3532
    %v3534 = vtanh.pop %v3520
    %v3535 = vxor.u32 %v3521, 2147483648
    %v3536 = vmul.f32 %v3535, 1.442695
    %v3537 = vpow.pop %v3536
    %v3538 = vadd.f32 %v3537, 1.0
    %v3539 = vrcp.pop %v3538
    %v3540 = vmul.f32 1.0, %v3539
    %v3541 = vmul.f32 %v3533, %v2508
    %v3542 = vmul.f32 %v3527, %v3534
    %v3543 = vadd.f32 %v3541, %v3542
    %v3544 = vtanh.pop %v3543
    %v3545 = vmul.f32 %v3540, %v3544
    %s3546 = scalar_lea.vmem [#allocation17], 16
    %3547 = vst [vmem:[%s3546] sm:$0xff] %v3545
    %3548 = vmatprep.subr.mxu0 0.0
    %3549 = vmatpush1.msra.mxu0 %v315
    %3550 = vmatprep.subr.mxu0 0.0
    %3551 = vmatpush1.msra.mxu0 %v314
    %3552 = vmatprep.subr.mxu0 0.0
    %3553 = vmatpush1.msra.mxu0 %v313
    %3554 = vmatprep.subr.mxu0 0.0
    %3555 = vmatpush1.msra.mxu0 %v312
    %3556 = vmatprep.subr.mxu0 0.0
    %3557 = vmatpush1.msra.mxu0 %v311
    %3558 = vmatprep.subr.mxu0 0.0
    %3559 = vmatpush1.msra.mxu0 %v310
    %3560 = vmatprep.subr.mxu0 0.0
    %3561 = vmatpush1.msra.mxu0 %v309
    %3562 = vmatprep.subr.mxu0 0.0
    %3563 = vmatpush1.msra.mxu0 %v308
    %3564 = vmatprep.subr.mxu0 0.0
    %3565 = vmatpush1.msra.mxu0 %v307
    %3566 = vmatprep.subr.mxu0 0.0
    %3567 = vmatpush1.msra.mxu0 %v306
    %3568 = vmatprep.subr.mxu0 0.0
    %3569 = vmatpush1.msra.mxu0 %v305
    %3570 = vmatprep.subr.mxu0 0.0
    %3571 = vmatpush1.msra.mxu0 %v304
    %3572 = vmatprep.subr.mxu0 0.0
    %3573 = vmatpush1.msra.mxu0 %v303
    %3574 = vmatprep.subr.mxu0 0.0
    %3575 = vmatpush1.msra.mxu0 %v302
    %3576 = vmatprep.subr.mxu0 0.0
    %3577 = vmatpush1.msra.mxu0 %v301
    %3578 = vmatprep.subr.mxu0 0.0
    %3579 = vmatpush1.msra.mxu0 %v300
    %3580 = vmatprep.subr.mxu0 0.0
    %3581 = vmatpush2.msra.mxu0 0.0
    %3582 = vmatprep.subr.mxu0 0.0
    %3583 = vmatpush2.msra.mxu0 0.0
    %3584 = vmatprep.subr.mxu0 0.0
    %3585 = vmatpush2.msra.mxu0 0.0
    %3586 = vmatprep.subr.mxu0 0.0
    %3587 = vmatpush2.msra.mxu0 0.0
    %3588 = vmatprep.subr.mxu0 0.0
    %3589 = vmatpush2.msra.mxu0 0.0
    %3590 = vmatprep.subr.mxu0 0.0
    %3591 = vmatpush2.msra.mxu0 0.0
    %3592 = vmatprep.subr.mxu0 0.0
    %3593 = vmatpush2.msra.mxu0 0.0
    %3594 = vmatprep.subr.mxu0 0.0
    %3595 = vmatpush2.msra.mxu0 0.0
    %3596 = vmatprep.subr.mxu0 0.0
    %3597 = vmatpush2.msra.mxu0 0.0
    %3598 = vmatprep.subr.mxu0 0.0
    %3599 = vmatpush2.msra.mxu0 0.0
    %3600 = vmatprep.subr.mxu0 0.0
    %3601 = vmatpush2.msra.mxu0 0.0
    %3602 = vmatprep.subr.mxu0 0.0
    %3603 = vmatpush2.msra.mxu0 0.0
    %3604 = vmatprep.subr.mxu0 0.0
    %3605 = vmatpush2.msra.mxu0 0.0
    %3606 = vmatprep.subr.mxu0 0.0
    %3607 = vmatpush2.msra.mxu0 0.0
    %3608 = vmatprep.subr.mxu0 0.0
    %3609 = vmatpush2.msra.mxu0 0.0
    %3610 = vmatprep.subr.mxu0 0.0
    %3611 = vmatpush2.msra.mxu0 0.0
    %3612 = vmatprep.mubr.f32.mxu0 0.0
    %3613 = vmatmul.mubr.f32.gmra.mxu0 %v3545
    %v3614 = vpop.f32.mrf.mxu0
    %v3615 = vadd.f32 %v405, %v3614
    %v3616 = vpop.f32.mrf.mxu0
    %3617 = vdwg.mxu0
    %v3619 = vcombine.high %v3615, %v3615
    %v3621 = vunpack.c.l.s4 1966171168
    %v3622 = vunpack.c.0.s8 %v3621
    %v3623 = vlaneseq
    %v3624 = vshrl.u32 %v3623, 7
    %v3625 = vsub.s32 %v3622, %v3624
    %v3626 = vrot.slane %v3615, %v3625
    %v3628 = vunpack.c.l.s4 1966171168
    %v3629 = vunpack.c.0.s8 %v3628
    %v3630 = vlaneseq
    %v3631 = vshrl.u32 %v3630, 7
    %v3632 = vsub.s32 %v3629, %v3631
    %v3633 = vrot.slane %v3619, %v3632
    %v3634 = vcombine.high %v3626, %v3626
    %v3635 = vcombine.high %v3633, %v3633
    %v3637 = vunpack.c.l.s4 1966171168
    %v3638 = vunpack.c.0.s8 %v3637
    %v3639 = vlaneseq
    %v3640 = vshrl.u32 %v3639, 7
    %v3641 = vsub.s32 %v3638, %v3640
    %v3642 = vrot.slane %v3626, %v3641
    %v3644 = vunpack.c.l.s4 1966171168
    %v3645 = vunpack.c.0.s8 %v3644
    %v3646 = vlaneseq
    %v3647 = vshrl.u32 %v3646, 7
    %v3648 = vsub.s32 %v3645, %v3647
    %v3649 = vrot.slane %v3633, %v3648
    %v3651 = vunpack.c.l.s4 1966171168
    %v3652 = vunpack.c.0.s8 %v3651
    %v3653 = vlaneseq
    %v3654 = vshrl.u32 %v3653, 7
    %v3655 = vsub.s32 %v3652, %v3654
    %v3656 = vrot.slane %v3634, %v3655
    %v3658 = vunpack.c.l.s4 1966171168
    %v3659 = vunpack.c.0.s8 %v3658
    %v3660 = vlaneseq
    %v3661 = vshrl.u32 %v3660, 7
    %v3662 = vsub.s32 %v3659, %v3661
    %v3663 = vrot.slane %v3635, %v3662
    %v3664 = vcombine.high %v3642, %v3642
    %v3665 = vcombine.high %v3649, %v3649
    %v3666 = vcombine.high %v3656, %v3656
    %v3667 = vcombine.high %v3663, %v3663
    %v3668 = vlaneseq
    %v3669 = vshrl.u32 %v3668, 7
    %v3670 = vsub.s32 0, %v3669
    %v3671 = vrot.slane %v3642, %v3670
    %v3672 = vlaneseq
    %v3673 = vshrl.u32 %v3672, 7
    %v3674 = vsub.s32 0, %v3673
    %v3675 = vrot.slane %v3656, %v3674
    %v3676 = vlaneseq
    %v3677 = vshrl.u32 %v3676, 7
    %v3678 = vsub.s32 0, %v3677
    %v3679 = vrot.slane %v3664, %v3678
    %v3680 = vlaneseq
    %v3681 = vshrl.u32 %v3680, 7
    %v3682 = vsub.s32 0, %v3681
    %v3683 = vrot.slane %v3666, %v3682
    %v3684 = vlaneseq
    %v3685 = vshrl.u32 %v3684, 7
    %v3686 = vsub.s32 0, %v3685
    %v3687 = vrot.slane %v3649, %v3686
    %v3688 = vlaneseq
    %v3689 = vshrl.u32 %v3688, 7
    %v3690 = vsub.s32 0, %v3689
    %v3691 = vrot.slane %v3663, %v3690
    %v3692 = vlaneseq
    %v3693 = vshrl.u32 %v3692, 7
    %v3694 = vsub.s32 0, %v3693
    %v3695 = vrot.slane %v3665, %v3694
    %v3696 = vlaneseq
    %v3697 = vshrl.u32 %v3696, 7
    %v3698 = vsub.s32 0, %v3697
    %v3699 = vrot.slane %v3667, %v3698
    %v3708 = vadd.f32 %v262, %v3671
    %v3709 = vadd.f32 %v267, %v3675
    %v3710 = vadd.f32 %v272, %v3679
    %v3711 = vadd.f32 %v277, %v3683
    %v3712 = vadd.f32 %v282, %v3687
    %v3713 = vadd.f32 %v287, %v3691
    %v3714 = vadd.f32 %v292, %v3695
    %v3715 = vadd.f32 %v297, %v3699
    %v3716 = vtanh.pop %v3708
    %v3717 = vtanh.pop %v3709
    %v3718 = vtanh.pop %v3710
    %v3719 = vtanh.pop %v3711
    %v3720 = vtanh.pop %v3712
    %v3721 = vtanh.pop %v3713
    %v3722 = vtanh.pop %v3714
    %v3723 = vtanh.pop %v3715
    %v3724 = vmul.f32 %v3716, %v587
    %v3725 = vmul.f32 %v3717, %v587
    %v3726 = vmul.f32 %v3718, %v587
    %v3727 = vmul.f32 %v3719, %v587
    %v3728 = vmul.f32 %v3720, %v587
    %v3729 = vmul.f32 %v3721, %v587
    %v3730 = vmul.f32 %v3722, %v587
    %v3731 = vmul.f32 %v3723, %v587
    %3732 = vadd.xlane.f32.xlu0 %v3724
    %v3733 = vpop.xlane.xlu0 %3732
    %3734 = vadd.xlane.f32.xlu0 %v3725
    %v3735 = vpop.xlane.xlu0 %3734
    %3736 = vadd.xlane.f32.xlu0 %v3726
    %v3737 = vpop.xlane.xlu0 %3736
    %3738 = vadd.xlane.f32.xlu0 %v3727
    %v3739 = vpop.xlane.xlu0 %3738
    %3740 = vadd.xlane.f32.xlu0 %v3728
    %v3741 = vpop.xlane.xlu0 %3740
    %3742 = vadd.xlane.f32.xlu0 %v3729
    %v3743 = vpop.xlane.xlu0 %3742
    %3744 = vadd.xlane.f32.xlu0 %v3730
    %v3745 = vpop.xlane.xlu0 %3744
    %3746 = vadd.xlane.f32.xlu0 %v3731
    %v3747 = vpop.xlane.xlu0 %3746
    %v3748 = vadd.f32 %v3733, %v613
    %v3749 = vadd.f32 %v3735, %v613
    %v3750 = vadd.f32 %v3737, %v613
    %v3751 = vadd.f32 %v3739, %v613
    %v3752 = vadd.f32 %v3741, %v613
    %v3753 = vadd.f32 %v3743, %v613
    %v3754 = vadd.f32 %v3745, %v613
    %v3755 = vadd.f32 %v3747, %v613
    %v3764 = vlaneseq
    %v3765 = vshrl.u32 %v3764, 7
    %v3766 = vsub.s32 %v631, %v3765
    %v3767 = vrot.slane %v3748, %v3766
    %v3768 = vlaneseq
    %v3769 = vshrl.u32 %v3768, 7
    %v3770 = vsub.s32 %v631, %v3769
    %v3771 = vrot.slane %v3749, %v3770
    %v3772 = vlaneseq
    %v3773 = vshrl.u32 %v3772, 7
    %v3774 = vsub.s32 %v631, %v3773
    %v3775 = vrot.slane %v3750, %v3774
    %v3776 = vlaneseq
    %v3777 = vshrl.u32 %v3776, 7
    %v3778 = vsub.s32 %v631, %v3777
    %v3779 = vrot.slane %v3751, %v3778
    %v3780 = vlaneseq
    %v3781 = vshrl.u32 %v3780, 7
    %v3782 = vsub.s32 %v631, %v3781
    %v3783 = vrot.slane %v3752, %v3782
    %v3784 = vlaneseq
    %v3785 = vshrl.u32 %v3784, 7
    %v3786 = vsub.s32 %v631, %v3785
    %v3787 = vrot.slane %v3753, %v3786
    %v3788 = vlaneseq
    %v3789 = vshrl.u32 %v3788, 7
    %v3790 = vsub.s32 %v631, %v3789
    %v3791 = vrot.slane %v3754, %v3790
    %v3792 = vlaneseq
    %v3793 = vshrl.u32 %v3792, 7
    %v3794 = vsub.s32 %v631, %v3793
    %v3795 = vrot.slane %v3755, %v3794
    %v3796 = vsel %vm664, %v3771, %v3767
    %v3797 = vsel %vm666, %v3775, %v3796
    %v3798 = vsel %vm668, %v3779, %v3797
    %v3799 = vsel %vm670, %v3783, %v3798
    %v3800 = vsel %vm672, %v3787, %v3799
    %v3801 = vsel %vm674, %v3791, %v3800
    %v3802 = vsel %vm676, %v3795, %v3801
    %v3804 = vsel %vm679, %v3802, -inf
    %3805 = vmax.xlane.f32.xlu0 %v3804
    %v3806 = vpop.xlane.xlu0 %3805
    %v3808 = vlaneseq
    %v3809 = vshrl.u32 %v3808, 7
    %v3810 = vsub.s32 0, %v3809
    %v3811 = vrot.slane %v3806, %v3810
    %v3812 = vlaneseq
    %v3813 = vshrl.u32 %v3812, 7
    %v3814 = vsub.s32 1, %v3813
    %v3815 = vrot.slane %v3806, %v3814
    %v3816 = vlaneseq
    %v3817 = vshrl.u32 %v3816, 7
    %v3818 = vsub.s32 2, %v3817
    %v3819 = vrot.slane %v3806, %v3818
    %v3820 = vlaneseq
    %v3821 = vshrl.u32 %v3820, 7
    %v3822 = vsub.s32 3, %v3821
    %v3823 = vrot.slane %v3806, %v3822
    %v3824 = vlaneseq
    %v3825 = vshrl.u32 %v3824, 7
    %v3826 = vsub.s32 4, %v3825
    %v3827 = vrot.slane %v3806, %v3826
    %v3828 = vlaneseq
    %v3829 = vshrl.u32 %v3828, 7
    %v3830 = vsub.s32 5, %v3829
    %v3831 = vrot.slane %v3806, %v3830
    %v3832 = vlaneseq
    %v3833 = vshrl.u32 %v3832, 7
    %v3834 = vsub.s32 6, %v3833
    %v3835 = vrot.slane %v3806, %v3834
    %v3836 = vlaneseq
    %v3837 = vshrl.u32 %v3836, 7
    %v3838 = vsub.s32 7, %v3837
    %v3839 = vrot.slane %v3806, %v3838
    %v3848 = vsub.f32 %v3748, %v3811
    %v3849 = vsub.f32 %v3749, %v3815
    %v3850 = vsub.f32 %v3750, %v3819
    %v3851 = vsub.f32 %v3751, %v3823
    %v3852 = vsub.f32 %v3752, %v3827
    %v3853 = vsub.f32 %v3753, %v3831
    %v3854 = vsub.f32 %v3754, %v3835
    %v3855 = vsub.f32 %v3755, %v3839
    %v3856 = vmul.f32 %v3848, 1.442695
    %v3857 = vpow.pop %v3856
    %v3858 = vmul.f32 %v3849, 1.442695
    %v3859 = vpow.pop %v3858
    %v3860 = vmul.f32 %v3850, 1.442695
    %v3861 = vpow.pop %v3860
    %v3862 = vmul.f32 %v3851, 1.442695
    %v3863 = vpow.pop %v3862
    %v3864 = vmul.f32 %v3852, 1.442695
    %v3865 = vpow.pop %v3864
    %v3866 = vmul.f32 %v3853, 1.442695
    %v3867 = vpow.pop %v3866
    %v3868 = vmul.f32 %v3854, 1.442695
    %v3869 = vpow.pop %v3868
    %v3870 = vmul.f32 %v3855, 1.442695
    %v3871 = vpow.pop %v3870
    %3880 = vset.pattern.permute.xlu0 0
    %3881 = vperm.xlu0 %3880, %v3857
    %v3882 = vpop.permute.xlu0 %3881
    %3883 = vset.pattern.permute.xlu0 0
    %3884 = vperm.xlu0 %3883, %v3859
    %v3885 = vpop.permute.xlu0 %3884
    %3886 = vset.pattern.permute.xlu0 0
    %3887 = vperm.xlu0 %3886, %v3861
    %v3888 = vpop.permute.xlu0 %3887
    %3889 = vset.pattern.permute.xlu0 0
    %3890 = vperm.xlu0 %3889, %v3863
    %v3891 = vpop.permute.xlu0 %3890
    %3892 = vset.pattern.permute.xlu0 0
    %3893 = vperm.xlu0 %3892, %v3865
    %v3894 = vpop.permute.xlu0 %3893
    %3895 = vset.pattern.permute.xlu0 0
    %3896 = vperm.xlu0 %3895, %v3867
    %v3897 = vpop.permute.xlu0 %3896
    %3898 = vset.pattern.permute.xlu0 0
    %3899 = vperm.xlu0 %3898, %v3869
    %v3900 = vpop.permute.xlu0 %3899
    %3901 = vset.pattern.permute.xlu0 0
    %3902 = vperm.xlu0 %3901, %v3871
    %v3903 = vpop.permute.xlu0 %3902
    %v3904 = vlaneseq
    %v3905 = vshrl.u32 %v3904, 7
    %v3906 = vsub.s32 %v631, %v3905
    %v3907 = vrot.slane %v3882, %v3906
    %v3908 = vlaneseq
    %v3909 = vshrl.u32 %v3908, 7
    %v3910 = vsub.s32 %v631, %v3909
    %v3911 = vrot.slane %v3885, %v3910
    %v3912 = vlaneseq
    %v3913 = vshrl.u32 %v3912, 7
    %v3914 = vsub.s32 %v631, %v3913
    %v3915 = vrot.slane %v3888, %v3914
    %v3916 = vlaneseq
    %v3917 = vshrl.u32 %v3916, 7
    %v3918 = vsub.s32 %v631, %v3917
    %v3919 = vrot.slane %v3891, %v3918
    %v3920 = vlaneseq
    %v3921 = vshrl.u32 %v3920, 7
    %v3922 = vsub.s32 %v631, %v3921
    %v3923 = vrot.slane %v3894, %v3922
    %v3924 = vlaneseq
    %v3925 = vshrl.u32 %v3924, 7
    %v3926 = vsub.s32 %v631, %v3925
    %v3927 = vrot.slane %v3897, %v3926
    %v3928 = vlaneseq
    %v3929 = vshrl.u32 %v3928, 7
    %v3930 = vsub.s32 %v631, %v3929
    %v3931 = vrot.slane %v3900, %v3930
    %v3932 = vlaneseq
    %v3933 = vshrl.u32 %v3932, 7
    %v3934 = vsub.s32 %v631, %v3933
    %v3935 = vrot.slane %v3903, %v3934
    %v3936 = vsel %vm664, %v3911, %v3907
    %v3937 = vsel %vm666, %v3915, %v3936
    %v3938 = vsel %vm668, %v3919, %v3937
    %v3939 = vsel %vm670, %v3923, %v3938
    %v3940 = vsel %vm672, %v3927, %v3939
    %v3941 = vsel %vm674, %v3931, %v3940
    %v3942 = vsel %vm676, %v3935, %v3941
    %v3944 = vsel %vm679, %v3942, 0.0
    %3945 = vadd.xlane.f32.xlu0 %v3944
    %v3946 = vpop.xlane.xlu0 %3945
    %v3947 = vrcp.pop %v3946
    %v3949 = vlaneseq
    %v3950 = vshrl.u32 %v3949, 7
    %v3951 = vsub.s32 0, %v3950
    %v3952 = vrot.slane %v3947, %v3951
    %v3953 = vlaneseq
    %v3954 = vshrl.u32 %v3953, 7
    %v3955 = vsub.s32 1, %v3954
    %v3956 = vrot.slane %v3947, %v3955
    %v3957 = vlaneseq
    %v3958 = vshrl.u32 %v3957, 7
    %v3959 = vsub.s32 2, %v3958
    %v3960 = vrot.slane %v3947, %v3959
    %v3961 = vlaneseq
    %v3962 = vshrl.u32 %v3961, 7
    %v3963 = vsub.s32 3, %v3962
    %v3964 = vrot.slane %v3947, %v3963
    %v3965 = vlaneseq
    %v3966 = vshrl.u32 %v3965, 7
    %v3967 = vsub.s32 4, %v3966
    %v3968 = vrot.slane %v3947, %v3967
    %v3969 = vlaneseq
    %v3970 = vshrl.u32 %v3969, 7
    %v3971 = vsub.s32 5, %v3970
    %v3972 = vrot.slane %v3947, %v3971
    %v3973 = vlaneseq
    %v3974 = vshrl.u32 %v3973, 7
    %v3975 = vsub.s32 6, %v3974
    %v3976 = vrot.slane %v3947, %v3975
    %v3977 = vlaneseq
    %v3978 = vshrl.u32 %v3977, 7
    %v3979 = vsub.s32 7, %v3978
    %v3980 = vrot.slane %v3947, %v3979
    %v3989 = vmul.f32 %v3857, %v3952
    %v3990 = vmul.f32 %v3859, %v3956
    %v3991 = vmul.f32 %v3861, %v3960
    %v3992 = vmul.f32 %v3863, %v3964
    %v3993 = vmul.f32 %v3865, %v3968
    %v3994 = vmul.f32 %v3867, %v3972
    %v3995 = vmul.f32 %v3869, %v3976
    %v3996 = vmul.f32 %v3871, %v3980
    %3998 = vset.pattern.permute.xlu0 0
    %3999 = vperm.xlu0 %3998, %v3989
    %v4000 = vpop.permute.xlu0 %3999
    %4003 = vset.pattern.permute.xlu0 0
    %4004 = vperm.xlu0 %4003, %v3990
    %v4005 = vpop.permute.xlu0 %4004
    %4008 = vset.pattern.permute.xlu0 0
    %4009 = vperm.xlu0 %4008, %v3991
    %v4010 = vpop.permute.xlu0 %4009
    %4013 = vset.pattern.permute.xlu0 0
    %4014 = vperm.xlu0 %4013, %v3992
    %v4015 = vpop.permute.xlu0 %4014
    %4018 = vset.pattern.permute.xlu0 0
    %4019 = vperm.xlu0 %4018, %v3993
    %v4020 = vpop.permute.xlu0 %4019
    %4023 = vset.pattern.permute.xlu0 0
    %4024 = vperm.xlu0 %4023, %v3994
    %v4025 = vpop.permute.xlu0 %4024
    %4028 = vset.pattern.permute.xlu0 0
    %4029 = vperm.xlu0 %4028, %v3995
    %v4030 = vpop.permute.xlu0 %4029
    %4033 = vset.pattern.permute.xlu0 0
    %4034 = vperm.xlu0 %4033, %v3996
    %v4035 = vpop.permute.xlu0 %4034
    %v4037 = vmul.f32 %v4000, %v153
    %v4038 = vmul.f32 %v4005, %v154
    %v4039 = vmul.f32 %v4010, %v155
    %v4040 = vmul.f32 %v4015, %v156
    %v4041 = vmul.f32 %v4020, %v157
    %v4042 = vmul.f32 %v4025, %v158
    %v4043 = vmul.f32 %v4030, %v159
    %v4044 = vmul.f32 %v4035, %v160
    %v4045 = vsel %vm170, %v4037, 0.0
    %v4046 = vrot.slane %v4045, 4
    %v4047 = vadd.f32 %v4045, %v4046
    %v4048 = vrot.slane %v4047, 2
    %v4049 = vadd.f32 %v4047, %v4048
    %v4050 = vrot.slane %v4049, 1
    %v4051 = vadd.f32 %v4049, %v4050
    %v4052 = vsel %vm170, %v4038, 0.0
    %v4053 = vrot.slane %v4052, 4
    %v4054 = vadd.f32 %v4052, %v4053
    %v4055 = vrot.slane %v4054, 2
    %v4056 = vadd.f32 %v4054, %v4055
    %v4057 = vrot.slane %v4056, 1
    %v4058 = vadd.f32 %v4056, %v4057
    %v4059 = vsel %vm170, %v4039, 0.0
    %v4060 = vrot.slane %v4059, 4
    %v4061 = vadd.f32 %v4059, %v4060
    %v4062 = vrot.slane %v4061, 2
    %v4063 = vadd.f32 %v4061, %v4062
    %v4064 = vrot.slane %v4063, 1
    %v4065 = vadd.f32 %v4063, %v4064
    %v4066 = vsel %vm170, %v4040, 0.0
    %v4067 = vrot.slane %v4066, 4
    %v4068 = vadd.f32 %v4066, %v4067
    %v4069 = vrot.slane %v4068, 2
    %v4070 = vadd.f32 %v4068, %v4069
    %v4071 = vrot.slane %v4070, 1
    %v4072 = vadd.f32 %v4070, %v4071
    %v4073 = vsel %vm170, %v4041, 0.0
    %v4074 = vrot.slane %v4073, 4
    %v4075 = vadd.f32 %v4073, %v4074
    %v4076 = vrot.slane %v4075, 2
    %v4077 = vadd.f32 %v4075, %v4076
    %v4078 = vrot.slane %v4077, 1
    %v4079 = vadd.f32 %v4077, %v4078
    %v4080 = vsel %vm170, %v4042, 0.0
    %v4081 = vrot.slane %v4080, 4
    %v4082 = vadd.f32 %v4080, %v4081
    %v4083 = vrot.slane %v4082, 2
    %v4084 = vadd.f32 %v4082, %v4083
    %v4085 = vrot.slane %v4084, 1
    %v4086 = vadd.f32 %v4084, %v4085
    %v4087 = vsel %vm170, %v4043, 0.0
    %v4088 = vrot.slane %v4087, 4
    %v4089 = vadd.f32 %v4087, %v4088
    %v4090 = vrot.slane %v4089, 2
    %v4091 = vadd.f32 %v4089, %v4090
    %v4092 = vrot.slane %v4091, 1
    %v4093 = vadd.f32 %v4091, %v4092
    %v4094 = vsel %vm170, %v4044, 0.0
    %v4095 = vrot.slane %v4094, 4
    %v4096 = vadd.f32 %v4094, %v4095
    %v4097 = vrot.slane %v4096, 2
    %v4098 = vadd.f32 %v4096, %v4097
    %v4099 = vrot.slane %v4098, 1
    %v4100 = vadd.f32 %v4098, %v4099
    %s4101 = scalar_lea.vmem [#allocation3], 24
    %v4102 = vld [vmem:[%s4101] sm:$0xff]
    %v4111 = vsel %vm664, %v4058, %v4051
    %v4112 = vsel %vm666, %v4065, %v4111
    %v4113 = vsel %vm668, %v4072, %v4112
    %v4114 = vsel %vm670, %v4079, %v4113
    %v4115 = vsel %vm672, %v4086, %v4114
    %v4116 = vsel %vm674, %v4093, %v4115
    %v4117 = vsel %vm676, %v4100, %v4116
    %v4118 = vsel %vm170, %v4117, 0
    %4120 = vmatprep.subr.mxu0 0.0
    %4121 = vmatpush1.msra.mxu0 0.0
    %4122 = vmatprep.subr.mxu0 0.0
    %4123 = vmatpush1.msra.mxu0 0.0
    %4124 = vmatprep.subr.mxu0 0.0
    %4125 = vmatpush1.msra.mxu0 0.0
    %4126 = vmatprep.subr.mxu0 0.0
    %4127 = vmatpush1.msra.mxu0 0.0
    %4128 = vmatprep.subr.mxu0 0.0
    %4129 = vmatpush1.msra.mxu0 0.0
    %4130 = vmatprep.subr.mxu0 0.0
    %4131 = vmatpush1.msra.mxu0 0.0
    %4132 = vmatprep.subr.mxu0 0.0
    %4133 = vmatpush1.msra.mxu0 0.0
    %4134 = vmatprep.subr.mxu0 0.0
    %4135 = vmatpush1.msra.mxu0 0.0
    %4136 = vmatprep.subr.mxu0 0.0
    %4137 = vmatpush1.msra.mxu0 0.0
    %4138 = vmatprep.subr.mxu0 0.0
    %4139 = vmatpush1.msra.mxu0 0.0
    %4140 = vmatprep.subr.mxu0 0.0
    %4141 = vmatpush1.msra.mxu0 0.0
    %4142 = vmatprep.subr.mxu0 0.0
    %4143 = vmatpush1.msra.mxu0 0.0
    %4144 = vmatprep.subr.mxu0 0.0
    %4145 = vmatpush1.msra.mxu0 0.0
    %4146 = vmatprep.subr.mxu0 0.0
    %4147 = vmatpush1.msra.mxu0 0.0
    %4148 = vmatprep.subr.mxu0 %v332
    %4149 = vmatpush1.msra.mxu0 %v331
    %4150 = vmatprep.subr.mxu0 %v328
    %4151 = vmatpush1.msra.mxu0 %v327
    %4152 = vmatprep.subr.mxu0 0.0
    %4153 = vmatpush2.msra.mxu0 0.0
    %4154 = vmatprep.subr.mxu0 0.0
    %4155 = vmatpush2.msra.mxu0 0.0
    %4156 = vmatprep.subr.mxu0 0.0
    %4157 = vmatpush2.msra.mxu0 0.0
    %4158 = vmatprep.subr.mxu0 0.0
    %4159 = vmatpush2.msra.mxu0 0.0
    %4160 = vmatprep.subr.mxu0 0.0
    %4161 = vmatpush2.msra.mxu0 0.0
    %4162 = vmatprep.subr.mxu0 0.0
    %4163 = vmatpush2.msra.mxu0 0.0
    %4164 = vmatprep.subr.mxu0 0.0
    %4165 = vmatpush2.msra.mxu0 0.0
    %4166 = vmatprep.subr.mxu0 0.0
    %4167 = vmatpush2.msra.mxu0 0.0
    %4168 = vmatprep.subr.mxu0 0.0
    %4169 = vmatpush2.msra.mxu0 0.0
    %4170 = vmatprep.subr.mxu0 0.0
    %4171 = vmatpush2.msra.mxu0 0.0
    %4172 = vmatprep.subr.mxu0 0.0
    %4173 = vmatpush2.msra.mxu0 0.0
    %4174 = vmatprep.subr.mxu0 0.0
    %4175 = vmatpush2.msra.mxu0 0.0
    %4176 = vmatprep.subr.mxu0 0.0
    %4177 = vmatpush2.msra.mxu0 0.0
    %4178 = vmatprep.subr.mxu0 0.0
    %4179 = vmatpush2.msra.mxu0 0.0
    %4180 = vmatprep.subr.mxu0 0.0
    %4181 = vmatpush2.msra.mxu0 0.0
    %4182 = vmatprep.subr.mxu0 0.0
    %4183 = vmatpush2.msra.mxu0 0.0
    %4184 = vmatprep.mubr.f32.mxu0 0.0
    %4185 = vmatmul.mubr.f32.gmra.mxu0 %v4118
    %v4186 = vpop.f32.mrf.mxu0
    %v4187 = vadd.f32 0.0, %v4186
    %v4188 = vpop.f32.mrf.mxu0
    %v4189 = vadd.f32 0.0, %v4188
    %4190 = vdwg.mxu0
    %4191 = vmatprep.subr.mxu0 0.0
    %4192 = vmatpush1.msra.mxu0 0.0
    %4193 = vmatprep.subr.mxu0 0.0
    %4194 = vmatpush1.msra.mxu0 0.0
    %4195 = vmatprep.subr.mxu0 0.0
    %4196 = vmatpush1.msra.mxu0 0.0
    %4197 = vmatprep.subr.mxu0 0.0
    %4198 = vmatpush1.msra.mxu0 0.0
    %4199 = vmatprep.subr.mxu0 0.0
    %4200 = vmatpush1.msra.mxu0 0.0
    %4201 = vmatprep.subr.mxu0 0.0
    %4202 = vmatpush1.msra.mxu0 0.0
    %4203 = vmatprep.subr.mxu0 0.0
    %4204 = vmatpush1.msra.mxu0 0.0
    %4205 = vmatprep.subr.mxu0 0.0
    %4206 = vmatpush1.msra.mxu0 0.0
    %4207 = vmatprep.subr.mxu0 0.0
    %4208 = vmatpush1.msra.mxu0 0.0
    %4209 = vmatprep.subr.mxu0 0.0
    %4210 = vmatpush1.msra.mxu0 0.0
    %4211 = vmatprep.subr.mxu0 0.0
    %4212 = vmatpush1.msra.mxu0 0.0
    %4213 = vmatprep.subr.mxu0 0.0
    %4214 = vmatpush1.msra.mxu0 0.0
    %4215 = vmatprep.subr.mxu0 0.0
    %4216 = vmatpush1.msra.mxu0 0.0
    %4217 = vmatprep.subr.mxu0 0.0
    %4218 = vmatpush1.msra.mxu0 0.0
    %4219 = vmatprep.subr.mxu0 %v334
    %4220 = vmatpush1.msra.mxu0 %v333
    %4221 = vmatprep.subr.mxu0 %v330
    %4222 = vmatpush1.msra.mxu0 %v329
    %4223 = vmatprep.subr.mxu0 0.0
    %4224 = vmatpush2.msra.mxu0 0.0
    %4225 = vmatprep.subr.mxu0 0.0
    %4226 = vmatpush2.msra.mxu0 0.0
    %4227 = vmatprep.subr.mxu0 0.0
    %4228 = vmatpush2.msra.mxu0 0.0
    %4229 = vmatprep.subr.mxu0 0.0
    %4230 = vmatpush2.msra.mxu0 0.0
    %4231 = vmatprep.subr.mxu0 0.0
    %4232 = vmatpush2.msra.mxu0 0.0
    %4233 = vmatprep.subr.mxu0 0.0
    %4234 = vmatpush2.msra.mxu0 0.0
    %4235 = vmatprep.subr.mxu0 0.0
    %4236 = vmatpush2.msra.mxu0 0.0
    %4237 = vmatprep.subr.mxu0 0.0
    %4238 = vmatpush2.msra.mxu0 0.0
    %4239 = vmatprep.subr.mxu0 0.0
    %4240 = vmatpush2.msra.mxu0 0.0
    %4241 = vmatprep.subr.mxu0 0.0
    %4242 = vmatpush2.msra.mxu0 0.0
    %4243 = vmatprep.subr.mxu0 0.0
    %4244 = vmatpush2.msra.mxu0 0.0
    %4245 = vmatprep.subr.mxu0 0.0
    %4246 = vmatpush2.msra.mxu0 0.0
    %4247 = vmatprep.subr.mxu0 0.0
    %4248 = vmatpush2.msra.mxu0 0.0
    %4249 = vmatprep.subr.mxu0 0.0
    %4250 = vmatpush2.msra.mxu0 0.0
    %4251 = vmatprep.subr.mxu0 0.0
    %4252 = vmatpush2.msra.mxu0 0.0
    %4253 = vmatprep.subr.mxu0 0.0
    %4254 = vmatpush2.msra.mxu0 0.0
    %4255 = vmatprep.mubr.f32.mxu0 0.0
    %4256 = vmatmul.mubr.f32.gmra.mxu0 %v4118
    %v4257 = vpop.f32.mrf.mxu0
    %v4258 = vadd.f32 0.0, %v4257
    %v4259 = vpop.f32.mrf.mxu0
    %v4260 = vadd.f32 0.0, %v4259
    %4261 = vdwg.mxu0
    %v4263 = vsel %vm170, %v4102, 0
    %4265 = vmatprep.subr.mxu0 0.0
    %4266 = vmatpush1.msra.mxu0 0.0
    %4267 = vmatprep.subr.mxu0 0.0
    %4268 = vmatpush1.msra.mxu0 0.0
    %4269 = vmatprep.subr.mxu0 0.0
    %4270 = vmatpush1.msra.mxu0 0.0
    %4271 = vmatprep.subr.mxu0 0.0
    %4272 = vmatpush1.msra.mxu0 0.0
    %4273 = vmatprep.subr.mxu0 0.0
    %4274 = vmatpush1.msra.mxu0 0.0
    %4275 = vmatprep.subr.mxu0 0.0
    %4276 = vmatpush1.msra.mxu0 0.0
    %4277 = vmatprep.subr.mxu0 0.0
    %4278 = vmatpush1.msra.mxu0 0.0
    %4279 = vmatprep.subr.mxu0 0.0
    %4280 = vmatpush1.msra.mxu0 0.0
    %4281 = vmatprep.subr.mxu0 0.0
    %4282 = vmatpush1.msra.mxu0 0.0
    %4283 = vmatprep.subr.mxu0 0.0
    %4284 = vmatpush1.msra.mxu0 0.0
    %4285 = vmatprep.subr.mxu0 0.0
    %4286 = vmatpush1.msra.mxu0 0.0
    %4287 = vmatprep.subr.mxu0 0.0
    %4288 = vmatpush1.msra.mxu0 0.0
    %4289 = vmatprep.subr.mxu0 0.0
    %4290 = vmatpush1.msra.mxu0 0.0
    %4291 = vmatprep.subr.mxu0 0.0
    %4292 = vmatpush1.msra.mxu0 0.0
    %4293 = vmatprep.subr.mxu0 %v324
    %4294 = vmatpush1.msra.mxu0 %v323
    %4295 = vmatprep.subr.mxu0 %v320
    %4296 = vmatpush1.msra.mxu0 %v319
    %4297 = vmatprep.subr.mxu0 0.0
    %4298 = vmatpush2.msra.mxu0 0.0
    %4299 = vmatprep.subr.mxu0 0.0
    %4300 = vmatpush2.msra.mxu0 0.0
    %4301 = vmatprep.subr.mxu0 0.0
    %4302 = vmatpush2.msra.mxu0 0.0
    %4303 = vmatprep.subr.mxu0 0.0
    %4304 = vmatpush2.msra.mxu0 0.0
    %4305 = vmatprep.subr.mxu0 0.0
    %4306 = vmatpush2.msra.mxu0 0.0
    %4307 = vmatprep.subr.mxu0 0.0
    %4308 = vmatpush2.msra.mxu0 0.0
    %4309 = vmatprep.subr.mxu0 0.0
    %4310 = vmatpush2.msra.mxu0 0.0
    %4311 = vmatprep.subr.mxu0 0.0
    %4312 = vmatpush2.msra.mxu0 0.0
    %4313 = vmatprep.subr.mxu0 0.0
    %4314 = vmatpush2.msra.mxu0 0.0
    %4315 = vmatprep.subr.mxu0 0.0
    %4316 = vmatpush2.msra.mxu0 0.0
    %4317 = vmatprep.subr.mxu0 0.0
    %4318 = vmatpush2.msra.mxu0 0.0
    %4319 = vmatprep.subr.mxu0 0.0
    %4320 = vmatpush2.msra.mxu0 0.0
    %4321 = vmatprep.subr.mxu0 0.0
    %4322 = vmatpush2.msra.mxu0 0.0
    %4323 = vmatprep.subr.mxu0 0.0
    %4324 = vmatpush2.msra.mxu0 0.0
    %4325 = vmatprep.subr.mxu0 0.0
    %4326 = vmatpush2.msra.mxu0 0.0
    %4327 = vmatprep.subr.mxu0 0.0
    %4328 = vmatpush2.msra.mxu0 0.0
    %4329 = vmatprep.mubr.f32.mxu0 0.0
    %4330 = vmatmul.mubr.f32.gmra.mxu0 %v4263
    %v4331 = vpop.f32.mrf.mxu0
    %v4332 = vadd.f32 %v4187, %v4331
    %v4333 = vpop.f32.mrf.mxu0
    %v4334 = vadd.f32 %v4189, %v4333
    %4335 = vdwg.mxu0
    %4336 = vmatprep.subr.mxu0 0.0
    %4337 = vmatpush1.msra.mxu0 0.0
    %4338 = vmatprep.subr.mxu0 0.0
    %4339 = vmatpush1.msra.mxu0 0.0
    %4340 = vmatprep.subr.mxu0 0.0
    %4341 = vmatpush1.msra.mxu0 0.0
    %4342 = vmatprep.subr.mxu0 0.0
    %4343 = vmatpush1.msra.mxu0 0.0
    %4344 = vmatprep.subr.mxu0 0.0
    %4345 = vmatpush1.msra.mxu0 0.0
    %4346 = vmatprep.subr.mxu0 0.0
    %4347 = vmatpush1.msra.mxu0 0.0
    %4348 = vmatprep.subr.mxu0 0.0
    %4349 = vmatpush1.msra.mxu0 0.0
    %4350 = vmatprep.subr.mxu0 0.0
    %4351 = vmatpush1.msra.mxu0 0.0
    %4352 = vmatprep.subr.mxu0 0.0
    %4353 = vmatpush1.msra.mxu0 0.0
    %4354 = vmatprep.subr.mxu0 0.0
    %4355 = vmatpush1.msra.mxu0 0.0
    %4356 = vmatprep.subr.mxu0 0.0
    %4357 = vmatpush1.msra.mxu0 0.0
    %4358 = vmatprep.subr.mxu0 0.0
    %4359 = vmatpush1.msra.mxu0 0.0
    %4360 = vmatprep.subr.mxu0 0.0
    %4361 = vmatpush1.msra.mxu0 0.0
    %4362 = vmatprep.subr.mxu0 0.0
    %4363 = vmatpush1.msra.mxu0 0.0
    %4364 = vmatprep.subr.mxu0 %v326
    %4365 = vmatpush1.msra.mxu0 %v325
    %4366 = vmatprep.subr.mxu0 %v322
    %4367 = vmatpush1.msra.mxu0 %v321
    %4368 = vmatprep.subr.mxu0 0.0
    %4369 = vmatpush2.msra.mxu0 0.0
    %4370 = vmatprep.subr.mxu0 0.0
    %4371 = vmatpush2.msra.mxu0 0.0
    %4372 = vmatprep.subr.mxu0 0.0
    %4373 = vmatpush2.msra.mxu0 0.0
    %4374 = vmatprep.subr.mxu0 0.0
    %4375 = vmatpush2.msra.mxu0 0.0
    %4376 = vmatprep.subr.mxu0 0.0
    %4377 = vmatpush2.msra.mxu0 0.0
    %4378 = vmatprep.subr.mxu0 0.0
    %4379 = vmatpush2.msra.mxu0 0.0
    %4380 = vmatprep.subr.mxu0 0.0
    %4381 = vmatpush2.msra.mxu0 0.0
    %4382 = vmatprep.subr.mxu0 0.0
    %4383 = vmatpush2.msra.mxu0 0.0
    %4384 = vmatprep.subr.mxu0 0.0
    %4385 = vmatpush2.msra.mxu0 0.0
    %4386 = vmatprep.subr.mxu0 0.0
    %4387 = vmatpush2.msra.mxu0 0.0
    %4388 = vmatprep.subr.mxu0 0.0
    %4389 = vmatpush2.msra.mxu0 0.0
    %4390 = vmatprep.subr.mxu0 0.0
    %4391 = vmatpush2.msra.mxu0 0.0
    %4392 = vmatprep.subr.mxu0 0.0
    %4393 = vmatpush2.msra.mxu0 0.0
    %4394 = vmatprep.subr.mxu0 0.0
    %4395 = vmatpush2.msra.mxu0 0.0
    %4396 = vmatprep.subr.mxu0 0.0
    %4397 = vmatpush2.msra.mxu0 0.0
    %4398 = vmatprep.subr.mxu0 0.0
    %4399 = vmatpush2.msra.mxu0 0.0
    %4400 = vmatprep.mubr.f32.mxu0 0.0
    %4401 = vmatmul.mubr.f32.gmra.mxu0 %v4263
    %v4402 = vpop.f32.mrf.mxu0
    %v4403 = vadd.f32 %v4258, %v4402
    %v4404 = vpop.f32.mrf.mxu0
    %v4405 = vadd.f32 %v4260, %v4404
    %4406 = vdwg.mxu0
    %4407 = vmatprep.subr.mxu0 %v396
    %4408 = vmatpush1.msra.mxu0 %v395
    %4409 = vmatprep.subr.mxu0 %v392
    %4410 = vmatpush1.msra.mxu0 %v391
    %4411 = vmatprep.subr.mxu0 %v388
    %4412 = vmatpush1.msra.mxu0 %v387
    %4413 = vmatprep.subr.mxu0 %v384
    %4414 = vmatpush1.msra.mxu0 %v383
    %4415 = vmatprep.subr.mxu0 %v380
    %4416 = vmatpush1.msra.mxu0 %v379
    %4417 = vmatprep.subr.mxu0 %v376
    %4418 = vmatpush1.msra.mxu0 %v375
    %4419 = vmatprep.subr.mxu0 %v372
    %4420 = vmatpush1.msra.mxu0 %v371
    %4421 = vmatprep.subr.mxu0 %v368
    %4422 = vmatpush1.msra.mxu0 %v367
    %4423 = vmatprep.subr.mxu0 %v364
    %4424 = vmatpush1.msra.mxu0 %v363
    %4425 = vmatprep.subr.mxu0 %v360
    %4426 = vmatpush1.msra.mxu0 %v359
    %4427 = vmatprep.subr.mxu0 %v356
    %4428 = vmatpush1.msra.mxu0 %v355
    %4429 = vmatprep.subr.mxu0 %v352
    %4430 = vmatpush1.msra.mxu0 %v351
    %4431 = vmatprep.subr.mxu0 %v348
    %4432 = vmatpush1.msra.mxu0 %v347
    %4433 = vmatprep.subr.mxu0 %v344
    %4434 = vmatpush1.msra.mxu0 %v343
    %4435 = vmatprep.subr.mxu0 %v340
    %4436 = vmatpush1.msra.mxu0 %v339
    %4437 = vmatprep.subr.mxu0 %v336
    %4438 = vmatpush1.msra.mxu0 %v335
    %4439 = vmatprep.subr.mxu0 0.0
    %4440 = vmatpush2.msra.mxu0 0.0
    %4441 = vmatprep.subr.mxu0 0.0
    %4442 = vmatpush2.msra.mxu0 0.0
    %4443 = vmatprep.subr.mxu0 0.0
    %4444 = vmatpush2.msra.mxu0 0.0
    %4445 = vmatprep.subr.mxu0 0.0
    %4446 = vmatpush2.msra.mxu0 0.0
    %4447 = vmatprep.subr.mxu0 0.0
    %4448 = vmatpush2.msra.mxu0 0.0
    %4449 = vmatprep.subr.mxu0 0.0
    %4450 = vmatpush2.msra.mxu0 0.0
    %4451 = vmatprep.subr.mxu0 0.0
    %4452 = vmatpush2.msra.mxu0 0.0
    %4453 = vmatprep.subr.mxu0 0.0
    %4454 = vmatpush2.msra.mxu0 0.0
    %4455 = vmatprep.subr.mxu0 0.0
    %4456 = vmatpush2.msra.mxu0 0.0
    %4457 = vmatprep.subr.mxu0 0.0
    %4458 = vmatpush2.msra.mxu0 0.0
    %4459 = vmatprep.subr.mxu0 0.0
    %4460 = vmatpush2.msra.mxu0 0.0
    %4461 = vmatprep.subr.mxu0 0.0
    %4462 = vmatpush2.msra.mxu0 0.0
    %4463 = vmatprep.subr.mxu0 0.0
    %4464 = vmatpush2.msra.mxu0 0.0
    %4465 = vmatprep.subr.mxu0 0.0
    %4466 = vmatpush2.msra.mxu0 0.0
    %4467 = vmatprep.subr.mxu0 0.0
    %4468 = vmatpush2.msra.mxu0 0.0
    %4469 = vmatprep.subr.mxu0 0.0
    %4470 = vmatpush2.msra.mxu0 0.0
    %4471 = vmatprep.mubr.f32.mxu0 0.0
    %4472 = vmatmul.mubr.f32.gmra.mxu0 %v3545
    %v4473 = vpop.f32.mrf.mxu0
    %v4474 = vadd.f32 0.0, %v4473
    %v4475 = vpop.f32.mrf.mxu0
    %v4476 = vadd.f32 0.0, %v4475
    %4477 = vdwg.mxu0
    %4478 = vmatprep.subr.mxu0 %v398
    %4479 = vmatpush1.msra.mxu0 %v397
    %4480 = vmatprep.subr.mxu0 %v394
    %4481 = vmatpush1.msra.mxu0 %v393
    %4482 = vmatprep.subr.mxu0 %v390
    %4483 = vmatpush1.msra.mxu0 %v389
    %4484 = vmatprep.subr.mxu0 %v386
    %4485 = vmatpush1.msra.mxu0 %v385
    %4486 = vmatprep.subr.mxu0 %v382
    %4487 = vmatpush1.msra.mxu0 %v381
    %4488 = vmatprep.subr.mxu0 %v378
    %4489 = vmatpush1.msra.mxu0 %v377
    %4490 = vmatprep.subr.mxu0 %v374
    %4491 = vmatpush1.msra.mxu0 %v373
    %4492 = vmatprep.subr.mxu0 %v370
    %4493 = vmatpush1.msra.mxu0 %v369
    %4494 = vmatprep.subr.mxu0 %v366
    %4495 = vmatpush1.msra.mxu0 %v365
    %4496 = vmatprep.subr.mxu0 %v362
    %4497 = vmatpush1.msra.mxu0 %v361
    %4498 = vmatprep.subr.mxu0 %v358
    %4499 = vmatpush1.msra.mxu0 %v357
    %4500 = vmatprep.subr.mxu0 %v354
    %4501 = vmatpush1.msra.mxu0 %v353
    %4502 = vmatprep.subr.mxu0 %v350
    %4503 = vmatpush1.msra.mxu0 %v349
    %4504 = vmatprep.subr.mxu0 %v346
    %4505 = vmatpush1.msra.mxu0 %v345
    %4506 = vmatprep.subr.mxu0 %v342
    %4507 = vmatpush1.msra.mxu0 %v341
    %4508 = vmatprep.subr.mxu0 %v338
    %4509 = vmatpush1.msra.mxu0 %v337
    %4510 = vmatprep.subr.mxu0 0.0
    %4511 = vmatpush2.msra.mxu0 0.0
    %4512 = vmatprep.subr.mxu0 0.0
    %4513 = vmatpush2.msra.mxu0 0.0
    %4514 = vmatprep.subr.mxu0 0.0
    %4515 = vmatpush2.msra.mxu0 0.0
    %4516 = vmatprep.subr.mxu0 0.0
    %4517 = vmatpush2.msra.mxu0 0.0
    %4518 = vmatprep.subr.mxu0 0.0
    %4519 = vmatpush2.msra.mxu0 0.0
    %4520 = vmatprep.subr.mxu0 0.0
    %4521 = vmatpush2.msra.mxu0 0.0
    %4522 = vmatprep.subr.mxu0 0.0
    %4523 = vmatpush2.msra.mxu0 0.0
    %4524 = vmatprep.subr.mxu0 0.0
    %4525 = vmatpush2.msra.mxu0 0.0
    %4526 = vmatprep.subr.mxu0 0.0
    %4527 = vmatpush2.msra.mxu0 0.0
    %4528 = vmatprep.subr.mxu0 0.0
    %4529 = vmatpush2.msra.mxu0 0.0
    %4530 = vmatprep.subr.mxu0 0.0
    %4531 = vmatpush2.msra.mxu0 0.0
    %4532 = vmatprep.subr.mxu0 0.0
    %4533 = vmatpush2.msra.mxu0 0.0
    %4534 = vmatprep.subr.mxu0 0.0
    %4535 = vmatpush2.msra.mxu0 0.0
    %4536 = vmatprep.subr.mxu0 0.0
    %4537 = vmatpush2.msra.mxu0 0.0
    %4538 = vmatprep.subr.mxu0 0.0
    %4539 = vmatpush2.msra.mxu0 0.0
    %4540 = vmatprep.subr.mxu0 0.0
    %4541 = vmatpush2.msra.mxu0 0.0
    %4542 = vmatprep.mubr.f32.mxu0 0.0
    %4543 = vmatmul.mubr.f32.gmra.mxu0 %v3545
    %v4544 = vpop.f32.mrf.mxu0
    %v4545 = vadd.f32 0.0, %v4544
    %v4546 = vpop.f32.mrf.mxu0
    %v4547 = vadd.f32 0.0, %v4546
    %4548 = vdwg.mxu0
    %v4549 = vadd.f32 %v4332, %v4474
    %v4550 = vadd.f32 %v4334, %v4476
    %v4551 = vadd.f32 %v4403, %v4545
    %v4552 = vadd.f32 %v4405, %v4547
    %v4553 = vadd.f32 %v4549, %v1432
    %v4554 = vadd.f32 %v4550, %v1436
    %v4555 = vadd.f32 %v4551, %v1440
    %v4556 = vadd.f32 %v4552, %v1444
    %v4557 = vxor.u32 %v4553, 2147483648
    %v4558 = vmul.f32 %v4557, 1.442695
    %v4559 = vpow.pop %v4558
    %v4560 = vadd.f32 %v4559, 1.0
    %v4561 = vrcp.pop %v4560
    %v4562 = vmul.f32 1.0, %v4561
    %v4563 = vxor.u32 %v4554, 2147483648
    %v4564 = vmul.f32 %v4563, 1.442695
    %v4565 = vpow.pop %v4564
    %v4566 = vadd.f32 %v4565, 1.0
    %v4567 = vrcp.pop %v4566
    %v4568 = vmul.f32 1.0, %v4567
    %v4569 = vtanh.pop %v4555
    %v4570 = vxor.u32 %v4556, 2147483648
    %v4571 = vmul.f32 %v4570, 1.442695
    %v4572 = vpow.pop %v4571
    %v4573 = vadd.f32 %v4572, 1.0
    %v4574 = vrcp.pop %v4573
    %v4575 = vmul.f32 1.0, %v4574
    %v4576 = vmul.f32 %v4568, %v3543
    %v4577 = vmul.f32 %v4562, %v4569
    %v4578 = vadd.f32 %v4576, %v4577
    %v4579 = vtanh.pop %v4578
    %v4580 = vmul.f32 %v4575, %v4579
    %s4581 = scalar_lea.vmem [#allocation17], 24
    %4582 = vst [vmem:[%s4581] sm:$0xff] %v4580
    %4583 = vmatprep.subr.mxu0 0.0
    %4584 = vmatpush1.msra.mxu0 %v315
    %4585 = vmatprep.subr.mxu0 0.0
    %4586 = vmatpush1.msra.mxu0 %v314
    %4587 = vmatprep.subr.mxu0 0.0
    %4588 = vmatpush1.msra.mxu0 %v313
    %4589 = vmatprep.subr.mxu0 0.0
    %4590 = vmatpush1.msra.mxu0 %v312
    %4591 = vmatprep.subr.mxu0 0.0
    %4592 = vmatpush1.msra.mxu0 %v311
    %4593 = vmatprep.subr.mxu0 0.0
    %4594 = vmatpush1.msra.mxu0 %v310
    %4595 = vmatprep.subr.mxu0 0.0
    %4596 = vmatpush1.msra.mxu0 %v309
    %4597 = vmatprep.subr.mxu0 0.0
    %4598 = vmatpush1.msra.mxu0 %v308
    %4599 = vmatprep.subr.mxu0 0.0
    %4600 = vmatpush1.msra.mxu0 %v307
    %4601 = vmatprep.subr.mxu0 0.0
    %4602 = vmatpush1.msra.mxu0 %v306
    %4603 = vmatprep.subr.mxu0 0.0
    %4604 = vmatpush1.msra.mxu0 %v305
    %4605 = vmatprep.subr.mxu0 0.0
    %4606 = vmatpush1.msra.mxu0 %v304
    %4607 = vmatprep.subr.mxu0 0.0
    %4608 = vmatpush1.msra.mxu0 %v303
    %4609 = vmatprep.subr.mxu0 0.0
    %4610 = vmatpush1.msra.mxu0 %v302
    %4611 = vmatprep.subr.mxu0 0.0
    %4612 = vmatpush1.msra.mxu0 %v301
    %4613 = vmatprep.subr.mxu0 0.0
    %4614 = vmatpush1.msra.mxu0 %v300
    %4615 = vmatprep.subr.mxu0 0.0
    %4616 = vmatpush2.msra.mxu0 0.0
    %4617 = vmatprep.subr.mxu0 0.0
    %4618 = vmatpush2.msra.mxu0 0.0
    %4619 = vmatprep.subr.mxu0 0.0
    %4620 = vmatpush2.msra.mxu0 0.0
    %4621 = vmatprep.subr.mxu0 0.0
    %4622 = vmatpush2.msra.mxu0 0.0
    %4623 = vmatprep.subr.mxu0 0.0
    %4624 = vmatpush2.msra.mxu0 0.0
    %4625 = vmatprep.subr.mxu0 0.0
    %4626 = vmatpush2.msra.mxu0 0.0
    %4627 = vmatprep.subr.mxu0 0.0
    %4628 = vmatpush2.msra.mxu0 0.0
    %4629 = vmatprep.subr.mxu0 0.0
    %4630 = vmatpush2.msra.mxu0 0.0
    %4631 = vmatprep.subr.mxu0 0.0
    %4632 = vmatpush2.msra.mxu0 0.0
    %4633 = vmatprep.subr.mxu0 0.0
    %4634 = vmatpush2.msra.mxu0 0.0
    %4635 = vmatprep.subr.mxu0 0.0
    %4636 = vmatpush2.msra.mxu0 0.0
    %4637 = vmatprep.subr.mxu0 0.0
    %4638 = vmatpush2.msra.mxu0 0.0
    %4639 = vmatprep.subr.mxu0 0.0
    %4640 = vmatpush2.msra.mxu0 0.0
    %4641 = vmatprep.subr.mxu0 0.0
    %4642 = vmatpush2.msra.mxu0 0.0
    %4643 = vmatprep.subr.mxu0 0.0
    %4644 = vmatpush2.msra.mxu0 0.0
    %4645 = vmatprep.subr.mxu0 0.0
    %4646 = vmatpush2.msra.mxu0 0.0
    %4647 = vmatprep.mubr.f32.mxu0 0.0
    %4648 = vmatmul.mubr.f32.gmra.mxu0 %v4580
    %v4649 = vpop.f32.mrf.mxu0
    %v4650 = vadd.f32 %v405, %v4649
    %v4651 = vpop.f32.mrf.mxu0
    %4652 = vdwg.mxu0
    %v4654 = vcombine.high %v4650, %v4650
    %v4656 = vunpack.c.l.s4 1966171168
    %v4657 = vunpack.c.0.s8 %v4656
    %v4658 = vlaneseq
    %v4659 = vshrl.u32 %v4658, 7
    %v4660 = vsub.s32 %v4657, %v4659
    %v4661 = vrot.slane %v4650, %v4660
    %v4663 = vunpack.c.l.s4 1966171168
    %v4664 = vunpack.c.0.s8 %v4663
    %v4665 = vlaneseq
    %v4666 = vshrl.u32 %v4665, 7
    %v4667 = vsub.s32 %v4664, %v4666
    %v4668 = vrot.slane %v4654, %v4667
    %v4669 = vcombine.high %v4661, %v4661
    %v4670 = vcombine.high %v4668, %v4668
    %v4672 = vunpack.c.l.s4 1966171168
    %v4673 = vunpack.c.0.s8 %v4672
    %v4674 = vlaneseq
    %v4675 = vshrl.u32 %v4674, 7
    %v4676 = vsub.s32 %v4673, %v4675
    %v4677 = vrot.slane %v4661, %v4676
    %v4679 = vunpack.c.l.s4 1966171168
    %v4680 = vunpack.c.0.s8 %v4679
    %v4681 = vlaneseq
    %v4682 = vshrl.u32 %v4681, 7
    %v4683 = vsub.s32 %v4680, %v4682
    %v4684 = vrot.slane %v4668, %v4683
    %v4686 = vunpack.c.l.s4 1966171168
    %v4687 = vunpack.c.0.s8 %v4686
    %v4688 = vlaneseq
    %v4689 = vshrl.u32 %v4688, 7
    %v4690 = vsub.s32 %v4687, %v4689
    %v4691 = vrot.slane %v4669, %v4690
    %v4693 = vunpack.c.l.s4 1966171168
    %v4694 = vunpack.c.0.s8 %v4693
    %v4695 = vlaneseq
    %v4696 = vshrl.u32 %v4695, 7
    %v4697 = vsub.s32 %v4694, %v4696
    %v4698 = vrot.slane %v4670, %v4697
    %v4699 = vcombine.high %v4677, %v4677
    %v4700 = vcombine.high %v4684, %v4684
    %v4701 = vcombine.high %v4691, %v4691
    %v4702 = vcombine.high %v4698, %v4698
    %v4703 = vlaneseq
    %v4704 = vshrl.u32 %v4703, 7
    %v4705 = vsub.s32 0, %v4704
    %v4706 = vrot.slane %v4677, %v4705
    %v4707 = vlaneseq
    %v4708 = vshrl.u32 %v4707, 7
    %v4709 = vsub.s32 0, %v4708
    %v4710 = vrot.slane %v4691, %v4709
    %v4711 = vlaneseq
    %v4712 = vshrl.u32 %v4711, 7
    %v4713 = vsub.s32 0, %v4712
    %v4714 = vrot.slane %v4699, %v4713
    %v4715 = vlaneseq
    %v4716 = vshrl.u32 %v4715, 7
    %v4717 = vsub.s32 0, %v4716
    %v4718 = vrot.slane %v4701, %v4717
    %v4719 = vlaneseq
    %v4720 = vshrl.u32 %v4719, 7
    %v4721 = vsub.s32 0, %v4720
    %v4722 = vrot.slane %v4684, %v4721
    %v4723 = vlaneseq
    %v4724 = vshrl.u32 %v4723, 7
    %v4725 = vsub.s32 0, %v4724
    %v4726 = vrot.slane %v4698, %v4725
    %v4727 = vlaneseq
    %v4728 = vshrl.u32 %v4727, 7
    %v4729 = vsub.s32 0, %v4728
    %v4730 = vrot.slane %v4700, %v4729
    %v4731 = vlaneseq
    %v4732 = vshrl.u32 %v4731, 7
    %v4733 = vsub.s32 0, %v4732
    %v4734 = vrot.slane %v4702, %v4733
    %v4743 = vadd.f32 %v262, %v4706
    %v4744 = vadd.f32 %v267, %v4710
    %v4745 = vadd.f32 %v272, %v4714
    %v4746 = vadd.f32 %v277, %v4718
    %v4747 = vadd.f32 %v282, %v4722
    %v4748 = vadd.f32 %v287, %v4726
    %v4749 = vadd.f32 %v292, %v4730
    %v4750 = vadd.f32 %v297, %v4734
    %v4751 = vtanh.pop %v4743
    %v4752 = vtanh.pop %v4744
    %v4753 = vtanh.pop %v4745
    %v4754 = vtanh.pop %v4746
    %v4755 = vtanh.pop %v4747
    %v4756 = vtanh.pop %v4748
    %v4757 = vtanh.pop %v4749
    %v4758 = vtanh.pop %v4750
    %v4759 = vmul.f32 %v4751, %v587
    %v4760 = vmul.f32 %v4752, %v587
    %v4761 = vmul.f32 %v4753, %v587
    %v4762 = vmul.f32 %v4754, %v587
    %v4763 = vmul.f32 %v4755, %v587
    %v4764 = vmul.f32 %v4756, %v587
    %v4765 = vmul.f32 %v4757, %v587
    %v4766 = vmul.f32 %v4758, %v587
    %4767 = vadd.xlane.f32.xlu0 %v4759
    %v4768 = vpop.xlane.xlu0 %4767
    %4769 = vadd.xlane.f32.xlu0 %v4760
    %v4770 = vpop.xlane.xlu0 %4769
    %4771 = vadd.xlane.f32.xlu0 %v4761
    %v4772 = vpop.xlane.xlu0 %4771
    %4773 = vadd.xlane.f32.xlu0 %v4762
    %v4774 = vpop.xlane.xlu0 %4773
    %4775 = vadd.xlane.f32.xlu0 %v4763
    %v4776 = vpop.xlane.xlu0 %4775
    %4777 = vadd.xlane.f32.xlu0 %v4764
    %v4778 = vpop.xlane.xlu0 %4777
    %4779 = vadd.xlane.f32.xlu0 %v4765
    %v4780 = vpop.xlane.xlu0 %4779
    %4781 = vadd.xlane.f32.xlu0 %v4766
    %v4782 = vpop.xlane.xlu0 %4781
    %v4783 = vadd.f32 %v4768, %v613
    %v4784 = vadd.f32 %v4770, %v613
    %v4785 = vadd.f32 %v4772, %v613
    %v4786 = vadd.f32 %v4774, %v613
    %v4787 = vadd.f32 %v4776, %v613
    %v4788 = vadd.f32 %v4778, %v613
    %v4789 = vadd.f32 %v4780, %v613
    %v4790 = vadd.f32 %v4782, %v613
    %v4799 = vlaneseq
    %v4800 = vshrl.u32 %v4799, 7
    %v4801 = vsub.s32 %v631, %v4800
    %v4802 = vrot.slane %v4783, %v4801
    %v4803 = vlaneseq
    %v4804 = vshrl.u32 %v4803, 7
    %v4805 = vsub.s32 %v631, %v4804
    %v4806 = vrot.slane %v4784, %v4805
    %v4807 = vlaneseq
    %v4808 = vshrl.u32 %v4807, 7
    %v4809 = vsub.s32 %v631, %v4808
    %v4810 = vrot.slane %v4785, %v4809
    %v4811 = vlaneseq
    %v4812 = vshrl.u32 %v4811, 7
    %v4813 = vsub.s32 %v631, %v4812
    %v4814 = vrot.slane %v4786, %v4813
    %v4815 = vlaneseq
    %v4816 = vshrl.u32 %v4815, 7
    %v4817 = vsub.s32 %v631, %v4816
    %v4818 = vrot.slane %v4787, %v4817
    %v4819 = vlaneseq
    %v4820 = vshrl.u32 %v4819, 7
    %v4821 = vsub.s32 %v631, %v4820
    %v4822 = vrot.slane %v4788, %v4821
    %v4823 = vlaneseq
    %v4824 = vshrl.u32 %v4823, 7
    %v4825 = vsub.s32 %v631, %v4824
    %v4826 = vrot.slane %v4789, %v4825
    %v4827 = vlaneseq
    %v4828 = vshrl.u32 %v4827, 7
    %v4829 = vsub.s32 %v631, %v4828
    %v4830 = vrot.slane %v4790, %v4829
    %v4831 = vsel %vm664, %v4806, %v4802
    %v4832 = vsel %vm666, %v4810, %v4831
    %v4833 = vsel %vm668, %v4814, %v4832
    %v4834 = vsel %vm670, %v4818, %v4833
    %v4835 = vsel %vm672, %v4822, %v4834
    %v4836 = vsel %vm674, %v4826, %v4835
    %v4837 = vsel %vm676, %v4830, %v4836
    %v4839 = vsel %vm679, %v4837, -inf
    %4840 = vmax.xlane.f32.xlu0 %v4839
    %v4841 = vpop.xlane.xlu0 %4840
    %v4843 = vlaneseq
    %v4844 = vshrl.u32 %v4843, 7
    %v4845 = vsub.s32 0, %v4844
    %v4846 = vrot.slane %v4841, %v4845
    %v4847 = vlaneseq
    %v4848 = vshrl.u32 %v4847, 7
    %v4849 = vsub.s32 1, %v4848
    %v4850 = vrot.slane %v4841, %v4849
    %v4851 = vlaneseq
    %v4852 = vshrl.u32 %v4851, 7
    %v4853 = vsub.s32 2, %v4852
    %v4854 = vrot.slane %v4841, %v4853
    %v4855 = vlaneseq
    %v4856 = vshrl.u32 %v4855, 7
    %v4857 = vsub.s32 3, %v4856
    %v4858 = vrot.slane %v4841, %v4857
    %v4859 = vlaneseq
    %v4860 = vshrl.u32 %v4859, 7
    %v4861 = vsub.s32 4, %v4860
    %v4862 = vrot.slane %v4841, %v4861
    %v4863 = vlaneseq
    %v4864 = vshrl.u32 %v4863, 7
    %v4865 = vsub.s32 5, %v4864
    %v4866 = vrot.slane %v4841, %v4865
    %v4867 = vlaneseq
    %v4868 = vshrl.u32 %v4867, 7
    %v4869 = vsub.s32 6, %v4868
    %v4870 = vrot.slane %v4841, %v4869
    %v4871 = vlaneseq
    %v4872 = vshrl.u32 %v4871, 7
    %v4873 = vsub.s32 7, %v4872
    %v4874 = vrot.slane %v4841, %v4873
    %v4883 = vsub.f32 %v4783, %v4846
    %v4884 = vsub.f32 %v4784, %v4850
    %v4885 = vsub.f32 %v4785, %v4854
    %v4886 = vsub.f32 %v4786, %v4858
    %v4887 = vsub.f32 %v4787, %v4862
    %v4888 = vsub.f32 %v4788, %v4866
    %v4889 = vsub.f32 %v4789, %v4870
    %v4890 = vsub.f32 %v4790, %v4874
    %v4891 = vmul.f32 %v4883, 1.442695
    %v4892 = vpow.pop %v4891
    %v4893 = vmul.f32 %v4884, 1.442695
    %v4894 = vpow.pop %v4893
    %v4895 = vmul.f32 %v4885, 1.442695
    %v4896 = vpow.pop %v4895
    %v4897 = vmul.f32 %v4886, 1.442695
    %v4898 = vpow.pop %v4897
    %v4899 = vmul.f32 %v4887, 1.442695
    %v4900 = vpow.pop %v4899
    %v4901 = vmul.f32 %v4888, 1.442695
    %v4902 = vpow.pop %v4901
    %v4903 = vmul.f32 %v4889, 1.442695
    %v4904 = vpow.pop %v4903
    %v4905 = vmul.f32 %v4890, 1.442695
    %v4906 = vpow.pop %v4905
    %4915 = vset.pattern.permute.xlu0 0
    %4916 = vperm.xlu0 %4915, %v4892
    %v4917 = vpop.permute.xlu0 %4916
    %4918 = vset.pattern.permute.xlu0 0
    %4919 = vperm.xlu0 %4918, %v4894
    %v4920 = vpop.permute.xlu0 %4919
    %4921 = vset.pattern.permute.xlu0 0
    %4922 = vperm.xlu0 %4921, %v4896
    %v4923 = vpop.permute.xlu0 %4922
    %4924 = vset.pattern.permute.xlu0 0
    %4925 = vperm.xlu0 %4924, %v4898
    %v4926 = vpop.permute.xlu0 %4925
    %4927 = vset.pattern.permute.xlu0 0
    %4928 = vperm.xlu0 %4927, %v4900
    %v4929 = vpop.permute.xlu0 %4928
    %4930 = vset.pattern.permute.xlu0 0
    %4931 = vperm.xlu0 %4930, %v4902
    %v4932 = vpop.permute.xlu0 %4931
    %4933 = vset.pattern.permute.xlu0 0
    %4934 = vperm.xlu0 %4933, %v4904
    %v4935 = vpop.permute.xlu0 %4934
    %4936 = vset.pattern.permute.xlu0 0
    %4937 = vperm.xlu0 %4936, %v4906
    %v4938 = vpop.permute.xlu0 %4937
    %v4939 = vlaneseq
    %v4940 = vshrl.u32 %v4939, 7
    %v4941 = vsub.s32 %v631, %v4940
    %v4942 = vrot.slane %v4917, %v4941
    %v4943 = vlaneseq
    %v4944 = vshrl.u32 %v4943, 7
    %v4945 = vsub.s32 %v631, %v4944
    %v4946 = vrot.slane %v4920, %v4945
    %v4947 = vlaneseq
    %v4948 = vshrl.u32 %v4947, 7
    %v4949 = vsub.s32 %v631, %v4948
    %v4950 = vrot.slane %v4923, %v4949
    %v4951 = vlaneseq
    %v4952 = vshrl.u32 %v4951, 7
    %v4953 = vsub.s32 %v631, %v4952
    %v4954 = vrot.slane %v4926, %v4953
    %v4955 = vlaneseq
    %v4956 = vshrl.u32 %v4955, 7
    %v4957 = vsub.s32 %v631, %v4956
    %v4958 = vrot.slane %v4929, %v4957
    %v4959 = vlaneseq
    %v4960 = vshrl.u32 %v4959, 7
    %v4961 = vsub.s32 %v631, %v4960
    %v4962 = vrot.slane %v4932, %v4961
    %v4963 = vlaneseq
    %v4964 = vshrl.u32 %v4963, 7
    %v4965 = vsub.s32 %v631, %v4964
    %v4966 = vrot.slane %v4935, %v4965
    %v4967 = vlaneseq
    %v4968 = vshrl.u32 %v4967, 7
    %v4969 = vsub.s32 %v631, %v4968
    %v4970 = vrot.slane %v4938, %v4969
    %v4971 = vsel %vm664, %v4946, %v4942
    %v4972 = vsel %vm666, %v4950, %v4971
    %v4973 = vsel %vm668, %v4954, %v4972
    %v4974 = vsel %vm670, %v4958, %v4973
    %v4975 = vsel %vm672, %v4962, %v4974
    %v4976 = vsel %vm674, %v4966, %v4975
    %v4977 = vsel %vm676, %v4970, %v4976
    %v4979 = vsel %vm679, %v4977, 0.0
    %4980 = vadd.xlane.f32.xlu0 %v4979
    %v4981 = vpop.xlane.xlu0 %4980
    %v4982 = vrcp.pop %v4981
    %v4984 = vlaneseq
    %v4985 = vshrl.u32 %v4984, 7
    %v4986 = vsub.s32 0, %v4985
    %v4987 = vrot.slane %v4982, %v4986
    %v4988 = vlaneseq
    %v4989 = vshrl.u32 %v4988, 7
    %v4990 = vsub.s32 1, %v4989
    %v4991 = vrot.slane %v4982, %v4990
    %v4992 = vlaneseq
    %v4993 = vshrl.u32 %v4992, 7
    %v4994 = vsub.s32 2, %v4993
    %v4995 = vrot.slane %v4982, %v4994
    %v4996 = vlaneseq
    %v4997 = vshrl.u32 %v4996, 7
    %v4998 = vsub.s32 3, %v4997
    %v4999 = vrot.slane %v4982, %v4998
    %v5000 = vlaneseq
    %v5001 = vshrl.u32 %v5000, 7
    %v5002 = vsub.s32 4, %v5001
    %v5003 = vrot.slane %v4982, %v5002
    %v5004 = vlaneseq
    %v5005 = vshrl.u32 %v5004, 7
    %v5006 = vsub.s32 5, %v5005
    %v5007 = vrot.slane %v4982, %v5006
    %v5008 = vlaneseq
    %v5009 = vshrl.u32 %v5008, 7
    %v5010 = vsub.s32 6, %v5009
    %v5011 = vrot.slane %v4982, %v5010
    %v5012 = vlaneseq
    %v5013 = vshrl.u32 %v5012, 7
    %v5014 = vsub.s32 7, %v5013
    %v5015 = vrot.slane %v4982, %v5014
    %v5024 = vmul.f32 %v4892, %v4987
    %v5025 = vmul.f32 %v4894, %v4991
    %v5026 = vmul.f32 %v4896, %v4995
    %v5027 = vmul.f32 %v4898, %v4999
    %v5028 = vmul.f32 %v4900, %v5003
    %v5029 = vmul.f32 %v4902, %v5007
    %v5030 = vmul.f32 %v4904, %v5011
    %v5031 = vmul.f32 %v4906, %v5015
    %5033 = vset.pattern.permute.xlu0 0
    %5034 = vperm.xlu0 %5033, %v5024
    %v5035 = vpop.permute.xlu0 %5034
    %5038 = vset.pattern.permute.xlu0 0
    %5039 = vperm.xlu0 %5038, %v5025
    %v5040 = vpop.permute.xlu0 %5039
    %5043 = vset.pattern.permute.xlu0 0
    %5044 = vperm.xlu0 %5043, %v5026
    %v5045 = vpop.permute.xlu0 %5044
    %5048 = vset.pattern.permute.xlu0 0
    %5049 = vperm.xlu0 %5048, %v5027
    %v5050 = vpop.permute.xlu0 %5049
    %5053 = vset.pattern.permute.xlu0 0
    %5054 = vperm.xlu0 %5053, %v5028
    %v5055 = vpop.permute.xlu0 %5054
    %5058 = vset.pattern.permute.xlu0 0
    %5059 = vperm.xlu0 %5058, %v5029
    %v5060 = vpop.permute.xlu0 %5059
    %5063 = vset.pattern.permute.xlu0 0
    %5064 = vperm.xlu0 %5063, %v5030
    %v5065 = vpop.permute.xlu0 %5064
    %5068 = vset.pattern.permute.xlu0 0
    %5069 = vperm.xlu0 %5068, %v5031
    %v5070 = vpop.permute.xlu0 %5069
    %v5072 = vmul.f32 %v5035, %v153
    %v5073 = vmul.f32 %v5040, %v154
    %v5074 = vmul.f32 %v5045, %v155
    %v5075 = vmul.f32 %v5050, %v156
    %v5076 = vmul.f32 %v5055, %v157
    %v5077 = vmul.f32 %v5060, %v158
    %v5078 = vmul.f32 %v5065, %v159
    %v5079 = vmul.f32 %v5070, %v160
    %v5080 = vsel %vm170, %v5072, 0.0
    %v5081 = vrot.slane %v5080, 4
    %v5082 = vadd.f32 %v5080, %v5081
    %v5083 = vrot.slane %v5082, 2
    %v5084 = vadd.f32 %v5082, %v5083
    %v5085 = vrot.slane %v5084, 1
    %v5086 = vadd.f32 %v5084, %v5085
    %v5087 = vsel %vm170, %v5073, 0.0
    %v5088 = vrot.slane %v5087, 4
    %v5089 = vadd.f32 %v5087, %v5088
    %v5090 = vrot.slane %v5089, 2
    %v5091 = vadd.f32 %v5089, %v5090
    %v5092 = vrot.slane %v5091, 1
    %v5093 = vadd.f32 %v5091, %v5092
    %v5094 = vsel %vm170, %v5074, 0.0
    %v5095 = vrot.slane %v5094, 4
    %v5096 = vadd.f32 %v5094, %v5095
    %v5097 = vrot.slane %v5096, 2
    %v5098 = vadd.f32 %v5096, %v5097
    %v5099 = vrot.slane %v5098, 1
    %v5100 = vadd.f32 %v5098, %v5099
    %v5101 = vsel %vm170, %v5075, 0.0
    %v5102 = vrot.slane %v5101, 4
    %v5103 = vadd.f32 %v5101, %v5102
    %v5104 = vrot.slane %v5103, 2
    %v5105 = vadd.f32 %v5103, %v5104
    %v5106 = vrot.slane %v5105, 1
    %v5107 = vadd.f32 %v5105, %v5106
    %v5108 = vsel %vm170, %v5076, 0.0
    %v5109 = vrot.slane %v5108, 4
    %v5110 = vadd.f32 %v5108, %v5109
    %v5111 = vrot.slane %v5110, 2
    %v5112 = vadd.f32 %v5110, %v5111
    %v5113 = vrot.slane %v5112, 1
    %v5114 = vadd.f32 %v5112, %v5113
    %v5115 = vsel %vm170, %v5077, 0.0
    %v5116 = vrot.slane %v5115, 4
    %v5117 = vadd.f32 %v5115, %v5116
    %v5118 = vrot.slane %v5117, 2
    %v5119 = vadd.f32 %v5117, %v5118
    %v5120 = vrot.slane %v5119, 1
    %v5121 = vadd.f32 %v5119, %v5120
    %v5122 = vsel %vm170, %v5078, 0.0
    %v5123 = vrot.slane %v5122, 4
    %v5124 = vadd.f32 %v5122, %v5123
    %v5125 = vrot.slane %v5124, 2
    %v5126 = vadd.f32 %v5124, %v5125
    %v5127 = vrot.slane %v5126, 1
    %v5128 = vadd.f32 %v5126, %v5127
    %v5129 = vsel %vm170, %v5079, 0.0
    %v5130 = vrot.slane %v5129, 4
    %v5131 = vadd.f32 %v5129, %v5130
    %v5132 = vrot.slane %v5131, 2
    %v5133 = vadd.f32 %v5131, %v5132
    %v5134 = vrot.slane %v5133, 1
    %v5135 = vadd.f32 %v5133, %v5134
    %s5136 = scalar_lea.vmem [#allocation3], 32
    %v5137 = vld [vmem:[%s5136] sm:$0xff]
    %v5146 = vsel %vm664, %v5093, %v5086
    %v5147 = vsel %vm666, %v5100, %v5146
    %v5148 = vsel %vm668, %v5107, %v5147
    %v5149 = vsel %vm670, %v5114, %v5148
    %v5150 = vsel %vm672, %v5121, %v5149
    %v5151 = vsel %vm674, %v5128, %v5150
    %v5152 = vsel %vm676, %v5135, %v5151
    %v5153 = vsel %vm170, %v5152, 0
    %5155 = vmatprep.subr.mxu0 0.0
    %5156 = vmatpush1.msra.mxu0 0.0
    %5157 = vmatprep.subr.mxu0 0.0
    %5158 = vmatpush1.msra.mxu0 0.0
    %5159 = vmatprep.subr.mxu0 0.0
    %5160 = vmatpush1.msra.mxu0 0.0
    %5161 = vmatprep.subr.mxu0 0.0
    %5162 = vmatpush1.msra.mxu0 0.0
    %5163 = vmatprep.subr.mxu0 0.0
    %5164 = vmatpush1.msra.mxu0 0.0
    %5165 = vmatprep.subr.mxu0 0.0
    %5166 = vmatpush1.msra.mxu0 0.0
    %5167 = vmatprep.subr.mxu0 0.0
    %5168 = vmatpush1.msra.mxu0 0.0
    %5169 = vmatprep.subr.mxu0 0.0
    %5170 = vmatpush1.msra.mxu0 0.0
    %5171 = vmatprep.subr.mxu0 0.0
    %5172 = vmatpush1.msra.mxu0 0.0
    %5173 = vmatprep.subr.mxu0 0.0
    %5174 = vmatpush1.msra.mxu0 0.0
    %5175 = vmatprep.subr.mxu0 0.0
    %5176 = vmatpush1.msra.mxu0 0.0
    %5177 = vmatprep.subr.mxu0 0.0
    %5178 = vmatpush1.msra.mxu0 0.0
    %5179 = vmatprep.subr.mxu0 0.0
    %5180 = vmatpush1.msra.mxu0 0.0
    %5181 = vmatprep.subr.mxu0 0.0
    %5182 = vmatpush1.msra.mxu0 0.0
    %5183 = vmatprep.subr.mxu0 %v332
    %5184 = vmatpush1.msra.mxu0 %v331
    %5185 = vmatprep.subr.mxu0 %v328
    %5186 = vmatpush1.msra.mxu0 %v327
    %5187 = vmatprep.subr.mxu0 0.0
    %5188 = vmatpush2.msra.mxu0 0.0
    %5189 = vmatprep.subr.mxu0 0.0
    %5190 = vmatpush2.msra.mxu0 0.0
    %5191 = vmatprep.subr.mxu0 0.0
    %5192 = vmatpush2.msra.mxu0 0.0
    %5193 = vmatprep.subr.mxu0 0.0
    %5194 = vmatpush2.msra.mxu0 0.0
    %5195 = vmatprep.subr.mxu0 0.0
    %5196 = vmatpush2.msra.mxu0 0.0
    %5197 = vmatprep.subr.mxu0 0.0
    %5198 = vmatpush2.msra.mxu0 0.0
    %5199 = vmatprep.subr.mxu0 0.0
    %5200 = vmatpush2.msra.mxu0 0.0
    %5201 = vmatprep.subr.mxu0 0.0
    %5202 = vmatpush2.msra.mxu0 0.0
    %5203 = vmatprep.subr.mxu0 0.0
    %5204 = vmatpush2.msra.mxu0 0.0
    %5205 = vmatprep.subr.mxu0 0.0
    %5206 = vmatpush2.msra.mxu0 0.0
    %5207 = vmatprep.subr.mxu0 0.0
    %5208 = vmatpush2.msra.mxu0 0.0
    %5209 = vmatprep.subr.mxu0 0.0
    %5210 = vmatpush2.msra.mxu0 0.0
    %5211 = vmatprep.subr.mxu0 0.0
    %5212 = vmatpush2.msra.mxu0 0.0
    %5213 = vmatprep.subr.mxu0 0.0
    %5214 = vmatpush2.msra.mxu0 0.0
    %5215 = vmatprep.subr.mxu0 0.0
    %5216 = vmatpush2.msra.mxu0 0.0
    %5217 = vmatprep.subr.mxu0 0.0
    %5218 = vmatpush2.msra.mxu0 0.0
    %5219 = vmatprep.mubr.f32.mxu0 0.0
    %5220 = vmatmul.mubr.f32.gmra.mxu0 %v5153
    %v5221 = vpop.f32.mrf.mxu0
    %v5222 = vadd.f32 0.0, %v5221
    %v5223 = vpop.f32.mrf.mxu0
    %v5224 = vadd.f32 0.0, %v5223
    %5225 = vdwg.mxu0
    %5226 = vmatprep.subr.mxu0 0.0
    %5227 = vmatpush1.msra.mxu0 0.0
    %5228 = vmatprep.subr.mxu0 0.0
    %5229 = vmatpush1.msra.mxu0 0.0
    %5230 = vmatprep.subr.mxu0 0.0
    %5231 = vmatpush1.msra.mxu0 0.0
    %5232 = vmatprep.subr.mxu0 0.0
    %5233 = vmatpush1.msra.mxu0 0.0
    %5234 = vmatprep.subr.mxu0 0.0
    %5235 = vmatpush1.msra.mxu0 0.0
    %5236 = vmatprep.subr.mxu0 0.0
    %5237 = vmatpush1.msra.mxu0 0.0
    %5238 = vmatprep.subr.mxu0 0.0
    %5239 = vmatpush1.msra.mxu0 0.0
    %5240 = vmatprep.subr.mxu0 0.0
    %5241 = vmatpush1.msra.mxu0 0.0
    %5242 = vmatprep.subr.mxu0 0.0
    %5243 = vmatpush1.msra.mxu0 0.0
    %5244 = vmatprep.subr.mxu0 0.0
    %5245 = vmatpush1.msra.mxu0 0.0
    %5246 = vmatprep.subr.mxu0 0.0
    %5247 = vmatpush1.msra.mxu0 0.0
    %5248 = vmatprep.subr.mxu0 0.0
    %5249 = vmatpush1.msra.mxu0 0.0
    %5250 = vmatprep.subr.mxu0 0.0
    %5251 = vmatpush1.msra.mxu0 0.0
    %5252 = vmatprep.subr.mxu0 0.0
    %5253 = vmatpush1.msra.mxu0 0.0
    %5254 = vmatprep.subr.mxu0 %v334
    %5255 = vmatpush1.msra.mxu0 %v333
    %5256 = vmatprep.subr.mxu0 %v330
    %5257 = vmatpush1.msra.mxu0 %v329
    %5258 = vmatprep.subr.mxu0 0.0
    %5259 = vmatpush2.msra.mxu0 0.0
    %5260 = vmatprep.subr.mxu0 0.0
    %5261 = vmatpush2.msra.mxu0 0.0
    %5262 = vmatprep.subr.mxu0 0.0
    %5263 = vmatpush2.msra.mxu0 0.0
    %5264 = vmatprep.subr.mxu0 0.0
    %5265 = vmatpush2.msra.mxu0 0.0
    %5266 = vmatprep.subr.mxu0 0.0
    %5267 = vmatpush2.msra.mxu0 0.0
    %5268 = vmatprep.subr.mxu0 0.0
    %5269 = vmatpush2.msra.mxu0 0.0
    %5270 = vmatprep.subr.mxu0 0.0
    %5271 = vmatpush2.msra.mxu0 0.0
    %5272 = vmatprep.subr.mxu0 0.0
    %5273 = vmatpush2.msra.mxu0 0.0
    %5274 = vmatprep.subr.mxu0 0.0
    %5275 = vmatpush2.msra.mxu0 0.0
    %5276 = vmatprep.subr.mxu0 0.0
    %5277 = vmatpush2.msra.mxu0 0.0
    %5278 = vmatprep.subr.mxu0 0.0
    %5279 = vmatpush2.msra.mxu0 0.0
    %5280 = vmatprep.subr.mxu0 0.0
    %5281 = vmatpush2.msra.mxu0 0.0
    %5282 = vmatprep.subr.mxu0 0.0
    %5283 = vmatpush2.msra.mxu0 0.0
    %5284 = vmatprep.subr.mxu0 0.0
    %5285 = vmatpush2.msra.mxu0 0.0
    %5286 = vmatprep.subr.mxu0 0.0
    %5287 = vmatpush2.msra.mxu0 0.0
    %5288 = vmatprep.subr.mxu0 0.0
    %5289 = vmatpush2.msra.mxu0 0.0
    %5290 = vmatprep.mubr.f32.mxu0 0.0
    %5291 = vmatmul.mubr.f32.gmra.mxu0 %v5153
    %v5292 = vpop.f32.mrf.mxu0
    %v5293 = vadd.f32 0.0, %v5292
    %v5294 = vpop.f32.mrf.mxu0
    %v5295 = vadd.f32 0.0, %v5294
    %5296 = vdwg.mxu0
    %v5298 = vsel %vm170, %v5137, 0
    %5300 = vmatprep.subr.mxu0 0.0
    %5301 = vmatpush1.msra.mxu0 0.0
    %5302 = vmatprep.subr.mxu0 0.0
    %5303 = vmatpush1.msra.mxu0 0.0
    %5304 = vmatprep.subr.mxu0 0.0
    %5305 = vmatpush1.msra.mxu0 0.0
    %5306 = vmatprep.subr.mxu0 0.0
    %5307 = vmatpush1.msra.mxu0 0.0
    %5308 = vmatprep.subr.mxu0 0.0
    %5309 = vmatpush1.msra.mxu0 0.0
    %5310 = vmatprep.subr.mxu0 0.0
    %5311 = vmatpush1.msra.mxu0 0.0
    %5312 = vmatprep.subr.mxu0 0.0
    %5313 = vmatpush1.msra.mxu0 0.0
    %5314 = vmatprep.subr.mxu0 0.0
    %5315 = vmatpush1.msra.mxu0 0.0
    %5316 = vmatprep.subr.mxu0 0.0
    %5317 = vmatpush1.msra.mxu0 0.0
    %5318 = vmatprep.subr.mxu0 0.0
    %5319 = vmatpush1.msra.mxu0 0.0
    %5320 = vmatprep.subr.mxu0 0.0
    %5321 = vmatpush1.msra.mxu0 0.0
    %5322 = vmatprep.subr.mxu0 0.0
    %5323 = vmatpush1.msra.mxu0 0.0
    %5324 = vmatprep.subr.mxu0 0.0
    %5325 = vmatpush1.msra.mxu0 0.0
    %5326 = vmatprep.subr.mxu0 0.0
    %5327 = vmatpush1.msra.mxu0 0.0
    %5328 = vmatprep.subr.mxu0 %v324
    %5329 = vmatpush1.msra.mxu0 %v323
    %5330 = vmatprep.subr.mxu0 %v320
    %5331 = vmatpush1.msra.mxu0 %v319
    %5332 = vmatprep.subr.mxu0 0.0
    %5333 = vmatpush2.msra.mxu0 0.0
    %5334 = vmatprep.subr.mxu0 0.0
    %5335 = vmatpush2.msra.mxu0 0.0
    %5336 = vmatprep.subr.mxu0 0.0
    %5337 = vmatpush2.msra.mxu0 0.0
    %5338 = vmatprep.subr.mxu0 0.0
    %5339 = vmatpush2.msra.mxu0 0.0
    %5340 = vmatprep.subr.mxu0 0.0
    %5341 = vmatpush2.msra.mxu0 0.0
    %5342 = vmatprep.subr.mxu0 0.0
    %5343 = vmatpush2.msra.mxu0 0.0
    %5344 = vmatprep.subr.mxu0 0.0
    %5345 = vmatpush2.msra.mxu0 0.0
    %5346 = vmatprep.subr.mxu0 0.0
    %5347 = vmatpush2.msra.mxu0 0.0
    %5348 = vmatprep.subr.mxu0 0.0
    %5349 = vmatpush2.msra.mxu0 0.0
    %5350 = vmatprep.subr.mxu0 0.0
    %5351 = vmatpush2.msra.mxu0 0.0
    %5352 = vmatprep.subr.mxu0 0.0
    %5353 = vmatpush2.msra.mxu0 0.0
    %5354 = vmatprep.subr.mxu0 0.0
    %5355 = vmatpush2.msra.mxu0 0.0
    %5356 = vmatprep.subr.mxu0 0.0
    %5357 = vmatpush2.msra.mxu0 0.0
    %5358 = vmatprep.subr.mxu0 0.0
    %5359 = vmatpush2.msra.mxu0 0.0
    %5360 = vmatprep.subr.mxu0 0.0
    %5361 = vmatpush2.msra.mxu0 0.0
    %5362 = vmatprep.subr.mxu0 0.0
    %5363 = vmatpush2.msra.mxu0 0.0
    %5364 = vmatprep.mubr.f32.mxu0 0.0
    %5365 = vmatmul.mubr.f32.gmra.mxu0 %v5298
    %v5366 = vpop.f32.mrf.mxu0
    %v5367 = vadd.f32 %v5222, %v5366
    %v5368 = vpop.f32.mrf.mxu0
    %v5369 = vadd.f32 %v5224, %v5368
    %5370 = vdwg.mxu0
    %5371 = vmatprep.subr.mxu0 0.0
    %5372 = vmatpush1.msra.mxu0 0.0
    %5373 = vmatprep.subr.mxu0 0.0
    %5374 = vmatpush1.msra.mxu0 0.0
    %5375 = vmatprep.subr.mxu0 0.0
    %5376 = vmatpush1.msra.mxu0 0.0
    %5377 = vmatprep.subr.mxu0 0.0
    %5378 = vmatpush1.msra.mxu0 0.0
    %5379 = vmatprep.subr.mxu0 0.0
    %5380 = vmatpush1.msra.mxu0 0.0
    %5381 = vmatprep.subr.mxu0 0.0
    %5382 = vmatpush1.msra.mxu0 0.0
    %5383 = vmatprep.subr.mxu0 0.0
    %5384 = vmatpush1.msra.mxu0 0.0
    %5385 = vmatprep.subr.mxu0 0.0
    %5386 = vmatpush1.msra.mxu0 0.0
    %5387 = vmatprep.subr.mxu0 0.0
    %5388 = vmatpush1.msra.mxu0 0.0
    %5389 = vmatprep.subr.mxu0 0.0
    %5390 = vmatpush1.msra.mxu0 0.0
    %5391 = vmatprep.subr.mxu0 0.0
    %5392 = vmatpush1.msra.mxu0 0.0
    %5393 = vmatprep.subr.mxu0 0.0
    %5394 = vmatpush1.msra.mxu0 0.0
    %5395 = vmatprep.subr.mxu0 0.0
    %5396 = vmatpush1.msra.mxu0 0.0
    %5397 = vmatprep.subr.mxu0 0.0
    %5398 = vmatpush1.msra.mxu0 0.0
    %5399 = vmatprep.subr.mxu0 %v326
    %5400 = vmatpush1.msra.mxu0 %v325
    %5401 = vmatprep.subr.mxu0 %v322
    %5402 = vmatpush1.msra.mxu0 %v321
    %5403 = vmatprep.subr.mxu0 0.0
    %5404 = vmatpush2.msra.mxu0 0.0
    %5405 = vmatprep.subr.mxu0 0.0
    %5406 = vmatpush2.msra.mxu0 0.0
    %5407 = vmatprep.subr.mxu0 0.0
    %5408 = vmatpush2.msra.mxu0 0.0
    %5409 = vmatprep.subr.mxu0 0.0
    %5410 = vmatpush2.msra.mxu0 0.0
    %5411 = vmatprep.subr.mxu0 0.0
    %5412 = vmatpush2.msra.mxu0 0.0
    %5413 = vmatprep.subr.mxu0 0.0
    %5414 = vmatpush2.msra.mxu0 0.0
    %5415 = vmatprep.subr.mxu0 0.0
    %5416 = vmatpush2.msra.mxu0 0.0
    %5417 = vmatprep.subr.mxu0 0.0
    %5418 = vmatpush2.msra.mxu0 0.0
    %5419 = vmatprep.subr.mxu0 0.0
    %5420 = vmatpush2.msra.mxu0 0.0
    %5421 = vmatprep.subr.mxu0 0.0
    %5422 = vmatpush2.msra.mxu0 0.0
    %5423 = vmatprep.subr.mxu0 0.0
    %5424 = vmatpush2.msra.mxu0 0.0
    %5425 = vmatprep.subr.mxu0 0.0
    %5426 = vmatpush2.msra.mxu0 0.0
    %5427 = vmatprep.subr.mxu0 0.0
    %5428 = vmatpush2.msra.mxu0 0.0
    %5429 = vmatprep.subr.mxu0 0.0
    %5430 = vmatpush2.msra.mxu0 0.0
    %5431 = vmatprep.subr.mxu0 0.0
    %5432 = vmatpush2.msra.mxu0 0.0
    %5433 = vmatprep.subr.mxu0 0.0
    %5434 = vmatpush2.msra.mxu0 0.0
    %5435 = vmatprep.mubr.f32.mxu0 0.0
    %5436 = vmatmul.mubr.f32.gmra.mxu0 %v5298
    %v5437 = vpop.f32.mrf.mxu0
    %v5438 = vadd.f32 %v5293, %v5437
    %v5439 = vpop.f32.mrf.mxu0
    %v5440 = vadd.f32 %v5295, %v5439
    %5441 = vdwg.mxu0
    %5442 = vmatprep.subr.mxu0 %v396
    %5443 = vmatpush1.msra.mxu0 %v395
    %5444 = vmatprep.subr.mxu0 %v392
    %5445 = vmatpush1.msra.mxu0 %v391
    %5446 = vmatprep.subr.mxu0 %v388
    %5447 = vmatpush1.msra.mxu0 %v387
    %5448 = vmatprep.subr.mxu0 %v384
    %5449 = vmatpush1.msra.mxu0 %v383
    %5450 = vmatprep.subr.mxu0 %v380
    %5451 = vmatpush1.msra.mxu0 %v379
    %5452 = vmatprep.subr.mxu0 %v376
    %5453 = vmatpush1.msra.mxu0 %v375
    %5454 = vmatprep.subr.mxu0 %v372
    %5455 = vmatpush1.msra.mxu0 %v371
    %5456 = vmatprep.subr.mxu0 %v368
    %5457 = vmatpush1.msra.mxu0 %v367
    %5458 = vmatprep.subr.mxu0 %v364
    %5459 = vmatpush1.msra.mxu0 %v363
    %5460 = vmatprep.subr.mxu0 %v360
    %5461 = vmatpush1.msra.mxu0 %v359
    %5462 = vmatprep.subr.mxu0 %v356
    %5463 = vmatpush1.msra.mxu0 %v355
    %5464 = vmatprep.subr.mxu0 %v352
    %5465 = vmatpush1.msra.mxu0 %v351
    %5466 = vmatprep.subr.mxu0 %v348
    %5467 = vmatpush1.msra.mxu0 %v347
    %5468 = vmatprep.subr.mxu0 %v344
    %5469 = vmatpush1.msra.mxu0 %v343
    %5470 = vmatprep.subr.mxu0 %v340
    %5471 = vmatpush1.msra.mxu0 %v339
    %5472 = vmatprep.subr.mxu0 %v336
    %5473 = vmatpush1.msra.mxu0 %v335
    %5474 = vmatprep.subr.mxu0 0.0
    %5475 = vmatpush2.msra.mxu0 0.0
    %5476 = vmatprep.subr.mxu0 0.0
    %5477 = vmatpush2.msra.mxu0 0.0
    %5478 = vmatprep.subr.mxu0 0.0
    %5479 = vmatpush2.msra.mxu0 0.0
    %5480 = vmatprep.subr.mxu0 0.0
    %5481 = vmatpush2.msra.mxu0 0.0
    %5482 = vmatprep.subr.mxu0 0.0
    %5483 = vmatpush2.msra.mxu0 0.0
    %5484 = vmatprep.subr.mxu0 0.0
    %5485 = vmatpush2.msra.mxu0 0.0
    %5486 = vmatprep.subr.mxu0 0.0
    %5487 = vmatpush2.msra.mxu0 0.0
    %5488 = vmatprep.subr.mxu0 0.0
    %5489 = vmatpush2.msra.mxu0 0.0
    %5490 = vmatprep.subr.mxu0 0.0
    %5491 = vmatpush2.msra.mxu0 0.0
    %5492 = vmatprep.subr.mxu0 0.0
    %5493 = vmatpush2.msra.mxu0 0.0
    %5494 = vmatprep.subr.mxu0 0.0
    %5495 = vmatpush2.msra.mxu0 0.0
    %5496 = vmatprep.subr.mxu0 0.0
    %5497 = vmatpush2.msra.mxu0 0.0
    %5498 = vmatprep.subr.mxu0 0.0
    %5499 = vmatpush2.msra.mxu0 0.0
    %5500 = vmatprep.subr.mxu0 0.0
    %5501 = vmatpush2.msra.mxu0 0.0
    %5502 = vmatprep.subr.mxu0 0.0
    %5503 = vmatpush2.msra.mxu0 0.0
    %5504 = vmatprep.subr.mxu0 0.0
    %5505 = vmatpush2.msra.mxu0 0.0
    %5506 = vmatprep.mubr.f32.mxu0 0.0
    %5507 = vmatmul.mubr.f32.gmra.mxu0 %v4580
    %v5508 = vpop.f32.mrf.mxu0
    %v5509 = vadd.f32 0.0, %v5508
    %v5510 = vpop.f32.mrf.mxu0
    %v5511 = vadd.f32 0.0, %v5510
    %5512 = vdwg.mxu0
    %5513 = vmatprep.subr.mxu0 %v398
    %5514 = vmatpush1.msra.mxu0 %v397
    %5515 = vmatprep.subr.mxu0 %v394
    %5516 = vmatpush1.msra.mxu0 %v393
    %5517 = vmatprep.subr.mxu0 %v390
    %5518 = vmatpush1.msra.mxu0 %v389
    %5519 = vmatprep.subr.mxu0 %v386
    %5520 = vmatpush1.msra.mxu0 %v385
    %5521 = vmatprep.subr.mxu0 %v382
    %5522 = vmatpush1.msra.mxu0 %v381
    %5523 = vmatprep.subr.mxu0 %v378
    %5524 = vmatpush1.msra.mxu0 %v377
    %5525 = vmatprep.subr.mxu0 %v374
    %5526 = vmatpush1.msra.mxu0 %v373
    %5527 = vmatprep.subr.mxu0 %v370
    %5528 = vmatpush1.msra.mxu0 %v369
    %5529 = vmatprep.subr.mxu0 %v366
    %5530 = vmatpush1.msra.mxu0 %v365
    %5531 = vmatprep.subr.mxu0 %v362
    %5532 = vmatpush1.msra.mxu0 %v361
    %5533 = vmatprep.subr.mxu0 %v358
    %5534 = vmatpush1.msra.mxu0 %v357
    %5535 = vmatprep.subr.mxu0 %v354
    %5536 = vmatpush1.msra.mxu0 %v353
    %5537 = vmatprep.subr.mxu0 %v350
    %5538 = vmatpush1.msra.mxu0 %v349
    %5539 = vmatprep.subr.mxu0 %v346
    %5540 = vmatpush1.msra.mxu0 %v345
    %5541 = vmatprep.subr.mxu0 %v342
    %5542 = vmatpush1.msra.mxu0 %v341
    %5543 = vmatprep.subr.mxu0 %v338
    %5544 = vmatpush1.msra.mxu0 %v337
    %5545 = vmatprep.subr.mxu0 0.0
    %5546 = vmatpush2.msra.mxu0 0.0
    %5547 = vmatprep.subr.mxu0 0.0
    %5548 = vmatpush2.msra.mxu0 0.0
    %5549 = vmatprep.subr.mxu0 0.0
    %5550 = vmatpush2.msra.mxu0 0.0
    %5551 = vmatprep.subr.mxu0 0.0
    %5552 = vmatpush2.msra.mxu0 0.0
    %5553 = vmatprep.subr.mxu0 0.0
    %5554 = vmatpush2.msra.mxu0 0.0
    %5555 = vmatprep.subr.mxu0 0.0
    %5556 = vmatpush2.msra.mxu0 0.0
    %5557 = vmatprep.subr.mxu0 0.0
    %5558 = vmatpush2.msra.mxu0 0.0
    %5559 = vmatprep.subr.mxu0 0.0
    %5560 = vmatpush2.msra.mxu0 0.0
    %5561 = vmatprep.subr.mxu0 0.0
    %5562 = vmatpush2.msra.mxu0 0.0
    %5563 = vmatprep.subr.mxu0 0.0
    %5564 = vmatpush2.msra.mxu0 0.0
    %5565 = vmatprep.subr.mxu0 0.0
    %5566 = vmatpush2.msra.mxu0 0.0
    %5567 = vmatprep.subr.mxu0 0.0
    %5568 = vmatpush2.msra.mxu0 0.0
    %5569 = vmatprep.subr.mxu0 0.0
    %5570 = vmatpush2.msra.mxu0 0.0
    %5571 = vmatprep.subr.mxu0 0.0
    %5572 = vmatpush2.msra.mxu0 0.0
    %5573 = vmatprep.subr.mxu0 0.0
    %5574 = vmatpush2.msra.mxu0 0.0
    %5575 = vmatprep.subr.mxu0 0.0
    %5576 = vmatpush2.msra.mxu0 0.0
    %5577 = vmatprep.mubr.f32.mxu0 0.0
    %5578 = vmatmul.mubr.f32.gmra.mxu0 %v4580
    %v5579 = vpop.f32.mrf.mxu0
    %v5580 = vadd.f32 0.0, %v5579
    %v5581 = vpop.f32.mrf.mxu0
    %v5582 = vadd.f32 0.0, %v5581
    %5583 = vdwg.mxu0
    %v5584 = vadd.f32 %v5367, %v5509
    %v5585 = vadd.f32 %v5369, %v5511
    %v5586 = vadd.f32 %v5438, %v5580
    %v5587 = vadd.f32 %v5440, %v5582
    %v5588 = vadd.f32 %v5584, %v1432
    %v5589 = vadd.f32 %v5585, %v1436
    %v5590 = vadd.f32 %v5586, %v1440
    %v5591 = vadd.f32 %v5587, %v1444
    %v5592 = vxor.u32 %v5588, 2147483648
    %v5593 = vmul.f32 %v5592, 1.442695
    %v5594 = vpow.pop %v5593
    %v5595 = vadd.f32 %v5594, 1.0
    %v5596 = vrcp.pop %v5595
    %v5597 = vmul.f32 1.0, %v5596
    %v5598 = vxor.u32 %v5589, 2147483648
    %v5599 = vmul.f32 %v5598, 1.442695
    %v5600 = vpow.pop %v5599
    %v5601 = vadd.f32 %v5600, 1.0
    %v5602 = vrcp.pop %v5601
    %v5603 = vmul.f32 1.0, %v5602
    %v5604 = vtanh.pop %v5590
    %v5605 = vxor.u32 %v5591, 2147483648
    %v5606 = vmul.f32 %v5605, 1.442695
    %v5607 = vpow.pop %v5606
    %v5608 = vadd.f32 %v5607, 1.0
    %v5609 = vrcp.pop %v5608
    %v5610 = vmul.f32 1.0, %v5609
    %v5611 = vmul.f32 %v5603, %v4578
    %v5612 = vmul.f32 %v5597, %v5604
    %v5613 = vadd.f32 %v5611, %v5612
    %v5614 = vtanh.pop %v5613
    %v5615 = vmul.f32 %v5610, %v5614
    %s5616 = scalar_lea.vmem [#allocation17], 32
    %5617 = vst [vmem:[%s5616] sm:$0xff] %v5615
    %5618 = vmatprep.subr.mxu0 0.0
    %5619 = vmatpush1.msra.mxu0 %v315
    %5620 = vmatprep.subr.mxu0 0.0
    %5621 = vmatpush1.msra.mxu0 %v314
    %5622 = vmatprep.subr.mxu0 0.0
    %5623 = vmatpush1.msra.mxu0 %v313
    %5624 = vmatprep.subr.mxu0 0.0
    %5625 = vmatpush1.msra.mxu0 %v312
    %5626 = vmatprep.subr.mxu0 0.0
    %5627 = vmatpush1.msra.mxu0 %v311
    %5628 = vmatprep.subr.mxu0 0.0
    %5629 = vmatpush1.msra.mxu0 %v310
    %5630 = vmatprep.subr.mxu0 0.0
    %5631 = vmatpush1.msra.mxu0 %v309
    %5632 = vmatprep.subr.mxu0 0.0
    %5633 = vmatpush1.msra.mxu0 %v308
    %5634 = vmatprep.subr.mxu0 0.0
    %5635 = vmatpush1.msra.mxu0 %v307
    %5636 = vmatprep.subr.mxu0 0.0
    %5637 = vmatpush1.msra.mxu0 %v306
    %5638 = vmatprep.subr.mxu0 0.0
    %5639 = vmatpush1.msra.mxu0 %v305
    %5640 = vmatprep.subr.mxu0 0.0
    %5641 = vmatpush1.msra.mxu0 %v304
    %5642 = vmatprep.subr.mxu0 0.0
    %5643 = vmatpush1.msra.mxu0 %v303
    %5644 = vmatprep.subr.mxu0 0.0
    %5645 = vmatpush1.msra.mxu0 %v302
    %5646 = vmatprep.subr.mxu0 0.0
    %5647 = vmatpush1.msra.mxu0 %v301
    %5648 = vmatprep.subr.mxu0 0.0
    %5649 = vmatpush1.msra.mxu0 %v300
    %5650 = vmatprep.subr.mxu0 0.0
    %5651 = vmatpush2.msra.mxu0 0.0
    %5652 = vmatprep.subr.mxu0 0.0
    %5653 = vmatpush2.msra.mxu0 0.0
    %5654 = vmatprep.subr.mxu0 0.0
    %5655 = vmatpush2.msra.mxu0 0.0
    %5656 = vmatprep.subr.mxu0 0.0
    %5657 = vmatpush2.msra.mxu0 0.0
    %5658 = vmatprep.subr.mxu0 0.0
    %5659 = vmatpush2.msra.mxu0 0.0
    %5660 = vmatprep.subr.mxu0 0.0
    %5661 = vmatpush2.msra.mxu0 0.0
    %5662 = vmatprep.subr.mxu0 0.0
    %5663 = vmatpush2.msra.mxu0 0.0
    %5664 = vmatprep.subr.mxu0 0.0
    %5665 = vmatpush2.msra.mxu0 0.0
    %5666 = vmatprep.subr.mxu0 0.0
    %5667 = vmatpush2.msra.mxu0 0.0
    %5668 = vmatprep.subr.mxu0 0.0
    %5669 = vmatpush2.msra.mxu0 0.0
    %5670 = vmatprep.subr.mxu0 0.0
    %5671 = vmatpush2.msra.mxu0 0.0
    %5672 = vmatprep.subr.mxu0 0.0
    %5673 = vmatpush2.msra.mxu0 0.0
    %5674 = vmatprep.subr.mxu0 0.0
    %5675 = vmatpush2.msra.mxu0 0.0
    %5676 = vmatprep.subr.mxu0 0.0
    %5677 = vmatpush2.msra.mxu0 0.0
    %5678 = vmatprep.subr.mxu0 0.0
    %5679 = vmatpush2.msra.mxu0 0.0
    %5680 = vmatprep.subr.mxu0 0.0
    %5681 = vmatpush2.msra.mxu0 0.0
    %5682 = vmatprep.mubr.f32.mxu0 0.0
    %5683 = vmatmul.mubr.f32.gmra.mxu0 %v5615
    %v5684 = vpop.f32.mrf.mxu0
    %v5685 = vadd.f32 %v405, %v5684
    %v5686 = vpop.f32.mrf.mxu0
    %5687 = vdwg.mxu0
    %v5689 = vcombine.high %v5685, %v5685
    %v5691 = vunpack.c.l.s4 1966171168
    %v5692 = vunpack.c.0.s8 %v5691
    %v5693 = vlaneseq
    %v5694 = vshrl.u32 %v5693, 7
    %v5695 = vsub.s32 %v5692, %v5694
    %v5696 = vrot.slane %v5685, %v5695
    %v5698 = vunpack.c.l.s4 1966171168
    %v5699 = vunpack.c.0.s8 %v5698
    %v5700 = vlaneseq
    %v5701 = vshrl.u32 %v5700, 7
    %v5702 = vsub.s32 %v5699, %v5701
    %v5703 = vrot.slane %v5689, %v5702
    %v5704 = vcombine.high %v5696, %v5696
    %v5705 = vcombine.high %v5703, %v5703
    %v5707 = vunpack.c.l.s4 1966171168
    %v5708 = vunpack.c.0.s8 %v5707
    %v5709 = vlaneseq
    %v5710 = vshrl.u32 %v5709, 7
    %v5711 = vsub.s32 %v5708, %v5710
    %v5712 = vrot.slane %v5696, %v5711
    %v5714 = vunpack.c.l.s4 1966171168
    %v5715 = vunpack.c.0.s8 %v5714
    %v5716 = vlaneseq
    %v5717 = vshrl.u32 %v5716, 7
    %v5718 = vsub.s32 %v5715, %v5717
    %v5719 = vrot.slane %v5703, %v5718
    %v5721 = vunpack.c.l.s4 1966171168
    %v5722 = vunpack.c.0.s8 %v5721
    %v5723 = vlaneseq
    %v5724 = vshrl.u32 %v5723, 7
    %v5725 = vsub.s32 %v5722, %v5724
    %v5726 = vrot.slane %v5704, %v5725
    %v5728 = vunpack.c.l.s4 1966171168
    %v5729 = vunpack.c.0.s8 %v5728
    %v5730 = vlaneseq
    %v5731 = vshrl.u32 %v5730, 7
    %v5732 = vsub.s32 %v5729, %v5731
    %v5733 = vrot.slane %v5705, %v5732
    %v5734 = vcombine.high %v5712, %v5712
    %v5735 = vcombine.high %v5719, %v5719
    %v5736 = vcombine.high %v5726, %v5726
    %v5737 = vcombine.high %v5733, %v5733
    %v5738 = vlaneseq
    %v5739 = vshrl.u32 %v5738, 7
    %v5740 = vsub.s32 0, %v5739
    %v5741 = vrot.slane %v5712, %v5740
    %v5742 = vlaneseq
    %v5743 = vshrl.u32 %v5742, 7
    %v5744 = vsub.s32 0, %v5743
    %v5745 = vrot.slane %v5726, %v5744
    %v5746 = vlaneseq
    %v5747 = vshrl.u32 %v5746, 7
    %v5748 = vsub.s32 0, %v5747
    %v5749 = vrot.slane %v5734, %v5748
    %v5750 = vlaneseq
    %v5751 = vshrl.u32 %v5750, 7
    %v5752 = vsub.s32 0, %v5751
    %v5753 = vrot.slane %v5736, %v5752
    %v5754 = vlaneseq
    %v5755 = vshrl.u32 %v5754, 7
    %v5756 = vsub.s32 0, %v5755
    %v5757 = vrot.slane %v5719, %v5756
    %v5758 = vlaneseq
    %v5759 = vshrl.u32 %v5758, 7
    %v5760 = vsub.s32 0, %v5759
    %v5761 = vrot.slane %v5733, %v5760
    %v5762 = vlaneseq
    %v5763 = vshrl.u32 %v5762, 7
    %v5764 = vsub.s32 0, %v5763
    %v5765 = vrot.slane %v5735, %v5764
    %v5766 = vlaneseq
    %v5767 = vshrl.u32 %v5766, 7
    %v5768 = vsub.s32 0, %v5767
    %v5769 = vrot.slane %v5737, %v5768
    %v5778 = vadd.f32 %v262, %v5741
    %v5779 = vadd.f32 %v267, %v5745
    %v5780 = vadd.f32 %v272, %v5749
    %v5781 = vadd.f32 %v277, %v5753
    %v5782 = vadd.f32 %v282, %v5757
    %v5783 = vadd.f32 %v287, %v5761
    %v5784 = vadd.f32 %v292, %v5765
    %v5785 = vadd.f32 %v297, %v5769
    %v5786 = vtanh.pop %v5778
    %v5787 = vtanh.pop %v5779
    %v5788 = vtanh.pop %v5780
    %v5789 = vtanh.pop %v5781
    %v5790 = vtanh.pop %v5782
    %v5791 = vtanh.pop %v5783
    %v5792 = vtanh.pop %v5784
    %v5793 = vtanh.pop %v5785
    %v5794 = vmul.f32 %v5786, %v587
    %v5795 = vmul.f32 %v5787, %v587
    %v5796 = vmul.f32 %v5788, %v587
    %v5797 = vmul.f32 %v5789, %v587
    %v5798 = vmul.f32 %v5790, %v587
    %v5799 = vmul.f32 %v5791, %v587
    %v5800 = vmul.f32 %v5792, %v587
    %v5801 = vmul.f32 %v5793, %v587
    %5802 = vadd.xlane.f32.xlu0 %v5794
    %v5803 = vpop.xlane.xlu0 %5802
    %5804 = vadd.xlane.f32.xlu0 %v5795
    %v5805 = vpop.xlane.xlu0 %5804
    %5806 = vadd.xlane.f32.xlu0 %v5796
    %v5807 = vpop.xlane.xlu0 %5806
    %5808 = vadd.xlane.f32.xlu0 %v5797
    %v5809 = vpop.xlane.xlu0 %5808
    %5810 = vadd.xlane.f32.xlu0 %v5798
    %v5811 = vpop.xlane.xlu0 %5810
    %5812 = vadd.xlane.f32.xlu0 %v5799
    %v5813 = vpop.xlane.xlu0 %5812
    %5814 = vadd.xlane.f32.xlu0 %v5800
    %v5815 = vpop.xlane.xlu0 %5814
    %5816 = vadd.xlane.f32.xlu0 %v5801
    %v5817 = vpop.xlane.xlu0 %5816
    %v5818 = vadd.f32 %v5803, %v613
    %v5819 = vadd.f32 %v5805, %v613
    %v5820 = vadd.f32 %v5807, %v613
    %v5821 = vadd.f32 %v5809, %v613
    %v5822 = vadd.f32 %v5811, %v613
    %v5823 = vadd.f32 %v5813, %v613
    %v5824 = vadd.f32 %v5815, %v613
    %v5825 = vadd.f32 %v5817, %v613
    %v5834 = vlaneseq
    %v5835 = vshrl.u32 %v5834, 7
    %v5836 = vsub.s32 %v631, %v5835
    %v5837 = vrot.slane %v5818, %v5836
    %v5838 = vlaneseq
    %v5839 = vshrl.u32 %v5838, 7
    %v5840 = vsub.s32 %v631, %v5839
    %v5841 = vrot.slane %v5819, %v5840
    %v5842 = vlaneseq
    %v5843 = vshrl.u32 %v5842, 7
    %v5844 = vsub.s32 %v631, %v5843
    %v5845 = vrot.slane %v5820, %v5844
    %v5846 = vlaneseq
    %v5847 = vshrl.u32 %v5846, 7
    %v5848 = vsub.s32 %v631, %v5847
    %v5849 = vrot.slane %v5821, %v5848
    %v5850 = vlaneseq
    %v5851 = vshrl.u32 %v5850, 7
    %v5852 = vsub.s32 %v631, %v5851
    %v5853 = vrot.slane %v5822, %v5852
    %v5854 = vlaneseq
    %v5855 = vshrl.u32 %v5854, 7
    %v5856 = vsub.s32 %v631, %v5855
    %v5857 = vrot.slane %v5823, %v5856
    %v5858 = vlaneseq
    %v5859 = vshrl.u32 %v5858, 7
    %v5860 = vsub.s32 %v631, %v5859
    %v5861 = vrot.slane %v5824, %v5860
    %v5862 = vlaneseq
    %v5863 = vshrl.u32 %v5862, 7
    %v5864 = vsub.s32 %v631, %v5863
    %v5865 = vrot.slane %v5825, %v5864
    %v5866 = vsel %vm664, %v5841, %v5837
    %v5867 = vsel %vm666, %v5845, %v5866
    %v5868 = vsel %vm668, %v5849, %v5867
    %v5869 = vsel %vm670, %v5853, %v5868
    %v5870 = vsel %vm672, %v5857, %v5869
    %v5871 = vsel %vm674, %v5861, %v5870
    %v5872 = vsel %vm676, %v5865, %v5871
    %v5874 = vsel %vm679, %v5872, -inf
    %5875 = vmax.xlane.f32.xlu0 %v5874
    %v5876 = vpop.xlane.xlu0 %5875
    %v5878 = vlaneseq
    %v5879 = vshrl.u32 %v5878, 7
    %v5880 = vsub.s32 0, %v5879
    %v5881 = vrot.slane %v5876, %v5880
    %v5882 = vlaneseq
    %v5883 = vshrl.u32 %v5882, 7
    %v5884 = vsub.s32 1, %v5883
    %v5885 = vrot.slane %v5876, %v5884
    %v5886 = vlaneseq
    %v5887 = vshrl.u32 %v5886, 7
    %v5888 = vsub.s32 2, %v5887
    %v5889 = vrot.slane %v5876, %v5888
    %v5890 = vlaneseq
    %v5891 = vshrl.u32 %v5890, 7
    %v5892 = vsub.s32 3, %v5891
    %v5893 = vrot.slane %v5876, %v5892
    %v5894 = vlaneseq
    %v5895 = vshrl.u32 %v5894, 7
    %v5896 = vsub.s32 4, %v5895
    %v5897 = vrot.slane %v5876, %v5896
    %v5898 = vlaneseq
    %v5899 = vshrl.u32 %v5898, 7
    %v5900 = vsub.s32 5, %v5899
    %v5901 = vrot.slane %v5876, %v5900
    %v5902 = vlaneseq
    %v5903 = vshrl.u32 %v5902, 7
    %v5904 = vsub.s32 6, %v5903
    %v5905 = vrot.slane %v5876, %v5904
    %v5906 = vlaneseq
    %v5907 = vshrl.u32 %v5906, 7
    %v5908 = vsub.s32 7, %v5907
    %v5909 = vrot.slane %v5876, %v5908
    %v5918 = vsub.f32 %v5818, %v5881
    %v5919 = vsub.f32 %v5819, %v5885
    %v5920 = vsub.f32 %v5820, %v5889
    %v5921 = vsub.f32 %v5821, %v5893
    %v5922 = vsub.f32 %v5822, %v5897
    %v5923 = vsub.f32 %v5823, %v5901
    %v5924 = vsub.f32 %v5824, %v5905
    %v5925 = vsub.f32 %v5825, %v5909
    %v5926 = vmul.f32 %v5918, 1.442695
    %v5927 = vpow.pop %v5926
    %v5928 = vmul.f32 %v5919, 1.442695
    %v5929 = vpow.pop %v5928
    %v5930 = vmul.f32 %v5920, 1.442695
    %v5931 = vpow.pop %v5930
    %v5932 = vmul.f32 %v5921, 1.442695
    %v5933 = vpow.pop %v5932
    %v5934 = vmul.f32 %v5922, 1.442695
    %v5935 = vpow.pop %v5934
    %v5936 = vmul.f32 %v5923, 1.442695
    %v5937 = vpow.pop %v5936
    %v5938 = vmul.f32 %v5924, 1.442695
    %v5939 = vpow.pop %v5938
    %v5940 = vmul.f32 %v5925, 1.442695
    %v5941 = vpow.pop %v5940
    %5950 = vset.pattern.permute.xlu0 0
    %5951 = vperm.xlu0 %5950, %v5927
    %v5952 = vpop.permute.xlu0 %5951
    %5953 = vset.pattern.permute.xlu0 0
    %5954 = vperm.xlu0 %5953, %v5929
    %v5955 = vpop.permute.xlu0 %5954
    %5956 = vset.pattern.permute.xlu0 0
    %5957 = vperm.xlu0 %5956, %v5931
    %v5958 = vpop.permute.xlu0 %5957
    %5959 = vset.pattern.permute.xlu0 0
    %5960 = vperm.xlu0 %5959, %v5933
    %v5961 = vpop.permute.xlu0 %5960
    %5962 = vset.pattern.permute.xlu0 0
    %5963 = vperm.xlu0 %5962, %v5935
    %v5964 = vpop.permute.xlu0 %5963
    %5965 = vset.pattern.permute.xlu0 0
    %5966 = vperm.xlu0 %5965, %v5937
    %v5967 = vpop.permute.xlu0 %5966
    %5968 = vset.pattern.permute.xlu0 0
    %5969 = vperm.xlu0 %5968, %v5939
    %v5970 = vpop.permute.xlu0 %5969
    %5971 = vset.pattern.permute.xlu0 0
    %5972 = vperm.xlu0 %5971, %v5941
    %v5973 = vpop.permute.xlu0 %5972
    %v5974 = vlaneseq
    %v5975 = vshrl.u32 %v5974, 7
    %v5976 = vsub.s32 %v631, %v5975
    %v5977 = vrot.slane %v5952, %v5976
    %v5978 = vlaneseq
    %v5979 = vshrl.u32 %v5978, 7
    %v5980 = vsub.s32 %v631, %v5979
    %v5981 = vrot.slane %v5955, %v5980
    %v5982 = vlaneseq
    %v5983 = vshrl.u32 %v5982, 7
    %v5984 = vsub.s32 %v631, %v5983
    %v5985 = vrot.slane %v5958, %v5984
    %v5986 = vlaneseq
    %v5987 = vshrl.u32 %v5986, 7
    %v5988 = vsub.s32 %v631, %v5987
    %v5989 = vrot.slane %v5961, %v5988
    %v5990 = vlaneseq
    %v5991 = vshrl.u32 %v5990, 7
    %v5992 = vsub.s32 %v631, %v5991
    %v5993 = vrot.slane %v5964, %v5992
    %v5994 = vlaneseq
    %v5995 = vshrl.u32 %v5994, 7
    %v5996 = vsub.s32 %v631, %v5995
    %v5997 = vrot.slane %v5967, %v5996
    %v5998 = vlaneseq
    %v5999 = vshrl.u32 %v5998, 7
    %v6000 = vsub.s32 %v631, %v5999
    %v6001 = vrot.slane %v5970, %v6000
    %v6002 = vlaneseq
    %v6003 = vshrl.u32 %v6002, 7
    %v6004 = vsub.s32 %v631, %v6003
    %v6005 = vrot.slane %v5973, %v6004
    %v6006 = vsel %vm664, %v5981, %v5977
    %v6007 = vsel %vm666, %v5985, %v6006
    %v6008 = vsel %vm668, %v5989, %v6007
    %v6009 = vsel %vm670, %v5993, %v6008
    %v6010 = vsel %vm672, %v5997, %v6009
    %v6011 = vsel %vm674, %v6001, %v6010
    %v6012 = vsel %vm676, %v6005, %v6011
    %v6014 = vsel %vm679, %v6012, 0.0
    %6015 = vadd.xlane.f32.xlu0 %v6014
    %v6016 = vpop.xlane.xlu0 %6015
    %v6017 = vrcp.pop %v6016
    %v6019 = vlaneseq
    %v6020 = vshrl.u32 %v6019, 7
    %v6021 = vsub.s32 0, %v6020
    %v6022 = vrot.slane %v6017, %v6021
    %v6023 = vlaneseq
    %v6024 = vshrl.u32 %v6023, 7
    %v6025 = vsub.s32 1, %v6024
    %v6026 = vrot.slane %v6017, %v6025
    %v6027 = vlaneseq
    %v6028 = vshrl.u32 %v6027, 7
    %v6029 = vsub.s32 2, %v6028
    %v6030 = vrot.slane %v6017, %v6029
    %v6031 = vlaneseq
    %v6032 = vshrl.u32 %v6031, 7
    %v6033 = vsub.s32 3, %v6032
    %v6034 = vrot.slane %v6017, %v6033
    %v6035 = vlaneseq
    %v6036 = vshrl.u32 %v6035, 7
    %v6037 = vsub.s32 4, %v6036
    %v6038 = vrot.slane %v6017, %v6037
    %v6039 = vlaneseq
    %v6040 = vshrl.u32 %v6039, 7
    %v6041 = vsub.s32 5, %v6040
    %v6042 = vrot.slane %v6017, %v6041
    %v6043 = vlaneseq
    %v6044 = vshrl.u32 %v6043, 7
    %v6045 = vsub.s32 6, %v6044
    %v6046 = vrot.slane %v6017, %v6045
    %v6047 = vlaneseq
    %v6048 = vshrl.u32 %v6047, 7
    %v6049 = vsub.s32 7, %v6048
    %v6050 = vrot.slane %v6017, %v6049
    %v6059 = vmul.f32 %v5927, %v6022
    %v6060 = vmul.f32 %v5929, %v6026
    %v6061 = vmul.f32 %v5931, %v6030
    %v6062 = vmul.f32 %v5933, %v6034
    %v6063 = vmul.f32 %v5935, %v6038
    %v6064 = vmul.f32 %v5937, %v6042
    %v6065 = vmul.f32 %v5939, %v6046
    %v6066 = vmul.f32 %v5941, %v6050
    %6068 = vset.pattern.permute.xlu0 0
    %6069 = vperm.xlu0 %6068, %v6059
    %v6070 = vpop.permute.xlu0 %6069
    %6073 = vset.pattern.permute.xlu0 0
    %6074 = vperm.xlu0 %6073, %v6060
    %v6075 = vpop.permute.xlu0 %6074
    %6078 = vset.pattern.permute.xlu0 0
    %6079 = vperm.xlu0 %6078, %v6061
    %v6080 = vpop.permute.xlu0 %6079
    %6083 = vset.pattern.permute.xlu0 0
    %6084 = vperm.xlu0 %6083, %v6062
    %v6085 = vpop.permute.xlu0 %6084
    %6088 = vset.pattern.permute.xlu0 0
    %6089 = vperm.xlu0 %6088, %v6063
    %v6090 = vpop.permute.xlu0 %6089
    %6093 = vset.pattern.permute.xlu0 0
    %6094 = vperm.xlu0 %6093, %v6064
    %v6095 = vpop.permute.xlu0 %6094
    %6098 = vset.pattern.permute.xlu0 0
    %6099 = vperm.xlu0 %6098, %v6065
    %v6100 = vpop.permute.xlu0 %6099
    %6103 = vset.pattern.permute.xlu0 0
    %6104 = vperm.xlu0 %6103, %v6066
    %v6105 = vpop.permute.xlu0 %6104
    %v6107 = vmul.f32 %v6070, %v153
    %v6108 = vmul.f32 %v6075, %v154
    %v6109 = vmul.f32 %v6080, %v155
    %v6110 = vmul.f32 %v6085, %v156
    %v6111 = vmul.f32 %v6090, %v157
    %v6112 = vmul.f32 %v6095, %v158
    %v6113 = vmul.f32 %v6100, %v159
    %v6114 = vmul.f32 %v6105, %v160
    %v6115 = vsel %vm170, %v6107, 0.0
    %v6116 = vrot.slane %v6115, 4
    %v6117 = vadd.f32 %v6115, %v6116
    %v6118 = vrot.slane %v6117, 2
    %v6119 = vadd.f32 %v6117, %v6118
    %v6120 = vrot.slane %v6119, 1
    %v6121 = vadd.f32 %v6119, %v6120
    %v6122 = vsel %vm170, %v6108, 0.0
    %v6123 = vrot.slane %v6122, 4
    %v6124 = vadd.f32 %v6122, %v6123
    %v6125 = vrot.slane %v6124, 2
    %v6126 = vadd.f32 %v6124, %v6125
    %v6127 = vrot.slane %v6126, 1
    %v6128 = vadd.f32 %v6126, %v6127
    %v6129 = vsel %vm170, %v6109, 0.0
    %v6130 = vrot.slane %v6129, 4
    %v6131 = vadd.f32 %v6129, %v6130
    %v6132 = vrot.slane %v6131, 2
    %v6133 = vadd.f32 %v6131, %v6132
    %v6134 = vrot.slane %v6133, 1
    %v6135 = vadd.f32 %v6133, %v6134
    %v6136 = vsel %vm170, %v6110, 0.0
    %v6137 = vrot.slane %v6136, 4
    %v6138 = vadd.f32 %v6136, %v6137
    %v6139 = vrot.slane %v6138, 2
    %v6140 = vadd.f32 %v6138, %v6139
    %v6141 = vrot.slane %v6140, 1
    %v6142 = vadd.f32 %v6140, %v6141
    %v6143 = vsel %vm170, %v6111, 0.0
    %v6144 = vrot.slane %v6143, 4
    %v6145 = vadd.f32 %v6143, %v6144
    %v6146 = vrot.slane %v6145, 2
    %v6147 = vadd.f32 %v6145, %v6146
    %v6148 = vrot.slane %v6147, 1
    %v6149 = vadd.f32 %v6147, %v6148
    %v6150 = vsel %vm170, %v6112, 0.0
    %v6151 = vrot.slane %v6150, 4
    %v6152 = vadd.f32 %v6150, %v6151
    %v6153 = vrot.slane %v6152, 2
    %v6154 = vadd.f32 %v6152, %v6153
    %v6155 = vrot.slane %v6154, 1
    %v6156 = vadd.f32 %v6154, %v6155
    %v6157 = vsel %vm170, %v6113, 0.0
    %v6158 = vrot.slane %v6157, 4
    %v6159 = vadd.f32 %v6157, %v6158
    %v6160 = vrot.slane %v6159, 2
    %v6161 = vadd.f32 %v6159, %v6160
    %v6162 = vrot.slane %v6161, 1
    %v6163 = vadd.f32 %v6161, %v6162
    %v6164 = vsel %vm170, %v6114, 0.0
    %v6165 = vrot.slane %v6164, 4
    %v6166 = vadd.f32 %v6164, %v6165
    %v6167 = vrot.slane %v6166, 2
    %v6168 = vadd.f32 %v6166, %v6167
    %v6169 = vrot.slane %v6168, 1
    %v6170 = vadd.f32 %v6168, %v6169
    %s6171 = scalar_lea.vmem [#allocation3], 40
    %v6172 = vld [vmem:[%s6171] sm:$0xff]
    %v6181 = vsel %vm664, %v6128, %v6121
    %v6182 = vsel %vm666, %v6135, %v6181
    %v6183 = vsel %vm668, %v6142, %v6182
    %v6184 = vsel %vm670, %v6149, %v6183
    %v6185 = vsel %vm672, %v6156, %v6184
    %v6186 = vsel %vm674, %v6163, %v6185
    %v6187 = vsel %vm676, %v6170, %v6186
    %v6188 = vsel %vm170, %v6187, 0
    %6190 = vmatprep.subr.mxu0 0.0
    %6191 = vmatpush1.msra.mxu0 0.0
    %6192 = vmatprep.subr.mxu0 0.0
    %6193 = vmatpush1.msra.mxu0 0.0
    %6194 = vmatprep.subr.mxu0 0.0
    %6195 = vmatpush1.msra.mxu0 0.0
    %6196 = vmatprep.subr.mxu0 0.0
    %6197 = vmatpush1.msra.mxu0 0.0
    %6198 = vmatprep.subr.mxu0 0.0
    %6199 = vmatpush1.msra.mxu0 0.0
    %6200 = vmatprep.subr.mxu0 0.0
    %6201 = vmatpush1.msra.mxu0 0.0
    %6202 = vmatprep.subr.mxu0 0.0
    %6203 = vmatpush1.msra.mxu0 0.0
    %6204 = vmatprep.subr.mxu0 0.0
    %6205 = vmatpush1.msra.mxu0 0.0
    %6206 = vmatprep.subr.mxu0 0.0
    %6207 = vmatpush1.msra.mxu0 0.0
    %6208 = vmatprep.subr.mxu0 0.0
    %6209 = vmatpush1.msra.mxu0 0.0
    %6210 = vmatprep.subr.mxu0 0.0
    %6211 = vmatpush1.msra.mxu0 0.0
    %6212 = vmatprep.subr.mxu0 0.0
    %6213 = vmatpush1.msra.mxu0 0.0
    %6214 = vmatprep.subr.mxu0 0.0
    %6215 = vmatpush1.msra.mxu0 0.0
    %6216 = vmatprep.subr.mxu0 0.0
    %6217 = vmatpush1.msra.mxu0 0.0
    %6218 = vmatprep.subr.mxu0 %v332
    %6219 = vmatpush1.msra.mxu0 %v331
    %6220 = vmatprep.subr.mxu0 %v328
    %6221 = vmatpush1.msra.mxu0 %v327
    %6222 = vmatprep.subr.mxu0 0.0
    %6223 = vmatpush2.msra.mxu0 0.0
    %6224 = vmatprep.subr.mxu0 0.0
    %6225 = vmatpush2.msra.mxu0 0.0
    %6226 = vmatprep.subr.mxu0 0.0
    %6227 = vmatpush2.msra.mxu0 0.0
    %6228 = vmatprep.subr.mxu0 0.0
    %6229 = vmatpush2.msra.mxu0 0.0
    %6230 = vmatprep.subr.mxu0 0.0
    %6231 = vmatpush2.msra.mxu0 0.0
    %6232 = vmatprep.subr.mxu0 0.0
    %6233 = vmatpush2.msra.mxu0 0.0
    %6234 = vmatprep.subr.mxu0 0.0
    %6235 = vmatpush2.msra.mxu0 0.0
    %6236 = vmatprep.subr.mxu0 0.0
    %6237 = vmatpush2.msra.mxu0 0.0
    %6238 = vmatprep.subr.mxu0 0.0
    %6239 = vmatpush2.msra.mxu0 0.0
    %6240 = vmatprep.subr.mxu0 0.0
    %6241 = vmatpush2.msra.mxu0 0.0
    %6242 = vmatprep.subr.mxu0 0.0
    %6243 = vmatpush2.msra.mxu0 0.0
    %6244 = vmatprep.subr.mxu0 0.0
    %6245 = vmatpush2.msra.mxu0 0.0
    %6246 = vmatprep.subr.mxu0 0.0
    %6247 = vmatpush2.msra.mxu0 0.0
    %6248 = vmatprep.subr.mxu0 0.0
    %6249 = vmatpush2.msra.mxu0 0.0
    %6250 = vmatprep.subr.mxu0 0.0
    %6251 = vmatpush2.msra.mxu0 0.0
    %6252 = vmatprep.subr.mxu0 0.0
    %6253 = vmatpush2.msra.mxu0 0.0
    %6254 = vmatprep.mubr.f32.mxu0 0.0
    %6255 = vmatmul.mubr.f32.gmra.mxu0 %v6188
    %v6256 = vpop.f32.mrf.mxu0
    %v6257 = vadd.f32 0.0, %v6256
    %v6258 = vpop.f32.mrf.mxu0
    %v6259 = vadd.f32 0.0, %v6258
    %6260 = vdwg.mxu0
    %6261 = vmatprep.subr.mxu0 0.0
    %6262 = vmatpush1.msra.mxu0 0.0
    %6263 = vmatprep.subr.mxu0 0.0
    %6264 = vmatpush1.msra.mxu0 0.0
    %6265 = vmatprep.subr.mxu0 0.0
    %6266 = vmatpush1.msra.mxu0 0.0
    %6267 = vmatprep.subr.mxu0 0.0
    %6268 = vmatpush1.msra.mxu0 0.0
    %6269 = vmatprep.subr.mxu0 0.0
    %6270 = vmatpush1.msra.mxu0 0.0
    %6271 = vmatprep.subr.mxu0 0.0
    %6272 = vmatpush1.msra.mxu0 0.0
    %6273 = vmatprep.subr.mxu0 0.0
    %6274 = vmatpush1.msra.mxu0 0.0
    %6275 = vmatprep.subr.mxu0 0.0
    %6276 = vmatpush1.msra.mxu0 0.0
    %6277 = vmatprep.subr.mxu0 0.0
    %6278 = vmatpush1.msra.mxu0 0.0
    %6279 = vmatprep.subr.mxu0 0.0
    %6280 = vmatpush1.msra.mxu0 0.0
    %6281 = vmatprep.subr.mxu0 0.0
    %6282 = vmatpush1.msra.mxu0 0.0
    %6283 = vmatprep.subr.mxu0 0.0
    %6284 = vmatpush1.msra.mxu0 0.0
    %6285 = vmatprep.subr.mxu0 0.0
    %6286 = vmatpush1.msra.mxu0 0.0
    %6287 = vmatprep.subr.mxu0 0.0
    %6288 = vmatpush1.msra.mxu0 0.0
    %6289 = vmatprep.subr.mxu0 %v334
    %6290 = vmatpush1.msra.mxu0 %v333
    %6291 = vmatprep.subr.mxu0 %v330
    %6292 = vmatpush1.msra.mxu0 %v329
    %6293 = vmatprep.subr.mxu0 0.0
    %6294 = vmatpush2.msra.mxu0 0.0
    %6295 = vmatprep.subr.mxu0 0.0
    %6296 = vmatpush2.msra.mxu0 0.0
    %6297 = vmatprep.subr.mxu0 0.0
    %6298 = vmatpush2.msra.mxu0 0.0
    %6299 = vmatprep.subr.mxu0 0.0
    %6300 = vmatpush2.msra.mxu0 0.0
    %6301 = vmatprep.subr.mxu0 0.0
    %6302 = vmatpush2.msra.mxu0 0.0
    %6303 = vmatprep.subr.mxu0 0.0
    %6304 = vmatpush2.msra.mxu0 0.0
    %6305 = vmatprep.subr.mxu0 0.0
    %6306 = vmatpush2.msra.mxu0 0.0
    %6307 = vmatprep.subr.mxu0 0.0
    %6308 = vmatpush2.msra.mxu0 0.0
    %6309 = vmatprep.subr.mxu0 0.0
    %6310 = vmatpush2.msra.mxu0 0.0
    %6311 = vmatprep.subr.mxu0 0.0
    %6312 = vmatpush2.msra.mxu0 0.0
    %6313 = vmatprep.subr.mxu0 0.0
    %6314 = vmatpush2.msra.mxu0 0.0
    %6315 = vmatprep.subr.mxu0 0.0
    %6316 = vmatpush2.msra.mxu0 0.0
    %6317 = vmatprep.subr.mxu0 0.0
    %6318 = vmatpush2.msra.mxu0 0.0
    %6319 = vmatprep.subr.mxu0 0.0
    %6320 = vmatpush2.msra.mxu0 0.0
    %6321 = vmatprep.subr.mxu0 0.0
    %6322 = vmatpush2.msra.mxu0 0.0
    %6323 = vmatprep.subr.mxu0 0.0
    %6324 = vmatpush2.msra.mxu0 0.0
    %6325 = vmatprep.mubr.f32.mxu0 0.0
    %6326 = vmatmul.mubr.f32.gmra.mxu0 %v6188
    %v6327 = vpop.f32.mrf.mxu0
    %v6328 = vadd.f32 0.0, %v6327
    %v6329 = vpop.f32.mrf.mxu0
    %v6330 = vadd.f32 0.0, %v6329
    %6331 = vdwg.mxu0
    %v6333 = vsel %vm170, %v6172, 0
    %6335 = vmatprep.subr.mxu0 0.0
    %6336 = vmatpush1.msra.mxu0 0.0
    %6337 = vmatprep.subr.mxu0 0.0
    %6338 = vmatpush1.msra.mxu0 0.0
    %6339 = vmatprep.subr.mxu0 0.0
    %6340 = vmatpush1.msra.mxu0 0.0
    %6341 = vmatprep.subr.mxu0 0.0
    %6342 = vmatpush1.msra.mxu0 0.0
    %6343 = vmatprep.subr.mxu0 0.0
    %6344 = vmatpush1.msra.mxu0 0.0
    %6345 = vmatprep.subr.mxu0 0.0
    %6346 = vmatpush1.msra.mxu0 0.0
    %6347 = vmatprep.subr.mxu0 0.0
    %6348 = vmatpush1.msra.mxu0 0.0
    %6349 = vmatprep.subr.mxu0 0.0
    %6350 = vmatpush1.msra.mxu0 0.0
    %6351 = vmatprep.subr.mxu0 0.0
    %6352 = vmatpush1.msra.mxu0 0.0
    %6353 = vmatprep.subr.mxu0 0.0
    %6354 = vmatpush1.msra.mxu0 0.0
    %6355 = vmatprep.subr.mxu0 0.0
    %6356 = vmatpush1.msra.mxu0 0.0
    %6357 = vmatprep.subr.mxu0 0.0
    %6358 = vmatpush1.msra.mxu0 0.0
    %6359 = vmatprep.subr.mxu0 0.0
    %6360 = vmatpush1.msra.mxu0 0.0
    %6361 = vmatprep.subr.mxu0 0.0
    %6362 = vmatpush1.msra.mxu0 0.0
    %6363 = vmatprep.subr.mxu0 %v324
    %6364 = vmatpush1.msra.mxu0 %v323
    %6365 = vmatprep.subr.mxu0 %v320
    %6366 = vmatpush1.msra.mxu0 %v319
    %6367 = vmatprep.subr.mxu0 0.0
    %6368 = vmatpush2.msra.mxu0 0.0
    %6369 = vmatprep.subr.mxu0 0.0
    %6370 = vmatpush2.msra.mxu0 0.0
    %6371 = vmatprep.subr.mxu0 0.0
    %6372 = vmatpush2.msra.mxu0 0.0
    %6373 = vmatprep.subr.mxu0 0.0
    %6374 = vmatpush2.msra.mxu0 0.0
    %6375 = vmatprep.subr.mxu0 0.0
    %6376 = vmatpush2.msra.mxu0 0.0
    %6377 = vmatprep.subr.mxu0 0.0
    %6378 = vmatpush2.msra.mxu0 0.0
    %6379 = vmatprep.subr.mxu0 0.0
    %6380 = vmatpush2.msra.mxu0 0.0
    %6381 = vmatprep.subr.mxu0 0.0
    %6382 = vmatpush2.msra.mxu0 0.0
    %6383 = vmatprep.subr.mxu0 0.0
    %6384 = vmatpush2.msra.mxu0 0.0
    %6385 = vmatprep.subr.mxu0 0.0
    %6386 = vmatpush2.msra.mxu0 0.0
    %6387 = vmatprep.subr.mxu0 0.0
    %6388 = vmatpush2.msra.mxu0 0.0
    %6389 = vmatprep.subr.mxu0 0.0
    %6390 = vmatpush2.msra.mxu0 0.0
    %6391 = vmatprep.subr.mxu0 0.0
    %6392 = vmatpush2.msra.mxu0 0.0
    %6393 = vmatprep.subr.mxu0 0.0
    %6394 = vmatpush2.msra.mxu0 0.0
    %6395 = vmatprep.subr.mxu0 0.0
    %6396 = vmatpush2.msra.mxu0 0.0
    %6397 = vmatprep.subr.mxu0 0.0
    %6398 = vmatpush2.msra.mxu0 0.0
    %6399 = vmatprep.mubr.f32.mxu0 0.0
    %6400 = vmatmul.mubr.f32.gmra.mxu0 %v6333
    %v6401 = vpop.f32.mrf.mxu0
    %v6402 = vadd.f32 %v6257, %v6401
    %v6403 = vpop.f32.mrf.mxu0
    %v6404 = vadd.f32 %v6259, %v6403
    %6405 = vdwg.mxu0
    %6406 = vmatprep.subr.mxu0 0.0
    %6407 = vmatpush1.msra.mxu0 0.0
    %6408 = vmatprep.subr.mxu0 0.0
    %6409 = vmatpush1.msra.mxu0 0.0
    %6410 = vmatprep.subr.mxu0 0.0
    %6411 = vmatpush1.msra.mxu0 0.0
    %6412 = vmatprep.subr.mxu0 0.0
    %6413 = vmatpush1.msra.mxu0 0.0
    %6414 = vmatprep.subr.mxu0 0.0
    %6415 = vmatpush1.msra.mxu0 0.0
    %6416 = vmatprep.subr.mxu0 0.0
    %6417 = vmatpush1.msra.mxu0 0.0
    %6418 = vmatprep.subr.mxu0 0.0
    %6419 = vmatpush1.msra.mxu0 0.0
    %6420 = vmatprep.subr.mxu0 0.0
    %6421 = vmatpush1.msra.mxu0 0.0
    %6422 = vmatprep.subr.mxu0 0.0
    %6423 = vmatpush1.msra.mxu0 0.0
    %6424 = vmatprep.subr.mxu0 0.0
    %6425 = vmatpush1.msra.mxu0 0.0
    %6426 = vmatprep.subr.mxu0 0.0
    %6427 = vmatpush1.msra.mxu0 0.0
    %6428 = vmatprep.subr.mxu0 0.0
    %6429 = vmatpush1.msra.mxu0 0.0
    %6430 = vmatprep.subr.mxu0 0.0
    %6431 = vmatpush1.msra.mxu0 0.0
    %6432 = vmatprep.subr.mxu0 0.0
    %6433 = vmatpush1.msra.mxu0 0.0
    %6434 = vmatprep.subr.mxu0 %v326
    %6435 = vmatpush1.msra.mxu0 %v325
    %6436 = vmatprep.subr.mxu0 %v322
    %6437 = vmatpush1.msra.mxu0 %v321
    %6438 = vmatprep.subr.mxu0 0.0
    %6439 = vmatpush2.msra.mxu0 0.0
    %6440 = vmatprep.subr.mxu0 0.0
    %6441 = vmatpush2.msra.mxu0 0.0
    %6442 = vmatprep.subr.mxu0 0.0
    %6443 = vmatpush2.msra.mxu0 0.0
    %6444 = vmatprep.subr.mxu0 0.0
    %6445 = vmatpush2.msra.mxu0 0.0
    %6446 = vmatprep.subr.mxu0 0.0
    %6447 = vmatpush2.msra.mxu0 0.0
    %6448 = vmatprep.subr.mxu0 0.0
    %6449 = vmatpush2.msra.mxu0 0.0
    %6450 = vmatprep.subr.mxu0 0.0
    %6451 = vmatpush2.msra.mxu0 0.0
    %6452 = vmatprep.subr.mxu0 0.0
    %6453 = vmatpush2.msra.mxu0 0.0
    %6454 = vmatprep.subr.mxu0 0.0
    %6455 = vmatpush2.msra.mxu0 0.0
    %6456 = vmatprep.subr.mxu0 0.0
    %6457 = vmatpush2.msra.mxu0 0.0
    %6458 = vmatprep.subr.mxu0 0.0
    %6459 = vmatpush2.msra.mxu0 0.0
    %6460 = vmatprep.subr.mxu0 0.0
    %6461 = vmatpush2.msra.mxu0 0.0
    %6462 = vmatprep.subr.mxu0 0.0
    %6463 = vmatpush2.msra.mxu0 0.0
    %6464 = vmatprep.subr.mxu0 0.0
    %6465 = vmatpush2.msra.mxu0 0.0
    %6466 = vmatprep.subr.mxu0 0.0
    %6467 = vmatpush2.msra.mxu0 0.0
    %6468 = vmatprep.subr.mxu0 0.0
    %6469 = vmatpush2.msra.mxu0 0.0
    %6470 = vmatprep.mubr.f32.mxu0 0.0
    %6471 = vmatmul.mubr.f32.gmra.mxu0 %v6333
    %v6472 = vpop.f32.mrf.mxu0
    %v6473 = vadd.f32 %v6328, %v6472
    %v6474 = vpop.f32.mrf.mxu0
    %v6475 = vadd.f32 %v6330, %v6474
    %6476 = vdwg.mxu0
    %6477 = vmatprep.subr.mxu0 %v396
    %6478 = vmatpush1.msra.mxu0 %v395
    %6479 = vmatprep.subr.mxu0 %v392
    %6480 = vmatpush1.msra.mxu0 %v391
    %6481 = vmatprep.subr.mxu0 %v388
    %6482 = vmatpush1.msra.mxu0 %v387
    %6483 = vmatprep.subr.mxu0 %v384
    %6484 = vmatpush1.msra.mxu0 %v383
    %6485 = vmatprep.subr.mxu0 %v380
    %6486 = vmatpush1.msra.mxu0 %v379
    %6487 = vmatprep.subr.mxu0 %v376
    %6488 = vmatpush1.msra.mxu0 %v375
    %6489 = vmatprep.subr.mxu0 %v372
    %6490 = vmatpush1.msra.mxu0 %v371
    %6491 = vmatprep.subr.mxu0 %v368
    %6492 = vmatpush1.msra.mxu0 %v367
    %6493 = vmatprep.subr.mxu0 %v364
    %6494 = vmatpush1.msra.mxu0 %v363
    %6495 = vmatprep.subr.mxu0 %v360
    %6496 = vmatpush1.msra.mxu0 %v359
    %6497 = vmatprep.subr.mxu0 %v356
    %6498 = vmatpush1.msra.mxu0 %v355
    %6499 = vmatprep.subr.mxu0 %v352
    %6500 = vmatpush1.msra.mxu0 %v351
    %6501 = vmatprep.subr.mxu0 %v348
    %6502 = vmatpush1.msra.mxu0 %v347
    %6503 = vmatprep.subr.mxu0 %v344
    %6504 = vmatpush1.msra.mxu0 %v343
    %6505 = vmatprep.subr.mxu0 %v340
    %6506 = vmatpush1.msra.mxu0 %v339
    %6507 = vmatprep.subr.mxu0 %v336
    %6508 = vmatpush1.msra.mxu0 %v335
    %6509 = vmatprep.subr.mxu0 0.0
    %6510 = vmatpush2.msra.mxu0 0.0
    %6511 = vmatprep.subr.mxu0 0.0
    %6512 = vmatpush2.msra.mxu0 0.0
    %6513 = vmatprep.subr.mxu0 0.0
    %6514 = vmatpush2.msra.mxu0 0.0
    %6515 = vmatprep.subr.mxu0 0.0
    %6516 = vmatpush2.msra.mxu0 0.0
    %6517 = vmatprep.subr.mxu0 0.0
    %6518 = vmatpush2.msra.mxu0 0.0
    %6519 = vmatprep.subr.mxu0 0.0
    %6520 = vmatpush2.msra.mxu0 0.0
    %6521 = vmatprep.subr.mxu0 0.0
    %6522 = vmatpush2.msra.mxu0 0.0
    %6523 = vmatprep.subr.mxu0 0.0
    %6524 = vmatpush2.msra.mxu0 0.0
    %6525 = vmatprep.subr.mxu0 0.0
    %6526 = vmatpush2.msra.mxu0 0.0
    %6527 = vmatprep.subr.mxu0 0.0
    %6528 = vmatpush2.msra.mxu0 0.0
    %6529 = vmatprep.subr.mxu0 0.0
    %6530 = vmatpush2.msra.mxu0 0.0
    %6531 = vmatprep.subr.mxu0 0.0
    %6532 = vmatpush2.msra.mxu0 0.0
    %6533 = vmatprep.subr.mxu0 0.0
    %6534 = vmatpush2.msra.mxu0 0.0
    %6535 = vmatprep.subr.mxu0 0.0
    %6536 = vmatpush2.msra.mxu0 0.0
    %6537 = vmatprep.subr.mxu0 0.0
    %6538 = vmatpush2.msra.mxu0 0.0
    %6539 = vmatprep.subr.mxu0 0.0
    %6540 = vmatpush2.msra.mxu0 0.0
    %6541 = vmatprep.mubr.f32.mxu0 0.0
    %6542 = vmatmul.mubr.f32.gmra.mxu0 %v5615
    %v6543 = vpop.f32.mrf.mxu0
    %v6544 = vadd.f32 0.0, %v6543
    %v6545 = vpop.f32.mrf.mxu0
    %v6546 = vadd.f32 0.0, %v6545
    %6547 = vdwg.mxu0
    %6548 = vmatprep.subr.mxu0 %v398
    %6549 = vmatpush1.msra.mxu0 %v397
    %6550 = vmatprep.subr.mxu0 %v394
    %6551 = vmatpush1.msra.mxu0 %v393
    %6552 = vmatprep.subr.mxu0 %v390
    %6553 = vmatpush1.msra.mxu0 %v389
    %6554 = vmatprep.subr.mxu0 %v386
    %6555 = vmatpush1.msra.mxu0 %v385
    %6556 = vmatprep.subr.mxu0 %v382
    %6557 = vmatpush1.msra.mxu0 %v381
    %6558 = vmatprep.subr.mxu0 %v378
    %6559 = vmatpush1.msra.mxu0 %v377
    %6560 = vmatprep.subr.mxu0 %v374
    %6561 = vmatpush1.msra.mxu0 %v373
    %6562 = vmatprep.subr.mxu0 %v370
    %6563 = vmatpush1.msra.mxu0 %v369
    %6564 = vmatprep.subr.mxu0 %v366
    %6565 = vmatpush1.msra.mxu0 %v365
    %6566 = vmatprep.subr.mxu0 %v362
    %6567 = vmatpush1.msra.mxu0 %v361
    %6568 = vmatprep.subr.mxu0 %v358
    %6569 = vmatpush1.msra.mxu0 %v357
    %6570 = vmatprep.subr.mxu0 %v354
    %6571 = vmatpush1.msra.mxu0 %v353
    %6572 = vmatprep.subr.mxu0 %v350
    %6573 = vmatpush1.msra.mxu0 %v349
    %6574 = vmatprep.subr.mxu0 %v346
    %6575 = vmatpush1.msra.mxu0 %v345
    %6576 = vmatprep.subr.mxu0 %v342
    %6577 = vmatpush1.msra.mxu0 %v341
    %6578 = vmatprep.subr.mxu0 %v338
    %6579 = vmatpush1.msra.mxu0 %v337
    %6580 = vmatprep.subr.mxu0 0.0
    %6581 = vmatpush2.msra.mxu0 0.0
    %6582 = vmatprep.subr.mxu0 0.0
    %6583 = vmatpush2.msra.mxu0 0.0
    %6584 = vmatprep.subr.mxu0 0.0
    %6585 = vmatpush2.msra.mxu0 0.0
    %6586 = vmatprep.subr.mxu0 0.0
    %6587 = vmatpush2.msra.mxu0 0.0
    %6588 = vmatprep.subr.mxu0 0.0
    %6589 = vmatpush2.msra.mxu0 0.0
    %6590 = vmatprep.subr.mxu0 0.0
    %6591 = vmatpush2.msra.mxu0 0.0
    %6592 = vmatprep.subr.mxu0 0.0
    %6593 = vmatpush2.msra.mxu0 0.0
    %6594 = vmatprep.subr.mxu0 0.0
    %6595 = vmatpush2.msra.mxu0 0.0
    %6596 = vmatprep.subr.mxu0 0.0
    %6597 = vmatpush2.msra.mxu0 0.0
    %6598 = vmatprep.subr.mxu0 0.0
    %6599 = vmatpush2.msra.mxu0 0.0
    %6600 = vmatprep.subr.mxu0 0.0
    %6601 = vmatpush2.msra.mxu0 0.0
    %6602 = vmatprep.subr.mxu0 0.0
    %6603 = vmatpush2.msra.mxu0 0.0
    %6604 = vmatprep.subr.mxu0 0.0
    %6605 = vmatpush2.msra.mxu0 0.0
    %6606 = vmatprep.subr.mxu0 0.0
    %6607 = vmatpush2.msra.mxu0 0.0
    %6608 = vmatprep.subr.mxu0 0.0
    %6609 = vmatpush2.msra.mxu0 0.0
    %6610 = vmatprep.subr.mxu0 0.0
    %6611 = vmatpush2.msra.mxu0 0.0
    %6612 = vmatprep.mubr.f32.mxu0 0.0
    %6613 = vmatmul.mubr.f32.gmra.mxu0 %v5615
    %v6614 = vpop.f32.mrf.mxu0
    %v6615 = vadd.f32 0.0, %v6614
    %v6616 = vpop.f32.mrf.mxu0
    %v6617 = vadd.f32 0.0, %v6616
    %6618 = vdwg.mxu0
    %v6619 = vadd.f32 %v6402, %v6544
    %v6620 = vadd.f32 %v6404, %v6546
    %v6621 = vadd.f32 %v6473, %v6615
    %v6622 = vadd.f32 %v6475, %v6617
    %v6623 = vadd.f32 %v6619, %v1432
    %v6624 = vadd.f32 %v6620, %v1436
    %v6625 = vadd.f32 %v6621, %v1440
    %v6626 = vadd.f32 %v6622, %v1444
    %v6627 = vxor.u32 %v6623, 2147483648
    %v6628 = vmul.f32 %v6627, 1.442695
    %v6629 = vpow.pop %v6628
    %v6630 = vadd.f32 %v6629, 1.0
    %v6631 = vrcp.pop %v6630
    %v6632 = vmul.f32 1.0, %v6631
    %v6633 = vxor.u32 %v6624, 2147483648
    %v6634 = vmul.f32 %v6633, 1.442695
    %v6635 = vpow.pop %v6634
    %v6636 = vadd.f32 %v6635, 1.0
    %v6637 = vrcp.pop %v6636
    %v6638 = vmul.f32 1.0, %v6637
    %v6639 = vtanh.pop %v6625
    %v6640 = vxor.u32 %v6626, 2147483648
    %v6641 = vmul.f32 %v6640, 1.442695
    %v6642 = vpow.pop %v6641
    %v6643 = vadd.f32 %v6642, 1.0
    %v6644 = vrcp.pop %v6643
    %v6645 = vmul.f32 1.0, %v6644
    %v6646 = vmul.f32 %v6638, %v5613
    %v6647 = vmul.f32 %v6632, %v6639
    %v6648 = vadd.f32 %v6646, %v6647
    %v6649 = vtanh.pop %v6648
    %v6650 = vmul.f32 %v6645, %v6649
    %s6651 = scalar_lea.vmem [#allocation17], 40
    %6652 = vst [vmem:[%s6651] sm:$0xff] %v6650
    %6653 = vmatprep.subr.mxu0 0.0
    %6654 = vmatpush1.msra.mxu0 %v315
    %6655 = vmatprep.subr.mxu0 0.0
    %6656 = vmatpush1.msra.mxu0 %v314
    %6657 = vmatprep.subr.mxu0 0.0
    %6658 = vmatpush1.msra.mxu0 %v313
    %6659 = vmatprep.subr.mxu0 0.0
    %6660 = vmatpush1.msra.mxu0 %v312
    %6661 = vmatprep.subr.mxu0 0.0
    %6662 = vmatpush1.msra.mxu0 %v311
    %6663 = vmatprep.subr.mxu0 0.0
    %6664 = vmatpush1.msra.mxu0 %v310
    %6665 = vmatprep.subr.mxu0 0.0
    %6666 = vmatpush1.msra.mxu0 %v309
    %6667 = vmatprep.subr.mxu0 0.0
    %6668 = vmatpush1.msra.mxu0 %v308
    %6669 = vmatprep.subr.mxu0 0.0
    %6670 = vmatpush1.msra.mxu0 %v307
    %6671 = vmatprep.subr.mxu0 0.0
    %6672 = vmatpush1.msra.mxu0 %v306
    %6673 = vmatprep.subr.mxu0 0.0
    %6674 = vmatpush1.msra.mxu0 %v305
    %6675 = vmatprep.subr.mxu0 0.0
    %6676 = vmatpush1.msra.mxu0 %v304
    %6677 = vmatprep.subr.mxu0 0.0
    %6678 = vmatpush1.msra.mxu0 %v303
    %6679 = vmatprep.subr.mxu0 0.0
    %6680 = vmatpush1.msra.mxu0 %v302
    %6681 = vmatprep.subr.mxu0 0.0
    %6682 = vmatpush1.msra.mxu0 %v301
    %6683 = vmatprep.subr.mxu0 0.0
    %6684 = vmatpush1.msra.mxu0 %v300
    %6685 = vmatprep.subr.mxu0 0.0
    %6686 = vmatpush2.msra.mxu0 0.0
    %6687 = vmatprep.subr.mxu0 0.0
    %6688 = vmatpush2.msra.mxu0 0.0
    %6689 = vmatprep.subr.mxu0 0.0
    %6690 = vmatpush2.msra.mxu0 0.0
    %6691 = vmatprep.subr.mxu0 0.0
    %6692 = vmatpush2.msra.mxu0 0.0
    %6693 = vmatprep.subr.mxu0 0.0
    %6694 = vmatpush2.msra.mxu0 0.0
    %6695 = vmatprep.subr.mxu0 0.0
    %6696 = vmatpush2.msra.mxu0 0.0
    %6697 = vmatprep.subr.mxu0 0.0
    %6698 = vmatpush2.msra.mxu0 0.0
    %6699 = vmatprep.subr.mxu0 0.0
    %6700 = vmatpush2.msra.mxu0 0.0
    %6701 = vmatprep.subr.mxu0 0.0
    %6702 = vmatpush2.msra.mxu0 0.0
    %6703 = vmatprep.subr.mxu0 0.0
    %6704 = vmatpush2.msra.mxu0 0.0
    %6705 = vmatprep.subr.mxu0 0.0
    %6706 = vmatpush2.msra.mxu0 0.0
    %6707 = vmatprep.subr.mxu0 0.0
    %6708 = vmatpush2.msra.mxu0 0.0
    %6709 = vmatprep.subr.mxu0 0.0
    %6710 = vmatpush2.msra.mxu0 0.0
    %6711 = vmatprep.subr.mxu0 0.0
    %6712 = vmatpush2.msra.mxu0 0.0
    %6713 = vmatprep.subr.mxu0 0.0
    %6714 = vmatpush2.msra.mxu0 0.0
    %6715 = vmatprep.subr.mxu0 0.0
    %6716 = vmatpush2.msra.mxu0 0.0
    %6717 = vmatprep.mubr.f32.mxu0 0.0
    %6718 = vmatmul.mubr.f32.gmra.mxu0 %v6650
    %v6719 = vpop.f32.mrf.mxu0
    %v6720 = vadd.f32 %v405, %v6719
    %v6721 = vpop.f32.mrf.mxu0
    %6722 = vdwg.mxu0
    %v6724 = vcombine.high %v6720, %v6720
    %v6726 = vunpack.c.l.s4 1966171168
    %v6727 = vunpack.c.0.s8 %v6726
    %v6728 = vlaneseq
    %v6729 = vshrl.u32 %v6728, 7
    %v6730 = vsub.s32 %v6727, %v6729
    %v6731 = vrot.slane %v6720, %v6730
    %v6733 = vunpack.c.l.s4 1966171168
    %v6734 = vunpack.c.0.s8 %v6733
    %v6735 = vlaneseq
    %v6736 = vshrl.u32 %v6735, 7
    %v6737 = vsub.s32 %v6734, %v6736
    %v6738 = vrot.slane %v6724, %v6737
    %v6739 = vcombine.high %v6731, %v6731
    %v6740 = vcombine.high %v6738, %v6738
    %v6742 = vunpack.c.l.s4 1966171168
    %v6743 = vunpack.c.0.s8 %v6742
    %v6744 = vlaneseq
    %v6745 = vshrl.u32 %v6744, 7
    %v6746 = vsub.s32 %v6743, %v6745
    %v6747 = vrot.slane %v6731, %v6746
    %v6749 = vunpack.c.l.s4 1966171168
    %v6750 = vunpack.c.0.s8 %v6749
    %v6751 = vlaneseq
    %v6752 = vshrl.u32 %v6751, 7
    %v6753 = vsub.s32 %v6750, %v6752
    %v6754 = vrot.slane %v6738, %v6753
    %v6756 = vunpack.c.l.s4 1966171168
    %v6757 = vunpack.c.0.s8 %v6756
    %v6758 = vlaneseq
    %v6759 = vshrl.u32 %v6758, 7
    %v6760 = vsub.s32 %v6757, %v6759
    %v6761 = vrot.slane %v6739, %v6760
    %v6763 = vunpack.c.l.s4 1966171168
    %v6764 = vunpack.c.0.s8 %v6763
    %v6765 = vlaneseq
    %v6766 = vshrl.u32 %v6765, 7
    %v6767 = vsub.s32 %v6764, %v6766
    %v6768 = vrot.slane %v6740, %v6767
    %v6769 = vcombine.high %v6747, %v6747
    %v6770 = vcombine.high %v6754, %v6754
    %v6771 = vcombine.high %v6761, %v6761
    %v6772 = vcombine.high %v6768, %v6768
    %v6773 = vlaneseq
    %v6774 = vshrl.u32 %v6773, 7
    %v6775 = vsub.s32 0, %v6774
    %v6776 = vrot.slane %v6747, %v6775
    %v6777 = vlaneseq
    %v6778 = vshrl.u32 %v6777, 7
    %v6779 = vsub.s32 0, %v6778
    %v6780 = vrot.slane %v6761, %v6779
    %v6781 = vlaneseq
    %v6782 = vshrl.u32 %v6781, 7
    %v6783 = vsub.s32 0, %v6782
    %v6784 = vrot.slane %v6769, %v6783
    %v6785 = vlaneseq
    %v6786 = vshrl.u32 %v6785, 7
    %v6787 = vsub.s32 0, %v6786
    %v6788 = vrot.slane %v6771, %v6787
    %v6789 = vlaneseq
    %v6790 = vshrl.u32 %v6789, 7
    %v6791 = vsub.s32 0, %v6790
    %v6792 = vrot.slane %v6754, %v6791
    %v6793 = vlaneseq
    %v6794 = vshrl.u32 %v6793, 7
    %v6795 = vsub.s32 0, %v6794
    %v6796 = vrot.slane %v6768, %v6795
    %v6797 = vlaneseq
    %v6798 = vshrl.u32 %v6797, 7
    %v6799 = vsub.s32 0, %v6798
    %v6800 = vrot.slane %v6770, %v6799
    %v6801 = vlaneseq
    %v6802 = vshrl.u32 %v6801, 7
    %v6803 = vsub.s32 0, %v6802
    %v6804 = vrot.slane %v6772, %v6803
    %v6813 = vadd.f32 %v262, %v6776
    %v6814 = vadd.f32 %v267, %v6780
    %v6815 = vadd.f32 %v272, %v6784
    %v6816 = vadd.f32 %v277, %v6788
    %v6817 = vadd.f32 %v282, %v6792
    %v6818 = vadd.f32 %v287, %v6796
    %v6819 = vadd.f32 %v292, %v6800
    %v6820 = vadd.f32 %v297, %v6804
    %v6821 = vtanh.pop %v6813
    %v6822 = vtanh.pop %v6814
    %v6823 = vtanh.pop %v6815
    %v6824 = vtanh.pop %v6816
    %v6825 = vtanh.pop %v6817
    %v6826 = vtanh.pop %v6818
    %v6827 = vtanh.pop %v6819
    %v6828 = vtanh.pop %v6820
    %v6829 = vmul.f32 %v6821, %v587
    %v6830 = vmul.f32 %v6822, %v587
    %v6831 = vmul.f32 %v6823, %v587
    %v6832 = vmul.f32 %v6824, %v587
    %v6833 = vmul.f32 %v6825, %v587
    %v6834 = vmul.f32 %v6826, %v587
    %v6835 = vmul.f32 %v6827, %v587
    %v6836 = vmul.f32 %v6828, %v587
    %6837 = vadd.xlane.f32.xlu0 %v6829
    %v6838 = vpop.xlane.xlu0 %6837
    %6839 = vadd.xlane.f32.xlu0 %v6830
    %v6840 = vpop.xlane.xlu0 %6839
    %6841 = vadd.xlane.f32.xlu0 %v6831
    %v6842 = vpop.xlane.xlu0 %6841
    %6843 = vadd.xlane.f32.xlu0 %v6832
    %v6844 = vpop.xlane.xlu0 %6843
    %6845 = vadd.xlane.f32.xlu0 %v6833
    %v6846 = vpop.xlane.xlu0 %6845
    %6847 = vadd.xlane.f32.xlu0 %v6834
    %v6848 = vpop.xlane.xlu0 %6847
    %6849 = vadd.xlane.f32.xlu0 %v6835
    %v6850 = vpop.xlane.xlu0 %6849
    %6851 = vadd.xlane.f32.xlu0 %v6836
    %v6852 = vpop.xlane.xlu0 %6851
    %v6853 = vadd.f32 %v6838, %v613
    %v6854 = vadd.f32 %v6840, %v613
    %v6855 = vadd.f32 %v6842, %v613
    %v6856 = vadd.f32 %v6844, %v613
    %v6857 = vadd.f32 %v6846, %v613
    %v6858 = vadd.f32 %v6848, %v613
    %v6859 = vadd.f32 %v6850, %v613
    %v6860 = vadd.f32 %v6852, %v613
    %v6869 = vlaneseq
    %v6870 = vshrl.u32 %v6869, 7
    %v6871 = vsub.s32 %v631, %v6870
    %v6872 = vrot.slane %v6853, %v6871
    %v6873 = vlaneseq
    %v6874 = vshrl.u32 %v6873, 7
    %v6875 = vsub.s32 %v631, %v6874
    %v6876 = vrot.slane %v6854, %v6875
    %v6877 = vlaneseq
    %v6878 = vshrl.u32 %v6877, 7
    %v6879 = vsub.s32 %v631, %v6878
    %v6880 = vrot.slane %v6855, %v6879
    %v6881 = vlaneseq
    %v6882 = vshrl.u32 %v6881, 7
    %v6883 = vsub.s32 %v631, %v6882
    %v6884 = vrot.slane %v6856, %v6883
    %v6885 = vlaneseq
    %v6886 = vshrl.u32 %v6885, 7
    %v6887 = vsub.s32 %v631, %v6886
    %v6888 = vrot.slane %v6857, %v6887
    %v6889 = vlaneseq
    %v6890 = vshrl.u32 %v6889, 7
    %v6891 = vsub.s32 %v631, %v6890
    %v6892 = vrot.slane %v6858, %v6891
    %v6893 = vlaneseq
    %v6894 = vshrl.u32 %v6893, 7
    %v6895 = vsub.s32 %v631, %v6894
    %v6896 = vrot.slane %v6859, %v6895
    %v6897 = vlaneseq
    %v6898 = vshrl.u32 %v6897, 7
    %v6899 = vsub.s32 %v631, %v6898
    %v6900 = vrot.slane %v6860, %v6899
    %v6901 = vsel %vm664, %v6876, %v6872
    %v6902 = vsel %vm666, %v6880, %v6901
    %v6903 = vsel %vm668, %v6884, %v6902
    %v6904 = vsel %vm670, %v6888, %v6903
    %v6905 = vsel %vm672, %v6892, %v6904
    %v6906 = vsel %vm674, %v6896, %v6905
    %v6907 = vsel %vm676, %v6900, %v6906
    %v6909 = vsel %vm679, %v6907, -inf
    %6910 = vmax.xlane.f32.xlu0 %v6909
    %v6911 = vpop.xlane.xlu0 %6910
    %v6913 = vlaneseq
    %v6914 = vshrl.u32 %v6913, 7
    %v6915 = vsub.s32 0, %v6914
    %v6916 = vrot.slane %v6911, %v6915
    %v6917 = vlaneseq
    %v6918 = vshrl.u32 %v6917, 7
    %v6919 = vsub.s32 1, %v6918
    %v6920 = vrot.slane %v6911, %v6919
    %v6921 = vlaneseq
    %v6922 = vshrl.u32 %v6921, 7
    %v6923 = vsub.s32 2, %v6922
    %v6924 = vrot.slane %v6911, %v6923
    %v6925 = vlaneseq
    %v6926 = vshrl.u32 %v6925, 7
    %v6927 = vsub.s32 3, %v6926
    %v6928 = vrot.slane %v6911, %v6927
    %v6929 = vlaneseq
    %v6930 = vshrl.u32 %v6929, 7
    %v6931 = vsub.s32 4, %v6930
    %v6932 = vrot.slane %v6911, %v6931
    %v6933 = vlaneseq
    %v6934 = vshrl.u32 %v6933, 7
    %v6935 = vsub.s32 5, %v6934
    %v6936 = vrot.slane %v6911, %v6935
    %v6937 = vlaneseq
    %v6938 = vshrl.u32 %v6937, 7
    %v6939 = vsub.s32 6, %v6938
    %v6940 = vrot.slane %v6911, %v6939
    %v6941 = vlaneseq
    %v6942 = vshrl.u32 %v6941, 7
    %v6943 = vsub.s32 7, %v6942
    %v6944 = vrot.slane %v6911, %v6943
    %v6953 = vsub.f32 %v6853, %v6916
    %v6954 = vsub.f32 %v6854, %v6920
    %v6955 = vsub.f32 %v6855, %v6924
    %v6956 = vsub.f32 %v6856, %v6928
    %v6957 = vsub.f32 %v6857, %v6932
    %v6958 = vsub.f32 %v6858, %v6936
    %v6959 = vsub.f32 %v6859, %v6940
    %v6960 = vsub.f32 %v6860, %v6944
    %v6961 = vmul.f32 %v6953, 1.442695
    %v6962 = vpow.pop %v6961
    %v6963 = vmul.f32 %v6954, 1.442695
    %v6964 = vpow.pop %v6963
    %v6965 = vmul.f32 %v6955, 1.442695
    %v6966 = vpow.pop %v6965
    %v6967 = vmul.f32 %v6956, 1.442695
    %v6968 = vpow.pop %v6967
    %v6969 = vmul.f32 %v6957, 1.442695
    %v6970 = vpow.pop %v6969
    %v6971 = vmul.f32 %v6958, 1.442695
    %v6972 = vpow.pop %v6971
    %v6973 = vmul.f32 %v6959, 1.442695
    %v6974 = vpow.pop %v6973
    %v6975 = vmul.f32 %v6960, 1.442695
    %v6976 = vpow.pop %v6975
    %6985 = vset.pattern.permute.xlu0 0
    %6986 = vperm.xlu0 %6985, %v6962
    %v6987 = vpop.permute.xlu0 %6986
    %6988 = vset.pattern.permute.xlu0 0
    %6989 = vperm.xlu0 %6988, %v6964
    %v6990 = vpop.permute.xlu0 %6989
    %6991 = vset.pattern.permute.xlu0 0
    %6992 = vperm.xlu0 %6991, %v6966
    %v6993 = vpop.permute.xlu0 %6992
    %6994 = vset.pattern.permute.xlu0 0
    %6995 = vperm.xlu0 %6994, %v6968
    %v6996 = vpop.permute.xlu0 %6995
    %6997 = vset.pattern.permute.xlu0 0
    %6998 = vperm.xlu0 %6997, %v6970
    %v6999 = vpop.permute.xlu0 %6998
    %7000 = vset.pattern.permute.xlu0 0
    %7001 = vperm.xlu0 %7000, %v6972
    %v7002 = vpop.permute.xlu0 %7001
    %7003 = vset.pattern.permute.xlu0 0
    %7004 = vperm.xlu0 %7003, %v6974
    %v7005 = vpop.permute.xlu0 %7004
    %7006 = vset.pattern.permute.xlu0 0
    %7007 = vperm.xlu0 %7006, %v6976
    %v7008 = vpop.permute.xlu0 %7007
    %v7009 = vlaneseq
    %v7010 = vshrl.u32 %v7009, 7
    %v7011 = vsub.s32 %v631, %v7010
    %v7012 = vrot.slane %v6987, %v7011
    %v7013 = vlaneseq
    %v7014 = vshrl.u32 %v7013, 7
    %v7015 = vsub.s32 %v631, %v7014
    %v7016 = vrot.slane %v6990, %v7015
    %v7017 = vlaneseq
    %v7018 = vshrl.u32 %v7017, 7
    %v7019 = vsub.s32 %v631, %v7018
    %v7020 = vrot.slane %v6993, %v7019
    %v7021 = vlaneseq
    %v7022 = vshrl.u32 %v7021, 7
    %v7023 = vsub.s32 %v631, %v7022
    %v7024 = vrot.slane %v6996, %v7023
    %v7025 = vlaneseq
    %v7026 = vshrl.u32 %v7025, 7
    %v7027 = vsub.s32 %v631, %v7026
    %v7028 = vrot.slane %v6999, %v7027
    %v7029 = vlaneseq
    %v7030 = vshrl.u32 %v7029, 7
    %v7031 = vsub.s32 %v631, %v7030
    %v7032 = vrot.slane %v7002, %v7031
    %v7033 = vlaneseq
    %v7034 = vshrl.u32 %v7033, 7
    %v7035 = vsub.s32 %v631, %v7034
    %v7036 = vrot.slane %v7005, %v7035
    %v7037 = vlaneseq
    %v7038 = vshrl.u32 %v7037, 7
    %v7039 = vsub.s32 %v631, %v7038
    %v7040 = vrot.slane %v7008, %v7039
    %v7041 = vsel %vm664, %v7016, %v7012
    %v7042 = vsel %vm666, %v7020, %v7041
    %v7043 = vsel %vm668, %v7024, %v7042
    %v7044 = vsel %vm670, %v7028, %v7043
    %v7045 = vsel %vm672, %v7032, %v7044
    %v7046 = vsel %vm674, %v7036, %v7045
    %v7047 = vsel %vm676, %v7040, %v7046
    %v7049 = vsel %vm679, %v7047, 0.0
    %7050 = vadd.xlane.f32.xlu0 %v7049
    %v7051 = vpop.xlane.xlu0 %7050
    %v7052 = vrcp.pop %v7051
    %v7054 = vlaneseq
    %v7055 = vshrl.u32 %v7054, 7
    %v7056 = vsub.s32 0, %v7055
    %v7057 = vrot.slane %v7052, %v7056
    %v7058 = vlaneseq
    %v7059 = vshrl.u32 %v7058, 7
    %v7060 = vsub.s32 1, %v7059
    %v7061 = vrot.slane %v7052, %v7060
    %v7062 = vlaneseq
    %v7063 = vshrl.u32 %v7062, 7
    %v7064 = vsub.s32 2, %v7063
    %v7065 = vrot.slane %v7052, %v7064
    %v7066 = vlaneseq
    %v7067 = vshrl.u32 %v7066, 7
    %v7068 = vsub.s32 3, %v7067
    %v7069 = vrot.slane %v7052, %v7068
    %v7070 = vlaneseq
    %v7071 = vshrl.u32 %v7070, 7
    %v7072 = vsub.s32 4, %v7071
    %v7073 = vrot.slane %v7052, %v7072
    %v7074 = vlaneseq
    %v7075 = vshrl.u32 %v7074, 7
    %v7076 = vsub.s32 5, %v7075
    %v7077 = vrot.slane %v7052, %v7076
    %v7078 = vlaneseq
    %v7079 = vshrl.u32 %v7078, 7
    %v7080 = vsub.s32 6, %v7079
    %v7081 = vrot.slane %v7052, %v7080
    %v7082 = vlaneseq
    %v7083 = vshrl.u32 %v7082, 7
    %v7084 = vsub.s32 7, %v7083
    %v7085 = vrot.slane %v7052, %v7084
    %v7094 = vmul.f32 %v6962, %v7057
    %v7095 = vmul.f32 %v6964, %v7061
    %v7096 = vmul.f32 %v6966, %v7065
    %v7097 = vmul.f32 %v6968, %v7069
    %v7098 = vmul.f32 %v6970, %v7073
    %v7099 = vmul.f32 %v6972, %v7077
    %v7100 = vmul.f32 %v6974, %v7081
    %v7101 = vmul.f32 %v6976, %v7085
    %7103 = vset.pattern.permute.xlu0 0
    %7104 = vperm.xlu0 %7103, %v7094
    %v7105 = vpop.permute.xlu0 %7104
    %7108 = vset.pattern.permute.xlu0 0
    %7109 = vperm.xlu0 %7108, %v7095
    %v7110 = vpop.permute.xlu0 %7109
    %7113 = vset.pattern.permute.xlu0 0
    %7114 = vperm.xlu0 %7113, %v7096
    %v7115 = vpop.permute.xlu0 %7114
    %7118 = vset.pattern.permute.xlu0 0
    %7119 = vperm.xlu0 %7118, %v7097
    %v7120 = vpop.permute.xlu0 %7119
    %7123 = vset.pattern.permute.xlu0 0
    %7124 = vperm.xlu0 %7123, %v7098
    %v7125 = vpop.permute.xlu0 %7124
    %7128 = vset.pattern.permute.xlu0 0
    %7129 = vperm.xlu0 %7128, %v7099
    %v7130 = vpop.permute.xlu0 %7129
    %7133 = vset.pattern.permute.xlu0 0
    %7134 = vperm.xlu0 %7133, %v7100
    %v7135 = vpop.permute.xlu0 %7134
    %7138 = vset.pattern.permute.xlu0 0
    %7139 = vperm.xlu0 %7138, %v7101
    %v7140 = vpop.permute.xlu0 %7139
    %v7142 = vmul.f32 %v7105, %v153
    %v7143 = vmul.f32 %v7110, %v154
    %v7144 = vmul.f32 %v7115, %v155
    %v7145 = vmul.f32 %v7120, %v156
    %v7146 = vmul.f32 %v7125, %v157
    %v7147 = vmul.f32 %v7130, %v158
    %v7148 = vmul.f32 %v7135, %v159
    %v7149 = vmul.f32 %v7140, %v160
    %v7150 = vsel %vm170, %v7142, 0.0
    %v7151 = vrot.slane %v7150, 4
    %v7152 = vadd.f32 %v7150, %v7151
    %v7153 = vrot.slane %v7152, 2
    %v7154 = vadd.f32 %v7152, %v7153
    %v7155 = vrot.slane %v7154, 1
    %v7156 = vadd.f32 %v7154, %v7155
    %v7157 = vsel %vm170, %v7143, 0.0
    %v7158 = vrot.slane %v7157, 4
    %v7159 = vadd.f32 %v7157, %v7158
    %v7160 = vrot.slane %v7159, 2
    %v7161 = vadd.f32 %v7159, %v7160
    %v7162 = vrot.slane %v7161, 1
    %v7163 = vadd.f32 %v7161, %v7162
    %v7164 = vsel %vm170, %v7144, 0.0
    %v7165 = vrot.slane %v7164, 4
    %v7166 = vadd.f32 %v7164, %v7165
    %v7167 = vrot.slane %v7166, 2
    %v7168 = vadd.f32 %v7166, %v7167
    %v7169 = vrot.slane %v7168, 1
    %v7170 = vadd.f32 %v7168, %v7169
    %v7171 = vsel %vm170, %v7145, 0.0
    %v7172 = vrot.slane %v7171, 4
    %v7173 = vadd.f32 %v7171, %v7172
    %v7174 = vrot.slane %v7173, 2
    %v7175 = vadd.f32 %v7173, %v7174
    %v7176 = vrot.slane %v7175, 1
    %v7177 = vadd.f32 %v7175, %v7176
    %v7178 = vsel %vm170, %v7146, 0.0
    %v7179 = vrot.slane %v7178, 4
    %v7180 = vadd.f32 %v7178, %v7179
    %v7181 = vrot.slane %v7180, 2
    %v7182 = vadd.f32 %v7180, %v7181
    %v7183 = vrot.slane %v7182, 1
    %v7184 = vadd.f32 %v7182, %v7183
    %v7185 = vsel %vm170, %v7147, 0.0
    %v7186 = vrot.slane %v7185, 4
    %v7187 = vadd.f32 %v7185, %v7186
    %v7188 = vrot.slane %v7187, 2
    %v7189 = vadd.f32 %v7187, %v7188
    %v7190 = vrot.slane %v7189, 1
    %v7191 = vadd.f32 %v7189, %v7190
    %v7192 = vsel %vm170, %v7148, 0.0
    %v7193 = vrot.slane %v7192, 4
    %v7194 = vadd.f32 %v7192, %v7193
    %v7195 = vrot.slane %v7194, 2
    %v7196 = vadd.f32 %v7194, %v7195
    %v7197 = vrot.slane %v7196, 1
    %v7198 = vadd.f32 %v7196, %v7197
    %v7199 = vsel %vm170, %v7149, 0.0
    %v7200 = vrot.slane %v7199, 4
    %v7201 = vadd.f32 %v7199, %v7200
    %v7202 = vrot.slane %v7201, 2
    %v7203 = vadd.f32 %v7201, %v7202
    %v7204 = vrot.slane %v7203, 1
    %v7205 = vadd.f32 %v7203, %v7204
    %s7206 = scalar_lea.vmem [#allocation3], 48
    %v7207 = vld [vmem:[%s7206] sm:$0xff]
    %v7216 = vsel %vm664, %v7163, %v7156
    %v7217 = vsel %vm666, %v7170, %v7216
    %v7218 = vsel %vm668, %v7177, %v7217
    %v7219 = vsel %vm670, %v7184, %v7218
    %v7220 = vsel %vm672, %v7191, %v7219
    %v7221 = vsel %vm674, %v7198, %v7220
    %v7222 = vsel %vm676, %v7205, %v7221
    %v7223 = vsel %vm170, %v7222, 0
    %7225 = vmatprep.subr.mxu0 0.0
    %7226 = vmatpush1.msra.mxu0 0.0
    %7227 = vmatprep.subr.mxu0 0.0
    %7228 = vmatpush1.msra.mxu0 0.0
    %7229 = vmatprep.subr.mxu0 0.0
    %7230 = vmatpush1.msra.mxu0 0.0
    %7231 = vmatprep.subr.mxu0 0.0
    %7232 = vmatpush1.msra.mxu0 0.0
    %7233 = vmatprep.subr.mxu0 0.0
    %7234 = vmatpush1.msra.mxu0 0.0
    %7235 = vmatprep.subr.mxu0 0.0
    %7236 = vmatpush1.msra.mxu0 0.0
    %7237 = vmatprep.subr.mxu0 0.0
    %7238 = vmatpush1.msra.mxu0 0.0
    %7239 = vmatprep.subr.mxu0 0.0
    %7240 = vmatpush1.msra.mxu0 0.0
    %7241 = vmatprep.subr.mxu0 0.0
    %7242 = vmatpush1.msra.mxu0 0.0
    %7243 = vmatprep.subr.mxu0 0.0
    %7244 = vmatpush1.msra.mxu0 0.0
    %7245 = vmatprep.subr.mxu0 0.0
    %7246 = vmatpush1.msra.mxu0 0.0
    %7247 = vmatprep.subr.mxu0 0.0
    %7248 = vmatpush1.msra.mxu0 0.0
    %7249 = vmatprep.subr.mxu0 0.0
    %7250 = vmatpush1.msra.mxu0 0.0
    %7251 = vmatprep.subr.mxu0 0.0
    %7252 = vmatpush1.msra.mxu0 0.0
    %7253 = vmatprep.subr.mxu0 %v332
    %7254 = vmatpush1.msra.mxu0 %v331
    %7255 = vmatprep.subr.mxu0 %v328
    %7256 = vmatpush1.msra.mxu0 %v327
    %7257 = vmatprep.subr.mxu0 0.0
    %7258 = vmatpush2.msra.mxu0 0.0
    %7259 = vmatprep.subr.mxu0 0.0
    %7260 = vmatpush2.msra.mxu0 0.0
    %7261 = vmatprep.subr.mxu0 0.0
    %7262 = vmatpush2.msra.mxu0 0.0
    %7263 = vmatprep.subr.mxu0 0.0
    %7264 = vmatpush2.msra.mxu0 0.0
    %7265 = vmatprep.subr.mxu0 0.0
    %7266 = vmatpush2.msra.mxu0 0.0
    %7267 = vmatprep.subr.mxu0 0.0
    %7268 = vmatpush2.msra.mxu0 0.0
    %7269 = vmatprep.subr.mxu0 0.0
    %7270 = vmatpush2.msra.mxu0 0.0
    %7271 = vmatprep.subr.mxu0 0.0
    %7272 = vmatpush2.msra.mxu0 0.0
    %7273 = vmatprep.subr.mxu0 0.0
    %7274 = vmatpush2.msra.mxu0 0.0
    %7275 = vmatprep.subr.mxu0 0.0
    %7276 = vmatpush2.msra.mxu0 0.0
    %7277 = vmatprep.subr.mxu0 0.0
    %7278 = vmatpush2.msra.mxu0 0.0
    %7279 = vmatprep.subr.mxu0 0.0
    %7280 = vmatpush2.msra.mxu0 0.0
    %7281 = vmatprep.subr.mxu0 0.0
    %7282 = vmatpush2.msra.mxu0 0.0
    %7283 = vmatprep.subr.mxu0 0.0
    %7284 = vmatpush2.msra.mxu0 0.0
    %7285 = vmatprep.subr.mxu0 0.0
    %7286 = vmatpush2.msra.mxu0 0.0
    %7287 = vmatprep.subr.mxu0 0.0
    %7288 = vmatpush2.msra.mxu0 0.0
    %7289 = vmatprep.mubr.f32.mxu0 0.0
    %7290 = vmatmul.mubr.f32.gmra.mxu0 %v7223
    %v7291 = vpop.f32.mrf.mxu0
    %v7292 = vadd.f32 0.0, %v7291
    %v7293 = vpop.f32.mrf.mxu0
    %v7294 = vadd.f32 0.0, %v7293
    %7295 = vdwg.mxu0
    %7296 = vmatprep.subr.mxu0 0.0
    %7297 = vmatpush1.msra.mxu0 0.0
    %7298 = vmatprep.subr.mxu0 0.0
    %7299 = vmatpush1.msra.mxu0 0.0
    %7300 = vmatprep.subr.mxu0 0.0
    %7301 = vmatpush1.msra.mxu0 0.0
    %7302 = vmatprep.subr.mxu0 0.0
    %7303 = vmatpush1.msra.mxu0 0.0
    %7304 = vmatprep.subr.mxu0 0.0
    %7305 = vmatpush1.msra.mxu0 0.0
    %7306 = vmatprep.subr.mxu0 0.0
    %7307 = vmatpush1.msra.mxu0 0.0
    %7308 = vmatprep.subr.mxu0 0.0
    %7309 = vmatpush1.msra.mxu0 0.0
    %7310 = vmatprep.subr.mxu0 0.0
    %7311 = vmatpush1.msra.mxu0 0.0
    %7312 = vmatprep.subr.mxu0 0.0
    %7313 = vmatpush1.msra.mxu0 0.0
    %7314 = vmatprep.subr.mxu0 0.0
    %7315 = vmatpush1.msra.mxu0 0.0
    %7316 = vmatprep.subr.mxu0 0.0
    %7317 = vmatpush1.msra.mxu0 0.0
    %7318 = vmatprep.subr.mxu0 0.0
    %7319 = vmatpush1.msra.mxu0 0.0
    %7320 = vmatprep.subr.mxu0 0.0
    %7321 = vmatpush1.msra.mxu0 0.0
    %7322 = vmatprep.subr.mxu0 0.0
    %7323 = vmatpush1.msra.mxu0 0.0
    %7324 = vmatprep.subr.mxu0 %v334
    %7325 = vmatpush1.msra.mxu0 %v333
    %7326 = vmatprep.subr.mxu0 %v330
    %7327 = vmatpush1.msra.mxu0 %v329
    %7328 = vmatprep.subr.mxu0 0.0
    %7329 = vmatpush2.msra.mxu0 0.0
    %7330 = vmatprep.subr.mxu0 0.0
    %7331 = vmatpush2.msra.mxu0 0.0
    %7332 = vmatprep.subr.mxu0 0.0
    %7333 = vmatpush2.msra.mxu0 0.0
    %7334 = vmatprep.subr.mxu0 0.0
    %7335 = vmatpush2.msra.mxu0 0.0
    %7336 = vmatprep.subr.mxu0 0.0
    %7337 = vmatpush2.msra.mxu0 0.0
    %7338 = vmatprep.subr.mxu0 0.0
    %7339 = vmatpush2.msra.mxu0 0.0
    %7340 = vmatprep.subr.mxu0 0.0
    %7341 = vmatpush2.msra.mxu0 0.0
    %7342 = vmatprep.subr.mxu0 0.0
    %7343 = vmatpush2.msra.mxu0 0.0
    %7344 = vmatprep.subr.mxu0 0.0
    %7345 = vmatpush2.msra.mxu0 0.0
    %7346 = vmatprep.subr.mxu0 0.0
    %7347 = vmatpush2.msra.mxu0 0.0
    %7348 = vmatprep.subr.mxu0 0.0
    %7349 = vmatpush2.msra.mxu0 0.0
    %7350 = vmatprep.subr.mxu0 0.0
    %7351 = vmatpush2.msra.mxu0 0.0
    %7352 = vmatprep.subr.mxu0 0.0
    %7353 = vmatpush2.msra.mxu0 0.0
    %7354 = vmatprep.subr.mxu0 0.0
    %7355 = vmatpush2.msra.mxu0 0.0
    %7356 = vmatprep.subr.mxu0 0.0
    %7357 = vmatpush2.msra.mxu0 0.0
    %7358 = vmatprep.subr.mxu0 0.0
    %7359 = vmatpush2.msra.mxu0 0.0
    %7360 = vmatprep.mubr.f32.mxu0 0.0
    %7361 = vmatmul.mubr.f32.gmra.mxu0 %v7223
    %v7362 = vpop.f32.mrf.mxu0
    %v7363 = vadd.f32 0.0, %v7362
    %v7364 = vpop.f32.mrf.mxu0
    %v7365 = vadd.f32 0.0, %v7364
    %7366 = vdwg.mxu0
    %v7368 = vsel %vm170, %v7207, 0
    %7370 = vmatprep.subr.mxu0 0.0
    %7371 = vmatpush1.msra.mxu0 0.0
    %7372 = vmatprep.subr.mxu0 0.0
    %7373 = vmatpush1.msra.mxu0 0.0
    %7374 = vmatprep.subr.mxu0 0.0
    %7375 = vmatpush1.msra.mxu0 0.0
    %7376 = vmatprep.subr.mxu0 0.0
    %7377 = vmatpush1.msra.mxu0 0.0
    %7378 = vmatprep.subr.mxu0 0.0
    %7379 = vmatpush1.msra.mxu0 0.0
    %7380 = vmatprep.subr.mxu0 0.0
    %7381 = vmatpush1.msra.mxu0 0.0
    %7382 = vmatprep.subr.mxu0 0.0
    %7383 = vmatpush1.msra.mxu0 0.0
    %7384 = vmatprep.subr.mxu0 0.0
    %7385 = vmatpush1.msra.mxu0 0.0
    %7386 = vmatprep.subr.mxu0 0.0
    %7387 = vmatpush1.msra.mxu0 0.0
    %7388 = vmatprep.subr.mxu0 0.0
    %7389 = vmatpush1.msra.mxu0 0.0
    %7390 = vmatprep.subr.mxu0 0.0
    %7391 = vmatpush1.msra.mxu0 0.0
    %7392 = vmatprep.subr.mxu0 0.0
    %7393 = vmatpush1.msra.mxu0 0.0
    %7394 = vmatprep.subr.mxu0 0.0
    %7395 = vmatpush1.msra.mxu0 0.0
    %7396 = vmatprep.subr.mxu0 0.0
    %7397 = vmatpush1.msra.mxu0 0.0
    %7398 = vmatprep.subr.mxu0 %v324
    %7399 = vmatpush1.msra.mxu0 %v323
    %7400 = vmatprep.subr.mxu0 %v320
    %7401 = vmatpush1.msra.mxu0 %v319
    %7402 = vmatprep.subr.mxu0 0.0
    %7403 = vmatpush2.msra.mxu0 0.0
    %7404 = vmatprep.subr.mxu0 0.0
    %7405 = vmatpush2.msra.mxu0 0.0
    %7406 = vmatprep.subr.mxu0 0.0
    %7407 = vmatpush2.msra.mxu0 0.0
    %7408 = vmatprep.subr.mxu0 0.0
    %7409 = vmatpush2.msra.mxu0 0.0
    %7410 = vmatprep.subr.mxu0 0.0
    %7411 = vmatpush2.msra.mxu0 0.0
    %7412 = vmatprep.subr.mxu0 0.0
    %7413 = vmatpush2.msra.mxu0 0.0
    %7414 = vmatprep.subr.mxu0 0.0
    %7415 = vmatpush2.msra.mxu0 0.0
    %7416 = vmatprep.subr.mxu0 0.0
    %7417 = vmatpush2.msra.mxu0 0.0
    %7418 = vmatprep.subr.mxu0 0.0
    %7419 = vmatpush2.msra.mxu0 0.0
    %7420 = vmatprep.subr.mxu0 0.0
    %7421 = vmatpush2.msra.mxu0 0.0
    %7422 = vmatprep.subr.mxu0 0.0
    %7423 = vmatpush2.msra.mxu0 0.0
    %7424 = vmatprep.subr.mxu0 0.0
    %7425 = vmatpush2.msra.mxu0 0.0
    %7426 = vmatprep.subr.mxu0 0.0
    %7427 = vmatpush2.msra.mxu0 0.0
    %7428 = vmatprep.subr.mxu0 0.0
    %7429 = vmatpush2.msra.mxu0 0.0
    %7430 = vmatprep.subr.mxu0 0.0
    %7431 = vmatpush2.msra.mxu0 0.0
    %7432 = vmatprep.subr.mxu0 0.0
    %7433 = vmatpush2.msra.mxu0 0.0
    %7434 = vmatprep.mubr.f32.mxu0 0.0
    %7435 = vmatmul.mubr.f32.gmra.mxu0 %v7368
    %v7436 = vpop.f32.mrf.mxu0
    %v7437 = vadd.f32 %v7292, %v7436
    %v7438 = vpop.f32.mrf.mxu0
    %v7439 = vadd.f32 %v7294, %v7438
    %7440 = vdwg.mxu0
    %7441 = vmatprep.subr.mxu0 0.0
    %7442 = vmatpush1.msra.mxu0 0.0
    %7443 = vmatprep.subr.mxu0 0.0
    %7444 = vmatpush1.msra.mxu0 0.0
    %7445 = vmatprep.subr.mxu0 0.0
    %7446 = vmatpush1.msra.mxu0 0.0
    %7447 = vmatprep.subr.mxu0 0.0
    %7448 = vmatpush1.msra.mxu0 0.0
    %7449 = vmatprep.subr.mxu0 0.0
    %7450 = vmatpush1.msra.mxu0 0.0
    %7451 = vmatprep.subr.mxu0 0.0
    %7452 = vmatpush1.msra.mxu0 0.0
    %7453 = vmatprep.subr.mxu0 0.0
    %7454 = vmatpush1.msra.mxu0 0.0
    %7455 = vmatprep.subr.mxu0 0.0
    %7456 = vmatpush1.msra.mxu0 0.0
    %7457 = vmatprep.subr.mxu0 0.0
    %7458 = vmatpush1.msra.mxu0 0.0
    %7459 = vmatprep.subr.mxu0 0.0
    %7460 = vmatpush1.msra.mxu0 0.0
    %7461 = vmatprep.subr.mxu0 0.0
    %7462 = vmatpush1.msra.mxu0 0.0
    %7463 = vmatprep.subr.mxu0 0.0
    %7464 = vmatpush1.msra.mxu0 0.0
    %7465 = vmatprep.subr.mxu0 0.0
    %7466 = vmatpush1.msra.mxu0 0.0
    %7467 = vmatprep.subr.mxu0 0.0
    %7468 = vmatpush1.msra.mxu0 0.0
    %7469 = vmatprep.subr.mxu0 %v326
    %7470 = vmatpush1.msra.mxu0 %v325
    %7471 = vmatprep.subr.mxu0 %v322
    %7472 = vmatpush1.msra.mxu0 %v321
    %7473 = vmatprep.subr.mxu0 0.0
    %7474 = vmatpush2.msra.mxu0 0.0
    %7475 = vmatprep.subr.mxu0 0.0
    %7476 = vmatpush2.msra.mxu0 0.0
    %7477 = vmatprep.subr.mxu0 0.0
    %7478 = vmatpush2.msra.mxu0 0.0
    %7479 = vmatprep.subr.mxu0 0.0
    %7480 = vmatpush2.msra.mxu0 0.0
    %7481 = vmatprep.subr.mxu0 0.0
    %7482 = vmatpush2.msra.mxu0 0.0
    %7483 = vmatprep.subr.mxu0 0.0
    %7484 = vmatpush2.msra.mxu0 0.0
    %7485 = vmatprep.subr.mxu0 0.0
    %7486 = vmatpush2.msra.mxu0 0.0
    %7487 = vmatprep.subr.mxu0 0.0
    %7488 = vmatpush2.msra.mxu0 0.0
    %7489 = vmatprep.subr.mxu0 0.0
    %7490 = vmatpush2.msra.mxu0 0.0
    %7491 = vmatprep.subr.mxu0 0.0
    %7492 = vmatpush2.msra.mxu0 0.0
    %7493 = vmatprep.subr.mxu0 0.0
    %7494 = vmatpush2.msra.mxu0 0.0
    %7495 = vmatprep.subr.mxu0 0.0
    %7496 = vmatpush2.msra.mxu0 0.0
    %7497 = vmatprep.subr.mxu0 0.0
    %7498 = vmatpush2.msra.mxu0 0.0
    %7499 = vmatprep.subr.mxu0 0.0
    %7500 = vmatpush2.msra.mxu0 0.0
    %7501 = vmatprep.subr.mxu0 0.0
    %7502 = vmatpush2.msra.mxu0 0.0
    %7503 = vmatprep.subr.mxu0 0.0
    %7504 = vmatpush2.msra.mxu0 0.0
    %7505 = vmatprep.mubr.f32.mxu0 0.0
    %7506 = vmatmul.mubr.f32.gmra.mxu0 %v7368
    %v7507 = vpop.f32.mrf.mxu0
    %v7508 = vadd.f32 %v7363, %v7507
    %v7509 = vpop.f32.mrf.mxu0
    %v7510 = vadd.f32 %v7365, %v7509
    %7511 = vdwg.mxu0
    %7512 = vmatprep.subr.mxu0 %v396
    %7513 = vmatpush1.msra.mxu0 %v395
    %7514 = vmatprep.subr.mxu0 %v392
    %7515 = vmatpush1.msra.mxu0 %v391
    %7516 = vmatprep.subr.mxu0 %v388
    %7517 = vmatpush1.msra.mxu0 %v387
    %7518 = vmatprep.subr.mxu0 %v384
    %7519 = vmatpush1.msra.mxu0 %v383
    %7520 = vmatprep.subr.mxu0 %v380
    %7521 = vmatpush1.msra.mxu0 %v379
    %7522 = vmatprep.subr.mxu0 %v376
    %7523 = vmatpush1.msra.mxu0 %v375
    %7524 = vmatprep.subr.mxu0 %v372
    %7525 = vmatpush1.msra.mxu0 %v371
    %7526 = vmatprep.subr.mxu0 %v368
    %7527 = vmatpush1.msra.mxu0 %v367
    %7528 = vmatprep.subr.mxu0 %v364
    %7529 = vmatpush1.msra.mxu0 %v363
    %7530 = vmatprep.subr.mxu0 %v360
    %7531 = vmatpush1.msra.mxu0 %v359
    %7532 = vmatprep.subr.mxu0 %v356
    %7533 = vmatpush1.msra.mxu0 %v355
    %7534 = vmatprep.subr.mxu0 %v352
    %7535 = vmatpush1.msra.mxu0 %v351
    %7536 = vmatprep.subr.mxu0 %v348
    %7537 = vmatpush1.msra.mxu0 %v347
    %7538 = vmatprep.subr.mxu0 %v344
    %7539 = vmatpush1.msra.mxu0 %v343
    %7540 = vmatprep.subr.mxu0 %v340
    %7541 = vmatpush1.msra.mxu0 %v339
    %7542 = vmatprep.subr.mxu0 %v336
    %7543 = vmatpush1.msra.mxu0 %v335
    %7544 = vmatprep.subr.mxu0 0.0
    %7545 = vmatpush2.msra.mxu0 0.0
    %7546 = vmatprep.subr.mxu0 0.0
    %7547 = vmatpush2.msra.mxu0 0.0
    %7548 = vmatprep.subr.mxu0 0.0
    %7549 = vmatpush2.msra.mxu0 0.0
    %7550 = vmatprep.subr.mxu0 0.0
    %7551 = vmatpush2.msra.mxu0 0.0
    %7552 = vmatprep.subr.mxu0 0.0
    %7553 = vmatpush2.msra.mxu0 0.0
    %7554 = vmatprep.subr.mxu0 0.0
    %7555 = vmatpush2.msra.mxu0 0.0
    %7556 = vmatprep.subr.mxu0 0.0
    %7557 = vmatpush2.msra.mxu0 0.0
    %7558 = vmatprep.subr.mxu0 0.0
    %7559 = vmatpush2.msra.mxu0 0.0
    %7560 = vmatprep.subr.mxu0 0.0
    %7561 = vmatpush2.msra.mxu0 0.0
    %7562 = vmatprep.subr.mxu0 0.0
    %7563 = vmatpush2.msra.mxu0 0.0
    %7564 = vmatprep.subr.mxu0 0.0
    %7565 = vmatpush2.msra.mxu0 0.0
    %7566 = vmatprep.subr.mxu0 0.0
    %7567 = vmatpush2.msra.mxu0 0.0
    %7568 = vmatprep.subr.mxu0 0.0
    %7569 = vmatpush2.msra.mxu0 0.0
    %7570 = vmatprep.subr.mxu0 0.0
    %7571 = vmatpush2.msra.mxu0 0.0
    %7572 = vmatprep.subr.mxu0 0.0
    %7573 = vmatpush2.msra.mxu0 0.0
    %7574 = vmatprep.subr.mxu0 0.0
    %7575 = vmatpush2.msra.mxu0 0.0
    %7576 = vmatprep.mubr.f32.mxu0 0.0
    %7577 = vmatmul.mubr.f32.gmra.mxu0 %v6650
    %v7578 = vpop.f32.mrf.mxu0
    %v7579 = vadd.f32 0.0, %v7578
    %v7580 = vpop.f32.mrf.mxu0
    %v7581 = vadd.f32 0.0, %v7580
    %7582 = vdwg.mxu0
    %7583 = vmatprep.subr.mxu0 %v398
    %7584 = vmatpush1.msra.mxu0 %v397
    %7585 = vmatprep.subr.mxu0 %v394
    %7586 = vmatpush1.msra.mxu0 %v393
    %7587 = vmatprep.subr.mxu0 %v390
    %7588 = vmatpush1.msra.mxu0 %v389
    %7589 = vmatprep.subr.mxu0 %v386
    %7590 = vmatpush1.msra.mxu0 %v385
    %7591 = vmatprep.subr.mxu0 %v382
    %7592 = vmatpush1.msra.mxu0 %v381
    %7593 = vmatprep.subr.mxu0 %v378
    %7594 = vmatpush1.msra.mxu0 %v377
    %7595 = vmatprep.subr.mxu0 %v374
    %7596 = vmatpush1.msra.mxu0 %v373
    %7597 = vmatprep.subr.mxu0 %v370
    %7598 = vmatpush1.msra.mxu0 %v369
    %7599 = vmatprep.subr.mxu0 %v366
    %7600 = vmatpush1.msra.mxu0 %v365
    %7601 = vmatprep.subr.mxu0 %v362
    %7602 = vmatpush1.msra.mxu0 %v361
    %7603 = vmatprep.subr.mxu0 %v358
    %7604 = vmatpush1.msra.mxu0 %v357
    %7605 = vmatprep.subr.mxu0 %v354
    %7606 = vmatpush1.msra.mxu0 %v353
    %7607 = vmatprep.subr.mxu0 %v350
    %7608 = vmatpush1.msra.mxu0 %v349
    %7609 = vmatprep.subr.mxu0 %v346
    %7610 = vmatpush1.msra.mxu0 %v345
    %7611 = vmatprep.subr.mxu0 %v342
    %7612 = vmatpush1.msra.mxu0 %v341
    %7613 = vmatprep.subr.mxu0 %v338
    %7614 = vmatpush1.msra.mxu0 %v337
    %7615 = vmatprep.subr.mxu0 0.0
    %7616 = vmatpush2.msra.mxu0 0.0
    %7617 = vmatprep.subr.mxu0 0.0
    %7618 = vmatpush2.msra.mxu0 0.0
    %7619 = vmatprep.subr.mxu0 0.0
    %7620 = vmatpush2.msra.mxu0 0.0
    %7621 = vmatprep.subr.mxu0 0.0
    %7622 = vmatpush2.msra.mxu0 0.0
    %7623 = vmatprep.subr.mxu0 0.0
    %7624 = vmatpush2.msra.mxu0 0.0
    %7625 = vmatprep.subr.mxu0 0.0
    %7626 = vmatpush2.msra.mxu0 0.0
    %7627 = vmatprep.subr.mxu0 0.0
    %7628 = vmatpush2.msra.mxu0 0.0
    %7629 = vmatprep.subr.mxu0 0.0
    %7630 = vmatpush2.msra.mxu0 0.0
    %7631 = vmatprep.subr.mxu0 0.0
    %7632 = vmatpush2.msra.mxu0 0.0
    %7633 = vmatprep.subr.mxu0 0.0
    %7634 = vmatpush2.msra.mxu0 0.0
    %7635 = vmatprep.subr.mxu0 0.0
    %7636 = vmatpush2.msra.mxu0 0.0
    %7637 = vmatprep.subr.mxu0 0.0
    %7638 = vmatpush2.msra.mxu0 0.0
    %7639 = vmatprep.subr.mxu0 0.0
    %7640 = vmatpush2.msra.mxu0 0.0
    %7641 = vmatprep.subr.mxu0 0.0
    %7642 = vmatpush2.msra.mxu0 0.0
    %7643 = vmatprep.subr.mxu0 0.0
    %7644 = vmatpush2.msra.mxu0 0.0
    %7645 = vmatprep.subr.mxu0 0.0
    %7646 = vmatpush2.msra.mxu0 0.0
    %7647 = vmatprep.mubr.f32.mxu0 0.0
    %7648 = vmatmul.mubr.f32.gmra.mxu0 %v6650
    %v7649 = vpop.f32.mrf.mxu0
    %v7650 = vadd.f32 0.0, %v7649
    %v7651 = vpop.f32.mrf.mxu0
    %v7652 = vadd.f32 0.0, %v7651
    %7653 = vdwg.mxu0
    %v7654 = vadd.f32 %v7437, %v7579
    %v7655 = vadd.f32 %v7439, %v7581
    %v7656 = vadd.f32 %v7508, %v7650
    %v7657 = vadd.f32 %v7510, %v7652
    %v7658 = vadd.f32 %v7654, %v1432
    %v7659 = vadd.f32 %v7655, %v1436
    %v7660 = vadd.f32 %v7656, %v1440
    %v7661 = vadd.f32 %v7657, %v1444
    %v7662 = vxor.u32 %v7658, 2147483648
    %v7663 = vmul.f32 %v7662, 1.442695
    %v7664 = vpow.pop %v7663
    %v7665 = vadd.f32 %v7664, 1.0
    %v7666 = vrcp.pop %v7665
    %v7667 = vmul.f32 1.0, %v7666
    %v7668 = vxor.u32 %v7659, 2147483648
    %v7669 = vmul.f32 %v7668, 1.442695
    %v7670 = vpow.pop %v7669
    %v7671 = vadd.f32 %v7670, 1.0
    %v7672 = vrcp.pop %v7671
    %v7673 = vmul.f32 1.0, %v7672
    %v7674 = vtanh.pop %v7660
    %v7675 = vxor.u32 %v7661, 2147483648
    %v7676 = vmul.f32 %v7675, 1.442695
    %v7677 = vpow.pop %v7676
    %v7678 = vadd.f32 %v7677, 1.0
    %v7679 = vrcp.pop %v7678
    %v7680 = vmul.f32 1.0, %v7679
    %v7681 = vmul.f32 %v7673, %v6648
    %v7682 = vmul.f32 %v7667, %v7674
    %v7683 = vadd.f32 %v7681, %v7682
    %v7684 = vtanh.pop %v7683
    %v7685 = vmul.f32 %v7680, %v7684
    %s7686 = scalar_lea.vmem [#allocation17], 48
    %7687 = vst [vmem:[%s7686] sm:$0xff] %v7685
    // Predicated region
    $region86: #{tpu_custom_call.1} parent=1 // pred_check
      _
    $region87: #{tpu_custom_call.1} parent=1 // pred_check_branch
      %7689 = sbr.rel (0) target = $region89
    $region88: #{tpu_custom_call.1} parent=1 // pred_region
      %s7691 = ssub.s32 896, 896
      %7692 = vsyncadd [#allocation5], %s7691
      %s7693 = sshll.u32 [#allocation17], 4
      %s7694 = int_to_ptr.vmem [resolvable:$true] %s7693
      %7699 = dma.vmem_to_hbm [thread:$0]  %s7694, 896, %s13, [#allocation5], 128, 128, 8
    $region89: #{tpu_custom_call.1} parent=1 // pred_fallthru
      _
    // Predicated region
    $region90: #{tpu_custom_call.1} parent=1 // pred_check
      _
    $region91: #{tpu_custom_call.1} parent=1 // pred_check_branch
      %7701 = sbr.rel (0) target = $region93
    $region92: #{tpu_custom_call.1} parent=1 // pred_region
      %7702 = dma.done [#allocation5], 896
    $region93: #{tpu_custom_call.1} parent=1 // pred_fallthru
      _
    %7703 = vsyncpa [#allocation4], 1
    %7704 = vsyncpa [#allocation7], 1
    %7705 = vsyncpa [#allocation10], 1
    %7706 = vsyncpa [#allocation13], 1
    %7707 = vsyncpa [#allocation16], 1
    %7708 = vsyncpa [#allocation5], 1

</llo_original>
